<compile_context>
chip_gen: v7x
topology: tpu7x:2x2x1
jax: 0.10.0
libtpu: 0.0.40
codegen_flags: <defaults>
</compile_context>

<pallas_src>
import functools

import numpy as np
import jax
import jax.numpy as jnp
from jax import lax
from jax.experimental import pallas as pl
from jax.experimental.pallas import tpu as pltpu


BTILE = 8   # images per grid step; BTILE*32 = 256 MXU rows (sweepable, >=8)


# --------------------------- offline weight packing ---------------------------

def _fold_conv_weights(w, wp, wo):
    """w: (O, C, KH, KW) -> U: (KH, C*wp, O*wo).

    U_kh[c*wp + (j+kw), o*wo + j] = w[o, c, kh, kw]; for an activation matrix
    X[row, c*wp + w] the product (X @ U_kh) accumulates the kw / input-channel
    part of the conv, and the kh shift is a row roll in-kernel.
    """
    O, C, KH, KW = w.shape
    w = np.asarray(w, np.float32)
    u = np.zeros((KH, C * wp, O * wo), np.float32)
    jj = np.arange(wo)
    for kh in range(KH):
        for kw in range(KW):
            for c in range(C):
                for o in range(O):
                    u[kh, c * wp + kw + jj, o * wo + jj] = w[o, c, kh, kw]
    return u


def _pool_lane_selectors(ch, wi):
    """0/1 matrices (ch*wi, ch*wi//2) picking even / odd width positions."""
    wo = wi // 2
    se = np.zeros((ch * wi, ch * wo), np.float32)
    so = np.zeros((ch * wi, ch * wo), np.float32)
    j = np.arange(wo)
    for c in range(ch):
        se[c * wi + 2 * j, c * wo + j] = 1.0
        so[c * wi + 2 * j + 1, c * wo + j] = 1.0
    return se, so


def pack_params(p, btile=BTILE):
    """Pre-pack PyTorch-layout params into kernel-ready matrices (runs once)."""
    w1 = np.asarray(p["conv1_w"], np.float32)        # (6, 1, 5, 5)
    w2 = np.asarray(p["conv2_w"], np.float32)        # (16, 6, 5, 5)
    fc1_w = np.asarray(p["fc1_w"], np.float32)       # (120, 400), in-idx c*25+h*5+w
    fc2_w = np.asarray(p["fc2_w"], np.float32)       # (84, 120)
    fc3_w = np.asarray(p["fc3_w"], np.float32)       # (10, 84)

    s1e, s1o = _pool_lane_selectors(6, 28)           # (168, 84)
    s2e, s2o = _pool_lane_selectors(16, 10)          # (160, 80)

    # fc1 weight reordered to (h, (c,w)-lanes, out), out lane-padded to 128.
    v1 = fc1_w.reshape(120, 16, 5, 5).transpose(2, 1, 3, 0).reshape(5, 80, 120)
    v1p = np.zeros((5, 80, 128), np.float32); v1p[..., :120] = v1
    # fc2 / fc3 pre-transposed, zero-padded to 128x128 (lane-dense path).
    v2p = np.zeros((128, 128), np.float32); v2p[:120, :84] = fc2_w.T
    v3p = np.zeros((128, 128), np.float32); v3p[:84, :10] = fc3_w.T

    # Per-image "row 0 of each 32-row slab" compaction selector (after fc1).
    rout = np.zeros((btile, btile * 32), np.float32)
    rout[np.arange(btile), np.arange(btile) * 32] = 1.0

    # All biases consolidated into one sublane-padded (8, 168) array.
    bias = np.zeros((8, 168), np.float32)
    bias[0, :168] = np.repeat(np.asarray(p["conv1_b"], np.float32), 28)
    bias[1, :160] = np.repeat(np.asarray(p["conv2_b"], np.float32), 10)
    bias[2, :120] = np.asarray(p["fc1_b"], np.float32)
    bias[3, :84] = np.asarray(p["fc2_b"], np.float32)
    bias[4, :10] = np.asarray(p["fc3_b"], np.float32)

    packed = {
        "u1": _fold_conv_weights(w1, 32, 28),        # (5, 32, 168)
        "u2": _fold_conv_weights(w2, 14, 10),        # (5, 84, 160)
        "s1e": s1e, "s1o": s1o, "s2e": s2e, "s2o": s2o,
        "v1": v1p, "v2": v2p, "v3": v3p,             # (5,80,128) (128,128) (128,128)
        "rout": rout, "bias": bias,                  # (BTILE, BTILE*32), (8, 168)
    }
    return {k: jnp.asarray(v) for k, v in packed.items()}


# --------------------------------- the kernel ---------------------------------

def _lenet5_kernel(x_ref, u1_ref, u2_ref, s1e_ref, s1o_ref, s2e_ref, s2o_ref,
                   v1_ref, v2_ref, v3_ref, rout_ref, bias_ref, out_ref):
    """Forward pass for BTILE images stacked along rows (32-row slab / image)."""
    f32 = jnp.float32
    dot = functools.partial(jnp.dot, preferred_element_type=f32)
    M = x_ref.shape[0]                                # BTILE * 32 (static)

    def shift_rows(a, k):
        # out[i] = a[i + k], static k; wrap only touches unused slab-tail rows.
        if k == 0:
            return a
        return pltpu.roll(a, shift=(M - k) % M, axis=0)

    xp = x_ref[...]                                   # (M, 32) padded images
    bias = bias_ref[...]                              # (8, 168)
    b1, b2 = bias[0:1, :], bias[1:2, :160]
    fb1, fb2, fb3 = bias[2:3, :128], bias[3:4, :128], bias[4:5, :128]

    # conv1 5x5 (pad=2) + bias + ReLU: kw/channel folded into U1, kh via roll.
    acc1 = dot(xp, u1_ref[0])
    for kh in range(1, 5):
        acc1 = acc1 + dot(shift_rows(xp, kh), u1_ref[kh])
    x1 = jnp.maximum(acc1 + b1, 0.0)                  # (M, 168); valid slab rows 0..27

    # maxpool1 2x2: width via lane selectors (MXU), height via roll+max (XLU/VPU).
    xh1 = jnp.maximum(dot(x1, s1e_ref[...]), dot(x1, s1o_ref[...]))   # (M, 84)
    y1 = jnp.maximum(xh1, shift_rows(xh1, 1))         # valid at even slab rows 0..26

    # conv2 5x5 (valid) + bias + ReLU: pooled rows live at stride-2 offsets.
    acc2 = dot(y1, u2_ref[0])
    for kh in range(1, 5):
        acc2 = acc2 + dot(shift_rows(y1, 2 * kh), u2_ref[kh])
    x2 = jnp.maximum(acc2 + b2, 0.0)                  # (M, 160); valid rows 0,2,..,18

    # maxpool2 2x2.
    xh2 = jnp.maximum(dot(x2, s2e_ref[...]), dot(x2, s2o_ref[...]))   # (M, 80)
    y2 = jnp.maximum(xh2, shift_rows(xh2, 2))         # valid rows 0,4,8,12,16

    # fc1 (torch NCHW flatten folded into V1): contract over (h, c*5+w), then
    # compact the single valid row per image with a tiny selector matmul.
    f1 = dot(y2, v1_ref[0])
    for h in range(1, 5):
        f1 = f1 + dot(shift_rows(y2, 4 * h), v1_ref[h])               # (M, 128)
    fc1 = jnp.maximum(dot(rout_ref[...], f1) + fb1, 0.0)              # (BTILE, 128)

    # fc2 + ReLU, fc3 (lane-dense padded logits).
    fc2 = jnp.maximum(dot(fc1, v2_ref[...]) + fb2, 0.0)               # (BTILE, 128)
    out_ref[...] = dot(fc2, v3_ref[...]) + fb3                        # (BTILE, 128)

    # TODO(synk): the torch module also stashes intermediates on `self`
    # (CONV1/CONV2/FC1/FC2); stateful bookkeeping with no effect on the output.


# ---------------------------------- wrapper -----------------------------------

def lenet5_forward(packed, x):
    """x: NCHW (B, 1, 28, 28) float32 -> logits (B, 10)."""
    B = x.shape[0]
    bt = BTILE
    Bp = ((B + bt - 1) // bt) * bt                    # pad batch to BTILE multiple

    x3 = x.astype(jnp.float32).reshape(B, 28, 28)
    if Bp != B:
        x3 = jnp.pad(x3, ((0, Bp - B), (0, 0), (0, 0)))
    # conv1 padding=2 done once on the HBM side; stack images into 32-row slabs.
    xs = jnp.pad(x3, ((0, 0), (2, 2), (2, 2))).reshape(Bp * 32, 32)

    names = ["u1", "u2", "s1e", "s1o", "s2e", "s2o",
             "v1", "v2", "v3", "rout", "bias"]
    weights = [packed[n] for n in names]

    def full(a):  # whole-array block, constant index -> fetched once
        return pl.BlockSpec(a.shape, lambda i, nd=a.ndim: (0,) * nd)

    out = pl.pallas_call(
        _lenet5_kernel,
        grid=(Bp // bt,),
        out_shape=jax.ShapeDtypeStruct((Bp, 128), jnp.float32),
        in_specs=[pl.BlockSpec((bt * 32, 32), lambda i: (i, 0))]
                 + [full(w) for w in weights],
        out_specs=pl.BlockSpec((bt, 128), lambda i: (i, 0)),
        compiler_params=pltpu.CompilerParams(
            dimension_semantics=("parallel",)),
    )(xs, *weights)
    return out[:B, :10]                               # lane-dense slab -> 10 logits


# ------------------------------- init & reference ------------------------------

def init_params(key):
    ks = jax.random.split(key, 10)

    def u(k, shape, fan_in):
        bound = 1.0 / jnp.sqrt(jnp.float32(fan_in))
        return jax.random.uniform(k, shape, jnp.float32, -bound, bound)

    return {
        "conv1_w": u(ks[0], (6, 1, 5, 5), 1 * 5 * 5),
        "conv1_b": u(ks[1], (6,), 1 * 5 * 5),
        "conv2_w": u(ks[2], (16, 6, 5, 5), 6 * 5 * 5),
        "conv2_b": u(ks[3], (16,), 6 * 5 * 5),
        "fc1_w": u(ks[4], (120, 400), 400),   # PyTorch Linear: (out, in)
        "fc1_b": u(ks[5], (120,), 400),
        "fc2_w": u(ks[6], (84, 120), 120),
        "fc2_b": u(ks[7], (84,), 120),
        "fc3_w": u(ks[8], (10, 84), 84),
        "fc3_b": u(ks[9], (10,), 84),
    }


def reference_forward(params, x):
    """Plain-JAX/XLA reference matching the PyTorch module semantics."""
    dn = ("NCHW", "OIHW", "NCHW")
    y = lax.conv_general_dilated(x, params["conv1_w"], (1, 1),
                                 ((2, 2), (2, 2)), dimension_numbers=dn)
    y = jax.nn.relu(y + params["conv1_b"][None, :, None, None])
    y = lax.reduce_window(y, -jnp.inf, lax.max, (1, 1, 2, 2), (1, 1, 2, 2), "VALID")
    y = lax.conv_general_dilated(y, params["conv2_w"], (1, 1), "VALID",
                                 dimension_numbers=dn)
    y = jax.nn.relu(y + params["conv2_b"][None, :, None, None])
    y = lax.reduce_window(y, -jnp.inf, lax.max, (1, 1, 2, 2), (1, 1, 2, 2), "VALID")
    y = y.reshape(y.shape[0], -1)
    y = jax.nn.relu(y @ params["fc1_w"].T + params["fc1_b"])
    y = jax.nn.relu(y @ params["fc2_w"].T + params["fc2_b"])
    return y @ params["fc3_w"].T + params["fc3_b"]


# ------------------------------------ main -------------------------------------

if __name__ == "__main__":
    key = jax.random.PRNGKey(0)
    pkey, xkey = jax.random.split(key)
    params = init_params(pkey)
    packed = pack_params(params)          # one-time offline packing

    # LeNet-5's FC sizes (16*5*5) pin the input to 28x28x1.  B=10 exercises both
    # batch padding (10 -> 16) and a 2-step grid (2 x BTILE images).
    x = jax.random.normal(xkey, (10, 1, 28, 28), jnp.float32)

    out = jax.jit(lenet5_forward)(packed, x)
    jax.block_until_ready(out)
    assert out.shape == (10, 10) and out.dtype == jnp.float32

    ref = reference_forward(params, x)
    err = float(jnp.max(jnp.abs(out - ref)))
    tol = 5e-2 * (1.0 + float(jnp.max(jnp.abs(ref))))
    assert err <= tol, f"kernel/reference mismatch: max abs err {err} (tol {tol})"

    print("KERNEL_OK")
</pallas_src>

<mosaic_0001>
module attributes {stable_mosaic.version = 11 : i64} {
  func.func @_lenet5_kernel(%arg0: i32, %arg1: memref<256x32xf32, #tpu.memory_space<vmem>>, %arg2: memref<5x32x168xf32, #tpu.memory_space<vmem>>, %arg3: memref<5x84x160xf32, #tpu.memory_space<vmem>>, %arg4: memref<168x84xf32, #tpu.memory_space<vmem>>, %arg5: memref<168x84xf32, #tpu.memory_space<vmem>>, %arg6: memref<160x80xf32, #tpu.memory_space<vmem>>, %arg7: memref<160x80xf32, #tpu.memory_space<vmem>>, %arg8: memref<5x80x128xf32, #tpu.memory_space<vmem>>, %arg9: memref<128x128xf32, #tpu.memory_space<vmem>>, %arg10: memref<128x128xf32, #tpu.memory_space<vmem>>, %arg11: memref<8x256xf32, #tpu.memory_space<vmem>>, %arg12: memref<8x168xf32, #tpu.memory_space<vmem>>, %arg13: memref<8x128xf32, #tpu.memory_space<vmem>>) attributes {dimension_semantics = [#tpu.dimension_semantics<parallel>], iteration_bounds = array<i64: 2>, scalar_prefetch = 0 : i64, scratch_operands = 0 : i64, tpu.core_type = #tpu.core_type<tc>, window_params = [{transform_indices = @transform_0, window_bounds = array<i64: 256, 32>}, {pipeline_mode = #tpu.pipeline_mode<synchronous>, transform_indices = @transform_1, window_bounds = array<i64: 5, 32, 168>}, {pipeline_mode = #tpu.pipeline_mode<synchronous>, transform_indices = @transform_2, window_bounds = array<i64: 5, 84, 160>}, {pipeline_mode = #tpu.pipeline_mode<synchronous>, transform_indices = @transform_3, window_bounds = array<i64: 168, 84>}, {pipeline_mode = #tpu.pipeline_mode<synchronous>, transform_indices = @transform_4, window_bounds = array<i64: 168, 84>}, {pipeline_mode = #tpu.pipeline_mode<synchronous>, transform_indices = @transform_5, window_bounds = array<i64: 160, 80>}, {pipeline_mode = #tpu.pipeline_mode<synchronous>, transform_indices = @transform_6, window_bounds = array<i64: 160, 80>}, {pipeline_mode = #tpu.pipeline_mode<synchronous>, transform_indices = @transform_7, window_bounds = array<i64: 5, 80, 128>}, {pipeline_mode = #tpu.pipeline_mode<synchronous>, transform_indices = @transform_8, window_bounds = array<i64: 128, 128>}, {pipeline_mode = #tpu.pipeline_mode<synchronous>, transform_indices = @transform_9, window_bounds = array<i64: 128, 128>}, {pipeline_mode = #tpu.pipeline_mode<synchronous>, transform_indices = @transform_10, window_bounds = array<i64: 8, 256>}, {pipeline_mode = #tpu.pipeline_mode<synchronous>, transform_indices = @transform_11, window_bounds = array<i64: 8, 168>}, {transform_indices = @transform_12, window_bounds = array<i64: 8, 128>}]} {
    %c0 = arith.constant 0 : index
    %c0_0 = arith.constant 0 : index
    %0 = vector.load %arg1[%c0, %c0_0] : memref<256x32xf32, #tpu.memory_space<vmem>>, vector<256x32xf32>
    %c0_1 = arith.constant 0 : index
    %c0_2 = arith.constant 0 : index
    %1 = vector.load %arg12[%c0_1, %c0_2] : memref<8x168xf32, #tpu.memory_space<vmem>>, vector<8x168xf32>
    %2 = vector.extract_strided_slice %1 {offsets = [0, 0], sizes = [1, 168], strides = [1, 1]} : vector<8x168xf32> to vector<1x168xf32>
    %3 = vector.extract_strided_slice %1 {offsets = [1, 0], sizes = [1, 160], strides = [1, 1]} : vector<8x168xf32> to vector<1x160xf32>
    %4 = vector.extract_strided_slice %1 {offsets = [2, 0], sizes = [1, 128], strides = [1, 1]} : vector<8x168xf32> to vector<1x128xf32>
    %5 = vector.extract_strided_slice %1 {offsets = [3, 0], sizes = [1, 128], strides = [1, 1]} : vector<8x168xf32> to vector<1x128xf32>
    %6 = vector.extract_strided_slice %1 {offsets = [4, 0], sizes = [1, 128], strides = [1, 1]} : vector<8x168xf32> to vector<1x128xf32>
    %c0_3 = arith.constant 0 : index
    %c0_4 = arith.constant 0 : index
    %c0_5 = arith.constant 0 : index
    %7 = vector.load %arg2[%c0_3, %c0_4, %c0_5] : memref<5x32x168xf32, #tpu.memory_space<vmem>>, vector<1x32x168xf32>
    %8 = vector.shape_cast %7 : vector<1x32x168xf32> to vector<32x168xf32>
    %cst = arith.constant dense<0.000000e+00> : vector<256x168xf32>
    %9 = tpu.matmul %0, %8, %cst {dimension_numbers = #tpu.dot_dimension_numbers<[1], [0], [0], [1], [0, 0, 1, 1], [], []>} : vector<256x32xf32>, vector<32x168xf32>, vector<256x168xf32> -> vector<256x168xf32>
    %c255_i32 = arith.constant 255 : i32
    %10 = tpu.dynamic_rotate %0 by %c255_i32 dim 0 : vector<256x32xf32>, i32 -> vector<256x32xf32>
    %c1 = arith.constant 1 : index
    %c0_6 = arith.constant 0 : index
    %c0_7 = arith.constant 0 : index
    %11 = vector.load %arg2[%c1, %c0_6, %c0_7] : memref<5x32x168xf32, #tpu.memory_space<vmem>>, vector<1x32x168xf32>
    %12 = vector.shape_cast %11 : vector<1x32x168xf32> to vector<32x168xf32>
    %cst_8 = arith.constant dense<0.000000e+00> : vector<256x168xf32>
    %13 = tpu.matmul %10, %12, %cst_8 {dimension_numbers = #tpu.dot_dimension_numbers<[1], [0], [0], [1], [0, 0, 1, 1], [], []>} : vector<256x32xf32>, vector<32x168xf32>, vector<256x168xf32> -> vector<256x168xf32>
    %14 = arith.addf %9, %13 : vector<256x168xf32>
    %c254_i32 = arith.constant 254 : i32
    %15 = tpu.dynamic_rotate %0 by %c254_i32 dim 0 : vector<256x32xf32>, i32 -> vector<256x32xf32>
    %c2 = arith.constant 2 : index
    %c0_9 = arith.constant 0 : index
    %c0_10 = arith.constant 0 : index
    %16 = vector.load %arg2[%c2, %c0_9, %c0_10] : memref<5x32x168xf32, #tpu.memory_space<vmem>>, vector<1x32x168xf32>
    %17 = vector.shape_cast %16 : vector<1x32x168xf32> to vector<32x168xf32>
    %cst_11 = arith.constant dense<0.000000e+00> : vector<256x168xf32>
    %18 = tpu.matmul %15, %17, %cst_11 {dimension_numbers = #tpu.dot_dimension_numbers<[1], [0], [0], [1], [0, 0, 1, 1], [], []>} : vector<256x32xf32>, vector<32x168xf32>, vector<256x168xf32> -> vector<256x168xf32>
    %19 = arith.addf %14, %18 : vector<256x168xf32>
    %c253_i32 = arith.constant 253 : i32
    %20 = tpu.dynamic_rotate %0 by %c253_i32 dim 0 : vector<256x32xf32>, i32 -> vector<256x32xf32>
    %c3 = arith.constant 3 : index
    %c0_12 = arith.constant 0 : index
    %c0_13 = arith.constant 0 : index
    %21 = vector.load %arg2[%c3, %c0_12, %c0_13] : memref<5x32x168xf32, #tpu.memory_space<vmem>>, vector<1x32x168xf32>
    %22 = vector.shape_cast %21 : vector<1x32x168xf32> to vector<32x168xf32>
    %cst_14 = arith.constant dense<0.000000e+00> : vector<256x168xf32>
    %23 = tpu.matmul %20, %22, %cst_14 {dimension_numbers = #tpu.dot_dimension_numbers<[1], [0], [0], [1], [0, 0, 1, 1], [], []>} : vector<256x32xf32>, vector<32x168xf32>, vector<256x168xf32> -> vector<256x168xf32>
    %24 = arith.addf %19, %23 : vector<256x168xf32>
    %c252_i32 = arith.constant 252 : i32
    %25 = tpu.dynamic_rotate %0 by %c252_i32 dim 0 : vector<256x32xf32>, i32 -> vector<256x32xf32>
    %c4 = arith.constant 4 : index
    %c0_15 = arith.constant 0 : index
    %c0_16 = arith.constant 0 : index
    %26 = vector.load %arg2[%c4, %c0_15, %c0_16] : memref<5x32x168xf32, #tpu.memory_space<vmem>>, vector<1x32x168xf32>
    %27 = vector.shape_cast %26 : vector<1x32x168xf32> to vector<32x168xf32>
    %cst_17 = arith.constant dense<0.000000e+00> : vector<256x168xf32>
    %28 = tpu.matmul %25, %27, %cst_17 {dimension_numbers = #tpu.dot_dimension_numbers<[1], [0], [0], [1], [0, 0, 1, 1], [], []>} : vector<256x32xf32>, vector<32x168xf32>, vector<256x168xf32> -> vector<256x168xf32>
    %29 = arith.addf %24, %28 : vector<256x168xf32>
    %30 = vector.broadcast %2 : vector<1x168xf32> to vector<256x168xf32>
    %31 = arith.addf %29, %30 : vector<256x168xf32>
    %cst_18 = arith.constant 0.000000e+00 : f32
    %32 = vector.broadcast %cst_18 : f32 to vector<256x168xf32>
    %33 = arith.maximumf %31, %32 : vector<256x168xf32>
    %c0_19 = arith.constant 0 : index
    %c0_20 = arith.constant 0 : index
    %34 = vector.load %arg4[%c0_19, %c0_20] : memref<168x84xf32, #tpu.memory_space<vmem>>, vector<168x84xf32>
    %cst_21 = arith.constant dense<0.000000e+00> : vector<256x84xf32>
    %35 = tpu.matmul %33, %34, %cst_21 {dimension_numbers = #tpu.dot_dimension_numbers<[1], [0], [0], [1], [0, 0, 1, 1], [], []>} : vector<256x168xf32>, vector<168x84xf32>, vector<256x84xf32> -> vector<256x84xf32>
    %c0_22 = arith.constant 0 : index
    %c0_23 = arith.constant 0 : index
    %36 = vector.load %arg5[%c0_22, %c0_23] : memref<168x84xf32, #tpu.memory_space<vmem>>, vector<168x84xf32>
    %cst_24 = arith.constant dense<0.000000e+00> : vector<256x84xf32>
    %37 = tpu.matmul %33, %36, %cst_24 {dimension_numbers = #tpu.dot_dimension_numbers<[1], [0], [0], [1], [0, 0, 1, 1], [], []>} : vector<256x168xf32>, vector<168x84xf32>, vector<256x84xf32> -> vector<256x84xf32>
    %38 = arith.maximumf %35, %37 : vector<256x84xf32>
    %c255_i32_25 = arith.constant 255 : i32
    %39 = tpu.dynamic_rotate %38 by %c255_i32_25 dim 0 : vector<256x84xf32>, i32 -> vector<256x84xf32>
    %40 = arith.maximumf %38, %39 : vector<256x84xf32>
    %c0_26 = arith.constant 0 : index
    %c0_27 = arith.constant 0 : index
    %c0_28 = arith.constant 0 : index
    %41 = vector.load %arg3[%c0_26, %c0_27, %c0_28] : memref<5x84x160xf32, #tpu.memory_space<vmem>>, vector<1x84x160xf32>
    %42 = vector.shape_cast %41 : vector<1x84x160xf32> to vector<84x160xf32>
    %cst_29 = arith.constant dense<0.000000e+00> : vector<256x160xf32>
    %43 = tpu.matmul %40, %42, %cst_29 {dimension_numbers = #tpu.dot_dimension_numbers<[1], [0], [0], [1], [0, 0, 1, 1], [], []>} : vector<256x84xf32>, vector<84x160xf32>, vector<256x160xf32> -> vector<256x160xf32>
    %c254_i32_30 = arith.constant 254 : i32
    %44 = tpu.dynamic_rotate %40 by %c254_i32_30 dim 0 : vector<256x84xf32>, i32 -> vector<256x84xf32>
    %c1_31 = arith.constant 1 : index
    %c0_32 = arith.constant 0 : index
    %c0_33 = arith.constant 0 : index
    %45 = vector.load %arg3[%c1_31, %c0_32, %c0_33] : memref<5x84x160xf32, #tpu.memory_space<vmem>>, vector<1x84x160xf32>
    %46 = vector.shape_cast %45 : vector<1x84x160xf32> to vector<84x160xf32>
    %cst_34 = arith.constant dense<0.000000e+00> : vector<256x160xf32>
    %47 = tpu.matmul %44, %46, %cst_34 {dimension_numbers = #tpu.dot_dimension_numbers<[1], [0], [0], [1], [0, 0, 1, 1], [], []>} : vector<256x84xf32>, vector<84x160xf32>, vector<256x160xf32> -> vector<256x160xf32>
    %48 = arith.addf %43, %47 : vector<256x160xf32>
    %c252_i32_35 = arith.constant 252 : i32
    %49 = tpu.dynamic_rotate %40 by %c252_i32_35 dim 0 : vector<256x84xf32>, i32 -> vector<256x84xf32>
    %c2_36 = arith.constant 2 : index
    %c0_37 = arith.constant 0 : index
    %c0_38 = arith.constant 0 : index
    %50 = vector.load %arg3[%c2_36, %c0_37, %c0_38] : memref<5x84x160xf32, #tpu.memory_space<vmem>>, vector<1x84x160xf32>
    %51 = vector.shape_cast %50 : vector<1x84x160xf32> to vector<84x160xf32>
    %cst_39 = arith.constant dense<0.000000e+00> : vector<256x160xf32>
    %52 = tpu.matmul %49, %51, %cst_39 {dimension_numbers = #tpu.dot_dimension_numbers<[1], [0], [0], [1], [0, 0, 1, 1], [], []>} : vector<256x84xf32>, vector<84x160xf32>, vector<256x160xf32> -> vector<256x160xf32>
    %53 = arith.addf %48, %52 : vector<256x160xf32>
    %c250_i32 = arith.constant 250 : i32
    %54 = tpu.dynamic_rotate %40 by %c250_i32 dim 0 : vector<256x84xf32>, i32 -> vector<256x84xf32>
    %c3_40 = arith.constant 3 : index
    %c0_41 = arith.constant 0 : index
    %c0_42 = arith.constant 0 : index
    %55 = vector.load %arg3[%c3_40, %c0_41, %c0_42] : memref<5x84x160xf32, #tpu.memory_space<vmem>>, vector<1x84x160xf32>
    %56 = vector.shape_cast %55 : vector<1x84x160xf32> to vector<84x160xf32>
    %cst_43 = arith.constant dense<0.000000e+00> : vector<256x160xf32>
    %57 = tpu.matmul %54, %56, %cst_43 {dimension_numbers = #tpu.dot_dimension_numbers<[1], [0], [0], [1], [0, 0, 1, 1], [], []>} : vector<256x84xf32>, vector<84x160xf32>, vector<256x160xf32> -> vector<256x160xf32>
    %58 = arith.addf %53, %57 : vector<256x160xf32>
    %c248_i32 = arith.constant 248 : i32
    %59 = tpu.dynamic_rotate %40 by %c248_i32 dim 0 : vector<256x84xf32>, i32 -> vector<256x84xf32>
    %c4_44 = arith.constant 4 : index
    %c0_45 = arith.constant 0 : index
    %c0_46 = arith.constant 0 : index
    %60 = vector.load %arg3[%c4_44, %c0_45, %c0_46] : memref<5x84x160xf32, #tpu.memory_space<vmem>>, vector<1x84x160xf32>
    %61 = vector.shape_cast %60 : vector<1x84x160xf32> to vector<84x160xf32>
    %cst_47 = arith.constant dense<0.000000e+00> : vector<256x160xf32>
    %62 = tpu.matmul %59, %61, %cst_47 {dimension_numbers = #tpu.dot_dimension_numbers<[1], [0], [0], [1], [0, 0, 1, 1], [], []>} : vector<256x84xf32>, vector<84x160xf32>, vector<256x160xf32> -> vector<256x160xf32>
    %63 = arith.addf %58, %62 : vector<256x160xf32>
    %64 = vector.broadcast %3 : vector<1x160xf32> to vector<256x160xf32>
    %65 = arith.addf %63, %64 : vector<256x160xf32>
    %cst_48 = arith.constant 0.000000e+00 : f32
    %66 = vector.broadcast %cst_48 : f32 to vector<256x160xf32>
    %67 = arith.maximumf %65, %66 : vector<256x160xf32>
    %c0_49 = arith.constant 0 : index
    %c0_50 = arith.constant 0 : index
    %68 = vector.load %arg6[%c0_49, %c0_50] : memref<160x80xf32, #tpu.memory_space<vmem>>, vector<160x80xf32>
    %cst_51 = arith.constant dense<0.000000e+00> : vector<256x80xf32>
    %69 = tpu.matmul %67, %68, %cst_51 {dimension_numbers = #tpu.dot_dimension_numbers<[1], [0], [0], [1], [0, 0, 1, 1], [], []>} : vector<256x160xf32>, vector<160x80xf32>, vector<256x80xf32> -> vector<256x80xf32>
    %c0_52 = arith.constant 0 : index
    %c0_53 = arith.constant 0 : index
    %70 = vector.load %arg7[%c0_52, %c0_53] : memref<160x80xf32, #tpu.memory_space<vmem>>, vector<160x80xf32>
    %cst_54 = arith.constant dense<0.000000e+00> : vector<256x80xf32>
    %71 = tpu.matmul %67, %70, %cst_54 {dimension_numbers = #tpu.dot_dimension_numbers<[1], [0], [0], [1], [0, 0, 1, 1], [], []>} : vector<256x160xf32>, vector<160x80xf32>, vector<256x80xf32> -> vector<256x80xf32>
    %72 = arith.maximumf %69, %71 : vector<256x80xf32>
    %c254_i32_55 = arith.constant 254 : i32
    %73 = tpu.dynamic_rotate %72 by %c254_i32_55 dim 0 : vector<256x80xf32>, i32 -> vector<256x80xf32>
    %74 = arith.maximumf %72, %73 : vector<256x80xf32>
    %c0_56 = arith.constant 0 : index
    %c0_57 = arith.constant 0 : index
    %c0_58 = arith.constant 0 : index
    %75 = vector.load %arg8[%c0_56, %c0_57, %c0_58] : memref<5x80x128xf32, #tpu.memory_space<vmem>>, vector<1x80x128xf32>
    %76 = vector.shape_cast %75 : vector<1x80x128xf32> to vector<80x128xf32>
    %cst_59 = arith.constant dense<0.000000e+00> : vector<256x128xf32>
    %77 = tpu.matmul %74, %76, %cst_59 {dimension_numbers = #tpu.dot_dimension_numbers<[1], [0], [0], [1], [0, 0, 1, 1], [], []>} : vector<256x80xf32>, vector<80x128xf32>, vector<256x128xf32> -> vector<256x128xf32>
    %c252_i32_60 = arith.constant 252 : i32
    %78 = tpu.dynamic_rotate %74 by %c252_i32_60 dim 0 : vector<256x80xf32>, i32 -> vector<256x80xf32>
    %c1_61 = arith.constant 1 : index
    %c0_62 = arith.constant 0 : index
    %c0_63 = arith.constant 0 : index
    %79 = vector.load %arg8[%c1_61, %c0_62, %c0_63] : memref<5x80x128xf32, #tpu.memory_space<vmem>>, vector<1x80x128xf32>
    %80 = vector.shape_cast %79 : vector<1x80x128xf32> to vector<80x128xf32>
    %cst_64 = arith.constant dense<0.000000e+00> : vector<256x128xf32>
    %81 = tpu.matmul %78, %80, %cst_64 {dimension_numbers = #tpu.dot_dimension_numbers<[1], [0], [0], [1], [0, 0, 1, 1], [], []>} : vector<256x80xf32>, vector<80x128xf32>, vector<256x128xf32> -> vector<256x128xf32>
    %82 = arith.addf %77, %81 : vector<256x128xf32>
    %c248_i32_65 = arith.constant 248 : i32
    %83 = tpu.dynamic_rotate %74 by %c248_i32_65 dim 0 : vector<256x80xf32>, i32 -> vector<256x80xf32>
    %c2_66 = arith.constant 2 : index
    %c0_67 = arith.constant 0 : index
    %c0_68 = arith.constant 0 : index
    %84 = vector.load %arg8[%c2_66, %c0_67, %c0_68] : memref<5x80x128xf32, #tpu.memory_space<vmem>>, vector<1x80x128xf32>
    %85 = vector.shape_cast %84 : vector<1x80x128xf32> to vector<80x128xf32>
    %cst_69 = arith.constant dense<0.000000e+00> : vector<256x128xf32>
    %86 = tpu.matmul %83, %85, %cst_69 {dimension_numbers = #tpu.dot_dimension_numbers<[1], [0], [0], [1], [0, 0, 1, 1], [], []>} : vector<256x80xf32>, vector<80x128xf32>, vector<256x128xf32> -> vector<256x128xf32>
    %87 = arith.addf %82, %86 : vector<256x128xf32>
    %c244_i32 = arith.constant 244 : i32
    %88 = tpu.dynamic_rotate %74 by %c244_i32 dim 0 : vector<256x80xf32>, i32 -> vector<256x80xf32>
    %c3_70 = arith.constant 3 : index
    %c0_71 = arith.constant 0 : index
    %c0_72 = arith.constant 0 : index
    %89 = vector.load %arg8[%c3_70, %c0_71, %c0_72] : memref<5x80x128xf32, #tpu.memory_space<vmem>>, vector<1x80x128xf32>
    %90 = vector.shape_cast %89 : vector<1x80x128xf32> to vector<80x128xf32>
    %cst_73 = arith.constant dense<0.000000e+00> : vector<256x128xf32>
    %91 = tpu.matmul %88, %90, %cst_73 {dimension_numbers = #tpu.dot_dimension_numbers<[1], [0], [0], [1], [0, 0, 1, 1], [], []>} : vector<256x80xf32>, vector<80x128xf32>, vector<256x128xf32> -> vector<256x128xf32>
    %92 = arith.addf %87, %91 : vector<256x128xf32>
    %c240_i32 = arith.constant 240 : i32
    %93 = tpu.dynamic_rotate %74 by %c240_i32 dim 0 : vector<256x80xf32>, i32 -> vector<256x80xf32>
    %c4_74 = arith.constant 4 : index
    %c0_75 = arith.constant 0 : index
    %c0_76 = arith.constant 0 : index
    %94 = vector.load %arg8[%c4_74, %c0_75, %c0_76] : memref<5x80x128xf32, #tpu.memory_space<vmem>>, vector<1x80x128xf32>
    %95 = vector.shape_cast %94 : vector<1x80x128xf32> to vector<80x128xf32>
    %cst_77 = arith.constant dense<0.000000e+00> : vector<256x128xf32>
    %96 = tpu.matmul %93, %95, %cst_77 {dimension_numbers = #tpu.dot_dimension_numbers<[1], [0], [0], [1], [0, 0, 1, 1], [], []>} : vector<256x80xf32>, vector<80x128xf32>, vector<256x128xf32> -> vector<256x128xf32>
    %97 = arith.addf %92, %96 : vector<256x128xf32>
    %c0_78 = arith.constant 0 : index
    %c0_79 = arith.constant 0 : index
    %98 = vector.load %arg11[%c0_78, %c0_79] : memref<8x256xf32, #tpu.memory_space<vmem>>, vector<8x256xf32>
    %cst_80 = arith.constant dense<0.000000e+00> : vector<8x128xf32>
    %99 = tpu.matmul %98, %97, %cst_80 {dimension_numbers = #tpu.dot_dimension_numbers<[1], [0], [0], [1], [0, 0, 1, 1], [], []>} : vector<8x256xf32>, vector<256x128xf32>, vector<8x128xf32> -> vector<8x128xf32>
    %100 = vector.broadcast %4 : vector<1x128xf32> to vector<8x128xf32>
    %101 = arith.addf %99, %100 : vector<8x128xf32>
    %cst_81 = arith.constant 0.000000e+00 : f32
    %102 = vector.broadcast %cst_81 : f32 to vector<8x128xf32>
    %103 = arith.maximumf %101, %102 : vector<8x128xf32>
    %c0_82 = arith.constant 0 : index
    %c0_83 = arith.constant 0 : index
    %104 = vector.load %arg9[%c0_82, %c0_83] : memref<128x128xf32, #tpu.memory_space<vmem>>, vector<128x128xf32>
    %cst_84 = arith.constant dense<0.000000e+00> : vector<8x128xf32>
    %105 = tpu.matmul %103, %104, %cst_84 {dimension_numbers = #tpu.dot_dimension_numbers<[1], [0], [0], [1], [0, 0, 1, 1], [], []>} : vector<8x128xf32>, vector<128x128xf32>, vector<8x128xf32> -> vector<8x128xf32>
    %106 = vector.broadcast %5 : vector<1x128xf32> to vector<8x128xf32>
    %107 = arith.addf %105, %106 : vector<8x128xf32>
    %cst_85 = arith.constant 0.000000e+00 : f32
    %108 = vector.broadcast %cst_85 : f32 to vector<8x128xf32>
    %109 = arith.maximumf %107, %108 : vector<8x128xf32>
    %c0_86 = arith.constant 0 : index
    %c0_87 = arith.constant 0 : index
    %110 = vector.load %arg10[%c0_86, %c0_87] : memref<128x128xf32, #tpu.memory_space<vmem>>, vector<128x128xf32>
    %cst_88 = arith.constant dense<0.000000e+00> : vector<8x128xf32>
    %111 = tpu.matmul %109, %110, %cst_88 {dimension_numbers = #tpu.dot_dimension_numbers<[1], [0], [0], [1], [0, 0, 1, 1], [], []>} : vector<8x128xf32>, vector<128x128xf32>, vector<8x128xf32> -> vector<8x128xf32>
    %112 = vector.broadcast %6 : vector<1x128xf32> to vector<8x128xf32>
    %113 = arith.addf %111, %112 : vector<8x128xf32>
    %c0_89 = arith.constant 0 : index
    %c0_90 = arith.constant 0 : index
    %114 = vector.load %arg13[%c0_89, %c0_90] : memref<8x128xf32, #tpu.memory_space<vmem>>, vector<8x128xf32>
    tpu.vector_store %arg13[%c0_89, %c0_90], %113 {strides = array<i32>} : memref<8x128xf32, #tpu.memory_space<vmem>>, vector<8x128xf32>,
    return
  }
  func.func @transform_0(%arg0: i32) -> (i32, i32) {
    %c0_i32 = arith.constant 0 : i32
    %c0_i32_0 = arith.constant 0 : i32
    return %arg0, %c0_i32 : i32, i32
  }
  func.func @transform_1(%arg0: i32) -> (i32, i32, i32) {
    %c0_i32 = arith.constant 0 : i32
    %c0_i32_0 = arith.constant 0 : i32
    %c0_i32_1 = arith.constant 0 : i32
    %c0_i32_2 = arith.constant 0 : i32
    return %c0_i32, %c0_i32_0, %c0_i32_1 : i32, i32, i32
  }
  func.func @transform_2(%arg0: i32) -> (i32, i32, i32) {
    %c0_i32 = arith.constant 0 : i32
    %c0_i32_0 = arith.constant 0 : i32
    %c0_i32_1 = arith.constant 0 : i32
    %c0_i32_2 = arith.constant 0 : i32
    return %c0_i32, %c0_i32_0, %c0_i32_1 : i32, i32, i32
  }
  func.func @transform_3(%arg0: i32) -> (i32, i32) {
    %c0_i32 = arith.constant 0 : i32
    %c0_i32_0 = arith.constant 0 : i32
    %c0_i32_1 = arith.constant 0 : i32
    return %c0_i32, %c0_i32_0 : i32, i32
  }
  func.func @transform_4(%arg0: i32) -> (i32, i32) {
    %c0_i32 = arith.constant 0 : i32
    %c0_i32_0 = arith.constant 0 : i32
    %c0_i32_1 = arith.constant 0 : i32
    return %c0_i32, %c0_i32_0 : i32, i32
  }
  func.func @transform_5(%arg0: i32) -> (i32, i32) {
    %c0_i32 = arith.constant 0 : i32
    %c0_i32_0 = arith.constant 0 : i32
    %c0_i32_1 = arith.constant 0 : i32
    return %c0_i32, %c0_i32_0 : i32, i32
  }
  func.func @transform_6(%arg0: i32) -> (i32, i32) {
    %c0_i32 = arith.constant 0 : i32
    %c0_i32_0 = arith.constant 0 : i32
    %c0_i32_1 = arith.constant 0 : i32
    return %c0_i32, %c0_i32_0 : i32, i32
  }
  func.func @transform_7(%arg0: i32) -> (i32, i32, i32) {
    %c0_i32 = arith.constant 0 : i32
    %c0_i32_0 = arith.constant 0 : i32
    %c0_i32_1 = arith.constant 0 : i32
    %c0_i32_2 = arith.constant 0 : i32
    return %c0_i32, %c0_i32_0, %c0_i32_1 : i32, i32, i32
  }
  func.func @transform_8(%arg0: i32) -> (i32, i32) {
    %c0_i32 = arith.constant 0 : i32
    %c0_i32_0 = arith.constant 0 : i32
    %c0_i32_1 = arith.constant 0 : i32
    return %c0_i32, %c0_i32_0 : i32, i32
  }
  func.func @transform_9(%arg0: i32) -> (i32, i32) {
    %c0_i32 = arith.constant 0 : i32
    %c0_i32_0 = arith.constant 0 : i32
    %c0_i32_1 = arith.constant 0 : i32
    return %c0_i32, %c0_i32_0 : i32, i32
  }
  func.func @transform_10(%arg0: i32) -> (i32, i32) {
    %c0_i32 = arith.constant 0 : i32
    %c0_i32_0 = arith.constant 0 : i32
    %c0_i32_1 = arith.constant 0 : i32
    return %c0_i32, %c0_i32_0 : i32, i32
  }
  func.func @transform_11(%arg0: i32) -> (i32, i32) {
    %c0_i32 = arith.constant 0 : i32
    %c0_i32_0 = arith.constant 0 : i32
    %c0_i32_1 = arith.constant 0 : i32
    return %c0_i32, %c0_i32_0 : i32, i32
  }
  func.func @transform_12(%arg0: i32) -> (i32, i32) {
    %c0_i32 = arith.constant 0 : i32
    %c0_i32_0 = arith.constant 0 : i32
    return %arg0, %c0_i32 : i32, i32
  }
}

</mosaic_0001>

<llo_original>
// kernel: lenet5_forward.1
$region0: #{lenet5_forward.1}
  #allocation0 [shape = 'u32[]', space=smem, size = 0x4, offset = 0x4, fixed_abs, tag = 'smem constant byte address 0x4 - core index']
  #allocation1 [shape = 'u32[144,128]{1,0:T(1,128)}', space=vmem, size = 0x12000, scoped, tag = 'internal scratch']
  %s0 = inlined_call_operand.vmem [shape: f32[512,32], index: 0, kind: input, shape index: {}]
  %s1 = inlined_call_operand.vmem [shape: f32[5,32,168], index: 1, kind: input, shape index: {}]
  %s2 = inlined_call_operand.vmem [shape: f32[5,84,160], index: 2, kind: input, shape index: {}]
  %s3 = inlined_call_operand.vmem [shape: f32[168,84], index: 3, kind: input, shape index: {}]
  %s4 = inlined_call_operand.vmem [shape: f32[168,84], index: 4, kind: input, shape index: {}]
  %s5 = inlined_call_operand.vmem [shape: f32[160,80], index: 5, kind: input, shape index: {}]
  %s6 = inlined_call_operand.vmem [shape: f32[160,80], index: 6, kind: input, shape index: {}]
  %s7 = inlined_call_operand.vmem [shape: f32[5,80,128], index: 7, kind: input, shape index: {}]
  %s8 = inlined_call_operand.vmem [shape: f32[128,128], index: 8, kind: input, shape index: {}]
  %s9 = inlined_call_operand.vmem [shape: f32[128,128], index: 9, kind: input, shape index: {}]
  %s10 = inlined_call_operand.vmem [shape: f32[8,256], index: 10, kind: input, shape index: {}]
  %s11 = inlined_call_operand.vmem [shape: f32[8,168], index: 11, kind: input, shape index: {}]
  %s12 = inlined_call_operand.hbm [shape: f32[16,128], index: 12, kind: output, shape index: {}]
  %s13 = sld [smem:[#allocation0]]
  $region81: #{lenet5_forward.1} parent=0
    _
  %s15 = ssub.s32 1, %s13
  %s16 = scalar_select 0, %s15, %s13
  $region1: #{lenet5_forward.1} parent=0
    #allocation2 [shape = 'u8[8192]{0}', space=vmem, size = 0x2000, scoped, tag = 'output window, operand 0']
    #allocation3 [shape = 's32[2]{0}', space=sflag, size = 0x8, scoped, tag = 'scoped memory for lenet5_forward.1']
    %17 = vsyncpa [#allocation3], 0
    %s18 = scalar_lea.sflag [#allocation3], 1
    %19 = vsyncpa %s18, 0
    loop: start=0, step=1, limit=4
    $region2: #{lenet5_forward.1} parent=1 // loop_pre_header
      _
    $region3: #{lenet5_forward.1} parent=1 // loop_header
      %s21 = sphi 0, %s25
      %p22 = scmp.ge.s32.totalorder %s21, 4
      %s31 = sphi 0, %s33
      %s34 = sphi 0, %s31
      %s35 = sphi 0, %s34
      %s51 = sphi 0, %s35
      %s55 = sphi 0, %s55
      %s57 = sphi 0, %s55
      %s58 = sphi 0, %s57
      %s72 = sphi 0, %s58
      %s76 = sphi 0, %s76
      %s78 = sphi 0, %s76
      %s79 = sphi 0, %s78
      %s93 = sphi 0, %s79
      %s97 = sphi 0, %s97
      %s99 = sphi 0, %s97
      %s100 = sphi 0, %s99
      %s114 = sphi 0, %s100
      %s118 = sphi 0, %s118
      %s120 = sphi 0, %s118
      %s121 = sphi 0, %s120
      %s135 = sphi 0, %s121
      %s139 = sphi 0, %s139
      %s141 = sphi 0, %s139
      %s142 = sphi 0, %s141
      %s156 = sphi 0, %s142
      %s160 = sphi 0, %s160
      %s162 = sphi 0, %s160
      %s163 = sphi 0, %s162
      %s177 = sphi 0, %s163
      %s181 = sphi 0, %s181
      %s183 = sphi 0, %s181
      %s184 = sphi 0, %s183
      %s198 = sphi 0, %s184
      %s202 = sphi 0, %s202
      %s204 = sphi 0, %s202
      %s205 = sphi 0, %s204
      %s219 = sphi 0, %s205
      %s223 = sphi 0, %s223
      %s225 = sphi 0, %s223
      %s226 = sphi 0, %s225
      %s240 = sphi 0, %s226
      %s244 = sphi 0, %s244
      %s246 = sphi 0, %s244
      %s247 = sphi 0, %s246
      %s261 = sphi 0, %s247
      %s265 = sphi 0, %s265
      %s267 = sphi 0, %s265
      %s268 = sphi 0, %s267
      %s282 = sphi 0, %s268
      %s288 = sphi 0, %s290
      %s291 = sphi 0, %s288
      %s292 = sphi 0, %s291
      %s308 = sphi 0, %s292
    $region4: #{lenet5_forward.1} parent=1 // loop_header_branch
      %24 = sbr.rel (%p22) target = $region8
    $region5: #{lenet5_forward.1} parent=1 // loop_body
      %s26 = ssub.s32 %s21, 1
      %s27 = ssub.s32 %s21, 2
      %s28 = sadd.s32 %s21, 1
      %s29 = ssub.s32 %s21, %s28
      %p30 = scmp.eq.s32.totalorder %s29, 0
      %s32 = sadd.s32 %s31, 1
      %s33 = scalar_select %p30, %s31, %s32
      %p36 = pneg %p30
      %p37 = scmp.eq.s32.totalorder %s21, 1
      %p38 = por %p36, %p37
      %p39 = scmp.ne.s32.totalorder %s31, %s34
      %p40 = scmp.eq.s32.totalorder %s21, 0
      %p41 = por %p39, %p40
      %p42 = scmp.ne.s32.totalorder %s31, %s34
      %p43 = scmp.eq.s32.totalorder %s26, 1
      %p44 = por %p42, %p43
      %p45 = scmp.ne.s32.totalorder %s34, %s35
      %p46 = scmp.eq.s32.totalorder %s26, 0
      %p47 = por %p45, %p46
      %p48 = scmp.ne.s32.totalorder %s34, %s35
      %p49 = scmp.eq.s32.totalorder %s27, 1
      %p50 = por %p48, %p49
      %p52 = scmp.ne.s32.totalorder %s35, %s51
      %p53 = scmp.eq.s32.totalorder %s27, 0
      %p54 = por %p52, %p53
      %s56 = sadd.s32 %s55, 1
      %p59 = scmp.eq.s32.totalorder %s21, 1
      %p60 = scmp.ne.s32.totalorder %s55, %s57
      %p61 = scmp.eq.s32.totalorder %s21, 0
      %p62 = por %p60, %p61
      %p63 = scmp.ne.s32.totalorder %s55, %s57
      %p64 = scmp.eq.s32.totalorder %s26, 1
      %p65 = por %p63, %p64
      %p66 = scmp.ne.s32.totalorder %s57, %s58
      %p67 = scmp.eq.s32.totalorder %s26, 0
      %p68 = por %p66, %p67
      %p69 = scmp.ne.s32.totalorder %s57, %s58
      %p70 = scmp.eq.s32.totalorder %s27, 1
      %p71 = por %p69, %p70
      %p73 = scmp.ne.s32.totalorder %s58, %s72
      %p74 = scmp.eq.s32.totalorder %s27, 0
      %p75 = por %p73, %p74
      %s77 = sadd.s32 %s76, 1
      %p80 = scmp.eq.s32.totalorder %s21, 1
      %p81 = scmp.ne.s32.totalorder %s76, %s78
      %p82 = scmp.eq.s32.totalorder %s21, 0
      %p83 = por %p81, %p82
      %p84 = scmp.ne.s32.totalorder %s76, %s78
      %p85 = scmp.eq.s32.totalorder %s26, 1
      %p86 = por %p84, %p85
      %p87 = scmp.ne.s32.totalorder %s78, %s79
      %p88 = scmp.eq.s32.totalorder %s26, 0
      %p89 = por %p87, %p88
      %p90 = scmp.ne.s32.totalorder %s78, %s79
      %p91 = scmp.eq.s32.totalorder %s27, 1
      %p92 = por %p90, %p91
      %p94 = scmp.ne.s32.totalorder %s79, %s93
      %p95 = scmp.eq.s32.totalorder %s27, 0
      %p96 = por %p94, %p95
      %s98 = sadd.s32 %s97, 1
      %p101 = scmp.eq.s32.totalorder %s21, 1
      %p102 = scmp.ne.s32.totalorder %s97, %s99
      %p103 = scmp.eq.s32.totalorder %s21, 0
      %p104 = por %p102, %p103
      %p105 = scmp.ne.s32.totalorder %s97, %s99
      %p106 = scmp.eq.s32.totalorder %s26, 1
      %p107 = por %p105, %p106
      %p108 = scmp.ne.s32.totalorder %s99, %s100
      %p109 = scmp.eq.s32.totalorder %s26, 0
      %p110 = por %p108, %p109
      %p111 = scmp.ne.s32.totalorder %s99, %s100
      %p112 = scmp.eq.s32.totalorder %s27, 1
      %p113 = por %p111, %p112
      %p115 = scmp.ne.s32.totalorder %s100, %s114
      %p116 = scmp.eq.s32.totalorder %s27, 0
      %p117 = por %p115, %p116
      %s119 = sadd.s32 %s118, 1
      %p122 = scmp.eq.s32.totalorder %s21, 1
      %p123 = scmp.ne.s32.totalorder %s118, %s120
      %p124 = scmp.eq.s32.totalorder %s21, 0
      %p125 = por %p123, %p124
      %p126 = scmp.ne.s32.totalorder %s118, %s120
      %p127 = scmp.eq.s32.totalorder %s26, 1
      %p128 = por %p126, %p127
      %p129 = scmp.ne.s32.totalorder %s120, %s121
      %p130 = scmp.eq.s32.totalorder %s26, 0
      %p131 = por %p129, %p130
      %p132 = scmp.ne.s32.totalorder %s120, %s121
      %p133 = scmp.eq.s32.totalorder %s27, 1
      %p134 = por %p132, %p133
      %p136 = scmp.ne.s32.totalorder %s121, %s135
      %p137 = scmp.eq.s32.totalorder %s27, 0
      %p138 = por %p136, %p137
      %s140 = sadd.s32 %s139, 1
      %p143 = scmp.eq.s32.totalorder %s21, 1
      %p144 = scmp.ne.s32.totalorder %s139, %s141
      %p145 = scmp.eq.s32.totalorder %s21, 0
      %p146 = por %p144, %p145
      %p147 = scmp.ne.s32.totalorder %s139, %s141
      %p148 = scmp.eq.s32.totalorder %s26, 1
      %p149 = por %p147, %p148
      %p150 = scmp.ne.s32.totalorder %s141, %s142
      %p151 = scmp.eq.s32.totalorder %s26, 0
      %p152 = por %p150, %p151
      %p153 = scmp.ne.s32.totalorder %s141, %s142
      %p154 = scmp.eq.s32.totalorder %s27, 1
      %p155 = por %p153, %p154
      %p157 = scmp.ne.s32.totalorder %s142, %s156
      %p158 = scmp.eq.s32.totalorder %s27, 0
      %p159 = por %p157, %p158
      %s161 = sadd.s32 %s160, 1
      %p164 = scmp.eq.s32.totalorder %s21, 1
      %p165 = scmp.ne.s32.totalorder %s160, %s162
      %p166 = scmp.eq.s32.totalorder %s21, 0
      %p167 = por %p165, %p166
      %p168 = scmp.ne.s32.totalorder %s160, %s162
      %p169 = scmp.eq.s32.totalorder %s26, 1
      %p170 = por %p168, %p169
      %p171 = scmp.ne.s32.totalorder %s162, %s163
      %p172 = scmp.eq.s32.totalorder %s26, 0
      %p173 = por %p171, %p172
      %p174 = scmp.ne.s32.totalorder %s162, %s163
      %p175 = scmp.eq.s32.totalorder %s27, 1
      %p176 = por %p174, %p175
      %p178 = scmp.ne.s32.totalorder %s163, %s177
      %p179 = scmp.eq.s32.totalorder %s27, 0
      %p180 = por %p178, %p179
      %s182 = sadd.s32 %s181, 1
      %p185 = scmp.eq.s32.totalorder %s21, 1
      %p186 = scmp.ne.s32.totalorder %s181, %s183
      %p187 = scmp.eq.s32.totalorder %s21, 0
      %p188 = por %p186, %p187
      %p189 = scmp.ne.s32.totalorder %s181, %s183
      %p190 = scmp.eq.s32.totalorder %s26, 1
      %p191 = por %p189, %p190
      %p192 = scmp.ne.s32.totalorder %s183, %s184
      %p193 = scmp.eq.s32.totalorder %s26, 0
      %p194 = por %p192, %p193
      %p195 = scmp.ne.s32.totalorder %s183, %s184
      %p196 = scmp.eq.s32.totalorder %s27, 1
      %p197 = por %p195, %p196
      %p199 = scmp.ne.s32.totalorder %s184, %s198
      %p200 = scmp.eq.s32.totalorder %s27, 0
      %p201 = por %p199, %p200
      %s203 = sadd.s32 %s202, 1
      %p206 = scmp.eq.s32.totalorder %s21, 1
      %p207 = scmp.ne.s32.totalorder %s202, %s204
      %p208 = scmp.eq.s32.totalorder %s21, 0
      %p209 = por %p207, %p208
      %p210 = scmp.ne.s32.totalorder %s202, %s204
      %p211 = scmp.eq.s32.totalorder %s26, 1
      %p212 = por %p210, %p211
      %p213 = scmp.ne.s32.totalorder %s204, %s205
      %p214 = scmp.eq.s32.totalorder %s26, 0
      %p215 = por %p213, %p214
      %p216 = scmp.ne.s32.totalorder %s204, %s205
      %p217 = scmp.eq.s32.totalorder %s27, 1
      %p218 = por %p216, %p217
      %p220 = scmp.ne.s32.totalorder %s205, %s219
      %p221 = scmp.eq.s32.totalorder %s27, 0
      %p222 = por %p220, %p221
      %s224 = sadd.s32 %s223, 1
      %p227 = scmp.eq.s32.totalorder %s21, 1
      %p228 = scmp.ne.s32.totalorder %s223, %s225
      %p229 = scmp.eq.s32.totalorder %s21, 0
      %p230 = por %p228, %p229
      %p231 = scmp.ne.s32.totalorder %s223, %s225
      %p232 = scmp.eq.s32.totalorder %s26, 1
      %p233 = por %p231, %p232
      %p234 = scmp.ne.s32.totalorder %s225, %s226
      %p235 = scmp.eq.s32.totalorder %s26, 0
      %p236 = por %p234, %p235
      %p237 = scmp.ne.s32.totalorder %s225, %s226
      %p238 = scmp.eq.s32.totalorder %s27, 1
      %p239 = por %p237, %p238
      %p241 = scmp.ne.s32.totalorder %s226, %s240
      %p242 = scmp.eq.s32.totalorder %s27, 0
      %p243 = por %p241, %p242
      %s245 = sadd.s32 %s244, 1
      %p248 = scmp.eq.s32.totalorder %s21, 1
      %p249 = scmp.ne.s32.totalorder %s244, %s246
      %p250 = scmp.eq.s32.totalorder %s21, 0
      %p251 = por %p249, %p250
      %p252 = scmp.ne.s32.totalorder %s244, %s246
      %p253 = scmp.eq.s32.totalorder %s26, 1
      %p254 = por %p252, %p253
      %p255 = scmp.ne.s32.totalorder %s246, %s247
      %p256 = scmp.eq.s32.totalorder %s26, 0
      %p257 = por %p255, %p256
      %p258 = scmp.ne.s32.totalorder %s246, %s247
      %p259 = scmp.eq.s32.totalorder %s27, 1
      %p260 = por %p258, %p259
      %p262 = scmp.ne.s32.totalorder %s247, %s261
      %p263 = scmp.eq.s32.totalorder %s27, 0
      %p264 = por %p262, %p263
      %s266 = sadd.s32 %s265, 1
      %p269 = scmp.eq.s32.totalorder %s21, 1
      %p270 = scmp.ne.s32.totalorder %s265, %s267
      %p271 = scmp.eq.s32.totalorder %s21, 0
      %p272 = por %p270, %p271
      %p273 = scmp.ne.s32.totalorder %s265, %s267
      %p274 = scmp.eq.s32.totalorder %s26, 1
      %p275 = por %p273, %p274
      %p276 = scmp.ne.s32.totalorder %s267, %s268
      %p277 = scmp.eq.s32.totalorder %s26, 0
      %p278 = por %p276, %p277
      %p279 = scmp.ne.s32.totalorder %s267, %s268
      %p280 = scmp.eq.s32.totalorder %s27, 1
      %p281 = por %p279, %p280
      %p283 = scmp.ne.s32.totalorder %s268, %s282
      %p284 = scmp.eq.s32.totalorder %s27, 0
      %p285 = por %p283, %p284
      %s286 = ssub.s32 %s21, %s28
      %p287 = scmp.eq.s32.totalorder %s286, 0
      %s289 = sadd.s32 %s288, 1
      %s290 = scalar_select %p287, %s288, %s289
      %p293 = pneg %p287
      %p294 = scmp.eq.s32.totalorder %s21, 1
      %p295 = por %p293, %p294
      %p296 = scmp.ne.s32.totalorder %s288, %s291
      %p297 = scmp.eq.s32.totalorder %s21, 0
      %p298 = por %p296, %p297
      %p299 = scmp.ne.s32.totalorder %s288, %s291
      %p300 = scmp.eq.s32.totalorder %s26, 1
      %p301 = por %p299, %p300
      %p302 = scmp.ne.s32.totalorder %s291, %s292
      %p303 = scmp.eq.s32.totalorder %s26, 0
      %p304 = por %p302, %p303
      %p305 = scmp.ne.s32.totalorder %s291, %s292
      %p306 = scmp.eq.s32.totalorder %s27, 1
      %p307 = por %p305, %p306
      %p309 = scmp.ne.s32.totalorder %s292, %s308
      %p310 = scmp.eq.s32.totalorder %s27, 0
      %p311 = por %p309, %p310
      %p312 = scmp.le.s32.totalorder 1, %s21
      %p313 = scmp.lt.s32.totalorder %s21, 3
      %p314 = pnand %p312, %p313
      %p315 = pneg %p314
      // Predicated region
      $region9: #{lenet5_forward.1} parent=5 // pred_check
        _
      $region10: #{lenet5_forward.1} parent=5 // pred_check_branch
        %317 = sbr.rel (%p314) target = $region12
      $region11: #{lenet5_forward.1} parent=5 // pred_region
        %s318 = ssub.s32 %s21, 1
        // Predicated region
        $region13: #{lenet5_forward.1} parent=11 // pred_check
          %p319 = pneg %p68
        $region14: #{lenet5_forward.1} parent=11 // pred_check_branch
          %321 = sbr.rel (%p319) target = $region16
        $region15: #{lenet5_forward.1} parent=11 // pred_region
          _
        $region16: #{lenet5_forward.1} parent=11 // pred_fallthru
          _
        // Predicated region
        $region17: #{lenet5_forward.1} parent=11 // pred_check
          %p322 = pneg %p89
        $region18: #{lenet5_forward.1} parent=11 // pred_check_branch
          %324 = sbr.rel (%p322) target = $region20
        $region19: #{lenet5_forward.1} parent=11 // pred_region
          _
        $region20: #{lenet5_forward.1} parent=11 // pred_fallthru
          _
        // Predicated region
        $region21: #{lenet5_forward.1} parent=11 // pred_check
          %p325 = pneg %p110
        $region22: #{lenet5_forward.1} parent=11 // pred_check_branch
          %327 = sbr.rel (%p325) target = $region24
        $region23: #{lenet5_forward.1} parent=11 // pred_region
          _
        $region24: #{lenet5_forward.1} parent=11 // pred_fallthru
          _
        // Predicated region
        $region25: #{lenet5_forward.1} parent=11 // pred_check
          %p328 = pneg %p131
        $region26: #{lenet5_forward.1} parent=11 // pred_check_branch
          %330 = sbr.rel (%p328) target = $region28
        $region27: #{lenet5_forward.1} parent=11 // pred_region
          _
        $region28: #{lenet5_forward.1} parent=11 // pred_fallthru
          _
        // Predicated region
        $region29: #{lenet5_forward.1} parent=11 // pred_check
          %p331 = pneg %p152
        $region30: #{lenet5_forward.1} parent=11 // pred_check_branch
          %333 = sbr.rel (%p331) target = $region32
        $region31: #{lenet5_forward.1} parent=11 // pred_region
          _
        $region32: #{lenet5_forward.1} parent=11 // pred_fallthru
          _
        // Predicated region
        $region33: #{lenet5_forward.1} parent=11 // pred_check
          %p334 = pneg %p173
        $region34: #{lenet5_forward.1} parent=11 // pred_check_branch
          %336 = sbr.rel (%p334) target = $region36
        $region35: #{lenet5_forward.1} parent=11 // pred_region
          _
        $region36: #{lenet5_forward.1} parent=11 // pred_fallthru
          _
        // Predicated region
        $region37: #{lenet5_forward.1} parent=11 // pred_check
          %p337 = pneg %p194
        $region38: #{lenet5_forward.1} parent=11 // pred_check_branch
          %339 = sbr.rel (%p337) target = $region40
        $region39: #{lenet5_forward.1} parent=11 // pred_region
          _
        $region40: #{lenet5_forward.1} parent=11 // pred_fallthru
          _
        // Predicated region
        $region41: #{lenet5_forward.1} parent=11 // pred_check
          %p340 = pneg %p215
        $region42: #{lenet5_forward.1} parent=11 // pred_check_branch
          %342 = sbr.rel (%p340) target = $region44
        $region43: #{lenet5_forward.1} parent=11 // pred_region
          _
        $region44: #{lenet5_forward.1} parent=11 // pred_fallthru
          _
        // Predicated region
        $region45: #{lenet5_forward.1} parent=11 // pred_check
          %p343 = pneg %p236
        $region46: #{lenet5_forward.1} parent=11 // pred_check_branch
          %345 = sbr.rel (%p343) target = $region48
        $region47: #{lenet5_forward.1} parent=11 // pred_region
          _
        $region48: #{lenet5_forward.1} parent=11 // pred_fallthru
          _
        // Predicated region
        $region49: #{lenet5_forward.1} parent=11 // pred_check
          %p346 = pneg %p257
        $region50: #{lenet5_forward.1} parent=11 // pred_check_branch
          %348 = sbr.rel (%p346) target = $region52
        $region51: #{lenet5_forward.1} parent=11 // pred_region
          _
        $region52: #{lenet5_forward.1} parent=11 // pred_fallthru
          _
        // Predicated region
        $region53: #{lenet5_forward.1} parent=11 // pred_check
          %p349 = pneg %p278
        $region54: #{lenet5_forward.1} parent=11 // pred_check_branch
          %351 = sbr.rel (%p349) target = $region56
        $region55: #{lenet5_forward.1} parent=11 // pred_region
          _
        $region56: #{lenet5_forward.1} parent=11 // pred_fallthru
          _
      $region12: #{lenet5_forward.1} parent=5 // pred_fallthru
        _
      %p352 = scmp.lt.s32.totalorder %s21, 2
      // Predicated region
      $region57: #{lenet5_forward.1} parent=5 // pred_check
        %p353 = pneg %p352
      $region58: #{lenet5_forward.1} parent=5 // pred_check_branch
        %355 = sbr.rel (%p353) target = $region60
      $region59: #{lenet5_forward.1} parent=5 // pred_region
        // Predicated region
        $region61: #{lenet5_forward.1} parent=59 // pred_check
          %p356 = pneg %p41
        $region62: #{lenet5_forward.1} parent=59 // pred_check_branch
          %358 = sbr.rel (%p356) target = $region64
        $region63: #{lenet5_forward.1} parent=59 // pred_region
          %s359 = smul.u32 32, %s21
          %p360 = scmp.lt.s32.totalorder %s359, 63
          %s361 = scalar_select %p360, %s359, 63
          %s362 = smul.addr %s361, 8
          %s363 = scalar_lea.vmem %s0, %s362
          %s364 = smul.u32 32, %s21
        $region64: #{lenet5_forward.1} parent=59 // pred_fallthru
          _
      $region60: #{lenet5_forward.1} parent=5 // pred_fallthru
        _
      %p365 = scmp.le.s32.totalorder 1, %s21
      %p366 = scmp.lt.s32.totalorder %s21, 3
      %p367 = pnand %p365, %p366
      %p368 = pneg %p367
      // Predicated region
      $region65: #{lenet5_forward.1} parent=5 // pred_check
        _
      $region66: #{lenet5_forward.1} parent=5 // pred_check_branch
        %370 = sbr.rel (%p367) target = $region68
      $region67: #{lenet5_forward.1} parent=5 // pred_region
        %s371 = ssub.s32 %s21, 1
        %s372 = smul.u32 32, %s26
        %p373 = scmp.lt.s32.totalorder %s372, 63
        %s374 = scalar_select %p373, %s372, 63
        %s375 = smul.addr %s374, 8
        %s376 = scalar_lea.vmem %s0, %s375
        %p377 = pneg %p47
        %p378 = pneg %p44
        %p379 = pneg %p68
        %p380 = pneg %p65
        %p381 = pneg %p89
        %p382 = pneg %p86
        %p383 = pneg %p110
        %p384 = pneg %p107
        %p385 = pneg %p131
        %p386 = pneg %p128
        %p387 = pneg %p152
        %p388 = pneg %p149
        %p389 = pneg %p173
        %p390 = pneg %p170
        %p391 = pneg %p194
        %p392 = pneg %p191
        %p393 = pneg %p215
        %p394 = pneg %p212
        %p395 = pneg %p236
        %p396 = pneg %p233
        %p397 = pneg %p257
        %p398 = pneg %p254
        %p399 = pneg %p278
        %p400 = pneg %p275
        %p401 = pneg %p304
        %p402 = pneg %p301
        %s403 = sand.u32 %s291, 1
        %s404 = scalar_lea.sflag [#allocation3], %s403
        %s405 = sand.u32 %s291, 1
        %s406 = smul.addr %s405, 8
        %s407 = scalar_lea.vmem [#allocation2], %s406
        %s408 = smul.u32 32, %s26
        %p409 = scmp.lt.s32.totalorder %s408, 63
        %s410 = scalar_select %p409, %s408, 63
        %s411 = smul.addr %s410, 8
        %s412 = scalar_lea.vmem %s0, %s411
        %s413 = smul.u32 32, %s26
        %v414 = vld [vmem:[%s412] sm:$0xff]
        %v415 = vld [vmem:[%s412 + $0x8] sm:$0xff]
        %v416 = vld [vmem:[%s412 + $0x10] sm:$0xff]
        %v417 = vld [vmem:[%s412 + $0x18] sm:$0xff]
        %v418 = vld [vmem:[%s412 + $0x20] sm:$0xff]
        %v419 = vld [vmem:[%s412 + $0x28] sm:$0xff]
        %v420 = vld [vmem:[%s412 + $0x30] sm:$0xff]
        %v421 = vld [vmem:[%s412 + $0x38] sm:$0xff]
        %v422 = vld [vmem:[%s412 + $0x40] sm:$0xff]
        %v423 = vld [vmem:[%s412 + $0x48] sm:$0xff]
        %v424 = vld [vmem:[%s412 + $0x50] sm:$0xff]
        %v425 = vld [vmem:[%s412 + $0x58] sm:$0xff]
        %v426 = vld [vmem:[%s412 + $0x60] sm:$0xff]
        %v427 = vld [vmem:[%s412 + $0x68] sm:$0xff]
        %v428 = vld [vmem:[%s412 + $0x70] sm:$0xff]
        %v429 = vld [vmem:[%s412 + $0x78] sm:$0xff]
        %v430 = vld [vmem:[%s412 + $0x80] sm:$0xff]
        %v431 = vld [vmem:[%s412 + $0x88] sm:$0xff]
        %v432 = vld [vmem:[%s412 + $0x90] sm:$0xff]
        %v433 = vld [vmem:[%s412 + $0x98] sm:$0xff]
        %v434 = vld [vmem:[%s412 + $0xa0] sm:$0xff]
        %v435 = vld [vmem:[%s412 + $0xa8] sm:$0xff]
        %v436 = vld [vmem:[%s412 + $0xb0] sm:$0xff]
        %v437 = vld [vmem:[%s412 + $0xb8] sm:$0xff]
        %v438 = vld [vmem:[%s412 + $0xc0] sm:$0xff]
        %v439 = vld [vmem:[%s412 + $0xc8] sm:$0xff]
        %v440 = vld [vmem:[%s412 + $0xd0] sm:$0xff]
        %v441 = vld [vmem:[%s412 + $0xd8] sm:$0xff]
        %v442 = vld [vmem:[%s412 + $0xe0] sm:$0xff]
        %v443 = vld [vmem:[%s412 + $0xe8] sm:$0xff]
        %v444 = vld [vmem:[%s412 + $0xf0] sm:$0xff]
        %v445 = vld [vmem:[%s412 + $0xf8] sm:$0xff]
        %v446 = vld [vmem:[%s11] sm:$0xff]
        %v447 = vld [vmem:[%s11 + $0x8] sm:$0xff]
        %v448 = vld [vmem:[%s1] sm:$0xff]
        %v449 = vld [vmem:[%s1 + $0x8] sm:$0xff]
        %v450 = vld [vmem:[%s1 + $0x10] sm:$0xff]
        %v451 = vld [vmem:[%s1 + $0x18] sm:$0xff]
        %v452 = vld [vmem:[%s1 + $0x20] sm:$0xff]
        %v453 = vld [vmem:[%s1 + $0x28] sm:$0xff]
        %v454 = vld [vmem:[%s1 + $0x30] sm:$0xff]
        %v455 = vld [vmem:[%s1 + $0x38] sm:$0xff]
        %v456 = vrot.slane %v414, 1
        %v457 = vrot.slane %v415, 1
        %v458 = vrot.slane %v416, 1
        %v459 = vrot.slane %v417, 1
        %v460 = vrot.slane %v418, 1
        %v461 = vrot.slane %v419, 1
        %v462 = vrot.slane %v420, 1
        %v463 = vrot.slane %v421, 1
        %v464 = vrot.slane %v422, 1
        %v465 = vrot.slane %v423, 1
        %v466 = vrot.slane %v424, 1
        %v467 = vrot.slane %v425, 1
        %v468 = vrot.slane %v426, 1
        %v469 = vrot.slane %v427, 1
        %v470 = vrot.slane %v428, 1
        %v471 = vrot.slane %v429, 1
        %v472 = vrot.slane %v430, 1
        %v473 = vrot.slane %v431, 1
        %v474 = vrot.slane %v432, 1
        %v475 = vrot.slane %v433, 1
        %v476 = vrot.slane %v434, 1
        %v477 = vrot.slane %v435, 1
        %v478 = vrot.slane %v436, 1
        %v479 = vrot.slane %v437, 1
        %v480 = vrot.slane %v438, 1
        %v481 = vrot.slane %v439, 1
        %v482 = vrot.slane %v440, 1
        %v483 = vrot.slane %v441, 1
        %v484 = vrot.slane %v442, 1
        %v485 = vrot.slane %v443, 1
        %v486 = vrot.slane %v444, 1
        %v487 = vrot.slane %v445, 1
        %v488 = vlaneseq
        %v489 = vshrl.u32 %v488, 7
        %vm490 = vcmp.lt.s32.totalorder %v489, 7
        %v491 = vsel %vm490, %v486, %v487
        %v492 = vsel %vm490, %v485, %v486
        %v493 = vsel %vm490, %v484, %v485
        %v494 = vsel %vm490, %v483, %v484
        %v495 = vsel %vm490, %v482, %v483
        %v496 = vsel %vm490, %v481, %v482
        %v497 = vsel %vm490, %v480, %v481
        %v498 = vsel %vm490, %v479, %v480
        %v499 = vsel %vm490, %v478, %v479
        %v500 = vsel %vm490, %v477, %v478
        %v501 = vsel %vm490, %v476, %v477
        %v502 = vsel %vm490, %v475, %v476
        %v503 = vsel %vm490, %v474, %v475
        %v504 = vsel %vm490, %v473, %v474
        %v505 = vsel %vm490, %v472, %v473
        %v506 = vsel %vm490, %v471, %v472
        %v507 = vsel %vm490, %v470, %v471
        %v508 = vsel %vm490, %v469, %v470
        %v509 = vsel %vm490, %v468, %v469
        %v510 = vsel %vm490, %v467, %v468
        %v511 = vsel %vm490, %v466, %v467
        %v512 = vsel %vm490, %v465, %v466
        %v513 = vsel %vm490, %v464, %v465
        %v514 = vsel %vm490, %v463, %v464
        %v515 = vsel %vm490, %v462, %v463
        %v516 = vsel %vm490, %v461, %v462
        %v517 = vsel %vm490, %v460, %v461
        %v518 = vsel %vm490, %v459, %v460
        %v519 = vsel %vm490, %v458, %v459
        %v520 = vsel %vm490, %v457, %v458
        %v521 = vsel %vm490, %v456, %v457
        %v522 = vsel %vm490, %v487, %v456
        %s523 = scalar_lea.vmem %s1, 64
        %v524 = vld [vmem:[%s523] sm:$0xff]
        %v525 = vld [vmem:[%s523 + $0x8] sm:$0xff]
        %v526 = vld [vmem:[%s523 + $0x10] sm:$0xff]
        %v527 = vld [vmem:[%s523 + $0x18] sm:$0xff]
        %v528 = vld [vmem:[%s523 + $0x20] sm:$0xff]
        %v529 = vld [vmem:[%s523 + $0x28] sm:$0xff]
        %v530 = vld [vmem:[%s523 + $0x30] sm:$0xff]
        %v531 = vld [vmem:[%s523 + $0x38] sm:$0xff]
        %vm532 = vcmask 261120
        %v534 = vsel %vm532, %v521, 0
        %v537 = vsel %vm532, %v520, 0
        %v540 = vsel %vm532, %v519, 0
        %v543 = vsel %vm532, %v518, 0
        %v546 = vsel %vm532, %v517, 0
        %v549 = vsel %vm532, %v516, 0
        %v552 = vsel %vm532, %v515, 0
        %v555 = vsel %vm532, %v514, 0
        %v558 = vsel %vm532, %v513, 0
        %v561 = vsel %vm532, %v512, 0
        %v564 = vsel %vm532, %v511, 0
        %v567 = vsel %vm532, %v510, 0
        %v570 = vsel %vm532, %v509, 0
        %v573 = vsel %vm532, %v508, 0
        %v576 = vsel %vm532, %v507, 0
        %v579 = vsel %vm532, %v506, 0
        %v582 = vsel %vm532, %v505, 0
        %v585 = vsel %vm532, %v504, 0
        %v588 = vsel %vm532, %v503, 0
        %v591 = vsel %vm532, %v502, 0
        %v594 = vsel %vm532, %v501, 0
        %v597 = vsel %vm532, %v500, 0
        %v600 = vsel %vm532, %v499, 0
        %v603 = vsel %vm532, %v498, 0
        %v606 = vsel %vm532, %v497, 0
        %v609 = vsel %vm532, %v496, 0
        %v612 = vsel %vm532, %v495, 0
        %v615 = vsel %vm532, %v494, 0
        %v618 = vsel %vm532, %v493, 0
        %v621 = vsel %vm532, %v492, 0
        %v624 = vsel %vm532, %v491, 0
        %v627 = vsel %vm532, %v522, 0
        %629 = vmatprep.subr.mxu0 %v525
        %630 = vmatpush1.msra.mxu0 %v524
        %631 = vmatprep.subr.mxu0 %v527
        %632 = vmatpush1.msra.mxu0 %v526
        %633 = vmatprep.subr.mxu0 %v529
        %634 = vmatpush1.msra.mxu0 %v528
        %635 = vmatprep.subr.mxu0 %v531
        %636 = vmatpush1.msra.mxu0 %v530
        %637 = vmatprep.subr.mxu0 0.0
        %638 = vmatpush1.msra.mxu0 0.0
        %639 = vmatprep.subr.mxu0 0.0
        %640 = vmatpush1.msra.mxu0 0.0
        %641 = vmatprep.subr.mxu0 0.0
        %642 = vmatpush1.msra.mxu0 0.0
        %643 = vmatprep.subr.mxu0 0.0
        %644 = vmatpush1.msra.mxu0 0.0
        %645 = vmatprep.subr.mxu0 0.0
        %646 = vmatpush1.msra.mxu0 0.0
        %647 = vmatprep.subr.mxu0 0.0
        %648 = vmatpush1.msra.mxu0 0.0
        %649 = vmatprep.subr.mxu0 0.0
        %650 = vmatpush1.msra.mxu0 0.0
        %651 = vmatprep.subr.mxu0 0.0
        %652 = vmatpush1.msra.mxu0 0.0
        %653 = vmatprep.subr.mxu0 0.0
        %654 = vmatpush1.msra.mxu0 0.0
        %655 = vmatprep.subr.mxu0 0.0
        %656 = vmatpush1.msra.mxu0 0.0
        %657 = vmatprep.subr.mxu0 0.0
        %658 = vmatpush1.msra.mxu0 0.0
        %659 = vmatprep.subr.mxu0 0.0
        %660 = vmatpush1.msra.mxu0 0.0
        %661 = vmatprep.subr.mxu0 0.0
        %662 = vmatpush1.msra.mxu0 0.0
        %663 = vmatprep.subr.mxu0 0.0
        %664 = vmatpush1.msra.mxu0 0.0
        %665 = vmatprep.subr.mxu0 0.0
        %666 = vmatpush1.msra.mxu0 0.0
        %667 = vmatprep.subr.mxu0 0.0
        %668 = vmatpush1.msra.mxu0 0.0
        %669 = vmatprep.subr.mxu0 0.0
        %670 = vmatpush1.msra.mxu0 0.0
        %671 = vmatprep.subr.mxu0 0.0
        %672 = vmatpush1.msra.mxu0 0.0
        %673 = vmatprep.subr.mxu0 0.0
        %674 = vmatpush1.msra.mxu0 0.0
        %675 = vmatprep.subr.mxu0 0.0
        %676 = vmatpush1.msra.mxu0 0.0
        %677 = vmatprep.subr.mxu0 0.0
        %678 = vmatpush1.msra.mxu0 0.0
        %679 = vmatprep.subr.mxu0 0.0
        %680 = vmatpush1.msra.mxu0 0.0
        %681 = vmatprep.subr.mxu0 0.0
        %682 = vmatpush1.msra.mxu0 0.0
        %683 = vmatprep.subr.mxu0 0.0
        %684 = vmatpush1.msra.mxu0 0.0
        %685 = vmatprep.subr.mxu0 0.0
        %686 = vmatpush1.msra.mxu0 0.0
        %687 = vmatprep.subr.mxu0 0.0
        %688 = vmatpush1.msra.mxu0 0.0
        %689 = vmatprep.subr.mxu0 0.0
        %690 = vmatpush1.msra.mxu0 0.0
        %691 = vmatprep.subr.mxu0 0.0
        %692 = vmatpush1.msra.mxu0 0.0
        %693 = vmatprep.mubr.f32.mxu0 0.0
        %694 = vmatmul.mubr.f32.gmra.mrb[0].mxu0 %v534
        %v695 = vpop.f32.mrb[0].mxu0
        %v696 = vadd.f32 0.0, %v695
        %v697 = vpop.f32.mrb[0].mxu0
        %v698 = vadd.f32 0.0, %v697
        %699 = vmatprep.mubr.f32.mxu0 0.0
        %700 = vmatmul.mubr.f32.gmra.mrb[0].mxu0 %v537
        %v701 = vpop.f32.mrb[0].mxu0
        %v702 = vadd.f32 0.0, %v701
        %v703 = vpop.f32.mrb[0].mxu0
        %v704 = vadd.f32 0.0, %v703
        %705 = vmatprep.mubr.f32.mxu0 0.0
        %706 = vmatmul.mubr.f32.gmra.mrb[0].mxu0 %v540
        %v707 = vpop.f32.mrb[0].mxu0
        %v708 = vadd.f32 0.0, %v707
        %v709 = vpop.f32.mrb[0].mxu0
        %v710 = vadd.f32 0.0, %v709
        %711 = vmatprep.mubr.f32.mxu0 0.0
        %712 = vmatmul.mubr.f32.gmra.mrb[0].mxu0 %v543
        %v713 = vpop.f32.mrb[0].mxu0
        %v714 = vadd.f32 0.0, %v713
        %v715 = vpop.f32.mrb[0].mxu0
        %v716 = vadd.f32 0.0, %v715
        %717 = vmatprep.mubr.f32.mxu0 0.0
        %718 = vmatmul.mubr.f32.gmra.mrb[0].mxu0 %v546
        %v719 = vpop.f32.mrb[0].mxu0
        %v720 = vadd.f32 0.0, %v719
        %v721 = vpop.f32.mrb[0].mxu0
        %v722 = vadd.f32 0.0, %v721
        %723 = vmatprep.mubr.f32.mxu0 0.0
        %724 = vmatmul.mubr.f32.gmra.mrb[0].mxu0 %v549
        %v725 = vpop.f32.mrb[0].mxu0
        %v726 = vadd.f32 0.0, %v725
        %v727 = vpop.f32.mrb[0].mxu0
        %v728 = vadd.f32 0.0, %v727
        %729 = vmatprep.mubr.f32.mxu0 0.0
        %730 = vmatmul.mubr.f32.gmra.mrb[0].mxu0 %v552
        %v731 = vpop.f32.mrb[0].mxu0
        %v732 = vadd.f32 0.0, %v731
        %v733 = vpop.f32.mrb[0].mxu0
        %v734 = vadd.f32 0.0, %v733
        %735 = vmatprep.mubr.f32.mxu0 0.0
        %736 = vmatmul.mubr.f32.gmra.mrb[0].mxu0 %v555
        %v737 = vpop.f32.mrb[0].mxu0
        %v738 = vadd.f32 0.0, %v737
        %v739 = vpop.f32.mrb[0].mxu0
        %v740 = vadd.f32 0.0, %v739
        %741 = vmatprep.mubr.f32.mxu0 0.0
        %742 = vmatmul.mubr.f32.gmra.mrb[0].mxu0 %v558
        %v743 = vpop.f32.mrb[0].mxu0
        %v744 = vadd.f32 0.0, %v743
        %v745 = vpop.f32.mrb[0].mxu0
        %v746 = vadd.f32 0.0, %v745
        %747 = vmatprep.mubr.f32.mxu0 0.0
        %748 = vmatmul.mubr.f32.gmra.mrb[0].mxu0 %v561
        %v749 = vpop.f32.mrb[0].mxu0
        %v750 = vadd.f32 0.0, %v749
        %v751 = vpop.f32.mrb[0].mxu0
        %v752 = vadd.f32 0.0, %v751
        %753 = vmatprep.mubr.f32.mxu0 0.0
        %754 = vmatmul.mubr.f32.gmra.mrb[0].mxu0 %v564
        %v755 = vpop.f32.mrb[0].mxu0
        %v756 = vadd.f32 0.0, %v755
        %v757 = vpop.f32.mrb[0].mxu0
        %v758 = vadd.f32 0.0, %v757
        %759 = vmatprep.mubr.f32.mxu0 0.0
        %760 = vmatmul.mubr.f32.gmra.mrb[0].mxu0 %v567
        %v761 = vpop.f32.mrb[0].mxu0
        %v762 = vadd.f32 0.0, %v761
        %v763 = vpop.f32.mrb[0].mxu0
        %v764 = vadd.f32 0.0, %v763
        %765 = vmatprep.mubr.f32.mxu0 0.0
        %766 = vmatmul.mubr.f32.gmra.mrb[0].mxu0 %v570
        %v767 = vpop.f32.mrb[0].mxu0
        %v768 = vadd.f32 0.0, %v767
        %v769 = vpop.f32.mrb[0].mxu0
        %v770 = vadd.f32 0.0, %v769
        %771 = vmatprep.mubr.f32.mxu0 0.0
        %772 = vmatmul.mubr.f32.gmra.mrb[0].mxu0 %v573
        %v773 = vpop.f32.mrb[0].mxu0
        %v774 = vadd.f32 0.0, %v773
        %v775 = vpop.f32.mrb[0].mxu0
        %v776 = vadd.f32 0.0, %v775
        %777 = vmatprep.mubr.f32.mxu0 0.0
        %778 = vmatmul.mubr.f32.gmra.mrb[0].mxu0 %v576
        %v779 = vpop.f32.mrb[0].mxu0
        %v780 = vadd.f32 0.0, %v779
        %v781 = vpop.f32.mrb[0].mxu0
        %v782 = vadd.f32 0.0, %v781
        %783 = vmatprep.mubr.f32.mxu0 0.0
        %784 = vmatmul.mubr.f32.gmra.mrb[0].mxu0 %v579
        %v785 = vpop.f32.mrb[0].mxu0
        %v786 = vadd.f32 0.0, %v785
        %v787 = vpop.f32.mrb[0].mxu0
        %v788 = vadd.f32 0.0, %v787
        %789 = vmatprep.mubr.f32.mxu0 0.0
        %790 = vmatmul.mubr.f32.gmra.mrb[0].mxu0 %v582
        %v791 = vpop.f32.mrb[0].mxu0
        %v792 = vadd.f32 0.0, %v791
        %v793 = vpop.f32.mrb[0].mxu0
        %v794 = vadd.f32 0.0, %v793
        %795 = vmatprep.mubr.f32.mxu0 0.0
        %796 = vmatmul.mubr.f32.gmra.mrb[0].mxu0 %v585
        %v797 = vpop.f32.mrb[0].mxu0
        %v798 = vadd.f32 0.0, %v797
        %v799 = vpop.f32.mrb[0].mxu0
        %v800 = vadd.f32 0.0, %v799
        %801 = vmatprep.mubr.f32.mxu0 0.0
        %802 = vmatmul.mubr.f32.gmra.mrb[0].mxu0 %v588
        %v803 = vpop.f32.mrb[0].mxu0
        %v804 = vadd.f32 0.0, %v803
        %v805 = vpop.f32.mrb[0].mxu0
        %v806 = vadd.f32 0.0, %v805
        %807 = vmatprep.mubr.f32.mxu0 0.0
        %808 = vmatmul.mubr.f32.gmra.mrb[0].mxu0 %v591
        %v809 = vpop.f32.mrb[0].mxu0
        %v810 = vadd.f32 0.0, %v809
        %v811 = vpop.f32.mrb[0].mxu0
        %v812 = vadd.f32 0.0, %v811
        %813 = vmatprep.mubr.f32.mxu0 0.0
        %814 = vmatmul.mubr.f32.gmra.mrb[0].mxu0 %v594
        %v815 = vpop.f32.mrb[0].mxu0
        %v816 = vadd.f32 0.0, %v815
        %v817 = vpop.f32.mrb[0].mxu0
        %v818 = vadd.f32 0.0, %v817
        %819 = vmatprep.mubr.f32.mxu0 0.0
        %820 = vmatmul.mubr.f32.gmra.mrb[0].mxu0 %v597
        %v821 = vpop.f32.mrb[0].mxu0
        %v822 = vadd.f32 0.0, %v821
        %v823 = vpop.f32.mrb[0].mxu0
        %v824 = vadd.f32 0.0, %v823
        %825 = vmatprep.mubr.f32.mxu0 0.0
        %826 = vmatmul.mubr.f32.gmra.mrb[0].mxu0 %v600
        %v827 = vpop.f32.mrb[0].mxu0
        %v828 = vadd.f32 0.0, %v827
        %v829 = vpop.f32.mrb[0].mxu0
        %v830 = vadd.f32 0.0, %v829
        %831 = vmatprep.mubr.f32.mxu0 0.0
        %832 = vmatmul.mubr.f32.gmra.mrb[0].mxu0 %v603
        %v833 = vpop.f32.mrb[0].mxu0
        %v834 = vadd.f32 0.0, %v833
        %v835 = vpop.f32.mrb[0].mxu0
        %v836 = vadd.f32 0.0, %v835
        %837 = vmatprep.mubr.f32.mxu0 0.0
        %838 = vmatmul.mubr.f32.gmra.mrb[0].mxu0 %v606
        %v839 = vpop.f32.mrb[0].mxu0
        %v840 = vadd.f32 0.0, %v839
        %v841 = vpop.f32.mrb[0].mxu0
        %v842 = vadd.f32 0.0, %v841
        %843 = vmatprep.mubr.f32.mxu0 0.0
        %844 = vmatmul.mubr.f32.gmra.mrb[0].mxu0 %v609
        %v845 = vpop.f32.mrb[0].mxu0
        %v846 = vadd.f32 0.0, %v845
        %v847 = vpop.f32.mrb[0].mxu0
        %v848 = vadd.f32 0.0, %v847
        %849 = vmatprep.mubr.f32.mxu0 0.0
        %850 = vmatmul.mubr.f32.gmra.mrb[0].mxu0 %v612
        %v851 = vpop.f32.mrb[0].mxu0
        %v852 = vadd.f32 0.0, %v851
        %v853 = vpop.f32.mrb[0].mxu0
        %v854 = vadd.f32 0.0, %v853
        %855 = vmatprep.mubr.f32.mxu0 0.0
        %856 = vmatmul.mubr.f32.gmra.mrb[0].mxu0 %v615
        %v857 = vpop.f32.mrb[0].mxu0
        %v858 = vadd.f32 0.0, %v857
        %v859 = vpop.f32.mrb[0].mxu0
        %v860 = vadd.f32 0.0, %v859
        %861 = vmatprep.mubr.f32.mxu0 0.0
        %862 = vmatmul.mubr.f32.gmra.mrb[0].mxu0 %v618
        %v863 = vpop.f32.mrb[0].mxu0
        %v864 = vadd.f32 0.0, %v863
        %v865 = vpop.f32.mrb[0].mxu0
        %v866 = vadd.f32 0.0, %v865
        %867 = vmatprep.mubr.f32.mxu0 0.0
        %868 = vmatmul.mubr.f32.gmra.mrb[0].mxu0 %v621
        %v869 = vpop.f32.mrb[0].mxu0
        %v870 = vadd.f32 0.0, %v869
        %v871 = vpop.f32.mrb[0].mxu0
        %v872 = vadd.f32 0.0, %v871
        %873 = vmatprep.mubr.f32.mxu0 0.0
        %874 = vmatmul.mubr.f32.gmra.mrb[0].mxu0 %v624
        %v875 = vpop.f32.mrb[0].mxu0
        %v876 = vadd.f32 0.0, %v875
        %v877 = vpop.f32.mrb[0].mxu0
        %v878 = vadd.f32 0.0, %v877
        %879 = vmatprep.mubr.f32.mxu0 0.0
        %880 = vmatmul.mubr.f32.gmra.mrb[0].mxu0 %v627
        %v881 = vpop.f32.mrb[0].mxu0
        %v882 = vadd.f32 0.0, %v881
        %v883 = vpop.f32.mrb[0].mxu0
        %v884 = vadd.f32 0.0, %v883
        %885 = vdwg.mxu0
        %v887 = vsel %vm532, %v414, 0
        %v890 = vsel %vm532, %v415, 0
        %v893 = vsel %vm532, %v416, 0
        %v896 = vsel %vm532, %v417, 0
        %v899 = vsel %vm532, %v418, 0
        %v902 = vsel %vm532, %v419, 0
        %v905 = vsel %vm532, %v420, 0
        %v908 = vsel %vm532, %v421, 0
        %v911 = vsel %vm532, %v422, 0
        %v914 = vsel %vm532, %v423, 0
        %v917 = vsel %vm532, %v424, 0
        %v920 = vsel %vm532, %v425, 0
        %v923 = vsel %vm532, %v426, 0
        %v926 = vsel %vm532, %v427, 0
        %v929 = vsel %vm532, %v428, 0
        %v932 = vsel %vm532, %v429, 0
        %v935 = vsel %vm532, %v430, 0
        %v938 = vsel %vm532, %v431, 0
        %v941 = vsel %vm532, %v432, 0
        %v944 = vsel %vm532, %v433, 0
        %v947 = vsel %vm532, %v434, 0
        %v950 = vsel %vm532, %v435, 0
        %v953 = vsel %vm532, %v436, 0
        %v956 = vsel %vm532, %v437, 0
        %v959 = vsel %vm532, %v438, 0
        %v962 = vsel %vm532, %v439, 0
        %v965 = vsel %vm532, %v440, 0
        %v968 = vsel %vm532, %v441, 0
        %v971 = vsel %vm532, %v442, 0
        %v974 = vsel %vm532, %v443, 0
        %v977 = vsel %vm532, %v444, 0
        %v980 = vsel %vm532, %v445, 0
        %982 = vmatprep.subr.mxu0 %v449
        %983 = vmatpush1.msra.mxu0 %v448
        %984 = vmatprep.subr.mxu0 %v451
        %985 = vmatpush1.msra.mxu0 %v450
        %986 = vmatprep.subr.mxu0 %v453
        %987 = vmatpush1.msra.mxu0 %v452
        %988 = vmatprep.subr.mxu0 %v455
        %989 = vmatpush1.msra.mxu0 %v454
        %990 = vmatprep.subr.mxu0 0.0
        %991 = vmatpush1.msra.mxu0 0.0
        %992 = vmatprep.subr.mxu0 0.0
        %993 = vmatpush1.msra.mxu0 0.0
        %994 = vmatprep.subr.mxu0 0.0
        %995 = vmatpush1.msra.mxu0 0.0
        %996 = vmatprep.subr.mxu0 0.0
        %997 = vmatpush1.msra.mxu0 0.0
        %998 = vmatprep.subr.mxu0 0.0
        %999 = vmatpush1.msra.mxu0 0.0
        %1000 = vmatprep.subr.mxu0 0.0
        %1001 = vmatpush1.msra.mxu0 0.0
        %1002 = vmatprep.subr.mxu0 0.0
        %1003 = vmatpush1.msra.mxu0 0.0
        %1004 = vmatprep.subr.mxu0 0.0
        %1005 = vmatpush1.msra.mxu0 0.0
        %1006 = vmatprep.subr.mxu0 0.0
        %1007 = vmatpush1.msra.mxu0 0.0
        %1008 = vmatprep.subr.mxu0 0.0
        %1009 = vmatpush1.msra.mxu0 0.0
        %1010 = vmatprep.subr.mxu0 0.0
        %1011 = vmatpush1.msra.mxu0 0.0
        %1012 = vmatprep.subr.mxu0 0.0
        %1013 = vmatpush1.msra.mxu0 0.0
        %1014 = vmatprep.subr.mxu0 0.0
        %1015 = vmatpush1.msra.mxu0 0.0
        %1016 = vmatprep.subr.mxu0 0.0
        %1017 = vmatpush1.msra.mxu0 0.0
        %1018 = vmatprep.subr.mxu0 0.0
        %1019 = vmatpush1.msra.mxu0 0.0
        %1020 = vmatprep.subr.mxu0 0.0
        %1021 = vmatpush1.msra.mxu0 0.0
        %1022 = vmatprep.subr.mxu0 0.0
        %1023 = vmatpush1.msra.mxu0 0.0
        %1024 = vmatprep.subr.mxu0 0.0
        %1025 = vmatpush1.msra.mxu0 0.0
        %1026 = vmatprep.subr.mxu0 0.0
        %1027 = vmatpush1.msra.mxu0 0.0
        %1028 = vmatprep.subr.mxu0 0.0
        %1029 = vmatpush1.msra.mxu0 0.0
        %1030 = vmatprep.subr.mxu0 0.0
        %1031 = vmatpush1.msra.mxu0 0.0
        %1032 = vmatprep.subr.mxu0 0.0
        %1033 = vmatpush1.msra.mxu0 0.0
        %1034 = vmatprep.subr.mxu0 0.0
        %1035 = vmatpush1.msra.mxu0 0.0
        %1036 = vmatprep.subr.mxu0 0.0
        %1037 = vmatpush1.msra.mxu0 0.0
        %1038 = vmatprep.subr.mxu0 0.0
        %1039 = vmatpush1.msra.mxu0 0.0
        %1040 = vmatprep.subr.mxu0 0.0
        %1041 = vmatpush1.msra.mxu0 0.0
        %1042 = vmatprep.subr.mxu0 0.0
        %1043 = vmatpush1.msra.mxu0 0.0
        %1044 = vmatprep.subr.mxu0 0.0
        %1045 = vmatpush1.msra.mxu0 0.0
        %1046 = vmatprep.mubr.f32.mxu0 0.0
        %1047 = vmatmul.mubr.f32.gmra.mrb[0].mxu0 %v887
        %v1048 = vpop.f32.mrb[0].mxu0
        %v1049 = vadd.f32 %v696, %v1048
        %v1050 = vpop.f32.mrb[0].mxu0
        %v1051 = vadd.f32 %v698, %v1050
        %1052 = vmatprep.mubr.f32.mxu0 0.0
        %1053 = vmatmul.mubr.f32.gmra.mrb[0].mxu0 %v890
        %v1054 = vpop.f32.mrb[0].mxu0
        %v1055 = vadd.f32 %v702, %v1054
        %v1056 = vpop.f32.mrb[0].mxu0
        %v1057 = vadd.f32 %v704, %v1056
        %1058 = vmatprep.mubr.f32.mxu0 0.0
        %1059 = vmatmul.mubr.f32.gmra.mrb[0].mxu0 %v893
        %v1060 = vpop.f32.mrb[0].mxu0
        %v1061 = vadd.f32 %v708, %v1060
        %v1062 = vpop.f32.mrb[0].mxu0
        %v1063 = vadd.f32 %v710, %v1062
        %1064 = vmatprep.mubr.f32.mxu0 0.0
        %1065 = vmatmul.mubr.f32.gmra.mrb[0].mxu0 %v896
        %v1066 = vpop.f32.mrb[0].mxu0
        %v1067 = vadd.f32 %v714, %v1066
        %v1068 = vpop.f32.mrb[0].mxu0
        %v1069 = vadd.f32 %v716, %v1068
        %1070 = vmatprep.mubr.f32.mxu0 0.0
        %1071 = vmatmul.mubr.f32.gmra.mrb[0].mxu0 %v899
        %v1072 = vpop.f32.mrb[0].mxu0
        %v1073 = vadd.f32 %v720, %v1072
        %v1074 = vpop.f32.mrb[0].mxu0
        %v1075 = vadd.f32 %v722, %v1074
        %1076 = vmatprep.mubr.f32.mxu0 0.0
        %1077 = vmatmul.mubr.f32.gmra.mrb[0].mxu0 %v902
        %v1078 = vpop.f32.mrb[0].mxu0
        %v1079 = vadd.f32 %v726, %v1078
        %v1080 = vpop.f32.mrb[0].mxu0
        %v1081 = vadd.f32 %v728, %v1080
        %1082 = vmatprep.mubr.f32.mxu0 0.0
        %1083 = vmatmul.mubr.f32.gmra.mrb[0].mxu0 %v905
        %v1084 = vpop.f32.mrb[0].mxu0
        %v1085 = vadd.f32 %v732, %v1084
        %v1086 = vpop.f32.mrb[0].mxu0
        %v1087 = vadd.f32 %v734, %v1086
        %1088 = vmatprep.mubr.f32.mxu0 0.0
        %1089 = vmatmul.mubr.f32.gmra.mrb[0].mxu0 %v908
        %v1090 = vpop.f32.mrb[0].mxu0
        %v1091 = vadd.f32 %v738, %v1090
        %v1092 = vpop.f32.mrb[0].mxu0
        %v1093 = vadd.f32 %v740, %v1092
        %1094 = vmatprep.mubr.f32.mxu0 0.0
        %1095 = vmatmul.mubr.f32.gmra.mrb[0].mxu0 %v911
        %v1096 = vpop.f32.mrb[0].mxu0
        %v1097 = vadd.f32 %v744, %v1096
        %v1098 = vpop.f32.mrb[0].mxu0
        %v1099 = vadd.f32 %v746, %v1098
        %1100 = vmatprep.mubr.f32.mxu0 0.0
        %1101 = vmatmul.mubr.f32.gmra.mrb[0].mxu0 %v914
        %v1102 = vpop.f32.mrb[0].mxu0
        %v1103 = vadd.f32 %v750, %v1102
        %v1104 = vpop.f32.mrb[0].mxu0
        %v1105 = vadd.f32 %v752, %v1104
        %1106 = vmatprep.mubr.f32.mxu0 0.0
        %1107 = vmatmul.mubr.f32.gmra.mrb[0].mxu0 %v917
        %v1108 = vpop.f32.mrb[0].mxu0
        %v1109 = vadd.f32 %v756, %v1108
        %v1110 = vpop.f32.mrb[0].mxu0
        %v1111 = vadd.f32 %v758, %v1110
        %1112 = vmatprep.mubr.f32.mxu0 0.0
        %1113 = vmatmul.mubr.f32.gmra.mrb[0].mxu0 %v920
        %v1114 = vpop.f32.mrb[0].mxu0
        %v1115 = vadd.f32 %v762, %v1114
        %v1116 = vpop.f32.mrb[0].mxu0
        %v1117 = vadd.f32 %v764, %v1116
        %1118 = vmatprep.mubr.f32.mxu0 0.0
        %1119 = vmatmul.mubr.f32.gmra.mrb[0].mxu0 %v923
        %v1120 = vpop.f32.mrb[0].mxu0
        %v1121 = vadd.f32 %v768, %v1120
        %v1122 = vpop.f32.mrb[0].mxu0
        %v1123 = vadd.f32 %v770, %v1122
        %1124 = vmatprep.mubr.f32.mxu0 0.0
        %1125 = vmatmul.mubr.f32.gmra.mrb[0].mxu0 %v926
        %v1126 = vpop.f32.mrb[0].mxu0
        %v1127 = vadd.f32 %v774, %v1126
        %v1128 = vpop.f32.mrb[0].mxu0
        %v1129 = vadd.f32 %v776, %v1128
        %1130 = vmatprep.mubr.f32.mxu0 0.0
        %1131 = vmatmul.mubr.f32.gmra.mrb[0].mxu0 %v929
        %v1132 = vpop.f32.mrb[0].mxu0
        %v1133 = vadd.f32 %v780, %v1132
        %v1134 = vpop.f32.mrb[0].mxu0
        %v1135 = vadd.f32 %v782, %v1134
        %1136 = vmatprep.mubr.f32.mxu0 0.0
        %1137 = vmatmul.mubr.f32.gmra.mrb[0].mxu0 %v932
        %v1138 = vpop.f32.mrb[0].mxu0
        %v1139 = vadd.f32 %v786, %v1138
        %v1140 = vpop.f32.mrb[0].mxu0
        %v1141 = vadd.f32 %v788, %v1140
        %1142 = vmatprep.mubr.f32.mxu0 0.0
        %1143 = vmatmul.mubr.f32.gmra.mrb[0].mxu0 %v935
        %v1144 = vpop.f32.mrb[0].mxu0
        %v1145 = vadd.f32 %v792, %v1144
        %v1146 = vpop.f32.mrb[0].mxu0
        %v1147 = vadd.f32 %v794, %v1146
        %1148 = vmatprep.mubr.f32.mxu0 0.0
        %1149 = vmatmul.mubr.f32.gmra.mrb[0].mxu0 %v938
        %v1150 = vpop.f32.mrb[0].mxu0
        %v1151 = vadd.f32 %v798, %v1150
        %v1152 = vpop.f32.mrb[0].mxu0
        %v1153 = vadd.f32 %v800, %v1152
        %1154 = vmatprep.mubr.f32.mxu0 0.0
        %1155 = vmatmul.mubr.f32.gmra.mrb[0].mxu0 %v941
        %v1156 = vpop.f32.mrb[0].mxu0
        %v1157 = vadd.f32 %v804, %v1156
        %v1158 = vpop.f32.mrb[0].mxu0
        %v1159 = vadd.f32 %v806, %v1158
        %1160 = vmatprep.mubr.f32.mxu0 0.0
        %1161 = vmatmul.mubr.f32.gmra.mrb[0].mxu0 %v944
        %v1162 = vpop.f32.mrb[0].mxu0
        %v1163 = vadd.f32 %v810, %v1162
        %v1164 = vpop.f32.mrb[0].mxu0
        %v1165 = vadd.f32 %v812, %v1164
        %1166 = vmatprep.mubr.f32.mxu0 0.0
        %1167 = vmatmul.mubr.f32.gmra.mrb[0].mxu0 %v947
        %v1168 = vpop.f32.mrb[0].mxu0
        %v1169 = vadd.f32 %v816, %v1168
        %v1170 = vpop.f32.mrb[0].mxu0
        %v1171 = vadd.f32 %v818, %v1170
        %1172 = vmatprep.mubr.f32.mxu0 0.0
        %1173 = vmatmul.mubr.f32.gmra.mrb[0].mxu0 %v950
        %v1174 = vpop.f32.mrb[0].mxu0
        %v1175 = vadd.f32 %v822, %v1174
        %v1176 = vpop.f32.mrb[0].mxu0
        %v1177 = vadd.f32 %v824, %v1176
        %1178 = vmatprep.mubr.f32.mxu0 0.0
        %1179 = vmatmul.mubr.f32.gmra.mrb[0].mxu0 %v953
        %v1180 = vpop.f32.mrb[0].mxu0
        %v1181 = vadd.f32 %v828, %v1180
        %v1182 = vpop.f32.mrb[0].mxu0
        %v1183 = vadd.f32 %v830, %v1182
        %1184 = vmatprep.mubr.f32.mxu0 0.0
        %1185 = vmatmul.mubr.f32.gmra.mrb[0].mxu0 %v956
        %v1186 = vpop.f32.mrb[0].mxu0
        %v1187 = vadd.f32 %v834, %v1186
        %v1188 = vpop.f32.mrb[0].mxu0
        %v1189 = vadd.f32 %v836, %v1188
        %1190 = vmatprep.mubr.f32.mxu0 0.0
        %1191 = vmatmul.mubr.f32.gmra.mrb[0].mxu0 %v959
        %v1192 = vpop.f32.mrb[0].mxu0
        %v1193 = vadd.f32 %v840, %v1192
        %v1194 = vpop.f32.mrb[0].mxu0
        %v1195 = vadd.f32 %v842, %v1194
        %1196 = vmatprep.mubr.f32.mxu0 0.0
        %1197 = vmatmul.mubr.f32.gmra.mrb[0].mxu0 %v962
        %v1198 = vpop.f32.mrb[0].mxu0
        %v1199 = vadd.f32 %v846, %v1198
        %v1200 = vpop.f32.mrb[0].mxu0
        %v1201 = vadd.f32 %v848, %v1200
        %1202 = vmatprep.mubr.f32.mxu0 0.0
        %1203 = vmatmul.mubr.f32.gmra.mrb[0].mxu0 %v965
        %v1204 = vpop.f32.mrb[0].mxu0
        %v1205 = vadd.f32 %v852, %v1204
        %v1206 = vpop.f32.mrb[0].mxu0
        %v1207 = vadd.f32 %v854, %v1206
        %1208 = vmatprep.mubr.f32.mxu0 0.0
        %1209 = vmatmul.mubr.f32.gmra.mrb[0].mxu0 %v968
        %v1210 = vpop.f32.mrb[0].mxu0
        %v1211 = vadd.f32 %v858, %v1210
        %v1212 = vpop.f32.mrb[0].mxu0
        %v1213 = vadd.f32 %v860, %v1212
        %1214 = vmatprep.mubr.f32.mxu0 0.0
        %1215 = vmatmul.mubr.f32.gmra.mrb[0].mxu0 %v971
        %v1216 = vpop.f32.mrb[0].mxu0
        %v1217 = vadd.f32 %v864, %v1216
        %v1218 = vpop.f32.mrb[0].mxu0
        %v1219 = vadd.f32 %v866, %v1218
        %1220 = vmatprep.mubr.f32.mxu0 0.0
        %1221 = vmatmul.mubr.f32.gmra.mrb[0].mxu0 %v974
        %v1222 = vpop.f32.mrb[0].mxu0
        %v1223 = vadd.f32 %v870, %v1222
        %v1224 = vpop.f32.mrb[0].mxu0
        %v1225 = vadd.f32 %v872, %v1224
        %1226 = vmatprep.mubr.f32.mxu0 0.0
        %1227 = vmatmul.mubr.f32.gmra.mrb[0].mxu0 %v977
        %v1228 = vpop.f32.mrb[0].mxu0
        %v1229 = vadd.f32 %v876, %v1228
        %v1230 = vpop.f32.mrb[0].mxu0
        %v1231 = vadd.f32 %v878, %v1230
        %1232 = vmatprep.mubr.f32.mxu0 0.0
        %1233 = vmatmul.mubr.f32.gmra.mrb[0].mxu0 %v980
        %v1234 = vpop.f32.mrb[0].mxu0
        %v1235 = vadd.f32 %v882, %v1234
        %v1236 = vpop.f32.mrb[0].mxu0
        %v1237 = vadd.f32 %v884, %v1236
        %1238 = vdwg.mxu0
        %v1239 = vrot.slane %v414, 2
        %v1240 = vrot.slane %v415, 2
        %v1241 = vrot.slane %v416, 2
        %v1242 = vrot.slane %v417, 2
        %v1243 = vrot.slane %v418, 2
        %v1244 = vrot.slane %v419, 2
        %v1245 = vrot.slane %v420, 2
        %v1246 = vrot.slane %v421, 2
        %v1247 = vrot.slane %v422, 2
        %v1248 = vrot.slane %v423, 2
        %v1249 = vrot.slane %v424, 2
        %v1250 = vrot.slane %v425, 2
        %v1251 = vrot.slane %v426, 2
        %v1252 = vrot.slane %v427, 2
        %v1253 = vrot.slane %v428, 2
        %v1254 = vrot.slane %v429, 2
        %v1255 = vrot.slane %v430, 2
        %v1256 = vrot.slane %v431, 2
        %v1257 = vrot.slane %v432, 2
        %v1258 = vrot.slane %v433, 2
        %v1259 = vrot.slane %v434, 2
        %v1260 = vrot.slane %v435, 2
        %v1261 = vrot.slane %v436, 2
        %v1262 = vrot.slane %v437, 2
        %v1263 = vrot.slane %v438, 2
        %v1264 = vrot.slane %v439, 2
        %v1265 = vrot.slane %v440, 2
        %v1266 = vrot.slane %v441, 2
        %v1267 = vrot.slane %v442, 2
        %v1268 = vrot.slane %v443, 2
        %v1269 = vrot.slane %v444, 2
        %v1270 = vrot.slane %v445, 2
        %vm1271 = vcmp.lt.s32.totalorder %v489, 6
        %v1272 = vsel %vm1271, %v1269, %v1270
        %v1273 = vsel %vm1271, %v1268, %v1269
        %v1274 = vsel %vm1271, %v1267, %v1268
        %v1275 = vsel %vm1271, %v1266, %v1267
        %v1276 = vsel %vm1271, %v1265, %v1266
        %v1277 = vsel %vm1271, %v1264, %v1265
        %v1278 = vsel %vm1271, %v1263, %v1264
        %v1279 = vsel %vm1271, %v1262, %v1263
        %v1280 = vsel %vm1271, %v1261, %v1262
        %v1281 = vsel %vm1271, %v1260, %v1261
        %v1282 = vsel %vm1271, %v1259, %v1260
        %v1283 = vsel %vm1271, %v1258, %v1259
        %v1284 = vsel %vm1271, %v1257, %v1258
        %v1285 = vsel %vm1271, %v1256, %v1257
        %v1286 = vsel %vm1271, %v1255, %v1256
        %v1287 = vsel %vm1271, %v1254, %v1255
        %v1288 = vsel %vm1271, %v1253, %v1254
        %v1289 = vsel %vm1271, %v1252, %v1253
        %v1290 = vsel %vm1271, %v1251, %v1252
        %v1291 = vsel %vm1271, %v1250, %v1251
        %v1292 = vsel %vm1271, %v1249, %v1250
        %v1293 = vsel %vm1271, %v1248, %v1249
        %v1294 = vsel %vm1271, %v1247, %v1248
        %v1295 = vsel %vm1271, %v1246, %v1247
        %v1296 = vsel %vm1271, %v1245, %v1246
        %v1297 = vsel %vm1271, %v1244, %v1245
        %v1298 = vsel %vm1271, %v1243, %v1244
        %v1299 = vsel %vm1271, %v1242, %v1243
        %v1300 = vsel %vm1271, %v1241, %v1242
        %v1301 = vsel %vm1271, %v1240, %v1241
        %v1302 = vsel %vm1271, %v1239, %v1240
        %v1303 = vsel %vm1271, %v1270, %v1239
        %s1304 = scalar_lea.vmem %s1, 128
        %v1305 = vld [vmem:[%s1304] sm:$0xff]
        %v1306 = vld [vmem:[%s1304 + $0x8] sm:$0xff]
        %v1307 = vld [vmem:[%s1304 + $0x10] sm:$0xff]
        %v1308 = vld [vmem:[%s1304 + $0x18] sm:$0xff]
        %v1309 = vld [vmem:[%s1304 + $0x20] sm:$0xff]
        %v1310 = vld [vmem:[%s1304 + $0x28] sm:$0xff]
        %v1311 = vld [vmem:[%s1304 + $0x30] sm:$0xff]
        %v1312 = vld [vmem:[%s1304 + $0x38] sm:$0xff]
        %v1314 = vsel %vm532, %v1302, 0
        %v1317 = vsel %vm532, %v1301, 0
        %v1320 = vsel %vm532, %v1300, 0
        %v1323 = vsel %vm532, %v1299, 0
        %v1326 = vsel %vm532, %v1298, 0
        %v1329 = vsel %vm532, %v1297, 0
        %v1332 = vsel %vm532, %v1296, 0
        %v1335 = vsel %vm532, %v1295, 0
        %v1338 = vsel %vm532, %v1294, 0
        %v1341 = vsel %vm532, %v1293, 0
        %v1344 = vsel %vm532, %v1292, 0
        %v1347 = vsel %vm532, %v1291, 0
        %v1350 = vsel %vm532, %v1290, 0
        %v1353 = vsel %vm532, %v1289, 0
        %v1356 = vsel %vm532, %v1288, 0
        %v1359 = vsel %vm532, %v1287, 0
        %v1362 = vsel %vm532, %v1286, 0
        %v1365 = vsel %vm532, %v1285, 0
        %v1368 = vsel %vm532, %v1284, 0
        %v1371 = vsel %vm532, %v1283, 0
        %v1374 = vsel %vm532, %v1282, 0
        %v1377 = vsel %vm532, %v1281, 0
        %v1380 = vsel %vm532, %v1280, 0
        %v1383 = vsel %vm532, %v1279, 0
        %v1386 = vsel %vm532, %v1278, 0
        %v1389 = vsel %vm532, %v1277, 0
        %v1392 = vsel %vm532, %v1276, 0
        %v1395 = vsel %vm532, %v1275, 0
        %v1398 = vsel %vm532, %v1274, 0
        %v1401 = vsel %vm532, %v1273, 0
        %v1404 = vsel %vm532, %v1272, 0
        %v1407 = vsel %vm532, %v1303, 0
        %1409 = vmatprep.subr.mxu0 %v1306
        %1410 = vmatpush1.msra.mxu0 %v1305
        %1411 = vmatprep.subr.mxu0 %v1308
        %1412 = vmatpush1.msra.mxu0 %v1307
        %1413 = vmatprep.subr.mxu0 %v1310
        %1414 = vmatpush1.msra.mxu0 %v1309
        %1415 = vmatprep.subr.mxu0 %v1312
        %1416 = vmatpush1.msra.mxu0 %v1311
        %1417 = vmatprep.subr.mxu0 0.0
        %1418 = vmatpush1.msra.mxu0 0.0
        %1419 = vmatprep.subr.mxu0 0.0
        %1420 = vmatpush1.msra.mxu0 0.0
        %1421 = vmatprep.subr.mxu0 0.0
        %1422 = vmatpush1.msra.mxu0 0.0
        %1423 = vmatprep.subr.mxu0 0.0
        %1424 = vmatpush1.msra.mxu0 0.0
        %1425 = vmatprep.subr.mxu0 0.0
        %1426 = vmatpush1.msra.mxu0 0.0
        %1427 = vmatprep.subr.mxu0 0.0
        %1428 = vmatpush1.msra.mxu0 0.0
        %1429 = vmatprep.subr.mxu0 0.0
        %1430 = vmatpush1.msra.mxu0 0.0
        %1431 = vmatprep.subr.mxu0 0.0
        %1432 = vmatpush1.msra.mxu0 0.0
        %1433 = vmatprep.subr.mxu0 0.0
        %1434 = vmatpush1.msra.mxu0 0.0
        %1435 = vmatprep.subr.mxu0 0.0
        %1436 = vmatpush1.msra.mxu0 0.0
        %1437 = vmatprep.subr.mxu0 0.0
        %1438 = vmatpush1.msra.mxu0 0.0
        %1439 = vmatprep.subr.mxu0 0.0
        %1440 = vmatpush1.msra.mxu0 0.0
        %1441 = vmatprep.subr.mxu0 0.0
        %1442 = vmatpush1.msra.mxu0 0.0
        %1443 = vmatprep.subr.mxu0 0.0
        %1444 = vmatpush1.msra.mxu0 0.0
        %1445 = vmatprep.subr.mxu0 0.0
        %1446 = vmatpush1.msra.mxu0 0.0
        %1447 = vmatprep.subr.mxu0 0.0
        %1448 = vmatpush1.msra.mxu0 0.0
        %1449 = vmatprep.subr.mxu0 0.0
        %1450 = vmatpush1.msra.mxu0 0.0
        %1451 = vmatprep.subr.mxu0 0.0
        %1452 = vmatpush1.msra.mxu0 0.0
        %1453 = vmatprep.subr.mxu0 0.0
        %1454 = vmatpush1.msra.mxu0 0.0
        %1455 = vmatprep.subr.mxu0 0.0
        %1456 = vmatpush1.msra.mxu0 0.0
        %1457 = vmatprep.subr.mxu0 0.0
        %1458 = vmatpush1.msra.mxu0 0.0
        %1459 = vmatprep.subr.mxu0 0.0
        %1460 = vmatpush1.msra.mxu0 0.0
        %1461 = vmatprep.subr.mxu0 0.0
        %1462 = vmatpush1.msra.mxu0 0.0
        %1463 = vmatprep.subr.mxu0 0.0
        %1464 = vmatpush1.msra.mxu0 0.0
        %1465 = vmatprep.subr.mxu0 0.0
        %1466 = vmatpush1.msra.mxu0 0.0
        %1467 = vmatprep.subr.mxu0 0.0
        %1468 = vmatpush1.msra.mxu0 0.0
        %1469 = vmatprep.subr.mxu0 0.0
        %1470 = vmatpush1.msra.mxu0 0.0
        %1471 = vmatprep.subr.mxu0 0.0
        %1472 = vmatpush1.msra.mxu0 0.0
        %1473 = vmatprep.mubr.f32.mxu0 0.0
        %1474 = vmatmul.mubr.f32.gmra.mrb[0].mxu0 %v1314
        %v1475 = vpop.f32.mrb[0].mxu0
        %v1476 = vadd.f32 0.0, %v1475
        %v1477 = vpop.f32.mrb[0].mxu0
        %v1478 = vadd.f32 0.0, %v1477
        %1479 = vmatprep.mubr.f32.mxu0 0.0
        %1480 = vmatmul.mubr.f32.gmra.mrb[0].mxu0 %v1317
        %v1481 = vpop.f32.mrb[0].mxu0
        %v1482 = vadd.f32 0.0, %v1481
        %v1483 = vpop.f32.mrb[0].mxu0
        %v1484 = vadd.f32 0.0, %v1483
        %1485 = vmatprep.mubr.f32.mxu0 0.0
        %1486 = vmatmul.mubr.f32.gmra.mrb[0].mxu0 %v1320
        %v1487 = vpop.f32.mrb[0].mxu0
        %v1488 = vadd.f32 0.0, %v1487
        %v1489 = vpop.f32.mrb[0].mxu0
        %v1490 = vadd.f32 0.0, %v1489
        %1491 = vmatprep.mubr.f32.mxu0 0.0
        %1492 = vmatmul.mubr.f32.gmra.mrb[0].mxu0 %v1323
        %v1493 = vpop.f32.mrb[0].mxu0
        %v1494 = vadd.f32 0.0, %v1493
        %v1495 = vpop.f32.mrb[0].mxu0
        %v1496 = vadd.f32 0.0, %v1495
        %1497 = vmatprep.mubr.f32.mxu0 0.0
        %1498 = vmatmul.mubr.f32.gmra.mrb[0].mxu0 %v1326
        %v1499 = vpop.f32.mrb[0].mxu0
        %v1500 = vadd.f32 0.0, %v1499
        %v1501 = vpop.f32.mrb[0].mxu0
        %v1502 = vadd.f32 0.0, %v1501
        %1503 = vmatprep.mubr.f32.mxu0 0.0
        %1504 = vmatmul.mubr.f32.gmra.mrb[0].mxu0 %v1329
        %v1505 = vpop.f32.mrb[0].mxu0
        %v1506 = vadd.f32 0.0, %v1505
        %v1507 = vpop.f32.mrb[0].mxu0
        %v1508 = vadd.f32 0.0, %v1507
        %1509 = vmatprep.mubr.f32.mxu0 0.0
        %1510 = vmatmul.mubr.f32.gmra.mrb[0].mxu0 %v1332
        %v1511 = vpop.f32.mrb[0].mxu0
        %v1512 = vadd.f32 0.0, %v1511
        %v1513 = vpop.f32.mrb[0].mxu0
        %v1514 = vadd.f32 0.0, %v1513
        %1515 = vmatprep.mubr.f32.mxu0 0.0
        %1516 = vmatmul.mubr.f32.gmra.mrb[0].mxu0 %v1335
        %v1517 = vpop.f32.mrb[0].mxu0
        %v1518 = vadd.f32 0.0, %v1517
        %v1519 = vpop.f32.mrb[0].mxu0
        %v1520 = vadd.f32 0.0, %v1519
        %1521 = vmatprep.mubr.f32.mxu0 0.0
        %1522 = vmatmul.mubr.f32.gmra.mrb[0].mxu0 %v1338
        %v1523 = vpop.f32.mrb[0].mxu0
        %v1524 = vadd.f32 0.0, %v1523
        %v1525 = vpop.f32.mrb[0].mxu0
        %v1526 = vadd.f32 0.0, %v1525
        %1527 = vmatprep.mubr.f32.mxu0 0.0
        %1528 = vmatmul.mubr.f32.gmra.mrb[0].mxu0 %v1341
        %v1529 = vpop.f32.mrb[0].mxu0
        %v1530 = vadd.f32 0.0, %v1529
        %v1531 = vpop.f32.mrb[0].mxu0
        %v1532 = vadd.f32 0.0, %v1531
        %1533 = vmatprep.mubr.f32.mxu0 0.0
        %1534 = vmatmul.mubr.f32.gmra.mrb[0].mxu0 %v1344
        %v1535 = vpop.f32.mrb[0].mxu0
        %v1536 = vadd.f32 0.0, %v1535
        %v1537 = vpop.f32.mrb[0].mxu0
        %v1538 = vadd.f32 0.0, %v1537
        %1539 = vmatprep.mubr.f32.mxu0 0.0
        %1540 = vmatmul.mubr.f32.gmra.mrb[0].mxu0 %v1347
        %v1541 = vpop.f32.mrb[0].mxu0
        %v1542 = vadd.f32 0.0, %v1541
        %v1543 = vpop.f32.mrb[0].mxu0
        %v1544 = vadd.f32 0.0, %v1543
        %1545 = vmatprep.mubr.f32.mxu0 0.0
        %1546 = vmatmul.mubr.f32.gmra.mrb[0].mxu0 %v1350
        %v1547 = vpop.f32.mrb[0].mxu0
        %v1548 = vadd.f32 0.0, %v1547
        %v1549 = vpop.f32.mrb[0].mxu0
        %v1550 = vadd.f32 0.0, %v1549
        %1551 = vmatprep.mubr.f32.mxu0 0.0
        %1552 = vmatmul.mubr.f32.gmra.mrb[0].mxu0 %v1353
        %v1553 = vpop.f32.mrb[0].mxu0
        %v1554 = vadd.f32 0.0, %v1553
        %v1555 = vpop.f32.mrb[0].mxu0
        %v1556 = vadd.f32 0.0, %v1555
        %1557 = vmatprep.mubr.f32.mxu0 0.0
        %1558 = vmatmul.mubr.f32.gmra.mrb[0].mxu0 %v1356
        %v1559 = vpop.f32.mrb[0].mxu0
        %v1560 = vadd.f32 0.0, %v1559
        %v1561 = vpop.f32.mrb[0].mxu0
        %v1562 = vadd.f32 0.0, %v1561
        %1563 = vmatprep.mubr.f32.mxu0 0.0
        %1564 = vmatmul.mubr.f32.gmra.mrb[0].mxu0 %v1359
        %v1565 = vpop.f32.mrb[0].mxu0
        %v1566 = vadd.f32 0.0, %v1565
        %v1567 = vpop.f32.mrb[0].mxu0
        %v1568 = vadd.f32 0.0, %v1567
        %1569 = vmatprep.mubr.f32.mxu0 0.0
        %1570 = vmatmul.mubr.f32.gmra.mrb[0].mxu0 %v1362
        %v1571 = vpop.f32.mrb[0].mxu0
        %v1572 = vadd.f32 0.0, %v1571
        %v1573 = vpop.f32.mrb[0].mxu0
        %v1574 = vadd.f32 0.0, %v1573
        %1575 = vmatprep.mubr.f32.mxu0 0.0
        %1576 = vmatmul.mubr.f32.gmra.mrb[0].mxu0 %v1365
        %v1577 = vpop.f32.mrb[0].mxu0
        %v1578 = vadd.f32 0.0, %v1577
        %v1579 = vpop.f32.mrb[0].mxu0
        %v1580 = vadd.f32 0.0, %v1579
        %1581 = vmatprep.mubr.f32.mxu0 0.0
        %1582 = vmatmul.mubr.f32.gmra.mrb[0].mxu0 %v1368
        %v1583 = vpop.f32.mrb[0].mxu0
        %v1584 = vadd.f32 0.0, %v1583
        %v1585 = vpop.f32.mrb[0].mxu0
        %v1586 = vadd.f32 0.0, %v1585
        %1587 = vmatprep.mubr.f32.mxu0 0.0
        %1588 = vmatmul.mubr.f32.gmra.mrb[0].mxu0 %v1371
        %v1589 = vpop.f32.mrb[0].mxu0
        %v1590 = vadd.f32 0.0, %v1589
        %v1591 = vpop.f32.mrb[0].mxu0
        %v1592 = vadd.f32 0.0, %v1591
        %1593 = vmatprep.mubr.f32.mxu0 0.0
        %1594 = vmatmul.mubr.f32.gmra.mrb[0].mxu0 %v1374
        %v1595 = vpop.f32.mrb[0].mxu0
        %v1596 = vadd.f32 0.0, %v1595
        %v1597 = vpop.f32.mrb[0].mxu0
        %v1598 = vadd.f32 0.0, %v1597
        %1599 = vmatprep.mubr.f32.mxu0 0.0
        %1600 = vmatmul.mubr.f32.gmra.mrb[0].mxu0 %v1377
        %v1601 = vpop.f32.mrb[0].mxu0
        %v1602 = vadd.f32 0.0, %v1601
        %v1603 = vpop.f32.mrb[0].mxu0
        %v1604 = vadd.f32 0.0, %v1603
        %1605 = vmatprep.mubr.f32.mxu0 0.0
        %1606 = vmatmul.mubr.f32.gmra.mrb[0].mxu0 %v1380
        %v1607 = vpop.f32.mrb[0].mxu0
        %v1608 = vadd.f32 0.0, %v1607
        %v1609 = vpop.f32.mrb[0].mxu0
        %v1610 = vadd.f32 0.0, %v1609
        %1611 = vmatprep.mubr.f32.mxu0 0.0
        %1612 = vmatmul.mubr.f32.gmra.mrb[0].mxu0 %v1383
        %v1613 = vpop.f32.mrb[0].mxu0
        %v1614 = vadd.f32 0.0, %v1613
        %v1615 = vpop.f32.mrb[0].mxu0
        %v1616 = vadd.f32 0.0, %v1615
        %1617 = vmatprep.mubr.f32.mxu0 0.0
        %1618 = vmatmul.mubr.f32.gmra.mrb[0].mxu0 %v1386
        %v1619 = vpop.f32.mrb[0].mxu0
        %v1620 = vadd.f32 0.0, %v1619
        %v1621 = vpop.f32.mrb[0].mxu0
        %v1622 = vadd.f32 0.0, %v1621
        %1623 = vmatprep.mubr.f32.mxu0 0.0
        %1624 = vmatmul.mubr.f32.gmra.mrb[0].mxu0 %v1389
        %v1625 = vpop.f32.mrb[0].mxu0
        %v1626 = vadd.f32 0.0, %v1625
        %v1627 = vpop.f32.mrb[0].mxu0
        %v1628 = vadd.f32 0.0, %v1627
        %1629 = vmatprep.mubr.f32.mxu0 0.0
        %1630 = vmatmul.mubr.f32.gmra.mrb[0].mxu0 %v1392
        %v1631 = vpop.f32.mrb[0].mxu0
        %v1632 = vadd.f32 0.0, %v1631
        %v1633 = vpop.f32.mrb[0].mxu0
        %v1634 = vadd.f32 0.0, %v1633
        %1635 = vmatprep.mubr.f32.mxu0 0.0
        %1636 = vmatmul.mubr.f32.gmra.mrb[0].mxu0 %v1395
        %v1637 = vpop.f32.mrb[0].mxu0
        %v1638 = vadd.f32 0.0, %v1637
        %v1639 = vpop.f32.mrb[0].mxu0
        %v1640 = vadd.f32 0.0, %v1639
        %1641 = vmatprep.mubr.f32.mxu0 0.0
        %1642 = vmatmul.mubr.f32.gmra.mrb[0].mxu0 %v1398
        %v1643 = vpop.f32.mrb[0].mxu0
        %v1644 = vadd.f32 0.0, %v1643
        %v1645 = vpop.f32.mrb[0].mxu0
        %v1646 = vadd.f32 0.0, %v1645
        %1647 = vmatprep.mubr.f32.mxu0 0.0
        %1648 = vmatmul.mubr.f32.gmra.mrb[0].mxu0 %v1401
        %v1649 = vpop.f32.mrb[0].mxu0
        %v1650 = vadd.f32 0.0, %v1649
        %v1651 = vpop.f32.mrb[0].mxu0
        %v1652 = vadd.f32 0.0, %v1651
        %1653 = vmatprep.mubr.f32.mxu0 0.0
        %1654 = vmatmul.mubr.f32.gmra.mrb[0].mxu0 %v1404
        %v1655 = vpop.f32.mrb[0].mxu0
        %v1656 = vadd.f32 0.0, %v1655
        %v1657 = vpop.f32.mrb[0].mxu0
        %v1658 = vadd.f32 0.0, %v1657
        %1659 = vmatprep.mubr.f32.mxu0 0.0
        %1660 = vmatmul.mubr.f32.gmra.mrb[0].mxu0 %v1407
        %v1661 = vpop.f32.mrb[0].mxu0
        %v1662 = vadd.f32 0.0, %v1661
        %v1663 = vpop.f32.mrb[0].mxu0
        %v1664 = vadd.f32 0.0, %v1663
        %1665 = vdwg.mxu0
        %v1666 = vadd.f32 %v1049, %v1476
        %v1667 = vadd.f32 %v1051, %v1478
        %v1668 = vadd.f32 %v1055, %v1482
        %v1669 = vadd.f32 %v1057, %v1484
        %v1670 = vadd.f32 %v1061, %v1488
        %v1671 = vadd.f32 %v1063, %v1490
        %v1672 = vadd.f32 %v1067, %v1494
        %v1673 = vadd.f32 %v1069, %v1496
        %v1674 = vadd.f32 %v1073, %v1500
        %v1675 = vadd.f32 %v1075, %v1502
        %v1676 = vadd.f32 %v1079, %v1506
        %v1677 = vadd.f32 %v1081, %v1508
        %v1678 = vadd.f32 %v1085, %v1512
        %v1679 = vadd.f32 %v1087, %v1514
        %v1680 = vadd.f32 %v1091, %v1518
        %v1681 = vadd.f32 %v1093, %v1520
        %v1682 = vadd.f32 %v1097, %v1524
        %v1683 = vadd.f32 %v1099, %v1526
        %v1684 = vadd.f32 %v1103, %v1530
        %v1685 = vadd.f32 %v1105, %v1532
        %v1686 = vadd.f32 %v1109, %v1536
        %v1687 = vadd.f32 %v1111, %v1538
        %v1688 = vadd.f32 %v1115, %v1542
        %v1689 = vadd.f32 %v1117, %v1544
        %v1690 = vadd.f32 %v1121, %v1548
        %v1691 = vadd.f32 %v1123, %v1550
        %v1692 = vadd.f32 %v1127, %v1554
        %v1693 = vadd.f32 %v1129, %v1556
        %v1694 = vadd.f32 %v1133, %v1560
        %v1695 = vadd.f32 %v1135, %v1562
        %v1696 = vadd.f32 %v1139, %v1566
        %v1697 = vadd.f32 %v1141, %v1568
        %v1698 = vadd.f32 %v1145, %v1572
        %v1699 = vadd.f32 %v1147, %v1574
        %v1700 = vadd.f32 %v1151, %v1578
        %v1701 = vadd.f32 %v1153, %v1580
        %v1702 = vadd.f32 %v1157, %v1584
        %v1703 = vadd.f32 %v1159, %v1586
        %v1704 = vadd.f32 %v1163, %v1590
        %v1705 = vadd.f32 %v1165, %v1592
        %v1706 = vadd.f32 %v1169, %v1596
        %v1707 = vadd.f32 %v1171, %v1598
        %v1708 = vadd.f32 %v1175, %v1602
        %v1709 = vadd.f32 %v1177, %v1604
        %v1710 = vadd.f32 %v1181, %v1608
        %v1711 = vadd.f32 %v1183, %v1610
        %v1712 = vadd.f32 %v1187, %v1614
        %v1713 = vadd.f32 %v1189, %v1616
        %v1714 = vadd.f32 %v1193, %v1620
        %v1715 = vadd.f32 %v1195, %v1622
        %v1716 = vadd.f32 %v1199, %v1626
        %v1717 = vadd.f32 %v1201, %v1628
        %v1718 = vadd.f32 %v1205, %v1632
        %v1719 = vadd.f32 %v1207, %v1634
        %v1720 = vadd.f32 %v1211, %v1638
        %v1721 = vadd.f32 %v1213, %v1640
        %v1722 = vadd.f32 %v1217, %v1644
        %v1723 = vadd.f32 %v1219, %v1646
        %v1724 = vadd.f32 %v1223, %v1650
        %v1725 = vadd.f32 %v1225, %v1652
        %v1726 = vadd.f32 %v1229, %v1656
        %v1727 = vadd.f32 %v1231, %v1658
        %v1728 = vadd.f32 %v1235, %v1662
        %v1729 = vadd.f32 %v1237, %v1664
        %v1730 = vrot.slane %v414, 3
        %v1731 = vrot.slane %v415, 3
        %v1732 = vrot.slane %v416, 3
        %v1733 = vrot.slane %v417, 3
        %v1734 = vrot.slane %v418, 3
        %v1735 = vrot.slane %v419, 3
        %v1736 = vrot.slane %v420, 3
        %v1737 = vrot.slane %v421, 3
        %v1738 = vrot.slane %v422, 3
        %v1739 = vrot.slane %v423, 3
        %v1740 = vrot.slane %v424, 3
        %v1741 = vrot.slane %v425, 3
        %v1742 = vrot.slane %v426, 3
        %v1743 = vrot.slane %v427, 3
        %v1744 = vrot.slane %v428, 3
        %v1745 = vrot.slane %v429, 3
        %v1746 = vrot.slane %v430, 3
        %v1747 = vrot.slane %v431, 3
        %v1748 = vrot.slane %v432, 3
        %v1749 = vrot.slane %v433, 3
        %v1750 = vrot.slane %v434, 3
        %v1751 = vrot.slane %v435, 3
        %v1752 = vrot.slane %v436, 3
        %v1753 = vrot.slane %v437, 3
        %v1754 = vrot.slane %v438, 3
        %v1755 = vrot.slane %v439, 3
        %v1756 = vrot.slane %v440, 3
        %v1757 = vrot.slane %v441, 3
        %v1758 = vrot.slane %v442, 3
        %v1759 = vrot.slane %v443, 3
        %v1760 = vrot.slane %v444, 3
        %v1761 = vrot.slane %v445, 3
        %vm1762 = vcmp.lt.s32.totalorder %v489, 5
        %v1763 = vsel %vm1762, %v1760, %v1761
        %v1764 = vsel %vm1762, %v1759, %v1760
        %v1765 = vsel %vm1762, %v1758, %v1759
        %v1766 = vsel %vm1762, %v1757, %v1758
        %v1767 = vsel %vm1762, %v1756, %v1757
        %v1768 = vsel %vm1762, %v1755, %v1756
        %v1769 = vsel %vm1762, %v1754, %v1755
        %v1770 = vsel %vm1762, %v1753, %v1754
        %v1771 = vsel %vm1762, %v1752, %v1753
        %v1772 = vsel %vm1762, %v1751, %v1752
        %v1773 = vsel %vm1762, %v1750, %v1751
        %v1774 = vsel %vm1762, %v1749, %v1750
        %v1775 = vsel %vm1762, %v1748, %v1749
        %v1776 = vsel %vm1762, %v1747, %v1748
        %v1777 = vsel %vm1762, %v1746, %v1747
        %v1778 = vsel %vm1762, %v1745, %v1746
        %v1779 = vsel %vm1762, %v1744, %v1745
        %v1780 = vsel %vm1762, %v1743, %v1744
        %v1781 = vsel %vm1762, %v1742, %v1743
        %v1782 = vsel %vm1762, %v1741, %v1742
        %v1783 = vsel %vm1762, %v1740, %v1741
        %v1784 = vsel %vm1762, %v1739, %v1740
        %v1785 = vsel %vm1762, %v1738, %v1739
        %v1786 = vsel %vm1762, %v1737, %v1738
        %v1787 = vsel %vm1762, %v1736, %v1737
        %v1788 = vsel %vm1762, %v1735, %v1736
        %v1789 = vsel %vm1762, %v1734, %v1735
        %v1790 = vsel %vm1762, %v1733, %v1734
        %v1791 = vsel %vm1762, %v1732, %v1733
        %v1792 = vsel %vm1762, %v1731, %v1732
        %v1793 = vsel %vm1762, %v1730, %v1731
        %v1794 = vsel %vm1762, %v1761, %v1730
        %s1795 = scalar_lea.vmem %s1, 192
        %v1796 = vld [vmem:[%s1795] sm:$0xff]
        %v1797 = vld [vmem:[%s1795 + $0x8] sm:$0xff]
        %v1798 = vld [vmem:[%s1795 + $0x10] sm:$0xff]
        %v1799 = vld [vmem:[%s1795 + $0x18] sm:$0xff]
        %v1800 = vld [vmem:[%s1795 + $0x20] sm:$0xff]
        %v1801 = vld [vmem:[%s1795 + $0x28] sm:$0xff]
        %v1802 = vld [vmem:[%s1795 + $0x30] sm:$0xff]
        %v1803 = vld [vmem:[%s1795 + $0x38] sm:$0xff]
        %v1805 = vsel %vm532, %v1793, 0
        %v1808 = vsel %vm532, %v1792, 0
        %v1811 = vsel %vm532, %v1791, 0
        %v1814 = vsel %vm532, %v1790, 0
        %v1817 = vsel %vm532, %v1789, 0
        %v1820 = vsel %vm532, %v1788, 0
        %v1823 = vsel %vm532, %v1787, 0
        %v1826 = vsel %vm532, %v1786, 0
        %v1829 = vsel %vm532, %v1785, 0
        %v1832 = vsel %vm532, %v1784, 0
        %v1835 = vsel %vm532, %v1783, 0
        %v1838 = vsel %vm532, %v1782, 0
        %v1841 = vsel %vm532, %v1781, 0
        %v1844 = vsel %vm532, %v1780, 0
        %v1847 = vsel %vm532, %v1779, 0
        %v1850 = vsel %vm532, %v1778, 0
        %v1853 = vsel %vm532, %v1777, 0
        %v1856 = vsel %vm532, %v1776, 0
        %v1859 = vsel %vm532, %v1775, 0
        %v1862 = vsel %vm532, %v1774, 0
        %v1865 = vsel %vm532, %v1773, 0
        %v1868 = vsel %vm532, %v1772, 0
        %v1871 = vsel %vm532, %v1771, 0
        %v1874 = vsel %vm532, %v1770, 0
        %v1877 = vsel %vm532, %v1769, 0
        %v1880 = vsel %vm532, %v1768, 0
        %v1883 = vsel %vm532, %v1767, 0
        %v1886 = vsel %vm532, %v1766, 0
        %v1889 = vsel %vm532, %v1765, 0
        %v1892 = vsel %vm532, %v1764, 0
        %v1895 = vsel %vm532, %v1763, 0
        %v1898 = vsel %vm532, %v1794, 0
        %1900 = vmatprep.subr.mxu0 %v1797
        %1901 = vmatpush1.msra.mxu0 %v1796
        %1902 = vmatprep.subr.mxu0 %v1799
        %1903 = vmatpush1.msra.mxu0 %v1798
        %1904 = vmatprep.subr.mxu0 %v1801
        %1905 = vmatpush1.msra.mxu0 %v1800
        %1906 = vmatprep.subr.mxu0 %v1803
        %1907 = vmatpush1.msra.mxu0 %v1802
        %1908 = vmatprep.subr.mxu0 0.0
        %1909 = vmatpush1.msra.mxu0 0.0
        %1910 = vmatprep.subr.mxu0 0.0
        %1911 = vmatpush1.msra.mxu0 0.0
        %1912 = vmatprep.subr.mxu0 0.0
        %1913 = vmatpush1.msra.mxu0 0.0
        %1914 = vmatprep.subr.mxu0 0.0
        %1915 = vmatpush1.msra.mxu0 0.0
        %1916 = vmatprep.subr.mxu0 0.0
        %1917 = vmatpush1.msra.mxu0 0.0
        %1918 = vmatprep.subr.mxu0 0.0
        %1919 = vmatpush1.msra.mxu0 0.0
        %1920 = vmatprep.subr.mxu0 0.0
        %1921 = vmatpush1.msra.mxu0 0.0
        %1922 = vmatprep.subr.mxu0 0.0
        %1923 = vmatpush1.msra.mxu0 0.0
        %1924 = vmatprep.subr.mxu0 0.0
        %1925 = vmatpush1.msra.mxu0 0.0
        %1926 = vmatprep.subr.mxu0 0.0
        %1927 = vmatpush1.msra.mxu0 0.0
        %1928 = vmatprep.subr.mxu0 0.0
        %1929 = vmatpush1.msra.mxu0 0.0
        %1930 = vmatprep.subr.mxu0 0.0
        %1931 = vmatpush1.msra.mxu0 0.0
        %1932 = vmatprep.subr.mxu0 0.0
        %1933 = vmatpush1.msra.mxu0 0.0
        %1934 = vmatprep.subr.mxu0 0.0
        %1935 = vmatpush1.msra.mxu0 0.0
        %1936 = vmatprep.subr.mxu0 0.0
        %1937 = vmatpush1.msra.mxu0 0.0
        %1938 = vmatprep.subr.mxu0 0.0
        %1939 = vmatpush1.msra.mxu0 0.0
        %1940 = vmatprep.subr.mxu0 0.0
        %1941 = vmatpush1.msra.mxu0 0.0
        %1942 = vmatprep.subr.mxu0 0.0
        %1943 = vmatpush1.msra.mxu0 0.0
        %1944 = vmatprep.subr.mxu0 0.0
        %1945 = vmatpush1.msra.mxu0 0.0
        %1946 = vmatprep.subr.mxu0 0.0
        %1947 = vmatpush1.msra.mxu0 0.0
        %1948 = vmatprep.subr.mxu0 0.0
        %1949 = vmatpush1.msra.mxu0 0.0
        %1950 = vmatprep.subr.mxu0 0.0
        %1951 = vmatpush1.msra.mxu0 0.0
        %1952 = vmatprep.subr.mxu0 0.0
        %1953 = vmatpush1.msra.mxu0 0.0
        %1954 = vmatprep.subr.mxu0 0.0
        %1955 = vmatpush1.msra.mxu0 0.0
        %1956 = vmatprep.subr.mxu0 0.0
        %1957 = vmatpush1.msra.mxu0 0.0
        %1958 = vmatprep.subr.mxu0 0.0
        %1959 = vmatpush1.msra.mxu0 0.0
        %1960 = vmatprep.subr.mxu0 0.0
        %1961 = vmatpush1.msra.mxu0 0.0
        %1962 = vmatprep.subr.mxu0 0.0
        %1963 = vmatpush1.msra.mxu0 0.0
        %1964 = vmatprep.mubr.f32.mxu0 0.0
        %1965 = vmatmul.mubr.f32.gmra.mrb[0].mxu0 %v1805
        %v1966 = vpop.f32.mrb[0].mxu0
        %v1967 = vadd.f32 0.0, %v1966
        %v1968 = vpop.f32.mrb[0].mxu0
        %v1969 = vadd.f32 0.0, %v1968
        %1970 = vmatprep.mubr.f32.mxu0 0.0
        %1971 = vmatmul.mubr.f32.gmra.mrb[0].mxu0 %v1808
        %v1972 = vpop.f32.mrb[0].mxu0
        %v1973 = vadd.f32 0.0, %v1972
        %v1974 = vpop.f32.mrb[0].mxu0
        %v1975 = vadd.f32 0.0, %v1974
        %1976 = vmatprep.mubr.f32.mxu0 0.0
        %1977 = vmatmul.mubr.f32.gmra.mrb[0].mxu0 %v1811
        %v1978 = vpop.f32.mrb[0].mxu0
        %v1979 = vadd.f32 0.0, %v1978
        %v1980 = vpop.f32.mrb[0].mxu0
        %v1981 = vadd.f32 0.0, %v1980
        %1982 = vmatprep.mubr.f32.mxu0 0.0
        %1983 = vmatmul.mubr.f32.gmra.mrb[0].mxu0 %v1814
        %v1984 = vpop.f32.mrb[0].mxu0
        %v1985 = vadd.f32 0.0, %v1984
        %v1986 = vpop.f32.mrb[0].mxu0
        %v1987 = vadd.f32 0.0, %v1986
        %1988 = vmatprep.mubr.f32.mxu0 0.0
        %1989 = vmatmul.mubr.f32.gmra.mrb[0].mxu0 %v1817
        %v1990 = vpop.f32.mrb[0].mxu0
        %v1991 = vadd.f32 0.0, %v1990
        %v1992 = vpop.f32.mrb[0].mxu0
        %v1993 = vadd.f32 0.0, %v1992
        %1994 = vmatprep.mubr.f32.mxu0 0.0
        %1995 = vmatmul.mubr.f32.gmra.mrb[0].mxu0 %v1820
        %v1996 = vpop.f32.mrb[0].mxu0
        %v1997 = vadd.f32 0.0, %v1996
        %v1998 = vpop.f32.mrb[0].mxu0
        %v1999 = vadd.f32 0.0, %v1998
        %2000 = vmatprep.mubr.f32.mxu0 0.0
        %2001 = vmatmul.mubr.f32.gmra.mrb[0].mxu0 %v1823
        %v2002 = vpop.f32.mrb[0].mxu0
        %v2003 = vadd.f32 0.0, %v2002
        %v2004 = vpop.f32.mrb[0].mxu0
        %v2005 = vadd.f32 0.0, %v2004
        %2006 = vmatprep.mubr.f32.mxu0 0.0
        %2007 = vmatmul.mubr.f32.gmra.mrb[0].mxu0 %v1826
        %v2008 = vpop.f32.mrb[0].mxu0
        %v2009 = vadd.f32 0.0, %v2008
        %v2010 = vpop.f32.mrb[0].mxu0
        %v2011 = vadd.f32 0.0, %v2010
        %2012 = vmatprep.mubr.f32.mxu0 0.0
        %2013 = vmatmul.mubr.f32.gmra.mrb[0].mxu0 %v1829
        %v2014 = vpop.f32.mrb[0].mxu0
        %v2015 = vadd.f32 0.0, %v2014
        %v2016 = vpop.f32.mrb[0].mxu0
        %v2017 = vadd.f32 0.0, %v2016
        %2018 = vmatprep.mubr.f32.mxu0 0.0
        %2019 = vmatmul.mubr.f32.gmra.mrb[0].mxu0 %v1832
        %v2020 = vpop.f32.mrb[0].mxu0
        %v2021 = vadd.f32 0.0, %v2020
        %v2022 = vpop.f32.mrb[0].mxu0
        %v2023 = vadd.f32 0.0, %v2022
        %2024 = vmatprep.mubr.f32.mxu0 0.0
        %2025 = vmatmul.mubr.f32.gmra.mrb[0].mxu0 %v1835
        %v2026 = vpop.f32.mrb[0].mxu0
        %v2027 = vadd.f32 0.0, %v2026
        %v2028 = vpop.f32.mrb[0].mxu0
        %v2029 = vadd.f32 0.0, %v2028
        %2030 = vmatprep.mubr.f32.mxu0 0.0
        %2031 = vmatmul.mubr.f32.gmra.mrb[0].mxu0 %v1838
        %v2032 = vpop.f32.mrb[0].mxu0
        %v2033 = vadd.f32 0.0, %v2032
        %v2034 = vpop.f32.mrb[0].mxu0
        %v2035 = vadd.f32 0.0, %v2034
        %2036 = vmatprep.mubr.f32.mxu0 0.0
        %2037 = vmatmul.mubr.f32.gmra.mrb[0].mxu0 %v1841
        %v2038 = vpop.f32.mrb[0].mxu0
        %v2039 = vadd.f32 0.0, %v2038
        %v2040 = vpop.f32.mrb[0].mxu0
        %v2041 = vadd.f32 0.0, %v2040
        %2042 = vmatprep.mubr.f32.mxu0 0.0
        %2043 = vmatmul.mubr.f32.gmra.mrb[0].mxu0 %v1844
        %v2044 = vpop.f32.mrb[0].mxu0
        %v2045 = vadd.f32 0.0, %v2044
        %v2046 = vpop.f32.mrb[0].mxu0
        %v2047 = vadd.f32 0.0, %v2046
        %2048 = vmatprep.mubr.f32.mxu0 0.0
        %2049 = vmatmul.mubr.f32.gmra.mrb[0].mxu0 %v1847
        %v2050 = vpop.f32.mrb[0].mxu0
        %v2051 = vadd.f32 0.0, %v2050
        %v2052 = vpop.f32.mrb[0].mxu0
        %v2053 = vadd.f32 0.0, %v2052
        %2054 = vmatprep.mubr.f32.mxu0 0.0
        %2055 = vmatmul.mubr.f32.gmra.mrb[0].mxu0 %v1850
        %v2056 = vpop.f32.mrb[0].mxu0
        %v2057 = vadd.f32 0.0, %v2056
        %v2058 = vpop.f32.mrb[0].mxu0
        %v2059 = vadd.f32 0.0, %v2058
        %2060 = vmatprep.mubr.f32.mxu0 0.0
        %2061 = vmatmul.mubr.f32.gmra.mrb[0].mxu0 %v1853
        %v2062 = vpop.f32.mrb[0].mxu0
        %v2063 = vadd.f32 0.0, %v2062
        %v2064 = vpop.f32.mrb[0].mxu0
        %v2065 = vadd.f32 0.0, %v2064
        %2066 = vmatprep.mubr.f32.mxu0 0.0
        %2067 = vmatmul.mubr.f32.gmra.mrb[0].mxu0 %v1856
        %v2068 = vpop.f32.mrb[0].mxu0
        %v2069 = vadd.f32 0.0, %v2068
        %v2070 = vpop.f32.mrb[0].mxu0
        %v2071 = vadd.f32 0.0, %v2070
        %2072 = vmatprep.mubr.f32.mxu0 0.0
        %2073 = vmatmul.mubr.f32.gmra.mrb[0].mxu0 %v1859
        %v2074 = vpop.f32.mrb[0].mxu0
        %v2075 = vadd.f32 0.0, %v2074
        %v2076 = vpop.f32.mrb[0].mxu0
        %v2077 = vadd.f32 0.0, %v2076
        %2078 = vmatprep.mubr.f32.mxu0 0.0
        %2079 = vmatmul.mubr.f32.gmra.mrb[0].mxu0 %v1862
        %v2080 = vpop.f32.mrb[0].mxu0
        %v2081 = vadd.f32 0.0, %v2080
        %v2082 = vpop.f32.mrb[0].mxu0
        %v2083 = vadd.f32 0.0, %v2082
        %2084 = vmatprep.mubr.f32.mxu0 0.0
        %2085 = vmatmul.mubr.f32.gmra.mrb[0].mxu0 %v1865
        %v2086 = vpop.f32.mrb[0].mxu0
        %v2087 = vadd.f32 0.0, %v2086
        %v2088 = vpop.f32.mrb[0].mxu0
        %v2089 = vadd.f32 0.0, %v2088
        %2090 = vmatprep.mubr.f32.mxu0 0.0
        %2091 = vmatmul.mubr.f32.gmra.mrb[0].mxu0 %v1868
        %v2092 = vpop.f32.mrb[0].mxu0
        %v2093 = vadd.f32 0.0, %v2092
        %v2094 = vpop.f32.mrb[0].mxu0
        %v2095 = vadd.f32 0.0, %v2094
        %2096 = vmatprep.mubr.f32.mxu0 0.0
        %2097 = vmatmul.mubr.f32.gmra.mrb[0].mxu0 %v1871
        %v2098 = vpop.f32.mrb[0].mxu0
        %v2099 = vadd.f32 0.0, %v2098
        %v2100 = vpop.f32.mrb[0].mxu0
        %v2101 = vadd.f32 0.0, %v2100
        %2102 = vmatprep.mubr.f32.mxu0 0.0
        %2103 = vmatmul.mubr.f32.gmra.mrb[0].mxu0 %v1874
        %v2104 = vpop.f32.mrb[0].mxu0
        %v2105 = vadd.f32 0.0, %v2104
        %v2106 = vpop.f32.mrb[0].mxu0
        %v2107 = vadd.f32 0.0, %v2106
        %2108 = vmatprep.mubr.f32.mxu0 0.0
        %2109 = vmatmul.mubr.f32.gmra.mrb[0].mxu0 %v1877
        %v2110 = vpop.f32.mrb[0].mxu0
        %v2111 = vadd.f32 0.0, %v2110
        %v2112 = vpop.f32.mrb[0].mxu0
        %v2113 = vadd.f32 0.0, %v2112
        %2114 = vmatprep.mubr.f32.mxu0 0.0
        %2115 = vmatmul.mubr.f32.gmra.mrb[0].mxu0 %v1880
        %v2116 = vpop.f32.mrb[0].mxu0
        %v2117 = vadd.f32 0.0, %v2116
        %v2118 = vpop.f32.mrb[0].mxu0
        %v2119 = vadd.f32 0.0, %v2118
        %2120 = vmatprep.mubr.f32.mxu0 0.0
        %2121 = vmatmul.mubr.f32.gmra.mrb[0].mxu0 %v1883
        %v2122 = vpop.f32.mrb[0].mxu0
        %v2123 = vadd.f32 0.0, %v2122
        %v2124 = vpop.f32.mrb[0].mxu0
        %v2125 = vadd.f32 0.0, %v2124
        %2126 = vmatprep.mubr.f32.mxu0 0.0
        %2127 = vmatmul.mubr.f32.gmra.mrb[0].mxu0 %v1886
        %v2128 = vpop.f32.mrb[0].mxu0
        %v2129 = vadd.f32 0.0, %v2128
        %v2130 = vpop.f32.mrb[0].mxu0
        %v2131 = vadd.f32 0.0, %v2130
        %2132 = vmatprep.mubr.f32.mxu0 0.0
        %2133 = vmatmul.mubr.f32.gmra.mrb[0].mxu0 %v1889
        %v2134 = vpop.f32.mrb[0].mxu0
        %v2135 = vadd.f32 0.0, %v2134
        %v2136 = vpop.f32.mrb[0].mxu0
        %v2137 = vadd.f32 0.0, %v2136
        %2138 = vmatprep.mubr.f32.mxu0 0.0
        %2139 = vmatmul.mubr.f32.gmra.mrb[0].mxu0 %v1892
        %v2140 = vpop.f32.mrb[0].mxu0
        %v2141 = vadd.f32 0.0, %v2140
        %v2142 = vpop.f32.mrb[0].mxu0
        %v2143 = vadd.f32 0.0, %v2142
        %2144 = vmatprep.mubr.f32.mxu0 0.0
        %2145 = vmatmul.mubr.f32.gmra.mrb[0].mxu0 %v1895
        %v2146 = vpop.f32.mrb[0].mxu0
        %v2147 = vadd.f32 0.0, %v2146
        %v2148 = vpop.f32.mrb[0].mxu0
        %v2149 = vadd.f32 0.0, %v2148
        %2150 = vmatprep.mubr.f32.mxu0 0.0
        %2151 = vmatmul.mubr.f32.gmra.mrb[0].mxu0 %v1898
        %v2152 = vpop.f32.mrb[0].mxu0
        %v2153 = vadd.f32 0.0, %v2152
        %v2154 = vpop.f32.mrb[0].mxu0
        %v2155 = vadd.f32 0.0, %v2154
        %2156 = vdwg.mxu0
        %v2157 = vadd.f32 %v1666, %v1967
        %v2158 = vadd.f32 %v1667, %v1969
        %v2159 = vadd.f32 %v1668, %v1973
        %v2160 = vadd.f32 %v1669, %v1975
        %v2161 = vadd.f32 %v1670, %v1979
        %v2162 = vadd.f32 %v1671, %v1981
        %v2163 = vadd.f32 %v1672, %v1985
        %v2164 = vadd.f32 %v1673, %v1987
        %v2165 = vadd.f32 %v1674, %v1991
        %v2166 = vadd.f32 %v1675, %v1993
        %v2167 = vadd.f32 %v1676, %v1997
        %v2168 = vadd.f32 %v1677, %v1999
        %v2169 = vadd.f32 %v1678, %v2003
        %v2170 = vadd.f32 %v1679, %v2005
        %v2171 = vadd.f32 %v1680, %v2009
        %v2172 = vadd.f32 %v1681, %v2011
        %v2173 = vadd.f32 %v1682, %v2015
        %v2174 = vadd.f32 %v1683, %v2017
        %v2175 = vadd.f32 %v1684, %v2021
        %v2176 = vadd.f32 %v1685, %v2023
        %v2177 = vadd.f32 %v1686, %v2027
        %v2178 = vadd.f32 %v1687, %v2029
        %v2179 = vadd.f32 %v1688, %v2033
        %v2180 = vadd.f32 %v1689, %v2035
        %v2181 = vadd.f32 %v1690, %v2039
        %v2182 = vadd.f32 %v1691, %v2041
        %v2183 = vadd.f32 %v1692, %v2045
        %v2184 = vadd.f32 %v1693, %v2047
        %v2185 = vadd.f32 %v1694, %v2051
        %v2186 = vadd.f32 %v1695, %v2053
        %v2187 = vadd.f32 %v1696, %v2057
        %v2188 = vadd.f32 %v1697, %v2059
        %v2189 = vadd.f32 %v1698, %v2063
        %v2190 = vadd.f32 %v1699, %v2065
        %v2191 = vadd.f32 %v1700, %v2069
        %v2192 = vadd.f32 %v1701, %v2071
        %v2193 = vadd.f32 %v1702, %v2075
        %v2194 = vadd.f32 %v1703, %v2077
        %v2195 = vadd.f32 %v1704, %v2081
        %v2196 = vadd.f32 %v1705, %v2083
        %v2197 = vadd.f32 %v1706, %v2087
        %v2198 = vadd.f32 %v1707, %v2089
        %v2199 = vadd.f32 %v1708, %v2093
        %v2200 = vadd.f32 %v1709, %v2095
        %v2201 = vadd.f32 %v1710, %v2099
        %v2202 = vadd.f32 %v1711, %v2101
        %v2203 = vadd.f32 %v1712, %v2105
        %v2204 = vadd.f32 %v1713, %v2107
        %v2205 = vadd.f32 %v1714, %v2111
        %v2206 = vadd.f32 %v1715, %v2113
        %v2207 = vadd.f32 %v1716, %v2117
        %v2208 = vadd.f32 %v1717, %v2119
        %v2209 = vadd.f32 %v1718, %v2123
        %v2210 = vadd.f32 %v1719, %v2125
        %v2211 = vadd.f32 %v1720, %v2129
        %v2212 = vadd.f32 %v1721, %v2131
        %v2213 = vadd.f32 %v1722, %v2135
        %v2214 = vadd.f32 %v1723, %v2137
        %v2215 = vadd.f32 %v1724, %v2141
        %v2216 = vadd.f32 %v1725, %v2143
        %v2217 = vadd.f32 %v1726, %v2147
        %v2218 = vadd.f32 %v1727, %v2149
        %v2219 = vadd.f32 %v1728, %v2153
        %v2220 = vadd.f32 %v1729, %v2155
        %v2221 = vrot.slane %v414, 4
        %v2222 = vrot.slane %v415, 4
        %v2223 = vrot.slane %v416, 4
        %v2224 = vrot.slane %v417, 4
        %v2225 = vrot.slane %v418, 4
        %v2226 = vrot.slane %v419, 4
        %v2227 = vrot.slane %v420, 4
        %v2228 = vrot.slane %v421, 4
        %v2229 = vrot.slane %v422, 4
        %v2230 = vrot.slane %v423, 4
        %v2231 = vrot.slane %v424, 4
        %v2232 = vrot.slane %v425, 4
        %v2233 = vrot.slane %v426, 4
        %v2234 = vrot.slane %v427, 4
        %v2235 = vrot.slane %v428, 4
        %v2236 = vrot.slane %v429, 4
        %v2237 = vrot.slane %v430, 4
        %v2238 = vrot.slane %v431, 4
        %v2239 = vrot.slane %v432, 4
        %v2240 = vrot.slane %v433, 4
        %v2241 = vrot.slane %v434, 4
        %v2242 = vrot.slane %v435, 4
        %v2243 = vrot.slane %v436, 4
        %v2244 = vrot.slane %v437, 4
        %v2245 = vrot.slane %v438, 4
        %v2246 = vrot.slane %v439, 4
        %v2247 = vrot.slane %v440, 4
        %v2248 = vrot.slane %v441, 4
        %v2249 = vrot.slane %v442, 4
        %v2250 = vrot.slane %v443, 4
        %v2251 = vrot.slane %v444, 4
        %v2252 = vrot.slane %v445, 4
        %vm2253 = vcmp.lt.s32.totalorder %v489, 4
        %v2254 = vsel %vm2253, %v2251, %v2252
        %v2255 = vsel %vm2253, %v2250, %v2251
        %v2256 = vsel %vm2253, %v2249, %v2250
        %v2257 = vsel %vm2253, %v2248, %v2249
        %v2258 = vsel %vm2253, %v2247, %v2248
        %v2259 = vsel %vm2253, %v2246, %v2247
        %v2260 = vsel %vm2253, %v2245, %v2246
        %v2261 = vsel %vm2253, %v2244, %v2245
        %v2262 = vsel %vm2253, %v2243, %v2244
        %v2263 = vsel %vm2253, %v2242, %v2243
        %v2264 = vsel %vm2253, %v2241, %v2242
        %v2265 = vsel %vm2253, %v2240, %v2241
        %v2266 = vsel %vm2253, %v2239, %v2240
        %v2267 = vsel %vm2253, %v2238, %v2239
        %v2268 = vsel %vm2253, %v2237, %v2238
        %v2269 = vsel %vm2253, %v2236, %v2237
        %v2270 = vsel %vm2253, %v2235, %v2236
        %v2271 = vsel %vm2253, %v2234, %v2235
        %v2272 = vsel %vm2253, %v2233, %v2234
        %v2273 = vsel %vm2253, %v2232, %v2233
        %v2274 = vsel %vm2253, %v2231, %v2232
        %v2275 = vsel %vm2253, %v2230, %v2231
        %v2276 = vsel %vm2253, %v2229, %v2230
        %v2277 = vsel %vm2253, %v2228, %v2229
        %v2278 = vsel %vm2253, %v2227, %v2228
        %v2279 = vsel %vm2253, %v2226, %v2227
        %v2280 = vsel %vm2253, %v2225, %v2226
        %v2281 = vsel %vm2253, %v2224, %v2225
        %v2282 = vsel %vm2253, %v2223, %v2224
        %v2283 = vsel %vm2253, %v2222, %v2223
        %v2284 = vsel %vm2253, %v2221, %v2222
        %v2285 = vsel %vm2253, %v2252, %v2221
        %s2286 = scalar_lea.vmem %s1, 256
        %v2287 = vld [vmem:[%s2286] sm:$0xff]
        %v2288 = vld [vmem:[%s2286 + $0x8] sm:$0xff]
        %v2289 = vld [vmem:[%s2286 + $0x10] sm:$0xff]
        %v2290 = vld [vmem:[%s2286 + $0x18] sm:$0xff]
        %v2291 = vld [vmem:[%s2286 + $0x20] sm:$0xff]
        %v2292 = vld [vmem:[%s2286 + $0x28] sm:$0xff]
        %v2293 = vld [vmem:[%s2286 + $0x30] sm:$0xff]
        %v2294 = vld [vmem:[%s2286 + $0x38] sm:$0xff]
        %v2296 = vsel %vm532, %v2284, 0
        %v2299 = vsel %vm532, %v2283, 0
        %v2302 = vsel %vm532, %v2282, 0
        %v2305 = vsel %vm532, %v2281, 0
        %v2308 = vsel %vm532, %v2280, 0
        %v2311 = vsel %vm532, %v2279, 0
        %v2314 = vsel %vm532, %v2278, 0
        %v2317 = vsel %vm532, %v2277, 0
        %v2320 = vsel %vm532, %v2276, 0
        %v2323 = vsel %vm532, %v2275, 0
        %v2326 = vsel %vm532, %v2274, 0
        %v2329 = vsel %vm532, %v2273, 0
        %v2332 = vsel %vm532, %v2272, 0
        %v2335 = vsel %vm532, %v2271, 0
        %v2338 = vsel %vm532, %v2270, 0
        %v2341 = vsel %vm532, %v2269, 0
        %v2344 = vsel %vm532, %v2268, 0
        %v2347 = vsel %vm532, %v2267, 0
        %v2350 = vsel %vm532, %v2266, 0
        %v2353 = vsel %vm532, %v2265, 0
        %v2356 = vsel %vm532, %v2264, 0
        %v2359 = vsel %vm532, %v2263, 0
        %v2362 = vsel %vm532, %v2262, 0
        %v2365 = vsel %vm532, %v2261, 0
        %v2368 = vsel %vm532, %v2260, 0
        %v2371 = vsel %vm532, %v2259, 0
        %v2374 = vsel %vm532, %v2258, 0
        %v2377 = vsel %vm532, %v2257, 0
        %v2380 = vsel %vm532, %v2256, 0
        %v2383 = vsel %vm532, %v2255, 0
        %v2386 = vsel %vm532, %v2254, 0
        %v2389 = vsel %vm532, %v2285, 0
        %2391 = vmatprep.subr.mxu0 %v2288
        %2392 = vmatpush1.msra.mxu0 %v2287
        %2393 = vmatprep.subr.mxu0 %v2290
        %2394 = vmatpush1.msra.mxu0 %v2289
        %2395 = vmatprep.subr.mxu0 %v2292
        %2396 = vmatpush1.msra.mxu0 %v2291
        %2397 = vmatprep.subr.mxu0 %v2294
        %2398 = vmatpush1.msra.mxu0 %v2293
        %2399 = vmatprep.subr.mxu0 0.0
        %2400 = vmatpush1.msra.mxu0 0.0
        %2401 = vmatprep.subr.mxu0 0.0
        %2402 = vmatpush1.msra.mxu0 0.0
        %2403 = vmatprep.subr.mxu0 0.0
        %2404 = vmatpush1.msra.mxu0 0.0
        %2405 = vmatprep.subr.mxu0 0.0
        %2406 = vmatpush1.msra.mxu0 0.0
        %2407 = vmatprep.subr.mxu0 0.0
        %2408 = vmatpush1.msra.mxu0 0.0
        %2409 = vmatprep.subr.mxu0 0.0
        %2410 = vmatpush1.msra.mxu0 0.0
        %2411 = vmatprep.subr.mxu0 0.0
        %2412 = vmatpush1.msra.mxu0 0.0
        %2413 = vmatprep.subr.mxu0 0.0
        %2414 = vmatpush1.msra.mxu0 0.0
        %2415 = vmatprep.subr.mxu0 0.0
        %2416 = vmatpush1.msra.mxu0 0.0
        %2417 = vmatprep.subr.mxu0 0.0
        %2418 = vmatpush1.msra.mxu0 0.0
        %2419 = vmatprep.subr.mxu0 0.0
        %2420 = vmatpush1.msra.mxu0 0.0
        %2421 = vmatprep.subr.mxu0 0.0
        %2422 = vmatpush1.msra.mxu0 0.0
        %2423 = vmatprep.subr.mxu0 0.0
        %2424 = vmatpush1.msra.mxu0 0.0
        %2425 = vmatprep.subr.mxu0 0.0
        %2426 = vmatpush1.msra.mxu0 0.0
        %2427 = vmatprep.subr.mxu0 0.0
        %2428 = vmatpush1.msra.mxu0 0.0
        %2429 = vmatprep.subr.mxu0 0.0
        %2430 = vmatpush1.msra.mxu0 0.0
        %2431 = vmatprep.subr.mxu0 0.0
        %2432 = vmatpush1.msra.mxu0 0.0
        %2433 = vmatprep.subr.mxu0 0.0
        %2434 = vmatpush1.msra.mxu0 0.0
        %2435 = vmatprep.subr.mxu0 0.0
        %2436 = vmatpush1.msra.mxu0 0.0
        %2437 = vmatprep.subr.mxu0 0.0
        %2438 = vmatpush1.msra.mxu0 0.0
        %2439 = vmatprep.subr.mxu0 0.0
        %2440 = vmatpush1.msra.mxu0 0.0
        %2441 = vmatprep.subr.mxu0 0.0
        %2442 = vmatpush1.msra.mxu0 0.0
        %2443 = vmatprep.subr.mxu0 0.0
        %2444 = vmatpush1.msra.mxu0 0.0
        %2445 = vmatprep.subr.mxu0 0.0
        %2446 = vmatpush1.msra.mxu0 0.0
        %2447 = vmatprep.subr.mxu0 0.0
        %2448 = vmatpush1.msra.mxu0 0.0
        %2449 = vmatprep.subr.mxu0 0.0
        %2450 = vmatpush1.msra.mxu0 0.0
        %2451 = vmatprep.subr.mxu0 0.0
        %2452 = vmatpush1.msra.mxu0 0.0
        %2453 = vmatprep.subr.mxu0 0.0
        %2454 = vmatpush1.msra.mxu0 0.0
        %2455 = vmatprep.mubr.f32.mxu0 0.0
        %2456 = vmatmul.mubr.f32.gmra.mrb[0].mxu0 %v2296
        %v2457 = vpop.f32.mrb[0].mxu0
        %v2458 = vadd.f32 0.0, %v2457
        %v2459 = vpop.f32.mrb[0].mxu0
        %v2460 = vadd.f32 0.0, %v2459
        %2461 = vmatprep.mubr.f32.mxu0 0.0
        %2462 = vmatmul.mubr.f32.gmra.mrb[0].mxu0 %v2299
        %v2463 = vpop.f32.mrb[0].mxu0
        %v2464 = vadd.f32 0.0, %v2463
        %v2465 = vpop.f32.mrb[0].mxu0
        %v2466 = vadd.f32 0.0, %v2465
        %2467 = vmatprep.mubr.f32.mxu0 0.0
        %2468 = vmatmul.mubr.f32.gmra.mrb[0].mxu0 %v2302
        %v2469 = vpop.f32.mrb[0].mxu0
        %v2470 = vadd.f32 0.0, %v2469
        %v2471 = vpop.f32.mrb[0].mxu0
        %v2472 = vadd.f32 0.0, %v2471
        %2473 = vmatprep.mubr.f32.mxu0 0.0
        %2474 = vmatmul.mubr.f32.gmra.mrb[0].mxu0 %v2305
        %v2475 = vpop.f32.mrb[0].mxu0
        %v2476 = vadd.f32 0.0, %v2475
        %v2477 = vpop.f32.mrb[0].mxu0
        %v2478 = vadd.f32 0.0, %v2477
        %2479 = vmatprep.mubr.f32.mxu0 0.0
        %2480 = vmatmul.mubr.f32.gmra.mrb[0].mxu0 %v2308
        %v2481 = vpop.f32.mrb[0].mxu0
        %v2482 = vadd.f32 0.0, %v2481
        %v2483 = vpop.f32.mrb[0].mxu0
        %v2484 = vadd.f32 0.0, %v2483
        %2485 = vmatprep.mubr.f32.mxu0 0.0
        %2486 = vmatmul.mubr.f32.gmra.mrb[0].mxu0 %v2311
        %v2487 = vpop.f32.mrb[0].mxu0
        %v2488 = vadd.f32 0.0, %v2487
        %v2489 = vpop.f32.mrb[0].mxu0
        %v2490 = vadd.f32 0.0, %v2489
        %2491 = vmatprep.mubr.f32.mxu0 0.0
        %2492 = vmatmul.mubr.f32.gmra.mrb[0].mxu0 %v2314
        %v2493 = vpop.f32.mrb[0].mxu0
        %v2494 = vadd.f32 0.0, %v2493
        %v2495 = vpop.f32.mrb[0].mxu0
        %v2496 = vadd.f32 0.0, %v2495
        %2497 = vmatprep.mubr.f32.mxu0 0.0
        %2498 = vmatmul.mubr.f32.gmra.mrb[0].mxu0 %v2317
        %v2499 = vpop.f32.mrb[0].mxu0
        %v2500 = vadd.f32 0.0, %v2499
        %v2501 = vpop.f32.mrb[0].mxu0
        %v2502 = vadd.f32 0.0, %v2501
        %2503 = vmatprep.mubr.f32.mxu0 0.0
        %2504 = vmatmul.mubr.f32.gmra.mrb[0].mxu0 %v2320
        %v2505 = vpop.f32.mrb[0].mxu0
        %v2506 = vadd.f32 0.0, %v2505
        %v2507 = vpop.f32.mrb[0].mxu0
        %v2508 = vadd.f32 0.0, %v2507
        %2509 = vmatprep.mubr.f32.mxu0 0.0
        %2510 = vmatmul.mubr.f32.gmra.mrb[0].mxu0 %v2323
        %v2511 = vpop.f32.mrb[0].mxu0
        %v2512 = vadd.f32 0.0, %v2511
        %v2513 = vpop.f32.mrb[0].mxu0
        %v2514 = vadd.f32 0.0, %v2513
        %2515 = vmatprep.mubr.f32.mxu0 0.0
        %2516 = vmatmul.mubr.f32.gmra.mrb[0].mxu0 %v2326
        %v2517 = vpop.f32.mrb[0].mxu0
        %v2518 = vadd.f32 0.0, %v2517
        %v2519 = vpop.f32.mrb[0].mxu0
        %v2520 = vadd.f32 0.0, %v2519
        %2521 = vmatprep.mubr.f32.mxu0 0.0
        %2522 = vmatmul.mubr.f32.gmra.mrb[0].mxu0 %v2329
        %v2523 = vpop.f32.mrb[0].mxu0
        %v2524 = vadd.f32 0.0, %v2523
        %v2525 = vpop.f32.mrb[0].mxu0
        %v2526 = vadd.f32 0.0, %v2525
        %2527 = vmatprep.mubr.f32.mxu0 0.0
        %2528 = vmatmul.mubr.f32.gmra.mrb[0].mxu0 %v2332
        %v2529 = vpop.f32.mrb[0].mxu0
        %v2530 = vadd.f32 0.0, %v2529
        %v2531 = vpop.f32.mrb[0].mxu0
        %v2532 = vadd.f32 0.0, %v2531
        %2533 = vmatprep.mubr.f32.mxu0 0.0
        %2534 = vmatmul.mubr.f32.gmra.mrb[0].mxu0 %v2335
        %v2535 = vpop.f32.mrb[0].mxu0
        %v2536 = vadd.f32 0.0, %v2535
        %v2537 = vpop.f32.mrb[0].mxu0
        %v2538 = vadd.f32 0.0, %v2537
        %2539 = vmatprep.mubr.f32.mxu0 0.0
        %2540 = vmatmul.mubr.f32.gmra.mrb[0].mxu0 %v2338
        %v2541 = vpop.f32.mrb[0].mxu0
        %v2542 = vadd.f32 0.0, %v2541
        %v2543 = vpop.f32.mrb[0].mxu0
        %v2544 = vadd.f32 0.0, %v2543
        %2545 = vmatprep.mubr.f32.mxu0 0.0
        %2546 = vmatmul.mubr.f32.gmra.mrb[0].mxu0 %v2341
        %v2547 = vpop.f32.mrb[0].mxu0
        %v2548 = vadd.f32 0.0, %v2547
        %v2549 = vpop.f32.mrb[0].mxu0
        %v2550 = vadd.f32 0.0, %v2549
        %2551 = vmatprep.mubr.f32.mxu0 0.0
        %2552 = vmatmul.mubr.f32.gmra.mrb[0].mxu0 %v2344
        %v2553 = vpop.f32.mrb[0].mxu0
        %v2554 = vadd.f32 0.0, %v2553
        %v2555 = vpop.f32.mrb[0].mxu0
        %v2556 = vadd.f32 0.0, %v2555
        %2557 = vmatprep.mubr.f32.mxu0 0.0
        %2558 = vmatmul.mubr.f32.gmra.mrb[0].mxu0 %v2347
        %v2559 = vpop.f32.mrb[0].mxu0
        %v2560 = vadd.f32 0.0, %v2559
        %v2561 = vpop.f32.mrb[0].mxu0
        %v2562 = vadd.f32 0.0, %v2561
        %2563 = vmatprep.mubr.f32.mxu0 0.0
        %2564 = vmatmul.mubr.f32.gmra.mrb[0].mxu0 %v2350
        %v2565 = vpop.f32.mrb[0].mxu0
        %v2566 = vadd.f32 0.0, %v2565
        %v2567 = vpop.f32.mrb[0].mxu0
        %v2568 = vadd.f32 0.0, %v2567
        %2569 = vmatprep.mubr.f32.mxu0 0.0
        %2570 = vmatmul.mubr.f32.gmra.mrb[0].mxu0 %v2353
        %v2571 = vpop.f32.mrb[0].mxu0
        %v2572 = vadd.f32 0.0, %v2571
        %v2573 = vpop.f32.mrb[0].mxu0
        %v2574 = vadd.f32 0.0, %v2573
        %2575 = vmatprep.mubr.f32.mxu0 0.0
        %2576 = vmatmul.mubr.f32.gmra.mrb[0].mxu0 %v2356
        %v2577 = vpop.f32.mrb[0].mxu0
        %v2578 = vadd.f32 0.0, %v2577
        %v2579 = vpop.f32.mrb[0].mxu0
        %v2580 = vadd.f32 0.0, %v2579
        %2581 = vmatprep.mubr.f32.mxu0 0.0
        %2582 = vmatmul.mubr.f32.gmra.mrb[0].mxu0 %v2359
        %v2583 = vpop.f32.mrb[0].mxu0
        %v2584 = vadd.f32 0.0, %v2583
        %v2585 = vpop.f32.mrb[0].mxu0
        %v2586 = vadd.f32 0.0, %v2585
        %2587 = vmatprep.mubr.f32.mxu0 0.0
        %2588 = vmatmul.mubr.f32.gmra.mrb[0].mxu0 %v2362
        %v2589 = vpop.f32.mrb[0].mxu0
        %v2590 = vadd.f32 0.0, %v2589
        %v2591 = vpop.f32.mrb[0].mxu0
        %v2592 = vadd.f32 0.0, %v2591
        %2593 = vmatprep.mubr.f32.mxu0 0.0
        %2594 = vmatmul.mubr.f32.gmra.mrb[0].mxu0 %v2365
        %v2595 = vpop.f32.mrb[0].mxu0
        %v2596 = vadd.f32 0.0, %v2595
        %v2597 = vpop.f32.mrb[0].mxu0
        %v2598 = vadd.f32 0.0, %v2597
        %2599 = vmatprep.mubr.f32.mxu0 0.0
        %2600 = vmatmul.mubr.f32.gmra.mrb[0].mxu0 %v2368
        %v2601 = vpop.f32.mrb[0].mxu0
        %v2602 = vadd.f32 0.0, %v2601
        %v2603 = vpop.f32.mrb[0].mxu0
        %v2604 = vadd.f32 0.0, %v2603
        %2605 = vmatprep.mubr.f32.mxu0 0.0
        %2606 = vmatmul.mubr.f32.gmra.mrb[0].mxu0 %v2371
        %v2607 = vpop.f32.mrb[0].mxu0
        %v2608 = vadd.f32 0.0, %v2607
        %v2609 = vpop.f32.mrb[0].mxu0
        %v2610 = vadd.f32 0.0, %v2609
        %2611 = vmatprep.mubr.f32.mxu0 0.0
        %2612 = vmatmul.mubr.f32.gmra.mrb[0].mxu0 %v2374
        %v2613 = vpop.f32.mrb[0].mxu0
        %v2614 = vadd.f32 0.0, %v2613
        %v2615 = vpop.f32.mrb[0].mxu0
        %v2616 = vadd.f32 0.0, %v2615
        %2617 = vmatprep.mubr.f32.mxu0 0.0
        %2618 = vmatmul.mubr.f32.gmra.mrb[0].mxu0 %v2377
        %v2619 = vpop.f32.mrb[0].mxu0
        %v2620 = vadd.f32 0.0, %v2619
        %v2621 = vpop.f32.mrb[0].mxu0
        %v2622 = vadd.f32 0.0, %v2621
        %2623 = vmatprep.mubr.f32.mxu0 0.0
        %2624 = vmatmul.mubr.f32.gmra.mrb[0].mxu0 %v2380
        %v2625 = vpop.f32.mrb[0].mxu0
        %v2626 = vadd.f32 0.0, %v2625
        %v2627 = vpop.f32.mrb[0].mxu0
        %v2628 = vadd.f32 0.0, %v2627
        %2629 = vmatprep.mubr.f32.mxu0 0.0
        %2630 = vmatmul.mubr.f32.gmra.mrb[0].mxu0 %v2383
        %v2631 = vpop.f32.mrb[0].mxu0
        %v2632 = vadd.f32 0.0, %v2631
        %v2633 = vpop.f32.mrb[0].mxu0
        %v2634 = vadd.f32 0.0, %v2633
        %2635 = vmatprep.mubr.f32.mxu0 0.0
        %2636 = vmatmul.mubr.f32.gmra.mrb[0].mxu0 %v2386
        %v2637 = vpop.f32.mrb[0].mxu0
        %v2638 = vadd.f32 0.0, %v2637
        %v2639 = vpop.f32.mrb[0].mxu0
        %v2640 = vadd.f32 0.0, %v2639
        %2641 = vmatprep.mubr.f32.mxu0 0.0
        %2642 = vmatmul.mubr.f32.gmra.mrb[0].mxu0 %v2389
        %v2643 = vpop.f32.mrb[0].mxu0
        %v2644 = vadd.f32 0.0, %v2643
        %v2645 = vpop.f32.mrb[0].mxu0
        %v2646 = vadd.f32 0.0, %v2645
        %2647 = vdwg.mxu0
        %v2648 = vadd.f32 %v2157, %v2458
        %v2649 = vadd.f32 %v2158, %v2460
        %v2650 = vadd.f32 %v2159, %v2464
        %v2651 = vadd.f32 %v2160, %v2466
        %v2652 = vadd.f32 %v2161, %v2470
        %v2653 = vadd.f32 %v2162, %v2472
        %v2654 = vadd.f32 %v2163, %v2476
        %v2655 = vadd.f32 %v2164, %v2478
        %v2656 = vadd.f32 %v2165, %v2482
        %v2657 = vadd.f32 %v2166, %v2484
        %v2658 = vadd.f32 %v2167, %v2488
        %v2659 = vadd.f32 %v2168, %v2490
        %v2660 = vadd.f32 %v2169, %v2494
        %v2661 = vadd.f32 %v2170, %v2496
        %v2662 = vadd.f32 %v2171, %v2500
        %v2663 = vadd.f32 %v2172, %v2502
        %v2664 = vadd.f32 %v2173, %v2506
        %v2665 = vadd.f32 %v2174, %v2508
        %v2666 = vadd.f32 %v2175, %v2512
        %v2667 = vadd.f32 %v2176, %v2514
        %v2668 = vadd.f32 %v2177, %v2518
        %v2669 = vadd.f32 %v2178, %v2520
        %v2670 = vadd.f32 %v2179, %v2524
        %v2671 = vadd.f32 %v2180, %v2526
        %v2672 = vadd.f32 %v2181, %v2530
        %v2673 = vadd.f32 %v2182, %v2532
        %v2674 = vadd.f32 %v2183, %v2536
        %v2675 = vadd.f32 %v2184, %v2538
        %v2676 = vadd.f32 %v2185, %v2542
        %v2677 = vadd.f32 %v2186, %v2544
        %v2678 = vadd.f32 %v2187, %v2548
        %v2679 = vadd.f32 %v2188, %v2550
        %v2680 = vadd.f32 %v2189, %v2554
        %v2681 = vadd.f32 %v2190, %v2556
        %v2682 = vadd.f32 %v2191, %v2560
        %v2683 = vadd.f32 %v2192, %v2562
        %v2684 = vadd.f32 %v2193, %v2566
        %v2685 = vadd.f32 %v2194, %v2568
        %v2686 = vadd.f32 %v2195, %v2572
        %v2687 = vadd.f32 %v2196, %v2574
        %v2688 = vadd.f32 %v2197, %v2578
        %v2689 = vadd.f32 %v2198, %v2580
        %v2690 = vadd.f32 %v2199, %v2584
        %v2691 = vadd.f32 %v2200, %v2586
        %v2692 = vadd.f32 %v2201, %v2590
        %v2693 = vadd.f32 %v2202, %v2592
        %v2694 = vadd.f32 %v2203, %v2596
        %v2695 = vadd.f32 %v2204, %v2598
        %v2696 = vadd.f32 %v2205, %v2602
        %v2697 = vadd.f32 %v2206, %v2604
        %v2698 = vadd.f32 %v2207, %v2608
        %v2699 = vadd.f32 %v2208, %v2610
        %v2700 = vadd.f32 %v2209, %v2614
        %v2701 = vadd.f32 %v2210, %v2616
        %v2702 = vadd.f32 %v2211, %v2620
        %v2703 = vadd.f32 %v2212, %v2622
        %v2704 = vadd.f32 %v2213, %v2626
        %v2705 = vadd.f32 %v2214, %v2628
        %v2706 = vadd.f32 %v2215, %v2632
        %v2707 = vadd.f32 %v2216, %v2634
        %v2708 = vadd.f32 %v2217, %v2638
        %v2709 = vadd.f32 %v2218, %v2640
        %v2710 = vadd.f32 %v2219, %v2644
        %v2711 = vadd.f32 %v2220, %v2646
        %v2712 = vlaneseq
        %v2713 = vshrl.u32 %v2712, 7
        %v2714 = vsub.s32 0, %v2713
        %v2715 = vrot.slane %v446, %v2714
        %v2716 = vlaneseq
        %v2717 = vshrl.u32 %v2716, 7
        %v2718 = vsub.s32 0, %v2717
        %v2719 = vrot.slane %v447, %v2718
        %v2720 = vadd.f32 %v2648, %v2715
        %v2721 = vadd.f32 %v2649, %v2719
        %v2722 = vadd.f32 %v2650, %v2715
        %v2723 = vadd.f32 %v2651, %v2719
        %v2724 = vadd.f32 %v2652, %v2715
        %v2725 = vadd.f32 %v2653, %v2719
        %v2726 = vadd.f32 %v2654, %v2715
        %v2727 = vadd.f32 %v2655, %v2719
        %v2728 = vadd.f32 %v2656, %v2715
        %v2729 = vadd.f32 %v2657, %v2719
        %v2730 = vadd.f32 %v2658, %v2715
        %v2731 = vadd.f32 %v2659, %v2719
        %v2732 = vadd.f32 %v2660, %v2715
        %v2733 = vadd.f32 %v2661, %v2719
        %v2734 = vadd.f32 %v2662, %v2715
        %v2735 = vadd.f32 %v2663, %v2719
        %v2736 = vadd.f32 %v2664, %v2715
        %v2737 = vadd.f32 %v2665, %v2719
        %v2738 = vadd.f32 %v2666, %v2715
        %v2739 = vadd.f32 %v2667, %v2719
        %v2740 = vadd.f32 %v2668, %v2715
        %v2741 = vadd.f32 %v2669, %v2719
        %v2742 = vadd.f32 %v2670, %v2715
        %v2743 = vadd.f32 %v2671, %v2719
        %v2744 = vadd.f32 %v2672, %v2715
        %v2745 = vadd.f32 %v2673, %v2719
        %v2746 = vadd.f32 %v2674, %v2715
        %v2747 = vadd.f32 %v2675, %v2719
        %v2748 = vadd.f32 %v2676, %v2715
        %v2749 = vadd.f32 %v2677, %v2719
        %v2750 = vadd.f32 %v2678, %v2715
        %v2751 = vadd.f32 %v2679, %v2719
        %v2752 = vadd.f32 %v2680, %v2715
        %v2753 = vadd.f32 %v2681, %v2719
        %v2754 = vadd.f32 %v2682, %v2715
        %v2755 = vadd.f32 %v2683, %v2719
        %v2756 = vadd.f32 %v2684, %v2715
        %v2757 = vadd.f32 %v2685, %v2719
        %v2758 = vadd.f32 %v2686, %v2715
        %v2759 = vadd.f32 %v2687, %v2719
        %v2760 = vadd.f32 %v2688, %v2715
        %v2761 = vadd.f32 %v2689, %v2719
        %v2762 = vadd.f32 %v2690, %v2715
        %v2763 = vadd.f32 %v2691, %v2719
        %v2764 = vadd.f32 %v2692, %v2715
        %v2765 = vadd.f32 %v2693, %v2719
        %v2766 = vadd.f32 %v2694, %v2715
        %v2767 = vadd.f32 %v2695, %v2719
        %v2768 = vadd.f32 %v2696, %v2715
        %v2769 = vadd.f32 %v2697, %v2719
        %v2770 = vadd.f32 %v2698, %v2715
        %v2771 = vadd.f32 %v2699, %v2719
        %v2772 = vadd.f32 %v2700, %v2715
        %v2773 = vadd.f32 %v2701, %v2719
        %v2774 = vadd.f32 %v2702, %v2715
        %v2775 = vadd.f32 %v2703, %v2719
        %v2776 = vadd.f32 %v2704, %v2715
        %v2777 = vadd.f32 %v2705, %v2719
        %v2778 = vadd.f32 %v2706, %v2715
        %v2779 = vadd.f32 %v2707, %v2719
        %v2780 = vadd.f32 %v2708, %v2715
        %v2781 = vadd.f32 %v2709, %v2719
        %v2782 = vadd.f32 %v2710, %v2715
        %v2783 = vadd.f32 %v2711, %v2719
        %v2784 = vmax.f32 %v2720, 0.0
        %v2785 = vmax.f32 %v2721, 0.0
        %v2786 = vmax.f32 %v2722, 0.0
        %v2787 = vmax.f32 %v2723, 0.0
        %v2788 = vmax.f32 %v2724, 0.0
        %v2789 = vmax.f32 %v2725, 0.0
        %v2790 = vmax.f32 %v2726, 0.0
        %v2791 = vmax.f32 %v2727, 0.0
        %v2792 = vmax.f32 %v2728, 0.0
        %v2793 = vmax.f32 %v2729, 0.0
        %v2794 = vmax.f32 %v2730, 0.0
        %v2795 = vmax.f32 %v2731, 0.0
        %v2796 = vmax.f32 %v2732, 0.0
        %v2797 = vmax.f32 %v2733, 0.0
        %v2798 = vmax.f32 %v2734, 0.0
        %v2799 = vmax.f32 %v2735, 0.0
        %v2800 = vmax.f32 %v2736, 0.0
        %v2801 = vmax.f32 %v2737, 0.0
        %v2802 = vmax.f32 %v2738, 0.0
        %v2803 = vmax.f32 %v2739, 0.0
        %v2804 = vmax.f32 %v2740, 0.0
        %v2805 = vmax.f32 %v2741, 0.0
        %v2806 = vmax.f32 %v2742, 0.0
        %v2807 = vmax.f32 %v2743, 0.0
        %v2808 = vmax.f32 %v2744, 0.0
        %v2809 = vmax.f32 %v2745, 0.0
        %v2810 = vmax.f32 %v2746, 0.0
        %v2811 = vmax.f32 %v2747, 0.0
        %v2812 = vmax.f32 %v2748, 0.0
        %v2813 = vmax.f32 %v2749, 0.0
        %v2814 = vmax.f32 %v2750, 0.0
        %v2815 = vmax.f32 %v2751, 0.0
        %v2816 = vmax.f32 %v2752, 0.0
        %v2817 = vmax.f32 %v2753, 0.0
        %v2818 = vmax.f32 %v2754, 0.0
        %v2819 = vmax.f32 %v2755, 0.0
        %v2820 = vmax.f32 %v2756, 0.0
        %v2821 = vmax.f32 %v2757, 0.0
        %v2822 = vmax.f32 %v2758, 0.0
        %v2823 = vmax.f32 %v2759, 0.0
        %v2824 = vmax.f32 %v2760, 0.0
        %v2825 = vmax.f32 %v2761, 0.0
        %v2826 = vmax.f32 %v2762, 0.0
        %v2827 = vmax.f32 %v2763, 0.0
        %v2828 = vmax.f32 %v2764, 0.0
        %v2829 = vmax.f32 %v2765, 0.0
        %v2830 = vmax.f32 %v2766, 0.0
        %v2831 = vmax.f32 %v2767, 0.0
        %v2832 = vmax.f32 %v2768, 0.0
        %v2833 = vmax.f32 %v2769, 0.0
        %v2834 = vmax.f32 %v2770, 0.0
        %v2835 = vmax.f32 %v2771, 0.0
        %v2836 = vmax.f32 %v2772, 0.0
        %v2837 = vmax.f32 %v2773, 0.0
        %v2838 = vmax.f32 %v2774, 0.0
        %v2839 = vmax.f32 %v2775, 0.0
        %v2840 = vmax.f32 %v2776, 0.0
        %v2841 = vmax.f32 %v2777, 0.0
        %v2842 = vmax.f32 %v2778, 0.0
        %v2843 = vmax.f32 %v2779, 0.0
        %v2844 = vmax.f32 %v2780, 0.0
        %v2845 = vmax.f32 %v2781, 0.0
        %v2846 = vmax.f32 %v2782, 0.0
        %v2847 = vmax.f32 %v2783, 0.0
        %v2848 = vld [vmem:[%s3] sm:$0xff]
        %v2849 = vld [vmem:[%s3 + $0x8] sm:$0xff]
        %v2850 = vld [vmem:[%s3 + $0x10] sm:$0xff]
        %v2851 = vld [vmem:[%s3 + $0x18] sm:$0xff]
        %v2852 = vld [vmem:[%s3 + $0x20] sm:$0xff]
        %v2853 = vld [vmem:[%s3 + $0x28] sm:$0xff]
        %v2854 = vld [vmem:[%s3 + $0x30] sm:$0xff]
        %v2855 = vld [vmem:[%s3 + $0x38] sm:$0xff]
        %v2856 = vld [vmem:[%s3 + $0x40] sm:$0xff]
        %v2857 = vld [vmem:[%s3 + $0x48] sm:$0xff]
        %v2858 = vld [vmem:[%s3 + $0x50] sm:$0xff]
        %v2859 = vld [vmem:[%s3 + $0x58] sm:$0xff]
        %v2860 = vld [vmem:[%s3 + $0x60] sm:$0xff]
        %v2861 = vld [vmem:[%s3 + $0x68] sm:$0xff]
        %v2862 = vld [vmem:[%s3 + $0x70] sm:$0xff]
        %v2863 = vld [vmem:[%s3 + $0x78] sm:$0xff]
        %v2864 = vld [vmem:[%s3 + $0x80] sm:$0xff]
        %v2865 = vld [vmem:[%s3 + $0x88] sm:$0xff]
        %v2866 = vld [vmem:[%s3 + $0x90] sm:$0xff]
        %v2867 = vld [vmem:[%s3 + $0x98] sm:$0xff]
        %v2868 = vld [vmem:[%s3 + $0xa0] sm:$0xff]
        %vm2869 = vcmask 326656
        %v2871 = vsel %vm2869, %v2785, 0
        %v2874 = vsel %vm2869, %v2787, 0
        %v2877 = vsel %vm2869, %v2789, 0
        %v2880 = vsel %vm2869, %v2791, 0
        %v2883 = vsel %vm2869, %v2793, 0
        %v2886 = vsel %vm2869, %v2795, 0
        %v2889 = vsel %vm2869, %v2797, 0
        %v2892 = vsel %vm2869, %v2799, 0
        %v2895 = vsel %vm2869, %v2801, 0
        %v2898 = vsel %vm2869, %v2803, 0
        %v2901 = vsel %vm2869, %v2805, 0
        %v2904 = vsel %vm2869, %v2807, 0
        %v2907 = vsel %vm2869, %v2809, 0
        %v2910 = vsel %vm2869, %v2811, 0
        %v2913 = vsel %vm2869, %v2813, 0
        %v2916 = vsel %vm2869, %v2815, 0
        %v2919 = vsel %vm2869, %v2817, 0
        %v2922 = vsel %vm2869, %v2819, 0
        %v2925 = vsel %vm2869, %v2821, 0
        %v2928 = vsel %vm2869, %v2823, 0
        %v2931 = vsel %vm2869, %v2825, 0
        %v2934 = vsel %vm2869, %v2827, 0
        %v2937 = vsel %vm2869, %v2829, 0
        %v2940 = vsel %vm2869, %v2831, 0
        %v2943 = vsel %vm2869, %v2833, 0
        %v2946 = vsel %vm2869, %v2835, 0
        %v2949 = vsel %vm2869, %v2837, 0
        %v2952 = vsel %vm2869, %v2839, 0
        %v2955 = vsel %vm2869, %v2841, 0
        %v2958 = vsel %vm2869, %v2843, 0
        %v2961 = vsel %vm2869, %v2845, 0
        %v2964 = vsel %vm2869, %v2847, 0
        %2966 = vmatprep.subr.mxu0 0.0
        %2967 = vmatpush1.msra.mxu0 %v2848
        %2968 = vmatprep.subr.mxu0 0.0
        %2969 = vmatpush1.msra.mxu0 %v2849
        %2970 = vmatprep.subr.mxu0 0.0
        %2971 = vmatpush1.msra.mxu0 %v2850
        %2972 = vmatprep.subr.mxu0 0.0
        %2973 = vmatpush1.msra.mxu0 %v2851
        %2974 = vmatprep.subr.mxu0 0.0
        %2975 = vmatpush1.msra.mxu0 %v2852
        %2976 = vmatprep.subr.mxu0 0.0
        %2977 = vmatpush1.msra.mxu0 %v2853
        %2978 = vmatprep.subr.mxu0 0.0
        %2979 = vmatpush1.msra.mxu0 %v2854
        %2980 = vmatprep.subr.mxu0 0.0
        %2981 = vmatpush1.msra.mxu0 %v2855
        %2982 = vmatprep.subr.mxu0 0.0
        %2983 = vmatpush1.msra.mxu0 %v2856
        %2984 = vmatprep.subr.mxu0 0.0
        %2985 = vmatpush1.msra.mxu0 %v2857
        %2986 = vmatprep.subr.mxu0 0.0
        %2987 = vmatpush1.msra.mxu0 %v2858
        %2988 = vmatprep.subr.mxu0 0.0
        %2989 = vmatpush1.msra.mxu0 %v2859
        %2990 = vmatprep.subr.mxu0 0.0
        %2991 = vmatpush1.msra.mxu0 %v2860
        %2992 = vmatprep.subr.mxu0 0.0
        %2993 = vmatpush1.msra.mxu0 %v2861
        %2994 = vmatprep.subr.mxu0 0.0
        %2995 = vmatpush1.msra.mxu0 %v2862
        %2996 = vmatprep.subr.mxu0 0.0
        %2997 = vmatpush1.msra.mxu0 %v2863
        %2998 = vmatprep.subr.mxu0 0.0
        %2999 = vmatpush1.msra.mxu0 %v2864
        %3000 = vmatprep.subr.mxu0 0.0
        %3001 = vmatpush1.msra.mxu0 %v2865
        %3002 = vmatprep.subr.mxu0 0.0
        %3003 = vmatpush1.msra.mxu0 %v2866
        %3004 = vmatprep.subr.mxu0 0.0
        %3005 = vmatpush1.msra.mxu0 %v2867
        %3006 = vmatprep.subr.mxu0 0.0
        %3007 = vmatpush1.msra.mxu0 %v2868
        %3008 = vmatprep.subr.mxu0 0.0
        %3009 = vmatpush1.msra.mxu0 0.0
        %3010 = vmatprep.subr.mxu0 0.0
        %3011 = vmatpush1.msra.mxu0 0.0
        %3012 = vmatprep.subr.mxu0 0.0
        %3013 = vmatpush1.msra.mxu0 0.0
        %3014 = vmatprep.subr.mxu0 0.0
        %3015 = vmatpush1.msra.mxu0 0.0
        %3016 = vmatprep.subr.mxu0 0.0
        %3017 = vmatpush1.msra.mxu0 0.0
        %3018 = vmatprep.subr.mxu0 0.0
        %3019 = vmatpush1.msra.mxu0 0.0
        %3020 = vmatprep.subr.mxu0 0.0
        %3021 = vmatpush1.msra.mxu0 0.0
        %3022 = vmatprep.subr.mxu0 0.0
        %3023 = vmatpush1.msra.mxu0 0.0
        %3024 = vmatprep.subr.mxu0 0.0
        %3025 = vmatpush1.msra.mxu0 0.0
        %3026 = vmatprep.subr.mxu0 0.0
        %3027 = vmatpush1.msra.mxu0 0.0
        %3028 = vmatprep.subr.mxu0 0.0
        %3029 = vmatpush1.msra.mxu0 0.0
        %3030 = vmatprep.mubr.f32.mxu0 %v2871
        %3031 = vmatmul.mubr.f32.gmra.mrb[0].mxu0 %v2784
        %v3032 = vpop.f32.mrb[0].mxu0
        %v3033 = vadd.f32 0.0, %v3032
        %v3034 = vpop.f32.mrb[0].mxu0
        %3035 = vmatprep.mubr.f32.mxu0 %v2874
        %3036 = vmatmul.mubr.f32.gmra.mrb[0].mxu0 %v2786
        %v3037 = vpop.f32.mrb[0].mxu0
        %v3038 = vadd.f32 0.0, %v3037
        %v3039 = vpop.f32.mrb[0].mxu0
        %3040 = vmatprep.mubr.f32.mxu0 %v2877
        %3041 = vmatmul.mubr.f32.gmra.mrb[0].mxu0 %v2788
        %v3042 = vpop.f32.mrb[0].mxu0
        %v3043 = vadd.f32 0.0, %v3042
        %v3044 = vpop.f32.mrb[0].mxu0
        %3045 = vmatprep.mubr.f32.mxu0 %v2880
        %3046 = vmatmul.mubr.f32.gmra.mrb[0].mxu0 %v2790
        %v3047 = vpop.f32.mrb[0].mxu0
        %v3048 = vadd.f32 0.0, %v3047
        %v3049 = vpop.f32.mrb[0].mxu0
        %3050 = vmatprep.mubr.f32.mxu0 %v2883
        %3051 = vmatmul.mubr.f32.gmra.mrb[0].mxu0 %v2792
        %v3052 = vpop.f32.mrb[0].mxu0
        %v3053 = vadd.f32 0.0, %v3052
        %v3054 = vpop.f32.mrb[0].mxu0
        %3055 = vmatprep.mubr.f32.mxu0 %v2886
        %3056 = vmatmul.mubr.f32.gmra.mrb[0].mxu0 %v2794
        %v3057 = vpop.f32.mrb[0].mxu0
        %v3058 = vadd.f32 0.0, %v3057
        %v3059 = vpop.f32.mrb[0].mxu0
        %3060 = vmatprep.mubr.f32.mxu0 %v2889
        %3061 = vmatmul.mubr.f32.gmra.mrb[0].mxu0 %v2796
        %v3062 = vpop.f32.mrb[0].mxu0
        %v3063 = vadd.f32 0.0, %v3062
        %v3064 = vpop.f32.mrb[0].mxu0
        %3065 = vmatprep.mubr.f32.mxu0 %v2892
        %3066 = vmatmul.mubr.f32.gmra.mrb[0].mxu0 %v2798
        %v3067 = vpop.f32.mrb[0].mxu0
        %v3068 = vadd.f32 0.0, %v3067
        %v3069 = vpop.f32.mrb[0].mxu0
        %3070 = vmatprep.mubr.f32.mxu0 %v2895
        %3071 = vmatmul.mubr.f32.gmra.mrb[0].mxu0 %v2800
        %v3072 = vpop.f32.mrb[0].mxu0
        %v3073 = vadd.f32 0.0, %v3072
        %v3074 = vpop.f32.mrb[0].mxu0
        %3075 = vmatprep.mubr.f32.mxu0 %v2898
        %3076 = vmatmul.mubr.f32.gmra.mrb[0].mxu0 %v2802
        %v3077 = vpop.f32.mrb[0].mxu0
        %v3078 = vadd.f32 0.0, %v3077
        %v3079 = vpop.f32.mrb[0].mxu0
        %3080 = vmatprep.mubr.f32.mxu0 %v2901
        %3081 = vmatmul.mubr.f32.gmra.mrb[0].mxu0 %v2804
        %v3082 = vpop.f32.mrb[0].mxu0
        %v3083 = vadd.f32 0.0, %v3082
        %v3084 = vpop.f32.mrb[0].mxu0
        %3085 = vmatprep.mubr.f32.mxu0 %v2904
        %3086 = vmatmul.mubr.f32.gmra.mrb[0].mxu0 %v2806
        %v3087 = vpop.f32.mrb[0].mxu0
        %v3088 = vadd.f32 0.0, %v3087
        %v3089 = vpop.f32.mrb[0].mxu0
        %3090 = vmatprep.mubr.f32.mxu0 %v2907
        %3091 = vmatmul.mubr.f32.gmra.mrb[0].mxu0 %v2808
        %v3092 = vpop.f32.mrb[0].mxu0
        %v3093 = vadd.f32 0.0, %v3092
        %v3094 = vpop.f32.mrb[0].mxu0
        %3095 = vmatprep.mubr.f32.mxu0 %v2910
        %3096 = vmatmul.mubr.f32.gmra.mrb[0].mxu0 %v2810
        %v3097 = vpop.f32.mrb[0].mxu0
        %v3098 = vadd.f32 0.0, %v3097
        %v3099 = vpop.f32.mrb[0].mxu0
        %3100 = vmatprep.mubr.f32.mxu0 %v2913
        %3101 = vmatmul.mubr.f32.gmra.mrb[0].mxu0 %v2812
        %v3102 = vpop.f32.mrb[0].mxu0
        %v3103 = vadd.f32 0.0, %v3102
        %v3104 = vpop.f32.mrb[0].mxu0
        %3105 = vmatprep.mubr.f32.mxu0 %v2916
        %3106 = vmatmul.mubr.f32.gmra.mrb[0].mxu0 %v2814
        %v3107 = vpop.f32.mrb[0].mxu0
        %v3108 = vadd.f32 0.0, %v3107
        %v3109 = vpop.f32.mrb[0].mxu0
        %3110 = vmatprep.mubr.f32.mxu0 %v2919
        %3111 = vmatmul.mubr.f32.gmra.mrb[0].mxu0 %v2816
        %v3112 = vpop.f32.mrb[0].mxu0
        %v3113 = vadd.f32 0.0, %v3112
        %v3114 = vpop.f32.mrb[0].mxu0
        %3115 = vmatprep.mubr.f32.mxu0 %v2922
        %3116 = vmatmul.mubr.f32.gmra.mrb[0].mxu0 %v2818
        %v3117 = vpop.f32.mrb[0].mxu0
        %v3118 = vadd.f32 0.0, %v3117
        %v3119 = vpop.f32.mrb[0].mxu0
        %3120 = vmatprep.mubr.f32.mxu0 %v2925
        %3121 = vmatmul.mubr.f32.gmra.mrb[0].mxu0 %v2820
        %v3122 = vpop.f32.mrb[0].mxu0
        %v3123 = vadd.f32 0.0, %v3122
        %v3124 = vpop.f32.mrb[0].mxu0
        %3125 = vmatprep.mubr.f32.mxu0 %v2928
        %3126 = vmatmul.mubr.f32.gmra.mrb[0].mxu0 %v2822
        %v3127 = vpop.f32.mrb[0].mxu0
        %v3128 = vadd.f32 0.0, %v3127
        %v3129 = vpop.f32.mrb[0].mxu0
        %3130 = vmatprep.mubr.f32.mxu0 %v2931
        %3131 = vmatmul.mubr.f32.gmra.mrb[0].mxu0 %v2824
        %v3132 = vpop.f32.mrb[0].mxu0
        %v3133 = vadd.f32 0.0, %v3132
        %v3134 = vpop.f32.mrb[0].mxu0
        %3135 = vmatprep.mubr.f32.mxu0 %v2934
        %3136 = vmatmul.mubr.f32.gmra.mrb[0].mxu0 %v2826
        %v3137 = vpop.f32.mrb[0].mxu0
        %v3138 = vadd.f32 0.0, %v3137
        %v3139 = vpop.f32.mrb[0].mxu0
        %3140 = vmatprep.mubr.f32.mxu0 %v2937
        %3141 = vmatmul.mubr.f32.gmra.mrb[0].mxu0 %v2828
        %v3142 = vpop.f32.mrb[0].mxu0
        %v3143 = vadd.f32 0.0, %v3142
        %v3144 = vpop.f32.mrb[0].mxu0
        %3145 = vmatprep.mubr.f32.mxu0 %v2940
        %3146 = vmatmul.mubr.f32.gmra.mrb[0].mxu0 %v2830
        %v3147 = vpop.f32.mrb[0].mxu0
        %v3148 = vadd.f32 0.0, %v3147
        %v3149 = vpop.f32.mrb[0].mxu0
        %3150 = vmatprep.mubr.f32.mxu0 %v2943
        %3151 = vmatmul.mubr.f32.gmra.mrb[0].mxu0 %v2832
        %v3152 = vpop.f32.mrb[0].mxu0
        %v3153 = vadd.f32 0.0, %v3152
        %v3154 = vpop.f32.mrb[0].mxu0
        %3155 = vmatprep.mubr.f32.mxu0 %v2946
        %3156 = vmatmul.mubr.f32.gmra.mrb[0].mxu0 %v2834
        %v3157 = vpop.f32.mrb[0].mxu0
        %v3158 = vadd.f32 0.0, %v3157
        %v3159 = vpop.f32.mrb[0].mxu0
        %3160 = vmatprep.mubr.f32.mxu0 %v2949
        %3161 = vmatmul.mubr.f32.gmra.mrb[0].mxu0 %v2836
        %v3162 = vpop.f32.mrb[0].mxu0
        %v3163 = vadd.f32 0.0, %v3162
        %v3164 = vpop.f32.mrb[0].mxu0
        %3165 = vmatprep.mubr.f32.mxu0 %v2952
        %3166 = vmatmul.mubr.f32.gmra.mrb[0].mxu0 %v2838
        %v3167 = vpop.f32.mrb[0].mxu0
        %v3168 = vadd.f32 0.0, %v3167
        %v3169 = vpop.f32.mrb[0].mxu0
        %3170 = vmatprep.mubr.f32.mxu0 %v2955
        %3171 = vmatmul.mubr.f32.gmra.mrb[0].mxu0 %v2840
        %v3172 = vpop.f32.mrb[0].mxu0
        %v3173 = vadd.f32 0.0, %v3172
        %v3174 = vpop.f32.mrb[0].mxu0
        %3175 = vmatprep.mubr.f32.mxu0 %v2958
        %3176 = vmatmul.mubr.f32.gmra.mrb[0].mxu0 %v2842
        %v3177 = vpop.f32.mrb[0].mxu0
        %v3178 = vadd.f32 0.0, %v3177
        %v3179 = vpop.f32.mrb[0].mxu0
        %3180 = vmatprep.mubr.f32.mxu0 %v2961
        %3181 = vmatmul.mubr.f32.gmra.mrb[0].mxu0 %v2844
        %v3182 = vpop.f32.mrb[0].mxu0
        %v3183 = vadd.f32 0.0, %v3182
        %v3184 = vpop.f32.mrb[0].mxu0
        %3185 = vmatprep.mubr.f32.mxu0 %v2964
        %3186 = vmatmul.mubr.f32.gmra.mrb[0].mxu0 %v2846
        %v3187 = vpop.f32.mrb[0].mxu0
        %v3188 = vadd.f32 0.0, %v3187
        %v3189 = vpop.f32.mrb[0].mxu0
        %3190 = vdwg.mxu0
        %v3191 = vld [vmem:[%s4] sm:$0xff]
        %v3192 = vld [vmem:[%s4 + $0x8] sm:$0xff]
        %v3193 = vld [vmem:[%s4 + $0x10] sm:$0xff]
        %v3194 = vld [vmem:[%s4 + $0x18] sm:$0xff]
        %v3195 = vld [vmem:[%s4 + $0x20] sm:$0xff]
        %v3196 = vld [vmem:[%s4 + $0x28] sm:$0xff]
        %v3197 = vld [vmem:[%s4 + $0x30] sm:$0xff]
        %v3198 = vld [vmem:[%s4 + $0x38] sm:$0xff]
        %v3199 = vld [vmem:[%s4 + $0x40] sm:$0xff]
        %v3200 = vld [vmem:[%s4 + $0x48] sm:$0xff]
        %v3201 = vld [vmem:[%s4 + $0x50] sm:$0xff]
        %v3202 = vld [vmem:[%s4 + $0x58] sm:$0xff]
        %v3203 = vld [vmem:[%s4 + $0x60] sm:$0xff]
        %v3204 = vld [vmem:[%s4 + $0x68] sm:$0xff]
        %v3205 = vld [vmem:[%s4 + $0x70] sm:$0xff]
        %v3206 = vld [vmem:[%s4 + $0x78] sm:$0xff]
        %v3207 = vld [vmem:[%s4 + $0x80] sm:$0xff]
        %v3208 = vld [vmem:[%s4 + $0x88] sm:$0xff]
        %v3209 = vld [vmem:[%s4 + $0x90] sm:$0xff]
        %v3210 = vld [vmem:[%s4 + $0x98] sm:$0xff]
        %v3211 = vld [vmem:[%s4 + $0xa0] sm:$0xff]
        %3212 = vmatprep.subr.mxu0 0.0
        %3213 = vmatpush1.msra.mxu0 %v3191
        %3214 = vmatprep.subr.mxu0 0.0
        %3215 = vmatpush1.msra.mxu0 %v3192
        %3216 = vmatprep.subr.mxu0 0.0
        %3217 = vmatpush1.msra.mxu0 %v3193
        %3218 = vmatprep.subr.mxu0 0.0
        %3219 = vmatpush1.msra.mxu0 %v3194
        %3220 = vmatprep.subr.mxu0 0.0
        %3221 = vmatpush1.msra.mxu0 %v3195
        %3222 = vmatprep.subr.mxu0 0.0
        %3223 = vmatpush1.msra.mxu0 %v3196
        %3224 = vmatprep.subr.mxu0 0.0
        %3225 = vmatpush1.msra.mxu0 %v3197
        %3226 = vmatprep.subr.mxu0 0.0
        %3227 = vmatpush1.msra.mxu0 %v3198
        %3228 = vmatprep.subr.mxu0 0.0
        %3229 = vmatpush1.msra.mxu0 %v3199
        %3230 = vmatprep.subr.mxu0 0.0
        %3231 = vmatpush1.msra.mxu0 %v3200
        %3232 = vmatprep.subr.mxu0 0.0
        %3233 = vmatpush1.msra.mxu0 %v3201
        %3234 = vmatprep.subr.mxu0 0.0
        %3235 = vmatpush1.msra.mxu0 %v3202
        %3236 = vmatprep.subr.mxu0 0.0
        %3237 = vmatpush1.msra.mxu0 %v3203
        %3238 = vmatprep.subr.mxu0 0.0
        %3239 = vmatpush1.msra.mxu0 %v3204
        %3240 = vmatprep.subr.mxu0 0.0
        %3241 = vmatpush1.msra.mxu0 %v3205
        %3242 = vmatprep.subr.mxu0 0.0
        %3243 = vmatpush1.msra.mxu0 %v3206
        %3244 = vmatprep.subr.mxu0 0.0
        %3245 = vmatpush1.msra.mxu0 %v3207
        %3246 = vmatprep.subr.mxu0 0.0
        %3247 = vmatpush1.msra.mxu0 %v3208
        %3248 = vmatprep.subr.mxu0 0.0
        %3249 = vmatpush1.msra.mxu0 %v3209
        %3250 = vmatprep.subr.mxu0 0.0
        %3251 = vmatpush1.msra.mxu0 %v3210
        %3252 = vmatprep.subr.mxu0 0.0
        %3253 = vmatpush1.msra.mxu0 %v3211
        %3254 = vmatprep.subr.mxu0 0.0
        %3255 = vmatpush1.msra.mxu0 0.0
        %3256 = vmatprep.subr.mxu0 0.0
        %3257 = vmatpush1.msra.mxu0 0.0
        %3258 = vmatprep.subr.mxu0 0.0
        %3259 = vmatpush1.msra.mxu0 0.0
        %3260 = vmatprep.subr.mxu0 0.0
        %3261 = vmatpush1.msra.mxu0 0.0
        %3262 = vmatprep.subr.mxu0 0.0
        %3263 = vmatpush1.msra.mxu0 0.0
        %3264 = vmatprep.subr.mxu0 0.0
        %3265 = vmatpush1.msra.mxu0 0.0
        %3266 = vmatprep.subr.mxu0 0.0
        %3267 = vmatpush1.msra.mxu0 0.0
        %3268 = vmatprep.subr.mxu0 0.0
        %3269 = vmatpush1.msra.mxu0 0.0
        %3270 = vmatprep.subr.mxu0 0.0
        %3271 = vmatpush1.msra.mxu0 0.0
        %3272 = vmatprep.subr.mxu0 0.0
        %3273 = vmatpush1.msra.mxu0 0.0
        %3274 = vmatprep.subr.mxu0 0.0
        %3275 = vmatpush1.msra.mxu0 0.0
        %3276 = vmatprep.mubr.f32.mxu0 %v2871
        %3277 = vmatmul.mubr.f32.gmra.mrb[0].mxu0 %v2784
        %v3278 = vpop.f32.mrb[0].mxu0
        %v3279 = vadd.f32 0.0, %v3278
        %v3280 = vpop.f32.mrb[0].mxu0
        %3281 = vmatprep.mubr.f32.mxu0 %v2874
        %3282 = vmatmul.mubr.f32.gmra.mrb[0].mxu0 %v2786
        %v3283 = vpop.f32.mrb[0].mxu0
        %v3284 = vadd.f32 0.0, %v3283
        %v3285 = vpop.f32.mrb[0].mxu0
        %3286 = vmatprep.mubr.f32.mxu0 %v2877
        %3287 = vmatmul.mubr.f32.gmra.mrb[0].mxu0 %v2788
        %v3288 = vpop.f32.mrb[0].mxu0
        %v3289 = vadd.f32 0.0, %v3288
        %v3290 = vpop.f32.mrb[0].mxu0
        %3291 = vmatprep.mubr.f32.mxu0 %v2880
        %3292 = vmatmul.mubr.f32.gmra.mrb[0].mxu0 %v2790
        %v3293 = vpop.f32.mrb[0].mxu0
        %v3294 = vadd.f32 0.0, %v3293
        %v3295 = vpop.f32.mrb[0].mxu0
        %3296 = vmatprep.mubr.f32.mxu0 %v2883
        %3297 = vmatmul.mubr.f32.gmra.mrb[0].mxu0 %v2792
        %v3298 = vpop.f32.mrb[0].mxu0
        %v3299 = vadd.f32 0.0, %v3298
        %v3300 = vpop.f32.mrb[0].mxu0
        %3301 = vmatprep.mubr.f32.mxu0 %v2886
        %3302 = vmatmul.mubr.f32.gmra.mrb[0].mxu0 %v2794
        %v3303 = vpop.f32.mrb[0].mxu0
        %v3304 = vadd.f32 0.0, %v3303
        %v3305 = vpop.f32.mrb[0].mxu0
        %3306 = vmatprep.mubr.f32.mxu0 %v2889
        %3307 = vmatmul.mubr.f32.gmra.mrb[0].mxu0 %v2796
        %v3308 = vpop.f32.mrb[0].mxu0
        %v3309 = vadd.f32 0.0, %v3308
        %v3310 = vpop.f32.mrb[0].mxu0
        %3311 = vmatprep.mubr.f32.mxu0 %v2892
        %3312 = vmatmul.mubr.f32.gmra.mrb[0].mxu0 %v2798
        %v3313 = vpop.f32.mrb[0].mxu0
        %v3314 = vadd.f32 0.0, %v3313
        %v3315 = vpop.f32.mrb[0].mxu0
        %3316 = vmatprep.mubr.f32.mxu0 %v2895
        %3317 = vmatmul.mubr.f32.gmra.mrb[0].mxu0 %v2800
        %v3318 = vpop.f32.mrb[0].mxu0
        %v3319 = vadd.f32 0.0, %v3318
        %v3320 = vpop.f32.mrb[0].mxu0
        %3321 = vmatprep.mubr.f32.mxu0 %v2898
        %3322 = vmatmul.mubr.f32.gmra.mrb[0].mxu0 %v2802
        %v3323 = vpop.f32.mrb[0].mxu0
        %v3324 = vadd.f32 0.0, %v3323
        %v3325 = vpop.f32.mrb[0].mxu0
        %3326 = vmatprep.mubr.f32.mxu0 %v2901
        %3327 = vmatmul.mubr.f32.gmra.mrb[0].mxu0 %v2804
        %v3328 = vpop.f32.mrb[0].mxu0
        %v3329 = vadd.f32 0.0, %v3328
        %v3330 = vpop.f32.mrb[0].mxu0
        %3331 = vmatprep.mubr.f32.mxu0 %v2904
        %3332 = vmatmul.mubr.f32.gmra.mrb[0].mxu0 %v2806
        %v3333 = vpop.f32.mrb[0].mxu0
        %v3334 = vadd.f32 0.0, %v3333
        %v3335 = vpop.f32.mrb[0].mxu0
        %3336 = vmatprep.mubr.f32.mxu0 %v2907
        %3337 = vmatmul.mubr.f32.gmra.mrb[0].mxu0 %v2808
        %v3338 = vpop.f32.mrb[0].mxu0
        %v3339 = vadd.f32 0.0, %v3338
        %v3340 = vpop.f32.mrb[0].mxu0
        %3341 = vmatprep.mubr.f32.mxu0 %v2910
        %3342 = vmatmul.mubr.f32.gmra.mrb[0].mxu0 %v2810
        %v3343 = vpop.f32.mrb[0].mxu0
        %v3344 = vadd.f32 0.0, %v3343
        %v3345 = vpop.f32.mrb[0].mxu0
        %3346 = vmatprep.mubr.f32.mxu0 %v2913
        %3347 = vmatmul.mubr.f32.gmra.mrb[0].mxu0 %v2812
        %v3348 = vpop.f32.mrb[0].mxu0
        %v3349 = vadd.f32 0.0, %v3348
        %v3350 = vpop.f32.mrb[0].mxu0
        %3351 = vmatprep.mubr.f32.mxu0 %v2916
        %3352 = vmatmul.mubr.f32.gmra.mrb[0].mxu0 %v2814
        %v3353 = vpop.f32.mrb[0].mxu0
        %v3354 = vadd.f32 0.0, %v3353
        %v3355 = vpop.f32.mrb[0].mxu0
        %3356 = vmatprep.mubr.f32.mxu0 %v2919
        %3357 = vmatmul.mubr.f32.gmra.mrb[0].mxu0 %v2816
        %v3358 = vpop.f32.mrb[0].mxu0
        %v3359 = vadd.f32 0.0, %v3358
        %v3360 = vpop.f32.mrb[0].mxu0
        %3361 = vmatprep.mubr.f32.mxu0 %v2922
        %3362 = vmatmul.mubr.f32.gmra.mrb[0].mxu0 %v2818
        %v3363 = vpop.f32.mrb[0].mxu0
        %v3364 = vadd.f32 0.0, %v3363
        %v3365 = vpop.f32.mrb[0].mxu0
        %3366 = vmatprep.mubr.f32.mxu0 %v2925
        %3367 = vmatmul.mubr.f32.gmra.mrb[0].mxu0 %v2820
        %v3368 = vpop.f32.mrb[0].mxu0
        %v3369 = vadd.f32 0.0, %v3368
        %v3370 = vpop.f32.mrb[0].mxu0
        %3371 = vmatprep.mubr.f32.mxu0 %v2928
        %3372 = vmatmul.mubr.f32.gmra.mrb[0].mxu0 %v2822
        %v3373 = vpop.f32.mrb[0].mxu0
        %v3374 = vadd.f32 0.0, %v3373
        %v3375 = vpop.f32.mrb[0].mxu0
        %3376 = vmatprep.mubr.f32.mxu0 %v2931
        %3377 = vmatmul.mubr.f32.gmra.mrb[0].mxu0 %v2824
        %v3378 = vpop.f32.mrb[0].mxu0
        %v3379 = vadd.f32 0.0, %v3378
        %v3380 = vpop.f32.mrb[0].mxu0
        %3381 = vmatprep.mubr.f32.mxu0 %v2934
        %3382 = vmatmul.mubr.f32.gmra.mrb[0].mxu0 %v2826
        %v3383 = vpop.f32.mrb[0].mxu0
        %v3384 = vadd.f32 0.0, %v3383
        %v3385 = vpop.f32.mrb[0].mxu0
        %3386 = vmatprep.mubr.f32.mxu0 %v2937
        %3387 = vmatmul.mubr.f32.gmra.mrb[0].mxu0 %v2828
        %v3388 = vpop.f32.mrb[0].mxu0
        %v3389 = vadd.f32 0.0, %v3388
        %v3390 = vpop.f32.mrb[0].mxu0
        %3391 = vmatprep.mubr.f32.mxu0 %v2940
        %3392 = vmatmul.mubr.f32.gmra.mrb[0].mxu0 %v2830
        %v3393 = vpop.f32.mrb[0].mxu0
        %v3394 = vadd.f32 0.0, %v3393
        %v3395 = vpop.f32.mrb[0].mxu0
        %3396 = vmatprep.mubr.f32.mxu0 %v2943
        %3397 = vmatmul.mubr.f32.gmra.mrb[0].mxu0 %v2832
        %v3398 = vpop.f32.mrb[0].mxu0
        %v3399 = vadd.f32 0.0, %v3398
        %v3400 = vpop.f32.mrb[0].mxu0
        %3401 = vmatprep.mubr.f32.mxu0 %v2946
        %3402 = vmatmul.mubr.f32.gmra.mrb[0].mxu0 %v2834
        %v3403 = vpop.f32.mrb[0].mxu0
        %v3404 = vadd.f32 0.0, %v3403
        %v3405 = vpop.f32.mrb[0].mxu0
        %3406 = vmatprep.mubr.f32.mxu0 %v2949
        %3407 = vmatmul.mubr.f32.gmra.mrb[0].mxu0 %v2836
        %v3408 = vpop.f32.mrb[0].mxu0
        %v3409 = vadd.f32 0.0, %v3408
        %v3410 = vpop.f32.mrb[0].mxu0
        %3411 = vmatprep.mubr.f32.mxu0 %v2952
        %3412 = vmatmul.mubr.f32.gmra.mrb[0].mxu0 %v2838
        %v3413 = vpop.f32.mrb[0].mxu0
        %v3414 = vadd.f32 0.0, %v3413
        %v3415 = vpop.f32.mrb[0].mxu0
        %3416 = vmatprep.mubr.f32.mxu0 %v2955
        %3417 = vmatmul.mubr.f32.gmra.mrb[0].mxu0 %v2840
        %v3418 = vpop.f32.mrb[0].mxu0
        %v3419 = vadd.f32 0.0, %v3418
        %v3420 = vpop.f32.mrb[0].mxu0
        %3421 = vmatprep.mubr.f32.mxu0 %v2958
        %3422 = vmatmul.mubr.f32.gmra.mrb[0].mxu0 %v2842
        %v3423 = vpop.f32.mrb[0].mxu0
        %v3424 = vadd.f32 0.0, %v3423
        %v3425 = vpop.f32.mrb[0].mxu0
        %3426 = vmatprep.mubr.f32.mxu0 %v2961
        %3427 = vmatmul.mubr.f32.gmra.mrb[0].mxu0 %v2844
        %v3428 = vpop.f32.mrb[0].mxu0
        %v3429 = vadd.f32 0.0, %v3428
        %v3430 = vpop.f32.mrb[0].mxu0
        %3431 = vmatprep.mubr.f32.mxu0 %v2964
        %3432 = vmatmul.mubr.f32.gmra.mrb[0].mxu0 %v2846
        %v3433 = vpop.f32.mrb[0].mxu0
        %v3434 = vadd.f32 0.0, %v3433
        %v3435 = vpop.f32.mrb[0].mxu0
        %3436 = vdwg.mxu0
        %v3437 = vmax.f32 %v3033, %v3279
        %v3438 = vmax.f32 %v3038, %v3284
        %v3439 = vmax.f32 %v3043, %v3289
        %v3440 = vmax.f32 %v3048, %v3294
        %v3441 = vmax.f32 %v3053, %v3299
        %v3442 = vmax.f32 %v3058, %v3304
        %v3443 = vmax.f32 %v3063, %v3309
        %v3444 = vmax.f32 %v3068, %v3314
        %v3445 = vmax.f32 %v3073, %v3319
        %v3446 = vmax.f32 %v3078, %v3324
        %v3447 = vmax.f32 %v3083, %v3329
        %v3448 = vmax.f32 %v3088, %v3334
        %v3449 = vmax.f32 %v3093, %v3339
        %v3450 = vmax.f32 %v3098, %v3344
        %v3451 = vmax.f32 %v3103, %v3349
        %v3452 = vmax.f32 %v3108, %v3354
        %v3453 = vmax.f32 %v3113, %v3359
        %v3454 = vmax.f32 %v3118, %v3364
        %v3455 = vmax.f32 %v3123, %v3369
        %v3456 = vmax.f32 %v3128, %v3374
        %v3457 = vmax.f32 %v3133, %v3379
        %v3458 = vmax.f32 %v3138, %v3384
        %v3459 = vmax.f32 %v3143, %v3389
        %v3460 = vmax.f32 %v3148, %v3394
        %v3461 = vmax.f32 %v3153, %v3399
        %v3462 = vmax.f32 %v3158, %v3404
        %v3463 = vmax.f32 %v3163, %v3409
        %v3464 = vmax.f32 %v3168, %v3414
        %v3465 = vmax.f32 %v3173, %v3419
        %v3466 = vmax.f32 %v3178, %v3424
        %v3467 = vmax.f32 %v3183, %v3429
        %v3468 = vmax.f32 %v3188, %v3434
        %v3469 = vrot.slane %v3437, 1
        %v3470 = vrot.slane %v3438, 1
        %v3471 = vrot.slane %v3439, 1
        %v3472 = vrot.slane %v3440, 1
        %v3473 = vrot.slane %v3441, 1
        %v3474 = vrot.slane %v3442, 1
        %v3475 = vrot.slane %v3443, 1
        %v3476 = vrot.slane %v3444, 1
        %v3477 = vrot.slane %v3445, 1
        %v3478 = vrot.slane %v3446, 1
        %v3479 = vrot.slane %v3447, 1
        %v3480 = vrot.slane %v3448, 1
        %v3481 = vrot.slane %v3449, 1
        %v3482 = vrot.slane %v3450, 1
        %v3483 = vrot.slane %v3451, 1
        %v3484 = vrot.slane %v3452, 1
        %v3485 = vrot.slane %v3453, 1
        %v3486 = vrot.slane %v3454, 1
        %v3487 = vrot.slane %v3455, 1
        %v3488 = vrot.slane %v3456, 1
        %v3489 = vrot.slane %v3457, 1
        %v3490 = vrot.slane %v3458, 1
        %v3491 = vrot.slane %v3459, 1
        %v3492 = vrot.slane %v3460, 1
        %v3493 = vrot.slane %v3461, 1
        %v3494 = vrot.slane %v3462, 1
        %v3495 = vrot.slane %v3463, 1
        %v3496 = vrot.slane %v3464, 1
        %v3497 = vrot.slane %v3465, 1
        %v3498 = vrot.slane %v3466, 1
        %v3499 = vrot.slane %v3467, 1
        %v3500 = vrot.slane %v3468, 1
        %v3501 = vsel %vm490, %v3499, %v3500
        %v3502 = vsel %vm490, %v3498, %v3499
        %v3503 = vsel %vm490, %v3497, %v3498
        %v3504 = vsel %vm490, %v3496, %v3497
        %v3505 = vsel %vm490, %v3495, %v3496
        %v3506 = vsel %vm490, %v3494, %v3495
        %v3507 = vsel %vm490, %v3493, %v3494
        %v3508 = vsel %vm490, %v3492, %v3493
        %v3509 = vsel %vm490, %v3491, %v3492
        %v3510 = vsel %vm490, %v3490, %v3491
        %v3511 = vsel %vm490, %v3489, %v3490
        %v3512 = vsel %vm490, %v3488, %v3489
        %v3513 = vsel %vm490, %v3487, %v3488
        %v3514 = vsel %vm490, %v3486, %v3487
        %v3515 = vsel %vm490, %v3485, %v3486
        %v3516 = vsel %vm490, %v3484, %v3485
        %v3517 = vsel %vm490, %v3483, %v3484
        %v3518 = vsel %vm490, %v3482, %v3483
        %v3519 = vsel %vm490, %v3481, %v3482
        %v3520 = vsel %vm490, %v3480, %v3481
        %v3521 = vsel %vm490, %v3479, %v3480
        %v3522 = vsel %vm490, %v3478, %v3479
        %v3523 = vsel %vm490, %v3477, %v3478
        %v3524 = vsel %vm490, %v3476, %v3477
        %v3525 = vsel %vm490, %v3475, %v3476
        %v3526 = vsel %vm490, %v3474, %v3475
        %v3527 = vsel %vm490, %v3473, %v3474
        %v3528 = vsel %vm490, %v3472, %v3473
        %v3529 = vsel %vm490, %v3471, %v3472
        %v3530 = vsel %vm490, %v3470, %v3471
        %v3531 = vsel %vm490, %v3469, %v3470
        %v3532 = vsel %vm490, %v3500, %v3469
        %v3533 = vmax.f32 %v3437, %v3531
        %v3534 = vmax.f32 %v3438, %v3530
        %v3535 = vmax.f32 %v3439, %v3529
        %v3536 = vmax.f32 %v3440, %v3528
        %v3537 = vmax.f32 %v3441, %v3527
        %v3538 = vmax.f32 %v3442, %v3526
        %v3539 = vmax.f32 %v3443, %v3525
        %v3540 = vmax.f32 %v3444, %v3524
        %v3541 = vmax.f32 %v3445, %v3523
        %v3542 = vmax.f32 %v3446, %v3522
        %v3543 = vmax.f32 %v3447, %v3521
        %v3544 = vmax.f32 %v3448, %v3520
        %v3545 = vmax.f32 %v3449, %v3519
        %v3546 = vmax.f32 %v3450, %v3518
        %v3547 = vmax.f32 %v3451, %v3517
        %v3548 = vmax.f32 %v3452, %v3516
        %v3549 = vmax.f32 %v3453, %v3515
        %v3550 = vmax.f32 %v3454, %v3514
        %v3551 = vmax.f32 %v3455, %v3513
        %v3552 = vmax.f32 %v3456, %v3512
        %v3553 = vmax.f32 %v3457, %v3511
        %v3554 = vmax.f32 %v3458, %v3510
        %v3555 = vmax.f32 %v3459, %v3509
        %v3556 = vmax.f32 %v3460, %v3508
        %v3557 = vmax.f32 %v3461, %v3507
        %v3558 = vmax.f32 %v3462, %v3506
        %v3559 = vmax.f32 %v3463, %v3505
        %v3560 = vmax.f32 %v3464, %v3504
        %v3561 = vmax.f32 %v3465, %v3503
        %v3562 = vmax.f32 %v3466, %v3502
        %v3563 = vmax.f32 %v3467, %v3501
        %v3564 = vmax.f32 %v3468, %v3532
        %v3565 = vld [vmem:[%s2] sm:$0xff]
        %v3566 = vld [vmem:[%s2 + $0x8] sm:$0xff]
        %v3567 = vld [vmem:[%s2 + $0x10] sm:$0xff]
        %v3568 = vld [vmem:[%s2 + $0x18] sm:$0xff]
        %v3569 = vld [vmem:[%s2 + $0x20] sm:$0xff]
        %v3570 = vld [vmem:[%s2 + $0x28] sm:$0xff]
        %v3571 = vld [vmem:[%s2 + $0x30] sm:$0xff]
        %v3572 = vld [vmem:[%s2 + $0x38] sm:$0xff]
        %v3573 = vld [vmem:[%s2 + $0x40] sm:$0xff]
        %v3574 = vld [vmem:[%s2 + $0x48] sm:$0xff]
        %v3575 = vld [vmem:[%s2 + $0x50] sm:$0xff]
        %v3576 = vld [vmem:[%s2 + $0x58] sm:$0xff]
        %v3577 = vld [vmem:[%s2 + $0x60] sm:$0xff]
        %v3578 = vld [vmem:[%s2 + $0x68] sm:$0xff]
        %v3579 = vld [vmem:[%s2 + $0x70] sm:$0xff]
        %v3580 = vld [vmem:[%s2 + $0x78] sm:$0xff]
        %v3581 = vld [vmem:[%s2 + $0x80] sm:$0xff]
        %v3582 = vld [vmem:[%s2 + $0x88] sm:$0xff]
        %v3583 = vld [vmem:[%s2 + $0x90] sm:$0xff]
        %v3584 = vld [vmem:[%s2 + $0x98] sm:$0xff]
        %v3585 = vld [vmem:[%s2 + $0xa0] sm:$0xf]
        %v3586 = vld [vmem:[%s2 + $0xa8] sm:$0xf]
        %v3587 = vrot.slane %v3533, 2
        %v3588 = vrot.slane %v3534, 2
        %v3589 = vrot.slane %v3535, 2
        %v3590 = vrot.slane %v3536, 2
        %v3591 = vrot.slane %v3537, 2
        %v3592 = vrot.slane %v3538, 2
        %v3593 = vrot.slane %v3539, 2
        %v3594 = vrot.slane %v3540, 2
        %v3595 = vrot.slane %v3541, 2
        %v3596 = vrot.slane %v3542, 2
        %v3597 = vrot.slane %v3543, 2
        %v3598 = vrot.slane %v3544, 2
        %v3599 = vrot.slane %v3545, 2
        %v3600 = vrot.slane %v3546, 2
        %v3601 = vrot.slane %v3547, 2
        %v3602 = vrot.slane %v3548, 2
        %v3603 = vrot.slane %v3549, 2
        %v3604 = vrot.slane %v3550, 2
        %v3605 = vrot.slane %v3551, 2
        %v3606 = vrot.slane %v3552, 2
        %v3607 = vrot.slane %v3553, 2
        %v3608 = vrot.slane %v3554, 2
        %v3609 = vrot.slane %v3555, 2
        %v3610 = vrot.slane %v3556, 2
        %v3611 = vrot.slane %v3557, 2
        %v3612 = vrot.slane %v3558, 2
        %v3613 = vrot.slane %v3559, 2
        %v3614 = vrot.slane %v3560, 2
        %v3615 = vrot.slane %v3561, 2
        %v3616 = vrot.slane %v3562, 2
        %v3617 = vrot.slane %v3563, 2
        %v3618 = vrot.slane %v3564, 2
        %v3619 = vsel %vm1271, %v3617, %v3618
        %v3620 = vsel %vm1271, %v3616, %v3617
        %v3621 = vsel %vm1271, %v3615, %v3616
        %v3622 = vsel %vm1271, %v3614, %v3615
        %v3623 = vsel %vm1271, %v3613, %v3614
        %v3624 = vsel %vm1271, %v3612, %v3613
        %v3625 = vsel %vm1271, %v3611, %v3612
        %v3626 = vsel %vm1271, %v3610, %v3611
        %v3627 = vsel %vm1271, %v3609, %v3610
        %v3628 = vsel %vm1271, %v3608, %v3609
        %v3629 = vsel %vm1271, %v3607, %v3608
        %v3630 = vsel %vm1271, %v3606, %v3607
        %v3631 = vsel %vm1271, %v3605, %v3606
        %v3632 = vsel %vm1271, %v3604, %v3605
        %v3633 = vsel %vm1271, %v3603, %v3604
        %v3634 = vsel %vm1271, %v3602, %v3603
        %v3635 = vsel %vm1271, %v3601, %v3602
        %v3636 = vsel %vm1271, %v3600, %v3601
        %v3637 = vsel %vm1271, %v3599, %v3600
        %v3638 = vsel %vm1271, %v3598, %v3599
        %v3639 = vsel %vm1271, %v3597, %v3598
        %v3640 = vsel %vm1271, %v3596, %v3597
        %v3641 = vsel %vm1271, %v3595, %v3596
        %v3642 = vsel %vm1271, %v3594, %v3595
        %v3643 = vsel %vm1271, %v3593, %v3594
        %v3644 = vsel %vm1271, %v3592, %v3593
        %v3645 = vsel %vm1271, %v3591, %v3592
        %v3646 = vsel %vm1271, %v3590, %v3591
        %v3647 = vsel %vm1271, %v3589, %v3590
        %v3648 = vsel %vm1271, %v3588, %v3589
        %v3649 = vsel %vm1271, %v3587, %v3588
        %v3650 = vsel %vm1271, %v3618, %v3587
        %s3651 = scalar_lea.vmem %s2, 176
        %v3652 = vld [vmem:[%s3651] sm:$0xff]
        %v3653 = vld [vmem:[%s3651 + $0x8] sm:$0xff]
        %v3654 = vld [vmem:[%s3651 + $0x10] sm:$0xff]
        %v3655 = vld [vmem:[%s3651 + $0x18] sm:$0xff]
        %v3656 = vld [vmem:[%s3651 + $0x20] sm:$0xff]
        %v3657 = vld [vmem:[%s3651 + $0x28] sm:$0xff]
        %v3658 = vld [vmem:[%s3651 + $0x30] sm:$0xff]
        %v3659 = vld [vmem:[%s3651 + $0x38] sm:$0xff]
        %v3660 = vld [vmem:[%s3651 + $0x40] sm:$0xff]
        %v3661 = vld [vmem:[%s3651 + $0x48] sm:$0xff]
        %v3662 = vld [vmem:[%s3651 + $0x50] sm:$0xff]
        %v3663 = vld [vmem:[%s3651 + $0x58] sm:$0xff]
        %v3664 = vld [vmem:[%s3651 + $0x60] sm:$0xff]
        %v3665 = vld [vmem:[%s3651 + $0x68] sm:$0xff]
        %v3666 = vld [vmem:[%s3651 + $0x70] sm:$0xff]
        %v3667 = vld [vmem:[%s3651 + $0x78] sm:$0xff]
        %v3668 = vld [vmem:[%s3651 + $0x80] sm:$0xff]
        %v3669 = vld [vmem:[%s3651 + $0x88] sm:$0xff]
        %v3670 = vld [vmem:[%s3651 + $0x90] sm:$0xff]
        %v3671 = vld [vmem:[%s3651 + $0x98] sm:$0xff]
        %v3672 = vld [vmem:[%s3651 + $0xa0] sm:$0xf]
        %v3673 = vld [vmem:[%s3651 + $0xa8] sm:$0xf]
        %vm3674 = vcmask 687104
        %v3676 = vsel %vm3674, %v3649, 0
        %v3679 = vsel %vm3674, %v3648, 0
        %v3682 = vsel %vm3674, %v3647, 0
        %v3685 = vsel %vm3674, %v3646, 0
        %v3688 = vsel %vm3674, %v3645, 0
        %v3691 = vsel %vm3674, %v3644, 0
        %v3694 = vsel %vm3674, %v3643, 0
        %v3697 = vsel %vm3674, %v3642, 0
        %v3700 = vsel %vm3674, %v3641, 0
        %v3703 = vsel %vm3674, %v3640, 0
        %v3706 = vsel %vm3674, %v3639, 0
        %v3709 = vsel %vm3674, %v3638, 0
        %v3712 = vsel %vm3674, %v3637, 0
        %v3715 = vsel %vm3674, %v3636, 0
        %v3718 = vsel %vm3674, %v3635, 0
        %v3721 = vsel %vm3674, %v3634, 0
        %v3724 = vsel %vm3674, %v3633, 0
        %v3727 = vsel %vm3674, %v3632, 0
        %v3730 = vsel %vm3674, %v3631, 0
        %v3733 = vsel %vm3674, %v3630, 0
        %v3736 = vsel %vm3674, %v3629, 0
        %v3739 = vsel %vm3674, %v3628, 0
        %v3742 = vsel %vm3674, %v3627, 0
        %v3745 = vsel %vm3674, %v3626, 0
        %v3748 = vsel %vm3674, %v3625, 0
        %v3751 = vsel %vm3674, %v3624, 0
        %v3754 = vsel %vm3674, %v3623, 0
        %v3757 = vsel %vm3674, %v3622, 0
        %v3760 = vsel %vm3674, %v3621, 0
        %v3763 = vsel %vm3674, %v3620, 0
        %v3766 = vsel %vm3674, %v3619, 0
        %v3769 = vsel %vm3674, %v3650, 0
        %vm3771 = vcmask 1043456
        %v3773 = vsel %vm3771, %v3672, 0
        %v3776 = vsel %vm3771, %v3673, 0
        %3778 = vmatprep.subr.mxu0 %v3653
        %3779 = vmatpush1.msra.mxu0 %v3652
        %3780 = vmatprep.subr.mxu0 %v3655
        %3781 = vmatpush1.msra.mxu0 %v3654
        %3782 = vmatprep.subr.mxu0 %v3657
        %3783 = vmatpush1.msra.mxu0 %v3656
        %3784 = vmatprep.subr.mxu0 %v3659
        %3785 = vmatpush1.msra.mxu0 %v3658
        %3786 = vmatprep.subr.mxu0 %v3661
        %3787 = vmatpush1.msra.mxu0 %v3660
        %3788 = vmatprep.subr.mxu0 %v3663
        %3789 = vmatpush1.msra.mxu0 %v3662
        %3790 = vmatprep.subr.mxu0 %v3665
        %3791 = vmatpush1.msra.mxu0 %v3664
        %3792 = vmatprep.subr.mxu0 %v3667
        %3793 = vmatpush1.msra.mxu0 %v3666
        %3794 = vmatprep.subr.mxu0 %v3669
        %3795 = vmatpush1.msra.mxu0 %v3668
        %3796 = vmatprep.subr.mxu0 %v3671
        %3797 = vmatpush1.msra.mxu0 %v3670
        %3798 = vmatprep.subr.mxu0 %v3776
        %3799 = vmatpush1.msra.mxu0 %v3773
        %3800 = vmatprep.subr.mxu0 0.0
        %3801 = vmatpush1.msra.mxu0 0.0
        %3802 = vmatprep.subr.mxu0 0.0
        %3803 = vmatpush1.msra.mxu0 0.0
        %3804 = vmatprep.subr.mxu0 0.0
        %3805 = vmatpush1.msra.mxu0 0.0
        %3806 = vmatprep.subr.mxu0 0.0
        %3807 = vmatpush1.msra.mxu0 0.0
        %3808 = vmatprep.subr.mxu0 0.0
        %3809 = vmatpush1.msra.mxu0 0.0
        %3810 = vmatprep.subr.mxu0 0.0
        %3811 = vmatpush1.msra.mxu0 0.0
        %3812 = vmatprep.subr.mxu0 0.0
        %3813 = vmatpush1.msra.mxu0 0.0
        %3814 = vmatprep.subr.mxu0 0.0
        %3815 = vmatpush1.msra.mxu0 0.0
        %3816 = vmatprep.subr.mxu0 0.0
        %3817 = vmatpush1.msra.mxu0 0.0
        %3818 = vmatprep.subr.mxu0 0.0
        %3819 = vmatpush1.msra.mxu0 0.0
        %3820 = vmatprep.subr.mxu0 0.0
        %3821 = vmatpush1.msra.mxu0 0.0
        %3822 = vmatprep.subr.mxu0 0.0
        %3823 = vmatpush1.msra.mxu0 0.0
        %3824 = vmatprep.subr.mxu0 0.0
        %3825 = vmatpush1.msra.mxu0 0.0
        %3826 = vmatprep.subr.mxu0 0.0
        %3827 = vmatpush1.msra.mxu0 0.0
        %3828 = vmatprep.subr.mxu0 0.0
        %3829 = vmatpush1.msra.mxu0 0.0
        %3830 = vmatprep.subr.mxu0 0.0
        %3831 = vmatpush1.msra.mxu0 0.0
        %3832 = vmatprep.subr.mxu0 0.0
        %3833 = vmatpush1.msra.mxu0 0.0
        %3834 = vmatprep.subr.mxu0 0.0
        %3835 = vmatpush1.msra.mxu0 0.0
        %3836 = vmatprep.subr.mxu0 0.0
        %3837 = vmatpush1.msra.mxu0 0.0
        %3838 = vmatprep.subr.mxu0 0.0
        %3839 = vmatpush1.msra.mxu0 0.0
        %3840 = vmatprep.subr.mxu0 0.0
        %3841 = vmatpush1.msra.mxu0 0.0
        %3842 = vmatprep.mubr.f32.mxu0 0.0
        %3843 = vmatmul.mubr.f32.gmra.mrb[0].mxu0 %v3676
        %v3844 = vpop.f32.mrb[0].mxu0
        %v3845 = vadd.f32 0.0, %v3844
        %v3846 = vpop.f32.mrb[0].mxu0
        %v3847 = vadd.f32 0.0, %v3846
        %3848 = vmatprep.mubr.f32.mxu0 0.0
        %3849 = vmatmul.mubr.f32.gmra.mrb[0].mxu0 %v3679
        %v3850 = vpop.f32.mrb[0].mxu0
        %v3851 = vadd.f32 0.0, %v3850
        %v3852 = vpop.f32.mrb[0].mxu0
        %v3853 = vadd.f32 0.0, %v3852
        %3854 = vmatprep.mubr.f32.mxu0 0.0
        %3855 = vmatmul.mubr.f32.gmra.mrb[0].mxu0 %v3682
        %v3856 = vpop.f32.mrb[0].mxu0
        %v3857 = vadd.f32 0.0, %v3856
        %v3858 = vpop.f32.mrb[0].mxu0
        %v3859 = vadd.f32 0.0, %v3858
        %3860 = vmatprep.mubr.f32.mxu0 0.0
        %3861 = vmatmul.mubr.f32.gmra.mrb[0].mxu0 %v3685
        %v3862 = vpop.f32.mrb[0].mxu0
        %v3863 = vadd.f32 0.0, %v3862
        %v3864 = vpop.f32.mrb[0].mxu0
        %v3865 = vadd.f32 0.0, %v3864
        %3866 = vmatprep.mubr.f32.mxu0 0.0
        %3867 = vmatmul.mubr.f32.gmra.mrb[0].mxu0 %v3688
        %v3868 = vpop.f32.mrb[0].mxu0
        %v3869 = vadd.f32 0.0, %v3868
        %v3870 = vpop.f32.mrb[0].mxu0
        %v3871 = vadd.f32 0.0, %v3870
        %3872 = vmatprep.mubr.f32.mxu0 0.0
        %3873 = vmatmul.mubr.f32.gmra.mrb[0].mxu0 %v3691
        %v3874 = vpop.f32.mrb[0].mxu0
        %v3875 = vadd.f32 0.0, %v3874
        %v3876 = vpop.f32.mrb[0].mxu0
        %v3877 = vadd.f32 0.0, %v3876
        %3878 = vmatprep.mubr.f32.mxu0 0.0
        %3879 = vmatmul.mubr.f32.gmra.mrb[0].mxu0 %v3694
        %v3880 = vpop.f32.mrb[0].mxu0
        %v3881 = vadd.f32 0.0, %v3880
        %v3882 = vpop.f32.mrb[0].mxu0
        %v3883 = vadd.f32 0.0, %v3882
        %3884 = vmatprep.mubr.f32.mxu0 0.0
        %3885 = vmatmul.mubr.f32.gmra.mrb[0].mxu0 %v3697
        %v3886 = vpop.f32.mrb[0].mxu0
        %v3887 = vadd.f32 0.0, %v3886
        %v3888 = vpop.f32.mrb[0].mxu0
        %v3889 = vadd.f32 0.0, %v3888
        %3890 = vmatprep.mubr.f32.mxu0 0.0
        %3891 = vmatmul.mubr.f32.gmra.mrb[0].mxu0 %v3700
        %v3892 = vpop.f32.mrb[0].mxu0
        %v3893 = vadd.f32 0.0, %v3892
        %v3894 = vpop.f32.mrb[0].mxu0
        %v3895 = vadd.f32 0.0, %v3894
        %3896 = vmatprep.mubr.f32.mxu0 0.0
        %3897 = vmatmul.mubr.f32.gmra.mrb[0].mxu0 %v3703
        %v3898 = vpop.f32.mrb[0].mxu0
        %v3899 = vadd.f32 0.0, %v3898
        %v3900 = vpop.f32.mrb[0].mxu0
        %v3901 = vadd.f32 0.0, %v3900
        %3902 = vmatprep.mubr.f32.mxu0 0.0
        %3903 = vmatmul.mubr.f32.gmra.mrb[0].mxu0 %v3706
        %v3904 = vpop.f32.mrb[0].mxu0
        %v3905 = vadd.f32 0.0, %v3904
        %v3906 = vpop.f32.mrb[0].mxu0
        %v3907 = vadd.f32 0.0, %v3906
        %3908 = vmatprep.mubr.f32.mxu0 0.0
        %3909 = vmatmul.mubr.f32.gmra.mrb[0].mxu0 %v3709
        %v3910 = vpop.f32.mrb[0].mxu0
        %v3911 = vadd.f32 0.0, %v3910
        %v3912 = vpop.f32.mrb[0].mxu0
        %v3913 = vadd.f32 0.0, %v3912
        %3914 = vmatprep.mubr.f32.mxu0 0.0
        %3915 = vmatmul.mubr.f32.gmra.mrb[0].mxu0 %v3712
        %v3916 = vpop.f32.mrb[0].mxu0
        %v3917 = vadd.f32 0.0, %v3916
        %v3918 = vpop.f32.mrb[0].mxu0
        %v3919 = vadd.f32 0.0, %v3918
        %3920 = vmatprep.mubr.f32.mxu0 0.0
        %3921 = vmatmul.mubr.f32.gmra.mrb[0].mxu0 %v3715
        %v3922 = vpop.f32.mrb[0].mxu0
        %v3923 = vadd.f32 0.0, %v3922
        %v3924 = vpop.f32.mrb[0].mxu0
        %v3925 = vadd.f32 0.0, %v3924
        %3926 = vmatprep.mubr.f32.mxu0 0.0
        %3927 = vmatmul.mubr.f32.gmra.mrb[0].mxu0 %v3718
        %v3928 = vpop.f32.mrb[0].mxu0
        %v3929 = vadd.f32 0.0, %v3928
        %v3930 = vpop.f32.mrb[0].mxu0
        %v3931 = vadd.f32 0.0, %v3930
        %3932 = vmatprep.mubr.f32.mxu0 0.0
        %3933 = vmatmul.mubr.f32.gmra.mrb[0].mxu0 %v3721
        %v3934 = vpop.f32.mrb[0].mxu0
        %v3935 = vadd.f32 0.0, %v3934
        %v3936 = vpop.f32.mrb[0].mxu0
        %v3937 = vadd.f32 0.0, %v3936
        %3938 = vmatprep.mubr.f32.mxu0 0.0
        %3939 = vmatmul.mubr.f32.gmra.mrb[0].mxu0 %v3724
        %v3940 = vpop.f32.mrb[0].mxu0
        %v3941 = vadd.f32 0.0, %v3940
        %v3942 = vpop.f32.mrb[0].mxu0
        %v3943 = vadd.f32 0.0, %v3942
        %3944 = vmatprep.mubr.f32.mxu0 0.0
        %3945 = vmatmul.mubr.f32.gmra.mrb[0].mxu0 %v3727
        %v3946 = vpop.f32.mrb[0].mxu0
        %v3947 = vadd.f32 0.0, %v3946
        %v3948 = vpop.f32.mrb[0].mxu0
        %v3949 = vadd.f32 0.0, %v3948
        %3950 = vmatprep.mubr.f32.mxu0 0.0
        %3951 = vmatmul.mubr.f32.gmra.mrb[0].mxu0 %v3730
        %v3952 = vpop.f32.mrb[0].mxu0
        %v3953 = vadd.f32 0.0, %v3952
        %v3954 = vpop.f32.mrb[0].mxu0
        %v3955 = vadd.f32 0.0, %v3954
        %3956 = vmatprep.mubr.f32.mxu0 0.0
        %3957 = vmatmul.mubr.f32.gmra.mrb[0].mxu0 %v3733
        %v3958 = vpop.f32.mrb[0].mxu0
        %v3959 = vadd.f32 0.0, %v3958
        %v3960 = vpop.f32.mrb[0].mxu0
        %v3961 = vadd.f32 0.0, %v3960
        %3962 = vmatprep.mubr.f32.mxu0 0.0
        %3963 = vmatmul.mubr.f32.gmra.mrb[0].mxu0 %v3736
        %v3964 = vpop.f32.mrb[0].mxu0
        %v3965 = vadd.f32 0.0, %v3964
        %v3966 = vpop.f32.mrb[0].mxu0
        %v3967 = vadd.f32 0.0, %v3966
        %3968 = vmatprep.mubr.f32.mxu0 0.0
        %3969 = vmatmul.mubr.f32.gmra.mrb[0].mxu0 %v3739
        %v3970 = vpop.f32.mrb[0].mxu0
        %v3971 = vadd.f32 0.0, %v3970
        %v3972 = vpop.f32.mrb[0].mxu0
        %v3973 = vadd.f32 0.0, %v3972
        %3974 = vmatprep.mubr.f32.mxu0 0.0
        %3975 = vmatmul.mubr.f32.gmra.mrb[0].mxu0 %v3742
        %v3976 = vpop.f32.mrb[0].mxu0
        %v3977 = vadd.f32 0.0, %v3976
        %v3978 = vpop.f32.mrb[0].mxu0
        %v3979 = vadd.f32 0.0, %v3978
        %3980 = vmatprep.mubr.f32.mxu0 0.0
        %3981 = vmatmul.mubr.f32.gmra.mrb[0].mxu0 %v3745
        %v3982 = vpop.f32.mrb[0].mxu0
        %v3983 = vadd.f32 0.0, %v3982
        %v3984 = vpop.f32.mrb[0].mxu0
        %v3985 = vadd.f32 0.0, %v3984
        %3986 = vmatprep.mubr.f32.mxu0 0.0
        %3987 = vmatmul.mubr.f32.gmra.mrb[0].mxu0 %v3748
        %v3988 = vpop.f32.mrb[0].mxu0
        %v3989 = vadd.f32 0.0, %v3988
        %v3990 = vpop.f32.mrb[0].mxu0
        %v3991 = vadd.f32 0.0, %v3990
        %3992 = vmatprep.mubr.f32.mxu0 0.0
        %3993 = vmatmul.mubr.f32.gmra.mrb[0].mxu0 %v3751
        %v3994 = vpop.f32.mrb[0].mxu0
        %v3995 = vadd.f32 0.0, %v3994
        %v3996 = vpop.f32.mrb[0].mxu0
        %v3997 = vadd.f32 0.0, %v3996
        %3998 = vmatprep.mubr.f32.mxu0 0.0
        %3999 = vmatmul.mubr.f32.gmra.mrb[0].mxu0 %v3754
        %v4000 = vpop.f32.mrb[0].mxu0
        %v4001 = vadd.f32 0.0, %v4000
        %v4002 = vpop.f32.mrb[0].mxu0
        %v4003 = vadd.f32 0.0, %v4002
        %4004 = vmatprep.mubr.f32.mxu0 0.0
        %4005 = vmatmul.mubr.f32.gmra.mrb[0].mxu0 %v3757
        %v4006 = vpop.f32.mrb[0].mxu0
        %v4007 = vadd.f32 0.0, %v4006
        %v4008 = vpop.f32.mrb[0].mxu0
        %v4009 = vadd.f32 0.0, %v4008
        %4010 = vmatprep.mubr.f32.mxu0 0.0
        %4011 = vmatmul.mubr.f32.gmra.mrb[0].mxu0 %v3760
        %v4012 = vpop.f32.mrb[0].mxu0
        %v4013 = vadd.f32 0.0, %v4012
        %v4014 = vpop.f32.mrb[0].mxu0
        %v4015 = vadd.f32 0.0, %v4014
        %4016 = vmatprep.mubr.f32.mxu0 0.0
        %4017 = vmatmul.mubr.f32.gmra.mrb[0].mxu0 %v3763
        %v4018 = vpop.f32.mrb[0].mxu0
        %v4019 = vadd.f32 0.0, %v4018
        %v4020 = vpop.f32.mrb[0].mxu0
        %v4021 = vadd.f32 0.0, %v4020
        %4022 = vmatprep.mubr.f32.mxu0 0.0
        %4023 = vmatmul.mubr.f32.gmra.mrb[0].mxu0 %v3766
        %v4024 = vpop.f32.mrb[0].mxu0
        %v4025 = vadd.f32 0.0, %v4024
        %v4026 = vpop.f32.mrb[0].mxu0
        %v4027 = vadd.f32 0.0, %v4026
        %4028 = vmatprep.mubr.f32.mxu0 0.0
        %4029 = vmatmul.mubr.f32.gmra.mrb[0].mxu0 %v3769
        %v4030 = vpop.f32.mrb[0].mxu0
        %v4031 = vadd.f32 0.0, %v4030
        %v4032 = vpop.f32.mrb[0].mxu0
        %v4033 = vadd.f32 0.0, %v4032
        %4034 = vdwg.mxu0
        %v4036 = vsel %vm3674, %v3533, 0
        %v4039 = vsel %vm3674, %v3534, 0
        %v4042 = vsel %vm3674, %v3535, 0
        %v4045 = vsel %vm3674, %v3536, 0
        %v4048 = vsel %vm3674, %v3537, 0
        %v4051 = vsel %vm3674, %v3538, 0
        %v4054 = vsel %vm3674, %v3539, 0
        %v4057 = vsel %vm3674, %v3540, 0
        %v4060 = vsel %vm3674, %v3541, 0
        %v4063 = vsel %vm3674, %v3542, 0
        %v4066 = vsel %vm3674, %v3543, 0
        %v4069 = vsel %vm3674, %v3544, 0
        %v4072 = vsel %vm3674, %v3545, 0
        %v4075 = vsel %vm3674, %v3546, 0
        %v4078 = vsel %vm3674, %v3547, 0
        %v4081 = vsel %vm3674, %v3548, 0
        %v4084 = vsel %vm3674, %v3549, 0
        %v4087 = vsel %vm3674, %v3550, 0
        %v4090 = vsel %vm3674, %v3551, 0
        %v4093 = vsel %vm3674, %v3552, 0
        %v4096 = vsel %vm3674, %v3553, 0
        %v4099 = vsel %vm3674, %v3554, 0
        %v4102 = vsel %vm3674, %v3555, 0
        %v4105 = vsel %vm3674, %v3556, 0
        %v4108 = vsel %vm3674, %v3557, 0
        %v4111 = vsel %vm3674, %v3558, 0
        %v4114 = vsel %vm3674, %v3559, 0
        %v4117 = vsel %vm3674, %v3560, 0
        %v4120 = vsel %vm3674, %v3561, 0
        %v4123 = vsel %vm3674, %v3562, 0
        %v4126 = vsel %vm3674, %v3563, 0
        %v4129 = vsel %vm3674, %v3564, 0
        %v4132 = vsel %vm3771, %v3585, 0
        %v4135 = vsel %vm3771, %v3586, 0
        %4137 = vmatprep.subr.mxu0 %v3566
        %4138 = vmatpush1.msra.mxu0 %v3565
        %4139 = vmatprep.subr.mxu0 %v3568
        %4140 = vmatpush1.msra.mxu0 %v3567
        %4141 = vmatprep.subr.mxu0 %v3570
        %4142 = vmatpush1.msra.mxu0 %v3569
        %4143 = vmatprep.subr.mxu0 %v3572
        %4144 = vmatpush1.msra.mxu0 %v3571
        %4145 = vmatprep.subr.mxu0 %v3574
        %4146 = vmatpush1.msra.mxu0 %v3573
        %4147 = vmatprep.subr.mxu0 %v3576
        %4148 = vmatpush1.msra.mxu0 %v3575
        %4149 = vmatprep.subr.mxu0 %v3578
        %4150 = vmatpush1.msra.mxu0 %v3577
        %4151 = vmatprep.subr.mxu0 %v3580
        %4152 = vmatpush1.msra.mxu0 %v3579
        %4153 = vmatprep.subr.mxu0 %v3582
        %4154 = vmatpush1.msra.mxu0 %v3581
        %4155 = vmatprep.subr.mxu0 %v3584
        %4156 = vmatpush1.msra.mxu0 %v3583
        %4157 = vmatprep.subr.mxu0 %v4135
        %4158 = vmatpush1.msra.mxu0 %v4132
        %4159 = vmatprep.subr.mxu0 0.0
        %4160 = vmatpush1.msra.mxu0 0.0
        %4161 = vmatprep.subr.mxu0 0.0
        %4162 = vmatpush1.msra.mxu0 0.0
        %4163 = vmatprep.subr.mxu0 0.0
        %4164 = vmatpush1.msra.mxu0 0.0
        %4165 = vmatprep.subr.mxu0 0.0
        %4166 = vmatpush1.msra.mxu0 0.0
        %4167 = vmatprep.subr.mxu0 0.0
        %4168 = vmatpush1.msra.mxu0 0.0
        %4169 = vmatprep.subr.mxu0 0.0
        %4170 = vmatpush1.msra.mxu0 0.0
        %4171 = vmatprep.subr.mxu0 0.0
        %4172 = vmatpush1.msra.mxu0 0.0
        %4173 = vmatprep.subr.mxu0 0.0
        %4174 = vmatpush1.msra.mxu0 0.0
        %4175 = vmatprep.subr.mxu0 0.0
        %4176 = vmatpush1.msra.mxu0 0.0
        %4177 = vmatprep.subr.mxu0 0.0
        %4178 = vmatpush1.msra.mxu0 0.0
        %4179 = vmatprep.subr.mxu0 0.0
        %4180 = vmatpush1.msra.mxu0 0.0
        %4181 = vmatprep.subr.mxu0 0.0
        %4182 = vmatpush1.msra.mxu0 0.0
        %4183 = vmatprep.subr.mxu0 0.0
        %4184 = vmatpush1.msra.mxu0 0.0
        %4185 = vmatprep.subr.mxu0 0.0
        %4186 = vmatpush1.msra.mxu0 0.0
        %4187 = vmatprep.subr.mxu0 0.0
        %4188 = vmatpush1.msra.mxu0 0.0
        %4189 = vmatprep.subr.mxu0 0.0
        %4190 = vmatpush1.msra.mxu0 0.0
        %4191 = vmatprep.subr.mxu0 0.0
        %4192 = vmatpush1.msra.mxu0 0.0
        %4193 = vmatprep.subr.mxu0 0.0
        %4194 = vmatpush1.msra.mxu0 0.0
        %4195 = vmatprep.subr.mxu0 0.0
        %4196 = vmatpush1.msra.mxu0 0.0
        %4197 = vmatprep.subr.mxu0 0.0
        %4198 = vmatpush1.msra.mxu0 0.0
        %4199 = vmatprep.subr.mxu0 0.0
        %4200 = vmatpush1.msra.mxu0 0.0
        %4201 = vmatprep.mubr.f32.mxu0 0.0
        %4202 = vmatmul.mubr.f32.gmra.mrb[0].mxu0 %v4036
        %v4203 = vpop.f32.mrb[0].mxu0
        %v4204 = vadd.f32 %v3845, %v4203
        %v4205 = vpop.f32.mrb[0].mxu0
        %v4206 = vadd.f32 %v3847, %v4205
        %4207 = vmatprep.mubr.f32.mxu0 0.0
        %4208 = vmatmul.mubr.f32.gmra.mrb[0].mxu0 %v4039
        %v4209 = vpop.f32.mrb[0].mxu0
        %v4210 = vadd.f32 %v3851, %v4209
        %v4211 = vpop.f32.mrb[0].mxu0
        %v4212 = vadd.f32 %v3853, %v4211
        %4213 = vmatprep.mubr.f32.mxu0 0.0
        %4214 = vmatmul.mubr.f32.gmra.mrb[0].mxu0 %v4042
        %v4215 = vpop.f32.mrb[0].mxu0
        %v4216 = vadd.f32 %v3857, %v4215
        %v4217 = vpop.f32.mrb[0].mxu0
        %v4218 = vadd.f32 %v3859, %v4217
        %4219 = vmatprep.mubr.f32.mxu0 0.0
        %4220 = vmatmul.mubr.f32.gmra.mrb[0].mxu0 %v4045
        %v4221 = vpop.f32.mrb[0].mxu0
        %v4222 = vadd.f32 %v3863, %v4221
        %v4223 = vpop.f32.mrb[0].mxu0
        %v4224 = vadd.f32 %v3865, %v4223
        %4225 = vmatprep.mubr.f32.mxu0 0.0
        %4226 = vmatmul.mubr.f32.gmra.mrb[0].mxu0 %v4048
        %v4227 = vpop.f32.mrb[0].mxu0
        %v4228 = vadd.f32 %v3869, %v4227
        %v4229 = vpop.f32.mrb[0].mxu0
        %v4230 = vadd.f32 %v3871, %v4229
        %4231 = vmatprep.mubr.f32.mxu0 0.0
        %4232 = vmatmul.mubr.f32.gmra.mrb[0].mxu0 %v4051
        %v4233 = vpop.f32.mrb[0].mxu0
        %v4234 = vadd.f32 %v3875, %v4233
        %v4235 = vpop.f32.mrb[0].mxu0
        %v4236 = vadd.f32 %v3877, %v4235
        %4237 = vmatprep.mubr.f32.mxu0 0.0
        %4238 = vmatmul.mubr.f32.gmra.mrb[0].mxu0 %v4054
        %v4239 = vpop.f32.mrb[0].mxu0
        %v4240 = vadd.f32 %v3881, %v4239
        %v4241 = vpop.f32.mrb[0].mxu0
        %v4242 = vadd.f32 %v3883, %v4241
        %4243 = vmatprep.mubr.f32.mxu0 0.0
        %4244 = vmatmul.mubr.f32.gmra.mrb[0].mxu0 %v4057
        %v4245 = vpop.f32.mrb[0].mxu0
        %v4246 = vadd.f32 %v3887, %v4245
        %v4247 = vpop.f32.mrb[0].mxu0
        %v4248 = vadd.f32 %v3889, %v4247
        %4249 = vmatprep.mubr.f32.mxu0 0.0
        %4250 = vmatmul.mubr.f32.gmra.mrb[0].mxu0 %v4060
        %v4251 = vpop.f32.mrb[0].mxu0
        %v4252 = vadd.f32 %v3893, %v4251
        %v4253 = vpop.f32.mrb[0].mxu0
        %v4254 = vadd.f32 %v3895, %v4253
        %4255 = vmatprep.mubr.f32.mxu0 0.0
        %4256 = vmatmul.mubr.f32.gmra.mrb[0].mxu0 %v4063
        %v4257 = vpop.f32.mrb[0].mxu0
        %v4258 = vadd.f32 %v3899, %v4257
        %v4259 = vpop.f32.mrb[0].mxu0
        %v4260 = vadd.f32 %v3901, %v4259
        %4261 = vmatprep.mubr.f32.mxu0 0.0
        %4262 = vmatmul.mubr.f32.gmra.mrb[0].mxu0 %v4066
        %v4263 = vpop.f32.mrb[0].mxu0
        %v4264 = vadd.f32 %v3905, %v4263
        %v4265 = vpop.f32.mrb[0].mxu0
        %v4266 = vadd.f32 %v3907, %v4265
        %4267 = vmatprep.mubr.f32.mxu0 0.0
        %4268 = vmatmul.mubr.f32.gmra.mrb[0].mxu0 %v4069
        %v4269 = vpop.f32.mrb[0].mxu0
        %v4270 = vadd.f32 %v3911, %v4269
        %v4271 = vpop.f32.mrb[0].mxu0
        %v4272 = vadd.f32 %v3913, %v4271
        %4273 = vmatprep.mubr.f32.mxu0 0.0
        %4274 = vmatmul.mubr.f32.gmra.mrb[0].mxu0 %v4072
        %v4275 = vpop.f32.mrb[0].mxu0
        %v4276 = vadd.f32 %v3917, %v4275
        %v4277 = vpop.f32.mrb[0].mxu0
        %v4278 = vadd.f32 %v3919, %v4277
        %4279 = vmatprep.mubr.f32.mxu0 0.0
        %4280 = vmatmul.mubr.f32.gmra.mrb[0].mxu0 %v4075
        %v4281 = vpop.f32.mrb[0].mxu0
        %v4282 = vadd.f32 %v3923, %v4281
        %v4283 = vpop.f32.mrb[0].mxu0
        %v4284 = vadd.f32 %v3925, %v4283
        %4285 = vmatprep.mubr.f32.mxu0 0.0
        %4286 = vmatmul.mubr.f32.gmra.mrb[0].mxu0 %v4078
        %v4287 = vpop.f32.mrb[0].mxu0
        %v4288 = vadd.f32 %v3929, %v4287
        %v4289 = vpop.f32.mrb[0].mxu0
        %v4290 = vadd.f32 %v3931, %v4289
        %4291 = vmatprep.mubr.f32.mxu0 0.0
        %4292 = vmatmul.mubr.f32.gmra.mrb[0].mxu0 %v4081
        %v4293 = vpop.f32.mrb[0].mxu0
        %v4294 = vadd.f32 %v3935, %v4293
        %v4295 = vpop.f32.mrb[0].mxu0
        %v4296 = vadd.f32 %v3937, %v4295
        %4297 = vmatprep.mubr.f32.mxu0 0.0
        %4298 = vmatmul.mubr.f32.gmra.mrb[0].mxu0 %v4084
        %v4299 = vpop.f32.mrb[0].mxu0
        %v4300 = vadd.f32 %v3941, %v4299
        %v4301 = vpop.f32.mrb[0].mxu0
        %v4302 = vadd.f32 %v3943, %v4301
        %4303 = vmatprep.mubr.f32.mxu0 0.0
        %4304 = vmatmul.mubr.f32.gmra.mrb[0].mxu0 %v4087
        %v4305 = vpop.f32.mrb[0].mxu0
        %v4306 = vadd.f32 %v3947, %v4305
        %v4307 = vpop.f32.mrb[0].mxu0
        %v4308 = vadd.f32 %v3949, %v4307
        %4309 = vmatprep.mubr.f32.mxu0 0.0
        %4310 = vmatmul.mubr.f32.gmra.mrb[0].mxu0 %v4090
        %v4311 = vpop.f32.mrb[0].mxu0
        %v4312 = vadd.f32 %v3953, %v4311
        %v4313 = vpop.f32.mrb[0].mxu0
        %v4314 = vadd.f32 %v3955, %v4313
        %4315 = vmatprep.mubr.f32.mxu0 0.0
        %4316 = vmatmul.mubr.f32.gmra.mrb[0].mxu0 %v4093
        %v4317 = vpop.f32.mrb[0].mxu0
        %v4318 = vadd.f32 %v3959, %v4317
        %v4319 = vpop.f32.mrb[0].mxu0
        %v4320 = vadd.f32 %v3961, %v4319
        %4321 = vmatprep.mubr.f32.mxu0 0.0
        %4322 = vmatmul.mubr.f32.gmra.mrb[0].mxu0 %v4096
        %v4323 = vpop.f32.mrb[0].mxu0
        %v4324 = vadd.f32 %v3965, %v4323
        %v4325 = vpop.f32.mrb[0].mxu0
        %v4326 = vadd.f32 %v3967, %v4325
        %4327 = vmatprep.mubr.f32.mxu0 0.0
        %4328 = vmatmul.mubr.f32.gmra.mrb[0].mxu0 %v4099
        %v4329 = vpop.f32.mrb[0].mxu0
        %v4330 = vadd.f32 %v3971, %v4329
        %v4331 = vpop.f32.mrb[0].mxu0
        %v4332 = vadd.f32 %v3973, %v4331
        %4333 = vmatprep.mubr.f32.mxu0 0.0
        %4334 = vmatmul.mubr.f32.gmra.mrb[0].mxu0 %v4102
        %v4335 = vpop.f32.mrb[0].mxu0
        %v4336 = vadd.f32 %v3977, %v4335
        %v4337 = vpop.f32.mrb[0].mxu0
        %v4338 = vadd.f32 %v3979, %v4337
        %4339 = vmatprep.mubr.f32.mxu0 0.0
        %4340 = vmatmul.mubr.f32.gmra.mrb[0].mxu0 %v4105
        %v4341 = vpop.f32.mrb[0].mxu0
        %v4342 = vadd.f32 %v3983, %v4341
        %v4343 = vpop.f32.mrb[0].mxu0
        %v4344 = vadd.f32 %v3985, %v4343
        %4345 = vmatprep.mubr.f32.mxu0 0.0
        %4346 = vmatmul.mubr.f32.gmra.mrb[0].mxu0 %v4108
        %v4347 = vpop.f32.mrb[0].mxu0
        %v4348 = vadd.f32 %v3989, %v4347
        %v4349 = vpop.f32.mrb[0].mxu0
        %v4350 = vadd.f32 %v3991, %v4349
        %4351 = vmatprep.mubr.f32.mxu0 0.0
        %4352 = vmatmul.mubr.f32.gmra.mrb[0].mxu0 %v4111
        %v4353 = vpop.f32.mrb[0].mxu0
        %v4354 = vadd.f32 %v3995, %v4353
        %v4355 = vpop.f32.mrb[0].mxu0
        %v4356 = vadd.f32 %v3997, %v4355
        %4357 = vmatprep.mubr.f32.mxu0 0.0
        %4358 = vmatmul.mubr.f32.gmra.mrb[0].mxu0 %v4114
        %v4359 = vpop.f32.mrb[0].mxu0
        %v4360 = vadd.f32 %v4001, %v4359
        %v4361 = vpop.f32.mrb[0].mxu0
        %v4362 = vadd.f32 %v4003, %v4361
        %4363 = vmatprep.mubr.f32.mxu0 0.0
        %4364 = vmatmul.mubr.f32.gmra.mrb[0].mxu0 %v4117
        %v4365 = vpop.f32.mrb[0].mxu0
        %v4366 = vadd.f32 %v4007, %v4365
        %v4367 = vpop.f32.mrb[0].mxu0
        %v4368 = vadd.f32 %v4009, %v4367
        %4369 = vmatprep.mubr.f32.mxu0 0.0
        %4370 = vmatmul.mubr.f32.gmra.mrb[0].mxu0 %v4120
        %v4371 = vpop.f32.mrb[0].mxu0
        %v4372 = vadd.f32 %v4013, %v4371
        %v4373 = vpop.f32.mrb[0].mxu0
        %v4374 = vadd.f32 %v4015, %v4373
        %4375 = vmatprep.mubr.f32.mxu0 0.0
        %4376 = vmatmul.mubr.f32.gmra.mrb[0].mxu0 %v4123
        %v4377 = vpop.f32.mrb[0].mxu0
        %v4378 = vadd.f32 %v4019, %v4377
        %v4379 = vpop.f32.mrb[0].mxu0
        %v4380 = vadd.f32 %v4021, %v4379
        %4381 = vmatprep.mubr.f32.mxu0 0.0
        %4382 = vmatmul.mubr.f32.gmra.mrb[0].mxu0 %v4126
        %v4383 = vpop.f32.mrb[0].mxu0
        %v4384 = vadd.f32 %v4025, %v4383
        %v4385 = vpop.f32.mrb[0].mxu0
        %v4386 = vadd.f32 %v4027, %v4385
        %4387 = vmatprep.mubr.f32.mxu0 0.0
        %4388 = vmatmul.mubr.f32.gmra.mrb[0].mxu0 %v4129
        %v4389 = vpop.f32.mrb[0].mxu0
        %v4390 = vadd.f32 %v4031, %v4389
        %v4391 = vpop.f32.mrb[0].mxu0
        %v4392 = vadd.f32 %v4033, %v4391
        %4393 = vdwg.mxu0
        %v4394 = vrot.slane %v3533, 4
        %v4395 = vrot.slane %v3534, 4
        %v4396 = vrot.slane %v3535, 4
        %v4397 = vrot.slane %v3536, 4
        %v4398 = vrot.slane %v3537, 4
        %v4399 = vrot.slane %v3538, 4
        %v4400 = vrot.slane %v3539, 4
        %v4401 = vrot.slane %v3540, 4
        %v4402 = vrot.slane %v3541, 4
        %v4403 = vrot.slane %v3542, 4
        %v4404 = vrot.slane %v3543, 4
        %v4405 = vrot.slane %v3544, 4
        %v4406 = vrot.slane %v3545, 4
        %v4407 = vrot.slane %v3546, 4
        %v4408 = vrot.slane %v3547, 4
        %v4409 = vrot.slane %v3548, 4
        %v4410 = vrot.slane %v3549, 4
        %v4411 = vrot.slane %v3550, 4
        %v4412 = vrot.slane %v3551, 4
        %v4413 = vrot.slane %v3552, 4
        %v4414 = vrot.slane %v3553, 4
        %v4415 = vrot.slane %v3554, 4
        %v4416 = vrot.slane %v3555, 4
        %v4417 = vrot.slane %v3556, 4
        %v4418 = vrot.slane %v3557, 4
        %v4419 = vrot.slane %v3558, 4
        %v4420 = vrot.slane %v3559, 4
        %v4421 = vrot.slane %v3560, 4
        %v4422 = vrot.slane %v3561, 4
        %v4423 = vrot.slane %v3562, 4
        %v4424 = vrot.slane %v3563, 4
        %v4425 = vrot.slane %v3564, 4
        %v4426 = vsel %vm2253, %v4424, %v4425
        %v4427 = vsel %vm2253, %v4423, %v4424
        %v4428 = vsel %vm2253, %v4422, %v4423
        %v4429 = vsel %vm2253, %v4421, %v4422
        %v4430 = vsel %vm2253, %v4420, %v4421
        %v4431 = vsel %vm2253, %v4419, %v4420
        %v4432 = vsel %vm2253, %v4418, %v4419
        %v4433 = vsel %vm2253, %v4417, %v4418
        %v4434 = vsel %vm2253, %v4416, %v4417
        %v4435 = vsel %vm2253, %v4415, %v4416
        %v4436 = vsel %vm2253, %v4414, %v4415
        %v4437 = vsel %vm2253, %v4413, %v4414
        %v4438 = vsel %vm2253, %v4412, %v4413
        %v4439 = vsel %vm2253, %v4411, %v4412
        %v4440 = vsel %vm2253, %v4410, %v4411
        %v4441 = vsel %vm2253, %v4409, %v4410
        %v4442 = vsel %vm2253, %v4408, %v4409
        %v4443 = vsel %vm2253, %v4407, %v4408
        %v4444 = vsel %vm2253, %v4406, %v4407
        %v4445 = vsel %vm2253, %v4405, %v4406
        %v4446 = vsel %vm2253, %v4404, %v4405
        %v4447 = vsel %vm2253, %v4403, %v4404
        %v4448 = vsel %vm2253, %v4402, %v4403
        %v4449 = vsel %vm2253, %v4401, %v4402
        %v4450 = vsel %vm2253, %v4400, %v4401
        %v4451 = vsel %vm2253, %v4399, %v4400
        %v4452 = vsel %vm2253, %v4398, %v4399
        %v4453 = vsel %vm2253, %v4397, %v4398
        %v4454 = vsel %vm2253, %v4396, %v4397
        %v4455 = vsel %vm2253, %v4395, %v4396
        %v4456 = vsel %vm2253, %v4394, %v4395
        %v4457 = vsel %vm2253, %v4425, %v4394
        %s4458 = scalar_lea.vmem %s2, 352
        %v4459 = vld [vmem:[%s4458] sm:$0xff]
        %v4460 = vld [vmem:[%s4458 + $0x8] sm:$0xff]
        %v4461 = vld [vmem:[%s4458 + $0x10] sm:$0xff]
        %v4462 = vld [vmem:[%s4458 + $0x18] sm:$0xff]
        %v4463 = vld [vmem:[%s4458 + $0x20] sm:$0xff]
        %v4464 = vld [vmem:[%s4458 + $0x28] sm:$0xff]
        %v4465 = vld [vmem:[%s4458 + $0x30] sm:$0xff]
        %v4466 = vld [vmem:[%s4458 + $0x38] sm:$0xff]
        %v4467 = vld [vmem:[%s4458 + $0x40] sm:$0xff]
        %v4468 = vld [vmem:[%s4458 + $0x48] sm:$0xff]
        %v4469 = vld [vmem:[%s4458 + $0x50] sm:$0xff]
        %v4470 = vld [vmem:[%s4458 + $0x58] sm:$0xff]
        %v4471 = vld [vmem:[%s4458 + $0x60] sm:$0xff]
        %v4472 = vld [vmem:[%s4458 + $0x68] sm:$0xff]
        %v4473 = vld [vmem:[%s4458 + $0x70] sm:$0xff]
        %v4474 = vld [vmem:[%s4458 + $0x78] sm:$0xff]
        %v4475 = vld [vmem:[%s4458 + $0x80] sm:$0xff]
        %v4476 = vld [vmem:[%s4458 + $0x88] sm:$0xff]
        %v4477 = vld [vmem:[%s4458 + $0x90] sm:$0xff]
        %v4478 = vld [vmem:[%s4458 + $0x98] sm:$0xff]
        %v4479 = vld [vmem:[%s4458 + $0xa0] sm:$0xf]
        %v4480 = vld [vmem:[%s4458 + $0xa8] sm:$0xf]
        %v4482 = vsel %vm3674, %v4456, 0
        %v4485 = vsel %vm3674, %v4455, 0
        %v4488 = vsel %vm3674, %v4454, 0
        %v4491 = vsel %vm3674, %v4453, 0
        %v4494 = vsel %vm3674, %v4452, 0
        %v4497 = vsel %vm3674, %v4451, 0
        %v4500 = vsel %vm3674, %v4450, 0
        %v4503 = vsel %vm3674, %v4449, 0
        %v4506 = vsel %vm3674, %v4448, 0
        %v4509 = vsel %vm3674, %v4447, 0
        %v4512 = vsel %vm3674, %v4446, 0
        %v4515 = vsel %vm3674, %v4445, 0
        %v4518 = vsel %vm3674, %v4444, 0
        %v4521 = vsel %vm3674, %v4443, 0
        %v4524 = vsel %vm3674, %v4442, 0
        %v4527 = vsel %vm3674, %v4441, 0
        %v4530 = vsel %vm3674, %v4440, 0
        %v4533 = vsel %vm3674, %v4439, 0
        %v4536 = vsel %vm3674, %v4438, 0
        %v4539 = vsel %vm3674, %v4437, 0
        %v4542 = vsel %vm3674, %v4436, 0
        %v4545 = vsel %vm3674, %v4435, 0
        %v4548 = vsel %vm3674, %v4434, 0
        %v4551 = vsel %vm3674, %v4433, 0
        %v4554 = vsel %vm3674, %v4432, 0
        %v4557 = vsel %vm3674, %v4431, 0
        %v4560 = vsel %vm3674, %v4430, 0
        %v4563 = vsel %vm3674, %v4429, 0
        %v4566 = vsel %vm3674, %v4428, 0
        %v4569 = vsel %vm3674, %v4427, 0
        %v4572 = vsel %vm3674, %v4426, 0
        %v4575 = vsel %vm3674, %v4457, 0
        %v4578 = vsel %vm3771, %v4479, 0
        %v4581 = vsel %vm3771, %v4480, 0
        %4583 = vmatprep.subr.mxu0 %v4460
        %4584 = vmatpush1.msra.mxu0 %v4459
        %4585 = vmatprep.subr.mxu0 %v4462
        %4586 = vmatpush1.msra.mxu0 %v4461
        %4587 = vmatprep.subr.mxu0 %v4464
        %4588 = vmatpush1.msra.mxu0 %v4463
        %4589 = vmatprep.subr.mxu0 %v4466
        %4590 = vmatpush1.msra.mxu0 %v4465
        %4591 = vmatprep.subr.mxu0 %v4468
        %4592 = vmatpush1.msra.mxu0 %v4467
        %4593 = vmatprep.subr.mxu0 %v4470
        %4594 = vmatpush1.msra.mxu0 %v4469
        %4595 = vmatprep.subr.mxu0 %v4472
        %4596 = vmatpush1.msra.mxu0 %v4471
        %4597 = vmatprep.subr.mxu0 %v4474
        %4598 = vmatpush1.msra.mxu0 %v4473
        %4599 = vmatprep.subr.mxu0 %v4476
        %4600 = vmatpush1.msra.mxu0 %v4475
        %4601 = vmatprep.subr.mxu0 %v4478
        %4602 = vmatpush1.msra.mxu0 %v4477
        %4603 = vmatprep.subr.mxu0 %v4581
        %4604 = vmatpush1.msra.mxu0 %v4578
        %4605 = vmatprep.subr.mxu0 0.0
        %4606 = vmatpush1.msra.mxu0 0.0
        %4607 = vmatprep.subr.mxu0 0.0
        %4608 = vmatpush1.msra.mxu0 0.0
        %4609 = vmatprep.subr.mxu0 0.0
        %4610 = vmatpush1.msra.mxu0 0.0
        %4611 = vmatprep.subr.mxu0 0.0
        %4612 = vmatpush1.msra.mxu0 0.0
        %4613 = vmatprep.subr.mxu0 0.0
        %4614 = vmatpush1.msra.mxu0 0.0
        %4615 = vmatprep.subr.mxu0 0.0
        %4616 = vmatpush1.msra.mxu0 0.0
        %4617 = vmatprep.subr.mxu0 0.0
        %4618 = vmatpush1.msra.mxu0 0.0
        %4619 = vmatprep.subr.mxu0 0.0
        %4620 = vmatpush1.msra.mxu0 0.0
        %4621 = vmatprep.subr.mxu0 0.0
        %4622 = vmatpush1.msra.mxu0 0.0
        %4623 = vmatprep.subr.mxu0 0.0
        %4624 = vmatpush1.msra.mxu0 0.0
        %4625 = vmatprep.subr.mxu0 0.0
        %4626 = vmatpush1.msra.mxu0 0.0
        %4627 = vmatprep.subr.mxu0 0.0
        %4628 = vmatpush1.msra.mxu0 0.0
        %4629 = vmatprep.subr.mxu0 0.0
        %4630 = vmatpush1.msra.mxu0 0.0
        %4631 = vmatprep.subr.mxu0 0.0
        %4632 = vmatpush1.msra.mxu0 0.0
        %4633 = vmatprep.subr.mxu0 0.0
        %4634 = vmatpush1.msra.mxu0 0.0
        %4635 = vmatprep.subr.mxu0 0.0
        %4636 = vmatpush1.msra.mxu0 0.0
        %4637 = vmatprep.subr.mxu0 0.0
        %4638 = vmatpush1.msra.mxu0 0.0
        %4639 = vmatprep.subr.mxu0 0.0
        %4640 = vmatpush1.msra.mxu0 0.0
        %4641 = vmatprep.subr.mxu0 0.0
        %4642 = vmatpush1.msra.mxu0 0.0
        %4643 = vmatprep.subr.mxu0 0.0
        %4644 = vmatpush1.msra.mxu0 0.0
        %4645 = vmatprep.subr.mxu0 0.0
        %4646 = vmatpush1.msra.mxu0 0.0
        %4647 = vmatprep.mubr.f32.mxu0 0.0
        %4648 = vmatmul.mubr.f32.gmra.mrb[0].mxu0 %v4482
        %v4649 = vpop.f32.mrb[0].mxu0
        %v4650 = vadd.f32 0.0, %v4649
        %v4651 = vpop.f32.mrb[0].mxu0
        %v4652 = vadd.f32 0.0, %v4651
        %4653 = vmatprep.mubr.f32.mxu0 0.0
        %4654 = vmatmul.mubr.f32.gmra.mrb[0].mxu0 %v4485
        %v4655 = vpop.f32.mrb[0].mxu0
        %v4656 = vadd.f32 0.0, %v4655
        %v4657 = vpop.f32.mrb[0].mxu0
        %v4658 = vadd.f32 0.0, %v4657
        %4659 = vmatprep.mubr.f32.mxu0 0.0
        %4660 = vmatmul.mubr.f32.gmra.mrb[0].mxu0 %v4488
        %v4661 = vpop.f32.mrb[0].mxu0
        %v4662 = vadd.f32 0.0, %v4661
        %v4663 = vpop.f32.mrb[0].mxu0
        %v4664 = vadd.f32 0.0, %v4663
        %4665 = vmatprep.mubr.f32.mxu0 0.0
        %4666 = vmatmul.mubr.f32.gmra.mrb[0].mxu0 %v4491
        %v4667 = vpop.f32.mrb[0].mxu0
        %v4668 = vadd.f32 0.0, %v4667
        %v4669 = vpop.f32.mrb[0].mxu0
        %v4670 = vadd.f32 0.0, %v4669
        %4671 = vmatprep.mubr.f32.mxu0 0.0
        %4672 = vmatmul.mubr.f32.gmra.mrb[0].mxu0 %v4494
        %v4673 = vpop.f32.mrb[0].mxu0
        %v4674 = vadd.f32 0.0, %v4673
        %v4675 = vpop.f32.mrb[0].mxu0
        %v4676 = vadd.f32 0.0, %v4675
        %4677 = vmatprep.mubr.f32.mxu0 0.0
        %4678 = vmatmul.mubr.f32.gmra.mrb[0].mxu0 %v4497
        %v4679 = vpop.f32.mrb[0].mxu0
        %v4680 = vadd.f32 0.0, %v4679
        %v4681 = vpop.f32.mrb[0].mxu0
        %v4682 = vadd.f32 0.0, %v4681
        %4683 = vmatprep.mubr.f32.mxu0 0.0
        %4684 = vmatmul.mubr.f32.gmra.mrb[0].mxu0 %v4500
        %v4685 = vpop.f32.mrb[0].mxu0
        %v4686 = vadd.f32 0.0, %v4685
        %v4687 = vpop.f32.mrb[0].mxu0
        %v4688 = vadd.f32 0.0, %v4687
        %4689 = vmatprep.mubr.f32.mxu0 0.0
        %4690 = vmatmul.mubr.f32.gmra.mrb[0].mxu0 %v4503
        %v4691 = vpop.f32.mrb[0].mxu0
        %v4692 = vadd.f32 0.0, %v4691
        %v4693 = vpop.f32.mrb[0].mxu0
        %v4694 = vadd.f32 0.0, %v4693
        %4695 = vmatprep.mubr.f32.mxu0 0.0
        %4696 = vmatmul.mubr.f32.gmra.mrb[0].mxu0 %v4506
        %v4697 = vpop.f32.mrb[0].mxu0
        %v4698 = vadd.f32 0.0, %v4697
        %v4699 = vpop.f32.mrb[0].mxu0
        %v4700 = vadd.f32 0.0, %v4699
        %4701 = vmatprep.mubr.f32.mxu0 0.0
        %4702 = vmatmul.mubr.f32.gmra.mrb[0].mxu0 %v4509
        %v4703 = vpop.f32.mrb[0].mxu0
        %v4704 = vadd.f32 0.0, %v4703
        %v4705 = vpop.f32.mrb[0].mxu0
        %v4706 = vadd.f32 0.0, %v4705
        %4707 = vmatprep.mubr.f32.mxu0 0.0
        %4708 = vmatmul.mubr.f32.gmra.mrb[0].mxu0 %v4512
        %v4709 = vpop.f32.mrb[0].mxu0
        %v4710 = vadd.f32 0.0, %v4709
        %v4711 = vpop.f32.mrb[0].mxu0
        %v4712 = vadd.f32 0.0, %v4711
        %4713 = vmatprep.mubr.f32.mxu0 0.0
        %4714 = vmatmul.mubr.f32.gmra.mrb[0].mxu0 %v4515
        %v4715 = vpop.f32.mrb[0].mxu0
        %v4716 = vadd.f32 0.0, %v4715
        %v4717 = vpop.f32.mrb[0].mxu0
        %v4718 = vadd.f32 0.0, %v4717
        %4719 = vmatprep.mubr.f32.mxu0 0.0
        %4720 = vmatmul.mubr.f32.gmra.mrb[0].mxu0 %v4518
        %v4721 = vpop.f32.mrb[0].mxu0
        %v4722 = vadd.f32 0.0, %v4721
        %v4723 = vpop.f32.mrb[0].mxu0
        %v4724 = vadd.f32 0.0, %v4723
        %4725 = vmatprep.mubr.f32.mxu0 0.0
        %4726 = vmatmul.mubr.f32.gmra.mrb[0].mxu0 %v4521
        %v4727 = vpop.f32.mrb[0].mxu0
        %v4728 = vadd.f32 0.0, %v4727
        %v4729 = vpop.f32.mrb[0].mxu0
        %v4730 = vadd.f32 0.0, %v4729
        %4731 = vmatprep.mubr.f32.mxu0 0.0
        %4732 = vmatmul.mubr.f32.gmra.mrb[0].mxu0 %v4524
        %v4733 = vpop.f32.mrb[0].mxu0
        %v4734 = vadd.f32 0.0, %v4733
        %v4735 = vpop.f32.mrb[0].mxu0
        %v4736 = vadd.f32 0.0, %v4735
        %4737 = vmatprep.mubr.f32.mxu0 0.0
        %4738 = vmatmul.mubr.f32.gmra.mrb[0].mxu0 %v4527
        %v4739 = vpop.f32.mrb[0].mxu0
        %v4740 = vadd.f32 0.0, %v4739
        %v4741 = vpop.f32.mrb[0].mxu0
        %v4742 = vadd.f32 0.0, %v4741
        %4743 = vmatprep.mubr.f32.mxu0 0.0
        %4744 = vmatmul.mubr.f32.gmra.mrb[0].mxu0 %v4530
        %v4745 = vpop.f32.mrb[0].mxu0
        %v4746 = vadd.f32 0.0, %v4745
        %v4747 = vpop.f32.mrb[0].mxu0
        %v4748 = vadd.f32 0.0, %v4747
        %4749 = vmatprep.mubr.f32.mxu0 0.0
        %4750 = vmatmul.mubr.f32.gmra.mrb[0].mxu0 %v4533
        %v4751 = vpop.f32.mrb[0].mxu0
        %v4752 = vadd.f32 0.0, %v4751
        %v4753 = vpop.f32.mrb[0].mxu0
        %v4754 = vadd.f32 0.0, %v4753
        %4755 = vmatprep.mubr.f32.mxu0 0.0
        %4756 = vmatmul.mubr.f32.gmra.mrb[0].mxu0 %v4536
        %v4757 = vpop.f32.mrb[0].mxu0
        %v4758 = vadd.f32 0.0, %v4757
        %v4759 = vpop.f32.mrb[0].mxu0
        %v4760 = vadd.f32 0.0, %v4759
        %4761 = vmatprep.mubr.f32.mxu0 0.0
        %4762 = vmatmul.mubr.f32.gmra.mrb[0].mxu0 %v4539
        %v4763 = vpop.f32.mrb[0].mxu0
        %v4764 = vadd.f32 0.0, %v4763
        %v4765 = vpop.f32.mrb[0].mxu0
        %v4766 = vadd.f32 0.0, %v4765
        %4767 = vmatprep.mubr.f32.mxu0 0.0
        %4768 = vmatmul.mubr.f32.gmra.mrb[0].mxu0 %v4542
        %v4769 = vpop.f32.mrb[0].mxu0
        %v4770 = vadd.f32 0.0, %v4769
        %v4771 = vpop.f32.mrb[0].mxu0
        %v4772 = vadd.f32 0.0, %v4771
        %4773 = vmatprep.mubr.f32.mxu0 0.0
        %4774 = vmatmul.mubr.f32.gmra.mrb[0].mxu0 %v4545
        %v4775 = vpop.f32.mrb[0].mxu0
        %v4776 = vadd.f32 0.0, %v4775
        %v4777 = vpop.f32.mrb[0].mxu0
        %v4778 = vadd.f32 0.0, %v4777
        %4779 = vmatprep.mubr.f32.mxu0 0.0
        %4780 = vmatmul.mubr.f32.gmra.mrb[0].mxu0 %v4548
        %v4781 = vpop.f32.mrb[0].mxu0
        %v4782 = vadd.f32 0.0, %v4781
        %v4783 = vpop.f32.mrb[0].mxu0
        %v4784 = vadd.f32 0.0, %v4783
        %4785 = vmatprep.mubr.f32.mxu0 0.0
        %4786 = vmatmul.mubr.f32.gmra.mrb[0].mxu0 %v4551
        %v4787 = vpop.f32.mrb[0].mxu0
        %v4788 = vadd.f32 0.0, %v4787
        %v4789 = vpop.f32.mrb[0].mxu0
        %v4790 = vadd.f32 0.0, %v4789
        %4791 = vmatprep.mubr.f32.mxu0 0.0
        %4792 = vmatmul.mubr.f32.gmra.mrb[0].mxu0 %v4554
        %v4793 = vpop.f32.mrb[0].mxu0
        %v4794 = vadd.f32 0.0, %v4793
        %v4795 = vpop.f32.mrb[0].mxu0
        %v4796 = vadd.f32 0.0, %v4795
        %4797 = vmatprep.mubr.f32.mxu0 0.0
        %4798 = vmatmul.mubr.f32.gmra.mrb[0].mxu0 %v4557
        %v4799 = vpop.f32.mrb[0].mxu0
        %v4800 = vadd.f32 0.0, %v4799
        %v4801 = vpop.f32.mrb[0].mxu0
        %v4802 = vadd.f32 0.0, %v4801
        %4803 = vmatprep.mubr.f32.mxu0 0.0
        %4804 = vmatmul.mubr.f32.gmra.mrb[0].mxu0 %v4560
        %v4805 = vpop.f32.mrb[0].mxu0
        %v4806 = vadd.f32 0.0, %v4805
        %v4807 = vpop.f32.mrb[0].mxu0
        %v4808 = vadd.f32 0.0, %v4807
        %4809 = vmatprep.mubr.f32.mxu0 0.0
        %4810 = vmatmul.mubr.f32.gmra.mrb[0].mxu0 %v4563
        %v4811 = vpop.f32.mrb[0].mxu0
        %v4812 = vadd.f32 0.0, %v4811
        %v4813 = vpop.f32.mrb[0].mxu0
        %v4814 = vadd.f32 0.0, %v4813
        %4815 = vmatprep.mubr.f32.mxu0 0.0
        %4816 = vmatmul.mubr.f32.gmra.mrb[0].mxu0 %v4566
        %v4817 = vpop.f32.mrb[0].mxu0
        %v4818 = vadd.f32 0.0, %v4817
        %v4819 = vpop.f32.mrb[0].mxu0
        %v4820 = vadd.f32 0.0, %v4819
        %4821 = vmatprep.mubr.f32.mxu0 0.0
        %4822 = vmatmul.mubr.f32.gmra.mrb[0].mxu0 %v4569
        %v4823 = vpop.f32.mrb[0].mxu0
        %v4824 = vadd.f32 0.0, %v4823
        %v4825 = vpop.f32.mrb[0].mxu0
        %v4826 = vadd.f32 0.0, %v4825
        %4827 = vmatprep.mubr.f32.mxu0 0.0
        %4828 = vmatmul.mubr.f32.gmra.mrb[0].mxu0 %v4572
        %v4829 = vpop.f32.mrb[0].mxu0
        %v4830 = vadd.f32 0.0, %v4829
        %v4831 = vpop.f32.mrb[0].mxu0
        %v4832 = vadd.f32 0.0, %v4831
        %4833 = vmatprep.mubr.f32.mxu0 0.0
        %4834 = vmatmul.mubr.f32.gmra.mrb[0].mxu0 %v4575
        %v4835 = vpop.f32.mrb[0].mxu0
        %v4836 = vadd.f32 0.0, %v4835
        %v4837 = vpop.f32.mrb[0].mxu0
        %v4838 = vadd.f32 0.0, %v4837
        %4839 = vdwg.mxu0
        %v4840 = vadd.f32 %v4204, %v4650
        %v4841 = vadd.f32 %v4206, %v4652
        %v4842 = vadd.f32 %v4210, %v4656
        %v4843 = vadd.f32 %v4212, %v4658
        %v4844 = vadd.f32 %v4216, %v4662
        %v4845 = vadd.f32 %v4218, %v4664
        %v4846 = vadd.f32 %v4222, %v4668
        %v4847 = vadd.f32 %v4224, %v4670
        %v4848 = vadd.f32 %v4228, %v4674
        %v4849 = vadd.f32 %v4230, %v4676
        %v4850 = vadd.f32 %v4234, %v4680
        %v4851 = vadd.f32 %v4236, %v4682
        %v4852 = vadd.f32 %v4240, %v4686
        %v4853 = vadd.f32 %v4242, %v4688
        %v4854 = vadd.f32 %v4246, %v4692
        %v4855 = vadd.f32 %v4248, %v4694
        %v4856 = vadd.f32 %v4252, %v4698
        %v4857 = vadd.f32 %v4254, %v4700
        %v4858 = vadd.f32 %v4258, %v4704
        %v4859 = vadd.f32 %v4260, %v4706
        %v4860 = vadd.f32 %v4264, %v4710
        %v4861 = vadd.f32 %v4266, %v4712
        %v4862 = vadd.f32 %v4270, %v4716
        %v4863 = vadd.f32 %v4272, %v4718
        %v4864 = vadd.f32 %v4276, %v4722
        %v4865 = vadd.f32 %v4278, %v4724
        %v4866 = vadd.f32 %v4282, %v4728
        %v4867 = vadd.f32 %v4284, %v4730
        %v4868 = vadd.f32 %v4288, %v4734
        %v4869 = vadd.f32 %v4290, %v4736
        %v4870 = vadd.f32 %v4294, %v4740
        %v4871 = vadd.f32 %v4296, %v4742
        %v4872 = vadd.f32 %v4300, %v4746
        %v4873 = vadd.f32 %v4302, %v4748
        %v4874 = vadd.f32 %v4306, %v4752
        %v4875 = vadd.f32 %v4308, %v4754
        %v4876 = vadd.f32 %v4312, %v4758
        %v4877 = vadd.f32 %v4314, %v4760
        %v4878 = vadd.f32 %v4318, %v4764
        %v4879 = vadd.f32 %v4320, %v4766
        %v4880 = vadd.f32 %v4324, %v4770
        %v4881 = vadd.f32 %v4326, %v4772
        %v4882 = vadd.f32 %v4330, %v4776
        %v4883 = vadd.f32 %v4332, %v4778
        %v4884 = vadd.f32 %v4336, %v4782
        %v4885 = vadd.f32 %v4338, %v4784
        %v4886 = vadd.f32 %v4342, %v4788
        %v4887 = vadd.f32 %v4344, %v4790
        %v4888 = vadd.f32 %v4348, %v4794
        %v4889 = vadd.f32 %v4350, %v4796
        %v4890 = vadd.f32 %v4354, %v4800
        %v4891 = vadd.f32 %v4356, %v4802
        %v4892 = vadd.f32 %v4360, %v4806
        %v4893 = vadd.f32 %v4362, %v4808
        %v4894 = vadd.f32 %v4366, %v4812
        %v4895 = vadd.f32 %v4368, %v4814
        %v4896 = vadd.f32 %v4372, %v4818
        %v4897 = vadd.f32 %v4374, %v4820
        %v4898 = vadd.f32 %v4378, %v4824
        %v4899 = vadd.f32 %v4380, %v4826
        %v4900 = vadd.f32 %v4384, %v4830
        %v4901 = vadd.f32 %v4386, %v4832
        %v4902 = vadd.f32 %v4390, %v4836
        %v4903 = vadd.f32 %v4392, %v4838
        %v4904 = vrot.slane %v3533, 6
        %v4905 = vrot.slane %v3534, 6
        %v4906 = vrot.slane %v3535, 6
        %v4907 = vrot.slane %v3536, 6
        %v4908 = vrot.slane %v3537, 6
        %v4909 = vrot.slane %v3538, 6
        %v4910 = vrot.slane %v3539, 6
        %v4911 = vrot.slane %v3540, 6
        %v4912 = vrot.slane %v3541, 6
        %v4913 = vrot.slane %v3542, 6
        %v4914 = vrot.slane %v3543, 6
        %v4915 = vrot.slane %v3544, 6
        %v4916 = vrot.slane %v3545, 6
        %v4917 = vrot.slane %v3546, 6
        %v4918 = vrot.slane %v3547, 6
        %v4919 = vrot.slane %v3548, 6
        %v4920 = vrot.slane %v3549, 6
        %v4921 = vrot.slane %v3550, 6
        %v4922 = vrot.slane %v3551, 6
        %v4923 = vrot.slane %v3552, 6
        %v4924 = vrot.slane %v3553, 6
        %v4925 = vrot.slane %v3554, 6
        %v4926 = vrot.slane %v3555, 6
        %v4927 = vrot.slane %v3556, 6
        %v4928 = vrot.slane %v3557, 6
        %v4929 = vrot.slane %v3558, 6
        %v4930 = vrot.slane %v3559, 6
        %v4931 = vrot.slane %v3560, 6
        %v4932 = vrot.slane %v3561, 6
        %v4933 = vrot.slane %v3562, 6
        %v4934 = vrot.slane %v3563, 6
        %v4935 = vrot.slane %v3564, 6
        %vm4936 = vcmp.lt.s32.totalorder %v489, 2
        %v4937 = vsel %vm4936, %v4934, %v4935
        %v4938 = vsel %vm4936, %v4933, %v4934
        %v4939 = vsel %vm4936, %v4932, %v4933
        %v4940 = vsel %vm4936, %v4931, %v4932
        %v4941 = vsel %vm4936, %v4930, %v4931
        %v4942 = vsel %vm4936, %v4929, %v4930
        %v4943 = vsel %vm4936, %v4928, %v4929
        %v4944 = vsel %vm4936, %v4927, %v4928
        %v4945 = vsel %vm4936, %v4926, %v4927
        %v4946 = vsel %vm4936, %v4925, %v4926
        %v4947 = vsel %vm4936, %v4924, %v4925
        %v4948 = vsel %vm4936, %v4923, %v4924
        %v4949 = vsel %vm4936, %v4922, %v4923
        %v4950 = vsel %vm4936, %v4921, %v4922
        %v4951 = vsel %vm4936, %v4920, %v4921
        %v4952 = vsel %vm4936, %v4919, %v4920
        %v4953 = vsel %vm4936, %v4918, %v4919
        %v4954 = vsel %vm4936, %v4917, %v4918
        %v4955 = vsel %vm4936, %v4916, %v4917
        %v4956 = vsel %vm4936, %v4915, %v4916
        %v4957 = vsel %vm4936, %v4914, %v4915
        %v4958 = vsel %vm4936, %v4913, %v4914
        %v4959 = vsel %vm4936, %v4912, %v4913
        %v4960 = vsel %vm4936, %v4911, %v4912
        %v4961 = vsel %vm4936, %v4910, %v4911
        %v4962 = vsel %vm4936, %v4909, %v4910
        %v4963 = vsel %vm4936, %v4908, %v4909
        %v4964 = vsel %vm4936, %v4907, %v4908
        %v4965 = vsel %vm4936, %v4906, %v4907
        %v4966 = vsel %vm4936, %v4905, %v4906
        %v4967 = vsel %vm4936, %v4904, %v4905
        %v4968 = vsel %vm4936, %v4935, %v4904
        %s4969 = scalar_lea.vmem %s2, 528
        %v4970 = vld [vmem:[%s4969] sm:$0xff]
        %v4971 = vld [vmem:[%s4969 + $0x8] sm:$0xff]
        %v4972 = vld [vmem:[%s4969 + $0x10] sm:$0xff]
        %v4973 = vld [vmem:[%s4969 + $0x18] sm:$0xff]
        %v4974 = vld [vmem:[%s4969 + $0x20] sm:$0xff]
        %v4975 = vld [vmem:[%s4969 + $0x28] sm:$0xff]
        %v4976 = vld [vmem:[%s4969 + $0x30] sm:$0xff]
        %v4977 = vld [vmem:[%s4969 + $0x38] sm:$0xff]
        %v4978 = vld [vmem:[%s4969 + $0x40] sm:$0xff]
        %v4979 = vld [vmem:[%s4969 + $0x48] sm:$0xff]
        %v4980 = vld [vmem:[%s4969 + $0x50] sm:$0xff]
        %v4981 = vld [vmem:[%s4969 + $0x58] sm:$0xff]
        %v4982 = vld [vmem:[%s4969 + $0x60] sm:$0xff]
        %v4983 = vld [vmem:[%s4969 + $0x68] sm:$0xff]
        %v4984 = vld [vmem:[%s4969 + $0x70] sm:$0xff]
        %v4985 = vld [vmem:[%s4969 + $0x78] sm:$0xff]
        %v4986 = vld [vmem:[%s4969 + $0x80] sm:$0xff]
        %v4987 = vld [vmem:[%s4969 + $0x88] sm:$0xff]
        %v4988 = vld [vmem:[%s4969 + $0x90] sm:$0xff]
        %v4989 = vld [vmem:[%s4969 + $0x98] sm:$0xff]
        %v4990 = vld [vmem:[%s4969 + $0xa0] sm:$0xf]
        %v4991 = vld [vmem:[%s4969 + $0xa8] sm:$0xf]
        %v4993 = vsel %vm3674, %v4967, 0
        %v4996 = vsel %vm3674, %v4966, 0
        %v4999 = vsel %vm3674, %v4965, 0
        %v5002 = vsel %vm3674, %v4964, 0
        %v5005 = vsel %vm3674, %v4963, 0
        %v5008 = vsel %vm3674, %v4962, 0
        %v5011 = vsel %vm3674, %v4961, 0
        %v5014 = vsel %vm3674, %v4960, 0
        %v5017 = vsel %vm3674, %v4959, 0
        %v5020 = vsel %vm3674, %v4958, 0
        %v5023 = vsel %vm3674, %v4957, 0
        %v5026 = vsel %vm3674, %v4956, 0
        %v5029 = vsel %vm3674, %v4955, 0
        %v5032 = vsel %vm3674, %v4954, 0
        %v5035 = vsel %vm3674, %v4953, 0
        %v5038 = vsel %vm3674, %v4952, 0
        %v5041 = vsel %vm3674, %v4951, 0
        %v5044 = vsel %vm3674, %v4950, 0
        %v5047 = vsel %vm3674, %v4949, 0
        %v5050 = vsel %vm3674, %v4948, 0
        %v5053 = vsel %vm3674, %v4947, 0
        %v5056 = vsel %vm3674, %v4946, 0
        %v5059 = vsel %vm3674, %v4945, 0
        %v5062 = vsel %vm3674, %v4944, 0
        %v5065 = vsel %vm3674, %v4943, 0
        %v5068 = vsel %vm3674, %v4942, 0
        %v5071 = vsel %vm3674, %v4941, 0
        %v5074 = vsel %vm3674, %v4940, 0
        %v5077 = vsel %vm3674, %v4939, 0
        %v5080 = vsel %vm3674, %v4938, 0
        %v5083 = vsel %vm3674, %v4937, 0
        %v5086 = vsel %vm3674, %v4968, 0
        %v5089 = vsel %vm3771, %v4990, 0
        %v5092 = vsel %vm3771, %v4991, 0
        %5094 = vmatprep.subr.mxu0 %v4971
        %5095 = vmatpush1.msra.mxu0 %v4970
        %5096 = vmatprep.subr.mxu0 %v4973
        %5097 = vmatpush1.msra.mxu0 %v4972
        %5098 = vmatprep.subr.mxu0 %v4975
        %5099 = vmatpush1.msra.mxu0 %v4974
        %5100 = vmatprep.subr.mxu0 %v4977
        %5101 = vmatpush1.msra.mxu0 %v4976
        %5102 = vmatprep.subr.mxu0 %v4979
        %5103 = vmatpush1.msra.mxu0 %v4978
        %5104 = vmatprep.subr.mxu0 %v4981
        %5105 = vmatpush1.msra.mxu0 %v4980
        %5106 = vmatprep.subr.mxu0 %v4983
        %5107 = vmatpush1.msra.mxu0 %v4982
        %5108 = vmatprep.subr.mxu0 %v4985
        %5109 = vmatpush1.msra.mxu0 %v4984
        %5110 = vmatprep.subr.mxu0 %v4987
        %5111 = vmatpush1.msra.mxu0 %v4986
        %5112 = vmatprep.subr.mxu0 %v4989
        %5113 = vmatpush1.msra.mxu0 %v4988
        %5114 = vmatprep.subr.mxu0 %v5092
        %5115 = vmatpush1.msra.mxu0 %v5089
        %5116 = vmatprep.subr.mxu0 0.0
        %5117 = vmatpush1.msra.mxu0 0.0
        %5118 = vmatprep.subr.mxu0 0.0
        %5119 = vmatpush1.msra.mxu0 0.0
        %5120 = vmatprep.subr.mxu0 0.0
        %5121 = vmatpush1.msra.mxu0 0.0
        %5122 = vmatprep.subr.mxu0 0.0
        %5123 = vmatpush1.msra.mxu0 0.0
        %5124 = vmatprep.subr.mxu0 0.0
        %5125 = vmatpush1.msra.mxu0 0.0
        %5126 = vmatprep.subr.mxu0 0.0
        %5127 = vmatpush1.msra.mxu0 0.0
        %5128 = vmatprep.subr.mxu0 0.0
        %5129 = vmatpush1.msra.mxu0 0.0
        %5130 = vmatprep.subr.mxu0 0.0
        %5131 = vmatpush1.msra.mxu0 0.0
        %5132 = vmatprep.subr.mxu0 0.0
        %5133 = vmatpush1.msra.mxu0 0.0
        %5134 = vmatprep.subr.mxu0 0.0
        %5135 = vmatpush1.msra.mxu0 0.0
        %5136 = vmatprep.subr.mxu0 0.0
        %5137 = vmatpush1.msra.mxu0 0.0
        %5138 = vmatprep.subr.mxu0 0.0
        %5139 = vmatpush1.msra.mxu0 0.0
        %5140 = vmatprep.subr.mxu0 0.0
        %5141 = vmatpush1.msra.mxu0 0.0
        %5142 = vmatprep.subr.mxu0 0.0
        %5143 = vmatpush1.msra.mxu0 0.0
        %5144 = vmatprep.subr.mxu0 0.0
        %5145 = vmatpush1.msra.mxu0 0.0
        %5146 = vmatprep.subr.mxu0 0.0
        %5147 = vmatpush1.msra.mxu0 0.0
        %5148 = vmatprep.subr.mxu0 0.0
        %5149 = vmatpush1.msra.mxu0 0.0
        %5150 = vmatprep.subr.mxu0 0.0
        %5151 = vmatpush1.msra.mxu0 0.0
        %5152 = vmatprep.subr.mxu0 0.0
        %5153 = vmatpush1.msra.mxu0 0.0
        %5154 = vmatprep.subr.mxu0 0.0
        %5155 = vmatpush1.msra.mxu0 0.0
        %5156 = vmatprep.subr.mxu0 0.0
        %5157 = vmatpush1.msra.mxu0 0.0
        %5158 = vmatprep.mubr.f32.mxu0 0.0
        %5159 = vmatmul.mubr.f32.gmra.mrb[0].mxu0 %v4993
        %v5160 = vpop.f32.mrb[0].mxu0
        %v5161 = vadd.f32 0.0, %v5160
        %v5162 = vpop.f32.mrb[0].mxu0
        %v5163 = vadd.f32 0.0, %v5162
        %5164 = vmatprep.mubr.f32.mxu0 0.0
        %5165 = vmatmul.mubr.f32.gmra.mrb[0].mxu0 %v4996
        %v5166 = vpop.f32.mrb[0].mxu0
        %v5167 = vadd.f32 0.0, %v5166
        %v5168 = vpop.f32.mrb[0].mxu0
        %v5169 = vadd.f32 0.0, %v5168
        %5170 = vmatprep.mubr.f32.mxu0 0.0
        %5171 = vmatmul.mubr.f32.gmra.mrb[0].mxu0 %v4999
        %v5172 = vpop.f32.mrb[0].mxu0
        %v5173 = vadd.f32 0.0, %v5172
        %v5174 = vpop.f32.mrb[0].mxu0
        %v5175 = vadd.f32 0.0, %v5174
        %5176 = vmatprep.mubr.f32.mxu0 0.0
        %5177 = vmatmul.mubr.f32.gmra.mrb[0].mxu0 %v5002
        %v5178 = vpop.f32.mrb[0].mxu0
        %v5179 = vadd.f32 0.0, %v5178
        %v5180 = vpop.f32.mrb[0].mxu0
        %v5181 = vadd.f32 0.0, %v5180
        %5182 = vmatprep.mubr.f32.mxu0 0.0
        %5183 = vmatmul.mubr.f32.gmra.mrb[0].mxu0 %v5005
        %v5184 = vpop.f32.mrb[0].mxu0
        %v5185 = vadd.f32 0.0, %v5184
        %v5186 = vpop.f32.mrb[0].mxu0
        %v5187 = vadd.f32 0.0, %v5186
        %5188 = vmatprep.mubr.f32.mxu0 0.0
        %5189 = vmatmul.mubr.f32.gmra.mrb[0].mxu0 %v5008
        %v5190 = vpop.f32.mrb[0].mxu0
        %v5191 = vadd.f32 0.0, %v5190
        %v5192 = vpop.f32.mrb[0].mxu0
        %v5193 = vadd.f32 0.0, %v5192
        %5194 = vmatprep.mubr.f32.mxu0 0.0
        %5195 = vmatmul.mubr.f32.gmra.mrb[0].mxu0 %v5011
        %v5196 = vpop.f32.mrb[0].mxu0
        %v5197 = vadd.f32 0.0, %v5196
        %v5198 = vpop.f32.mrb[0].mxu0
        %v5199 = vadd.f32 0.0, %v5198
        %5200 = vmatprep.mubr.f32.mxu0 0.0
        %5201 = vmatmul.mubr.f32.gmra.mrb[0].mxu0 %v5014
        %v5202 = vpop.f32.mrb[0].mxu0
        %v5203 = vadd.f32 0.0, %v5202
        %v5204 = vpop.f32.mrb[0].mxu0
        %v5205 = vadd.f32 0.0, %v5204
        %5206 = vmatprep.mubr.f32.mxu0 0.0
        %5207 = vmatmul.mubr.f32.gmra.mrb[0].mxu0 %v5017
        %v5208 = vpop.f32.mrb[0].mxu0
        %v5209 = vadd.f32 0.0, %v5208
        %v5210 = vpop.f32.mrb[0].mxu0
        %v5211 = vadd.f32 0.0, %v5210
        %5212 = vmatprep.mubr.f32.mxu0 0.0
        %5213 = vmatmul.mubr.f32.gmra.mrb[0].mxu0 %v5020
        %v5214 = vpop.f32.mrb[0].mxu0
        %v5215 = vadd.f32 0.0, %v5214
        %v5216 = vpop.f32.mrb[0].mxu0
        %v5217 = vadd.f32 0.0, %v5216
        %5218 = vmatprep.mubr.f32.mxu0 0.0
        %5219 = vmatmul.mubr.f32.gmra.mrb[0].mxu0 %v5023
        %v5220 = vpop.f32.mrb[0].mxu0
        %v5221 = vadd.f32 0.0, %v5220
        %v5222 = vpop.f32.mrb[0].mxu0
        %v5223 = vadd.f32 0.0, %v5222
        %5224 = vmatprep.mubr.f32.mxu0 0.0
        %5225 = vmatmul.mubr.f32.gmra.mrb[0].mxu0 %v5026
        %v5226 = vpop.f32.mrb[0].mxu0
        %v5227 = vadd.f32 0.0, %v5226
        %v5228 = vpop.f32.mrb[0].mxu0
        %v5229 = vadd.f32 0.0, %v5228
        %5230 = vmatprep.mubr.f32.mxu0 0.0
        %5231 = vmatmul.mubr.f32.gmra.mrb[0].mxu0 %v5029
        %v5232 = vpop.f32.mrb[0].mxu0
        %v5233 = vadd.f32 0.0, %v5232
        %v5234 = vpop.f32.mrb[0].mxu0
        %v5235 = vadd.f32 0.0, %v5234
        %5236 = vmatprep.mubr.f32.mxu0 0.0
        %5237 = vmatmul.mubr.f32.gmra.mrb[0].mxu0 %v5032
        %v5238 = vpop.f32.mrb[0].mxu0
        %v5239 = vadd.f32 0.0, %v5238
        %v5240 = vpop.f32.mrb[0].mxu0
        %v5241 = vadd.f32 0.0, %v5240
        %5242 = vmatprep.mubr.f32.mxu0 0.0
        %5243 = vmatmul.mubr.f32.gmra.mrb[0].mxu0 %v5035
        %v5244 = vpop.f32.mrb[0].mxu0
        %v5245 = vadd.f32 0.0, %v5244
        %v5246 = vpop.f32.mrb[0].mxu0
        %v5247 = vadd.f32 0.0, %v5246
        %5248 = vmatprep.mubr.f32.mxu0 0.0
        %5249 = vmatmul.mubr.f32.gmra.mrb[0].mxu0 %v5038
        %v5250 = vpop.f32.mrb[0].mxu0
        %v5251 = vadd.f32 0.0, %v5250
        %v5252 = vpop.f32.mrb[0].mxu0
        %v5253 = vadd.f32 0.0, %v5252
        %5254 = vmatprep.mubr.f32.mxu0 0.0
        %5255 = vmatmul.mubr.f32.gmra.mrb[0].mxu0 %v5041
        %v5256 = vpop.f32.mrb[0].mxu0
        %v5257 = vadd.f32 0.0, %v5256
        %v5258 = vpop.f32.mrb[0].mxu0
        %v5259 = vadd.f32 0.0, %v5258
        %5260 = vmatprep.mubr.f32.mxu0 0.0
        %5261 = vmatmul.mubr.f32.gmra.mrb[0].mxu0 %v5044
        %v5262 = vpop.f32.mrb[0].mxu0
        %v5263 = vadd.f32 0.0, %v5262
        %v5264 = vpop.f32.mrb[0].mxu0
        %v5265 = vadd.f32 0.0, %v5264
        %5266 = vmatprep.mubr.f32.mxu0 0.0
        %5267 = vmatmul.mubr.f32.gmra.mrb[0].mxu0 %v5047
        %v5268 = vpop.f32.mrb[0].mxu0
        %v5269 = vadd.f32 0.0, %v5268
        %v5270 = vpop.f32.mrb[0].mxu0
        %v5271 = vadd.f32 0.0, %v5270
        %5272 = vmatprep.mubr.f32.mxu0 0.0
        %5273 = vmatmul.mubr.f32.gmra.mrb[0].mxu0 %v5050
        %v5274 = vpop.f32.mrb[0].mxu0
        %v5275 = vadd.f32 0.0, %v5274
        %v5276 = vpop.f32.mrb[0].mxu0
        %v5277 = vadd.f32 0.0, %v5276
        %5278 = vmatprep.mubr.f32.mxu0 0.0
        %5279 = vmatmul.mubr.f32.gmra.mrb[0].mxu0 %v5053
        %v5280 = vpop.f32.mrb[0].mxu0
        %v5281 = vadd.f32 0.0, %v5280
        %v5282 = vpop.f32.mrb[0].mxu0
        %v5283 = vadd.f32 0.0, %v5282
        %5284 = vmatprep.mubr.f32.mxu0 0.0
        %5285 = vmatmul.mubr.f32.gmra.mrb[0].mxu0 %v5056
        %v5286 = vpop.f32.mrb[0].mxu0
        %v5287 = vadd.f32 0.0, %v5286
        %v5288 = vpop.f32.mrb[0].mxu0
        %v5289 = vadd.f32 0.0, %v5288
        %5290 = vmatprep.mubr.f32.mxu0 0.0
        %5291 = vmatmul.mubr.f32.gmra.mrb[0].mxu0 %v5059
        %v5292 = vpop.f32.mrb[0].mxu0
        %v5293 = vadd.f32 0.0, %v5292
        %v5294 = vpop.f32.mrb[0].mxu0
        %v5295 = vadd.f32 0.0, %v5294
        %5296 = vmatprep.mubr.f32.mxu0 0.0
        %5297 = vmatmul.mubr.f32.gmra.mrb[0].mxu0 %v5062
        %v5298 = vpop.f32.mrb[0].mxu0
        %v5299 = vadd.f32 0.0, %v5298
        %v5300 = vpop.f32.mrb[0].mxu0
        %v5301 = vadd.f32 0.0, %v5300
        %5302 = vmatprep.mubr.f32.mxu0 0.0
        %5303 = vmatmul.mubr.f32.gmra.mrb[0].mxu0 %v5065
        %v5304 = vpop.f32.mrb[0].mxu0
        %v5305 = vadd.f32 0.0, %v5304
        %v5306 = vpop.f32.mrb[0].mxu0
        %v5307 = vadd.f32 0.0, %v5306
        %5308 = vmatprep.mubr.f32.mxu0 0.0
        %5309 = vmatmul.mubr.f32.gmra.mrb[0].mxu0 %v5068
        %v5310 = vpop.f32.mrb[0].mxu0
        %v5311 = vadd.f32 0.0, %v5310
        %v5312 = vpop.f32.mrb[0].mxu0
        %v5313 = vadd.f32 0.0, %v5312
        %5314 = vmatprep.mubr.f32.mxu0 0.0
        %5315 = vmatmul.mubr.f32.gmra.mrb[0].mxu0 %v5071
        %v5316 = vpop.f32.mrb[0].mxu0
        %v5317 = vadd.f32 0.0, %v5316
        %v5318 = vpop.f32.mrb[0].mxu0
        %v5319 = vadd.f32 0.0, %v5318
        %5320 = vmatprep.mubr.f32.mxu0 0.0
        %5321 = vmatmul.mubr.f32.gmra.mrb[0].mxu0 %v5074
        %v5322 = vpop.f32.mrb[0].mxu0
        %v5323 = vadd.f32 0.0, %v5322
        %v5324 = vpop.f32.mrb[0].mxu0
        %v5325 = vadd.f32 0.0, %v5324
        %5326 = vmatprep.mubr.f32.mxu0 0.0
        %5327 = vmatmul.mubr.f32.gmra.mrb[0].mxu0 %v5077
        %v5328 = vpop.f32.mrb[0].mxu0
        %v5329 = vadd.f32 0.0, %v5328
        %v5330 = vpop.f32.mrb[0].mxu0
        %v5331 = vadd.f32 0.0, %v5330
        %5332 = vmatprep.mubr.f32.mxu0 0.0
        %5333 = vmatmul.mubr.f32.gmra.mrb[0].mxu0 %v5080
        %v5334 = vpop.f32.mrb[0].mxu0
        %v5335 = vadd.f32 0.0, %v5334
        %v5336 = vpop.f32.mrb[0].mxu0
        %v5337 = vadd.f32 0.0, %v5336
        %5338 = vmatprep.mubr.f32.mxu0 0.0
        %5339 = vmatmul.mubr.f32.gmra.mrb[0].mxu0 %v5083
        %v5340 = vpop.f32.mrb[0].mxu0
        %v5341 = vadd.f32 0.0, %v5340
        %v5342 = vpop.f32.mrb[0].mxu0
        %v5343 = vadd.f32 0.0, %v5342
        %5344 = vmatprep.mubr.f32.mxu0 0.0
        %5345 = vmatmul.mubr.f32.gmra.mrb[0].mxu0 %v5086
        %v5346 = vpop.f32.mrb[0].mxu0
        %v5347 = vadd.f32 0.0, %v5346
        %v5348 = vpop.f32.mrb[0].mxu0
        %v5349 = vadd.f32 0.0, %v5348
        %5350 = vdwg.mxu0
        %v5351 = vadd.f32 %v4840, %v5161
        %v5352 = vadd.f32 %v4841, %v5163
        %v5353 = vadd.f32 %v4842, %v5167
        %v5354 = vadd.f32 %v4843, %v5169
        %v5355 = vadd.f32 %v4844, %v5173
        %v5356 = vadd.f32 %v4845, %v5175
        %v5357 = vadd.f32 %v4846, %v5179
        %v5358 = vadd.f32 %v4847, %v5181
        %v5359 = vadd.f32 %v4848, %v5185
        %v5360 = vadd.f32 %v4849, %v5187
        %v5361 = vadd.f32 %v4850, %v5191
        %v5362 = vadd.f32 %v4851, %v5193
        %v5363 = vadd.f32 %v4852, %v5197
        %v5364 = vadd.f32 %v4853, %v5199
        %v5365 = vadd.f32 %v4854, %v5203
        %v5366 = vadd.f32 %v4855, %v5205
        %v5367 = vadd.f32 %v4856, %v5209
        %v5368 = vadd.f32 %v4857, %v5211
        %v5369 = vadd.f32 %v4858, %v5215
        %v5370 = vadd.f32 %v4859, %v5217
        %v5371 = vadd.f32 %v4860, %v5221
        %v5372 = vadd.f32 %v4861, %v5223
        %v5373 = vadd.f32 %v4862, %v5227
        %v5374 = vadd.f32 %v4863, %v5229
        %v5375 = vadd.f32 %v4864, %v5233
        %v5376 = vadd.f32 %v4865, %v5235
        %v5377 = vadd.f32 %v4866, %v5239
        %v5378 = vadd.f32 %v4867, %v5241
        %v5379 = vadd.f32 %v4868, %v5245
        %v5380 = vadd.f32 %v4869, %v5247
        %v5381 = vadd.f32 %v4870, %v5251
        %v5382 = vadd.f32 %v4871, %v5253
        %v5383 = vadd.f32 %v4872, %v5257
        %v5384 = vadd.f32 %v4873, %v5259
        %v5385 = vadd.f32 %v4874, %v5263
        %v5386 = vadd.f32 %v4875, %v5265
        %v5387 = vadd.f32 %v4876, %v5269
        %v5388 = vadd.f32 %v4877, %v5271
        %v5389 = vadd.f32 %v4878, %v5275
        %v5390 = vadd.f32 %v4879, %v5277
        %v5391 = vadd.f32 %v4880, %v5281
        %v5392 = vadd.f32 %v4881, %v5283
        %v5393 = vadd.f32 %v4882, %v5287
        %v5394 = vadd.f32 %v4883, %v5289
        %v5395 = vadd.f32 %v4884, %v5293
        %v5396 = vadd.f32 %v4885, %v5295
        %v5397 = vadd.f32 %v4886, %v5299
        %v5398 = vadd.f32 %v4887, %v5301
        %v5399 = vadd.f32 %v4888, %v5305
        %v5400 = vadd.f32 %v4889, %v5307
        %v5401 = vadd.f32 %v4890, %v5311
        %v5402 = vadd.f32 %v4891, %v5313
        %v5403 = vadd.f32 %v4892, %v5317
        %v5404 = vadd.f32 %v4893, %v5319
        %v5405 = vadd.f32 %v4894, %v5323
        %v5406 = vadd.f32 %v4895, %v5325
        %v5407 = vadd.f32 %v4896, %v5329
        %v5408 = vadd.f32 %v4897, %v5331
        %v5409 = vadd.f32 %v4898, %v5335
        %v5410 = vadd.f32 %v4899, %v5337
        %v5411 = vadd.f32 %v4900, %v5341
        %v5412 = vadd.f32 %v4901, %v5343
        %v5413 = vadd.f32 %v4902, %v5347
        %v5414 = vadd.f32 %v4903, %v5349
        %s5415 = scalar_lea.vmem %s2, 704
        %v5416 = vld [vmem:[%s5415] sm:$0xff]
        %v5417 = vld [vmem:[%s5415 + $0x8] sm:$0xff]
        %v5418 = vld [vmem:[%s5415 + $0x10] sm:$0xff]
        %v5419 = vld [vmem:[%s5415 + $0x18] sm:$0xff]
        %v5420 = vld [vmem:[%s5415 + $0x20] sm:$0xff]
        %v5421 = vld [vmem:[%s5415 + $0x28] sm:$0xff]
        %v5422 = vld [vmem:[%s5415 + $0x30] sm:$0xff]
        %v5423 = vld [vmem:[%s5415 + $0x38] sm:$0xff]
        %v5424 = vld [vmem:[%s5415 + $0x40] sm:$0xff]
        %v5425 = vld [vmem:[%s5415 + $0x48] sm:$0xff]
        %v5426 = vld [vmem:[%s5415 + $0x50] sm:$0xff]
        %v5427 = vld [vmem:[%s5415 + $0x58] sm:$0xff]
        %v5428 = vld [vmem:[%s5415 + $0x60] sm:$0xff]
        %v5429 = vld [vmem:[%s5415 + $0x68] sm:$0xff]
        %v5430 = vld [vmem:[%s5415 + $0x70] sm:$0xff]
        %v5431 = vld [vmem:[%s5415 + $0x78] sm:$0xff]
        %v5432 = vld [vmem:[%s5415 + $0x80] sm:$0xff]
        %v5433 = vld [vmem:[%s5415 + $0x88] sm:$0xff]
        %v5434 = vld [vmem:[%s5415 + $0x90] sm:$0xff]
        %v5435 = vld [vmem:[%s5415 + $0x98] sm:$0xff]
        %v5436 = vld [vmem:[%s5415 + $0xa0] sm:$0xf]
        %v5437 = vld [vmem:[%s5415 + $0xa8] sm:$0xf]
        %v5439 = vsel %vm3771, %v5436, 0
        %v5442 = vsel %vm3771, %v5437, 0
        %5444 = vmatprep.subr.mxu0 %v5417
        %5445 = vmatpush1.msra.mxu0 %v5416
        %5446 = vmatprep.subr.mxu0 %v5419
        %5447 = vmatpush1.msra.mxu0 %v5418
        %5448 = vmatprep.subr.mxu0 %v5421
        %5449 = vmatpush1.msra.mxu0 %v5420
        %5450 = vmatprep.subr.mxu0 %v5423
        %5451 = vmatpush1.msra.mxu0 %v5422
        %5452 = vmatprep.subr.mxu0 %v5425
        %5453 = vmatpush1.msra.mxu0 %v5424
        %5454 = vmatprep.subr.mxu0 %v5427
        %5455 = vmatpush1.msra.mxu0 %v5426
        %5456 = vmatprep.subr.mxu0 %v5429
        %5457 = vmatpush1.msra.mxu0 %v5428
        %5458 = vmatprep.subr.mxu0 %v5431
        %5459 = vmatpush1.msra.mxu0 %v5430
        %5460 = vmatprep.subr.mxu0 %v5433
        %5461 = vmatpush1.msra.mxu0 %v5432
        %5462 = vmatprep.subr.mxu0 %v5435
        %5463 = vmatpush1.msra.mxu0 %v5434
        %5464 = vmatprep.subr.mxu0 %v5442
        %5465 = vmatpush1.msra.mxu0 %v5439
        %5466 = vmatprep.subr.mxu0 0.0
        %5467 = vmatpush1.msra.mxu0 0.0
        %5468 = vmatprep.subr.mxu0 0.0
        %5469 = vmatpush1.msra.mxu0 0.0
        %5470 = vmatprep.subr.mxu0 0.0
        %5471 = vmatpush1.msra.mxu0 0.0
        %5472 = vmatprep.subr.mxu0 0.0
        %5473 = vmatpush1.msra.mxu0 0.0
        %5474 = vmatprep.subr.mxu0 0.0
        %5475 = vmatpush1.msra.mxu0 0.0
        %5476 = vmatprep.subr.mxu0 0.0
        %5477 = vmatpush1.msra.mxu0 0.0
        %5478 = vmatprep.subr.mxu0 0.0
        %5479 = vmatpush1.msra.mxu0 0.0
        %5480 = vmatprep.subr.mxu0 0.0
        %5481 = vmatpush1.msra.mxu0 0.0
        %5482 = vmatprep.subr.mxu0 0.0
        %5483 = vmatpush1.msra.mxu0 0.0
        %5484 = vmatprep.subr.mxu0 0.0
        %5485 = vmatpush1.msra.mxu0 0.0
        %5486 = vmatprep.subr.mxu0 0.0
        %5487 = vmatpush1.msra.mxu0 0.0
        %5488 = vmatprep.subr.mxu0 0.0
        %5489 = vmatpush1.msra.mxu0 0.0
        %5490 = vmatprep.subr.mxu0 0.0
        %5491 = vmatpush1.msra.mxu0 0.0
        %5492 = vmatprep.subr.mxu0 0.0
        %5493 = vmatpush1.msra.mxu0 0.0
        %5494 = vmatprep.subr.mxu0 0.0
        %5495 = vmatpush1.msra.mxu0 0.0
        %5496 = vmatprep.subr.mxu0 0.0
        %5497 = vmatpush1.msra.mxu0 0.0
        %5498 = vmatprep.subr.mxu0 0.0
        %5499 = vmatpush1.msra.mxu0 0.0
        %5500 = vmatprep.subr.mxu0 0.0
        %5501 = vmatpush1.msra.mxu0 0.0
        %5502 = vmatprep.subr.mxu0 0.0
        %5503 = vmatpush1.msra.mxu0 0.0
        %5504 = vmatprep.subr.mxu0 0.0
        %5505 = vmatpush1.msra.mxu0 0.0
        %5506 = vmatprep.subr.mxu0 0.0
        %5507 = vmatpush1.msra.mxu0 0.0
        %5508 = vmatprep.mubr.f32.mxu0 0.0
        %5509 = vmatmul.mubr.f32.gmra.mrb[0].mxu0 %v4039
        %v5510 = vpop.f32.mrb[0].mxu0
        %v5511 = vadd.f32 0.0, %v5510
        %v5512 = vpop.f32.mrb[0].mxu0
        %v5513 = vadd.f32 0.0, %v5512
        %5514 = vmatprep.mubr.f32.mxu0 0.0
        %5515 = vmatmul.mubr.f32.gmra.mrb[0].mxu0 %v4042
        %v5516 = vpop.f32.mrb[0].mxu0
        %v5517 = vadd.f32 0.0, %v5516
        %v5518 = vpop.f32.mrb[0].mxu0
        %v5519 = vadd.f32 0.0, %v5518
        %5520 = vmatprep.mubr.f32.mxu0 0.0
        %5521 = vmatmul.mubr.f32.gmra.mrb[0].mxu0 %v4045
        %v5522 = vpop.f32.mrb[0].mxu0
        %v5523 = vadd.f32 0.0, %v5522
        %v5524 = vpop.f32.mrb[0].mxu0
        %v5525 = vadd.f32 0.0, %v5524
        %5526 = vmatprep.mubr.f32.mxu0 0.0
        %5527 = vmatmul.mubr.f32.gmra.mrb[0].mxu0 %v4048
        %v5528 = vpop.f32.mrb[0].mxu0
        %v5529 = vadd.f32 0.0, %v5528
        %v5530 = vpop.f32.mrb[0].mxu0
        %v5531 = vadd.f32 0.0, %v5530
        %5532 = vmatprep.mubr.f32.mxu0 0.0
        %5533 = vmatmul.mubr.f32.gmra.mrb[0].mxu0 %v4051
        %v5534 = vpop.f32.mrb[0].mxu0
        %v5535 = vadd.f32 0.0, %v5534
        %v5536 = vpop.f32.mrb[0].mxu0
        %v5537 = vadd.f32 0.0, %v5536
        %5538 = vmatprep.mubr.f32.mxu0 0.0
        %5539 = vmatmul.mubr.f32.gmra.mrb[0].mxu0 %v4054
        %v5540 = vpop.f32.mrb[0].mxu0
        %v5541 = vadd.f32 0.0, %v5540
        %v5542 = vpop.f32.mrb[0].mxu0
        %v5543 = vadd.f32 0.0, %v5542
        %5544 = vmatprep.mubr.f32.mxu0 0.0
        %5545 = vmatmul.mubr.f32.gmra.mrb[0].mxu0 %v4057
        %v5546 = vpop.f32.mrb[0].mxu0
        %v5547 = vadd.f32 0.0, %v5546
        %v5548 = vpop.f32.mrb[0].mxu0
        %v5549 = vadd.f32 0.0, %v5548
        %5550 = vmatprep.mubr.f32.mxu0 0.0
        %5551 = vmatmul.mubr.f32.gmra.mrb[0].mxu0 %v4060
        %v5552 = vpop.f32.mrb[0].mxu0
        %v5553 = vadd.f32 0.0, %v5552
        %v5554 = vpop.f32.mrb[0].mxu0
        %v5555 = vadd.f32 0.0, %v5554
        %5556 = vmatprep.mubr.f32.mxu0 0.0
        %5557 = vmatmul.mubr.f32.gmra.mrb[0].mxu0 %v4063
        %v5558 = vpop.f32.mrb[0].mxu0
        %v5559 = vadd.f32 0.0, %v5558
        %v5560 = vpop.f32.mrb[0].mxu0
        %v5561 = vadd.f32 0.0, %v5560
        %5562 = vmatprep.mubr.f32.mxu0 0.0
        %5563 = vmatmul.mubr.f32.gmra.mrb[0].mxu0 %v4066
        %v5564 = vpop.f32.mrb[0].mxu0
        %v5565 = vadd.f32 0.0, %v5564
        %v5566 = vpop.f32.mrb[0].mxu0
        %v5567 = vadd.f32 0.0, %v5566
        %5568 = vmatprep.mubr.f32.mxu0 0.0
        %5569 = vmatmul.mubr.f32.gmra.mrb[0].mxu0 %v4069
        %v5570 = vpop.f32.mrb[0].mxu0
        %v5571 = vadd.f32 0.0, %v5570
        %v5572 = vpop.f32.mrb[0].mxu0
        %v5573 = vadd.f32 0.0, %v5572
        %5574 = vmatprep.mubr.f32.mxu0 0.0
        %5575 = vmatmul.mubr.f32.gmra.mrb[0].mxu0 %v4072
        %v5576 = vpop.f32.mrb[0].mxu0
        %v5577 = vadd.f32 0.0, %v5576
        %v5578 = vpop.f32.mrb[0].mxu0
        %v5579 = vadd.f32 0.0, %v5578
        %5580 = vmatprep.mubr.f32.mxu0 0.0
        %5581 = vmatmul.mubr.f32.gmra.mrb[0].mxu0 %v4075
        %v5582 = vpop.f32.mrb[0].mxu0
        %v5583 = vadd.f32 0.0, %v5582
        %v5584 = vpop.f32.mrb[0].mxu0
        %v5585 = vadd.f32 0.0, %v5584
        %5586 = vmatprep.mubr.f32.mxu0 0.0
        %5587 = vmatmul.mubr.f32.gmra.mrb[0].mxu0 %v4078
        %v5588 = vpop.f32.mrb[0].mxu0
        %v5589 = vadd.f32 0.0, %v5588
        %v5590 = vpop.f32.mrb[0].mxu0
        %v5591 = vadd.f32 0.0, %v5590
        %5592 = vmatprep.mubr.f32.mxu0 0.0
        %5593 = vmatmul.mubr.f32.gmra.mrb[0].mxu0 %v4081
        %v5594 = vpop.f32.mrb[0].mxu0
        %v5595 = vadd.f32 0.0, %v5594
        %v5596 = vpop.f32.mrb[0].mxu0
        %v5597 = vadd.f32 0.0, %v5596
        %5598 = vmatprep.mubr.f32.mxu0 0.0
        %5599 = vmatmul.mubr.f32.gmra.mrb[0].mxu0 %v4084
        %v5600 = vpop.f32.mrb[0].mxu0
        %v5601 = vadd.f32 0.0, %v5600
        %v5602 = vpop.f32.mrb[0].mxu0
        %v5603 = vadd.f32 0.0, %v5602
        %5604 = vmatprep.mubr.f32.mxu0 0.0
        %5605 = vmatmul.mubr.f32.gmra.mrb[0].mxu0 %v4087
        %v5606 = vpop.f32.mrb[0].mxu0
        %v5607 = vadd.f32 0.0, %v5606
        %v5608 = vpop.f32.mrb[0].mxu0
        %v5609 = vadd.f32 0.0, %v5608
        %5610 = vmatprep.mubr.f32.mxu0 0.0
        %5611 = vmatmul.mubr.f32.gmra.mrb[0].mxu0 %v4090
        %v5612 = vpop.f32.mrb[0].mxu0
        %v5613 = vadd.f32 0.0, %v5612
        %v5614 = vpop.f32.mrb[0].mxu0
        %v5615 = vadd.f32 0.0, %v5614
        %5616 = vmatprep.mubr.f32.mxu0 0.0
        %5617 = vmatmul.mubr.f32.gmra.mrb[0].mxu0 %v4093
        %v5618 = vpop.f32.mrb[0].mxu0
        %v5619 = vadd.f32 0.0, %v5618
        %v5620 = vpop.f32.mrb[0].mxu0
        %v5621 = vadd.f32 0.0, %v5620
        %5622 = vmatprep.mubr.f32.mxu0 0.0
        %5623 = vmatmul.mubr.f32.gmra.mrb[0].mxu0 %v4096
        %v5624 = vpop.f32.mrb[0].mxu0
        %v5625 = vadd.f32 0.0, %v5624
        %v5626 = vpop.f32.mrb[0].mxu0
        %v5627 = vadd.f32 0.0, %v5626
        %5628 = vmatprep.mubr.f32.mxu0 0.0
        %5629 = vmatmul.mubr.f32.gmra.mrb[0].mxu0 %v4099
        %v5630 = vpop.f32.mrb[0].mxu0
        %v5631 = vadd.f32 0.0, %v5630
        %v5632 = vpop.f32.mrb[0].mxu0
        %v5633 = vadd.f32 0.0, %v5632
        %5634 = vmatprep.mubr.f32.mxu0 0.0
        %5635 = vmatmul.mubr.f32.gmra.mrb[0].mxu0 %v4102
        %v5636 = vpop.f32.mrb[0].mxu0
        %v5637 = vadd.f32 0.0, %v5636
        %v5638 = vpop.f32.mrb[0].mxu0
        %v5639 = vadd.f32 0.0, %v5638
        %5640 = vmatprep.mubr.f32.mxu0 0.0
        %5641 = vmatmul.mubr.f32.gmra.mrb[0].mxu0 %v4105
        %v5642 = vpop.f32.mrb[0].mxu0
        %v5643 = vadd.f32 0.0, %v5642
        %v5644 = vpop.f32.mrb[0].mxu0
        %v5645 = vadd.f32 0.0, %v5644
        %5646 = vmatprep.mubr.f32.mxu0 0.0
        %5647 = vmatmul.mubr.f32.gmra.mrb[0].mxu0 %v4108
        %v5648 = vpop.f32.mrb[0].mxu0
        %v5649 = vadd.f32 0.0, %v5648
        %v5650 = vpop.f32.mrb[0].mxu0
        %v5651 = vadd.f32 0.0, %v5650
        %5652 = vmatprep.mubr.f32.mxu0 0.0
        %5653 = vmatmul.mubr.f32.gmra.mrb[0].mxu0 %v4111
        %v5654 = vpop.f32.mrb[0].mxu0
        %v5655 = vadd.f32 0.0, %v5654
        %v5656 = vpop.f32.mrb[0].mxu0
        %v5657 = vadd.f32 0.0, %v5656
        %5658 = vmatprep.mubr.f32.mxu0 0.0
        %5659 = vmatmul.mubr.f32.gmra.mrb[0].mxu0 %v4114
        %v5660 = vpop.f32.mrb[0].mxu0
        %v5661 = vadd.f32 0.0, %v5660
        %v5662 = vpop.f32.mrb[0].mxu0
        %v5663 = vadd.f32 0.0, %v5662
        %5664 = vmatprep.mubr.f32.mxu0 0.0
        %5665 = vmatmul.mubr.f32.gmra.mrb[0].mxu0 %v4117
        %v5666 = vpop.f32.mrb[0].mxu0
        %v5667 = vadd.f32 0.0, %v5666
        %v5668 = vpop.f32.mrb[0].mxu0
        %v5669 = vadd.f32 0.0, %v5668
        %5670 = vmatprep.mubr.f32.mxu0 0.0
        %5671 = vmatmul.mubr.f32.gmra.mrb[0].mxu0 %v4120
        %v5672 = vpop.f32.mrb[0].mxu0
        %v5673 = vadd.f32 0.0, %v5672
        %v5674 = vpop.f32.mrb[0].mxu0
        %v5675 = vadd.f32 0.0, %v5674
        %5676 = vmatprep.mubr.f32.mxu0 0.0
        %5677 = vmatmul.mubr.f32.gmra.mrb[0].mxu0 %v4123
        %v5678 = vpop.f32.mrb[0].mxu0
        %v5679 = vadd.f32 0.0, %v5678
        %v5680 = vpop.f32.mrb[0].mxu0
        %v5681 = vadd.f32 0.0, %v5680
        %5682 = vmatprep.mubr.f32.mxu0 0.0
        %5683 = vmatmul.mubr.f32.gmra.mrb[0].mxu0 %v4126
        %v5684 = vpop.f32.mrb[0].mxu0
        %v5685 = vadd.f32 0.0, %v5684
        %v5686 = vpop.f32.mrb[0].mxu0
        %v5687 = vadd.f32 0.0, %v5686
        %5688 = vmatprep.mubr.f32.mxu0 0.0
        %5689 = vmatmul.mubr.f32.gmra.mrb[0].mxu0 %v4129
        %v5690 = vpop.f32.mrb[0].mxu0
        %v5691 = vadd.f32 0.0, %v5690
        %v5692 = vpop.f32.mrb[0].mxu0
        %v5693 = vadd.f32 0.0, %v5692
        %5694 = vmatprep.mubr.f32.mxu0 0.0
        %5695 = vmatmul.mubr.f32.gmra.mrb[0].mxu0 %v4036
        %v5696 = vpop.f32.mrb[0].mxu0
        %v5697 = vadd.f32 0.0, %v5696
        %v5698 = vpop.f32.mrb[0].mxu0
        %v5699 = vadd.f32 0.0, %v5698
        %5700 = vdwg.mxu0
        %v5701 = vadd.f32 %v5351, %v5511
        %v5702 = vadd.f32 %v5352, %v5513
        %v5703 = vadd.f32 %v5353, %v5517
        %v5704 = vadd.f32 %v5354, %v5519
        %v5705 = vadd.f32 %v5355, %v5523
        %v5706 = vadd.f32 %v5356, %v5525
        %v5707 = vadd.f32 %v5357, %v5529
        %v5708 = vadd.f32 %v5358, %v5531
        %v5709 = vadd.f32 %v5359, %v5535
        %v5710 = vadd.f32 %v5360, %v5537
        %v5711 = vadd.f32 %v5361, %v5541
        %v5712 = vadd.f32 %v5362, %v5543
        %v5713 = vadd.f32 %v5363, %v5547
        %v5714 = vadd.f32 %v5364, %v5549
        %v5715 = vadd.f32 %v5365, %v5553
        %v5716 = vadd.f32 %v5366, %v5555
        %v5717 = vadd.f32 %v5367, %v5559
        %v5718 = vadd.f32 %v5368, %v5561
        %v5719 = vadd.f32 %v5369, %v5565
        %v5720 = vadd.f32 %v5370, %v5567
        %v5721 = vadd.f32 %v5371, %v5571
        %v5722 = vadd.f32 %v5372, %v5573
        %v5723 = vadd.f32 %v5373, %v5577
        %v5724 = vadd.f32 %v5374, %v5579
        %v5725 = vadd.f32 %v5375, %v5583
        %v5726 = vadd.f32 %v5376, %v5585
        %v5727 = vadd.f32 %v5377, %v5589
        %v5728 = vadd.f32 %v5378, %v5591
        %v5729 = vadd.f32 %v5379, %v5595
        %v5730 = vadd.f32 %v5380, %v5597
        %v5731 = vadd.f32 %v5381, %v5601
        %v5732 = vadd.f32 %v5382, %v5603
        %v5733 = vadd.f32 %v5383, %v5607
        %v5734 = vadd.f32 %v5384, %v5609
        %v5735 = vadd.f32 %v5385, %v5613
        %v5736 = vadd.f32 %v5386, %v5615
        %v5737 = vadd.f32 %v5387, %v5619
        %v5738 = vadd.f32 %v5388, %v5621
        %v5739 = vadd.f32 %v5389, %v5625
        %v5740 = vadd.f32 %v5390, %v5627
        %v5741 = vadd.f32 %v5391, %v5631
        %v5742 = vadd.f32 %v5392, %v5633
        %v5743 = vadd.f32 %v5393, %v5637
        %v5744 = vadd.f32 %v5394, %v5639
        %v5745 = vadd.f32 %v5395, %v5643
        %v5746 = vadd.f32 %v5396, %v5645
        %v5747 = vadd.f32 %v5397, %v5649
        %v5748 = vadd.f32 %v5398, %v5651
        %v5749 = vadd.f32 %v5399, %v5655
        %v5750 = vadd.f32 %v5400, %v5657
        %v5751 = vadd.f32 %v5401, %v5661
        %v5752 = vadd.f32 %v5402, %v5663
        %v5753 = vadd.f32 %v5403, %v5667
        %v5754 = vadd.f32 %v5404, %v5669
        %v5755 = vadd.f32 %v5405, %v5673
        %v5756 = vadd.f32 %v5406, %v5675
        %v5757 = vadd.f32 %v5407, %v5679
        %v5758 = vadd.f32 %v5408, %v5681
        %v5759 = vadd.f32 %v5409, %v5685
        %v5760 = vadd.f32 %v5410, %v5687
        %v5761 = vadd.f32 %v5411, %v5691
        %v5762 = vadd.f32 %v5412, %v5693
        %v5763 = vadd.f32 %v5413, %v5697
        %v5764 = vadd.f32 %v5414, %v5699
        %v5765 = vlaneseq
        %v5766 = vshrl.u32 %v5765, 7
        %v5767 = vsub.s32 1, %v5766
        %v5768 = vrot.slane %v446, %v5767
        %v5769 = vlaneseq
        %v5770 = vshrl.u32 %v5769, 7
        %v5771 = vsub.s32 1, %v5770
        %v5772 = vrot.slane %v447, %v5771
        %v5773 = vadd.f32 %v5701, %v5768
        %v5774 = vadd.f32 %v5702, %v5772
        %v5775 = vadd.f32 %v5703, %v5768
        %v5776 = vadd.f32 %v5704, %v5772
        %v5777 = vadd.f32 %v5705, %v5768
        %v5778 = vadd.f32 %v5706, %v5772
        %v5779 = vadd.f32 %v5707, %v5768
        %v5780 = vadd.f32 %v5708, %v5772
        %v5781 = vadd.f32 %v5709, %v5768
        %v5782 = vadd.f32 %v5710, %v5772
        %v5783 = vadd.f32 %v5711, %v5768
        %v5784 = vadd.f32 %v5712, %v5772
        %v5785 = vadd.f32 %v5713, %v5768
        %v5786 = vadd.f32 %v5714, %v5772
        %v5787 = vadd.f32 %v5715, %v5768
        %v5788 = vadd.f32 %v5716, %v5772
        %v5789 = vadd.f32 %v5717, %v5768
        %v5790 = vadd.f32 %v5718, %v5772
        %v5791 = vadd.f32 %v5719, %v5768
        %v5792 = vadd.f32 %v5720, %v5772
        %v5793 = vadd.f32 %v5721, %v5768
        %v5794 = vadd.f32 %v5722, %v5772
        %v5795 = vadd.f32 %v5723, %v5768
        %v5796 = vadd.f32 %v5724, %v5772
        %v5797 = vadd.f32 %v5725, %v5768
        %v5798 = vadd.f32 %v5726, %v5772
        %v5799 = vadd.f32 %v5727, %v5768
        %v5800 = vadd.f32 %v5728, %v5772
        %v5801 = vadd.f32 %v5729, %v5768
        %v5802 = vadd.f32 %v5730, %v5772
        %v5803 = vadd.f32 %v5731, %v5768
        %v5804 = vadd.f32 %v5732, %v5772
        %v5805 = vadd.f32 %v5733, %v5768
        %v5806 = vadd.f32 %v5734, %v5772
        %v5807 = vadd.f32 %v5735, %v5768
        %v5808 = vadd.f32 %v5736, %v5772
        %v5809 = vadd.f32 %v5737, %v5768
        %v5810 = vadd.f32 %v5738, %v5772
        %v5811 = vadd.f32 %v5739, %v5768
        %v5812 = vadd.f32 %v5740, %v5772
        %v5813 = vadd.f32 %v5741, %v5768
        %v5814 = vadd.f32 %v5742, %v5772
        %v5815 = vadd.f32 %v5743, %v5768
        %v5816 = vadd.f32 %v5744, %v5772
        %v5817 = vadd.f32 %v5745, %v5768
        %v5818 = vadd.f32 %v5746, %v5772
        %v5819 = vadd.f32 %v5747, %v5768
        %v5820 = vadd.f32 %v5748, %v5772
        %v5821 = vadd.f32 %v5749, %v5768
        %v5822 = vadd.f32 %v5750, %v5772
        %v5823 = vadd.f32 %v5751, %v5768
        %v5824 = vadd.f32 %v5752, %v5772
        %v5825 = vadd.f32 %v5753, %v5768
        %v5826 = vadd.f32 %v5754, %v5772
        %v5827 = vadd.f32 %v5755, %v5768
        %v5828 = vadd.f32 %v5756, %v5772
        %v5829 = vadd.f32 %v5757, %v5768
        %v5830 = vadd.f32 %v5758, %v5772
        %v5831 = vadd.f32 %v5759, %v5768
        %v5832 = vadd.f32 %v5760, %v5772
        %v5833 = vadd.f32 %v5761, %v5768
        %v5834 = vadd.f32 %v5762, %v5772
        %v5835 = vadd.f32 %v5763, %v5768
        %v5836 = vadd.f32 %v5764, %v5772
        %v5837 = vmax.f32 %v5773, 0.0
        %v5838 = vmax.f32 %v5774, 0.0
        %v5839 = vmax.f32 %v5775, 0.0
        %v5840 = vmax.f32 %v5776, 0.0
        %v5841 = vmax.f32 %v5777, 0.0
        %v5842 = vmax.f32 %v5778, 0.0
        %v5843 = vmax.f32 %v5779, 0.0
        %v5844 = vmax.f32 %v5780, 0.0
        %v5845 = vmax.f32 %v5781, 0.0
        %v5846 = vmax.f32 %v5782, 0.0
        %v5847 = vmax.f32 %v5783, 0.0
        %v5848 = vmax.f32 %v5784, 0.0
        %v5849 = vmax.f32 %v5785, 0.0
        %v5850 = vmax.f32 %v5786, 0.0
        %v5851 = vmax.f32 %v5787, 0.0
        %v5852 = vmax.f32 %v5788, 0.0
        %v5853 = vmax.f32 %v5789, 0.0
        %v5854 = vmax.f32 %v5790, 0.0
        %v5855 = vmax.f32 %v5791, 0.0
        %v5856 = vmax.f32 %v5792, 0.0
        %v5857 = vmax.f32 %v5793, 0.0
        %v5858 = vmax.f32 %v5794, 0.0
        %v5859 = vmax.f32 %v5795, 0.0
        %v5860 = vmax.f32 %v5796, 0.0
        %v5861 = vmax.f32 %v5797, 0.0
        %v5862 = vmax.f32 %v5798, 0.0
        %v5863 = vmax.f32 %v5799, 0.0
        %v5864 = vmax.f32 %v5800, 0.0
        %v5865 = vmax.f32 %v5801, 0.0
        %v5866 = vmax.f32 %v5802, 0.0
        %v5867 = vmax.f32 %v5803, 0.0
        %v5868 = vmax.f32 %v5804, 0.0
        %v5869 = vmax.f32 %v5805, 0.0
        %v5870 = vmax.f32 %v5806, 0.0
        %v5871 = vmax.f32 %v5807, 0.0
        %v5872 = vmax.f32 %v5808, 0.0
        %v5873 = vmax.f32 %v5809, 0.0
        %v5874 = vmax.f32 %v5810, 0.0
        %v5875 = vmax.f32 %v5811, 0.0
        %v5876 = vmax.f32 %v5812, 0.0
        %v5877 = vmax.f32 %v5813, 0.0
        %v5878 = vmax.f32 %v5814, 0.0
        %v5879 = vmax.f32 %v5815, 0.0
        %v5880 = vmax.f32 %v5816, 0.0
        %v5881 = vmax.f32 %v5817, 0.0
        %v5882 = vmax.f32 %v5818, 0.0
        %v5883 = vmax.f32 %v5819, 0.0
        %v5884 = vmax.f32 %v5820, 0.0
        %v5885 = vmax.f32 %v5821, 0.0
        %v5886 = vmax.f32 %v5822, 0.0
        %v5887 = vmax.f32 %v5823, 0.0
        %v5888 = vmax.f32 %v5824, 0.0
        %v5889 = vmax.f32 %v5825, 0.0
        %v5890 = vmax.f32 %v5826, 0.0
        %v5891 = vmax.f32 %v5827, 0.0
        %v5892 = vmax.f32 %v5828, 0.0
        %v5893 = vmax.f32 %v5829, 0.0
        %v5894 = vmax.f32 %v5830, 0.0
        %v5895 = vmax.f32 %v5831, 0.0
        %v5896 = vmax.f32 %v5832, 0.0
        %v5897 = vmax.f32 %v5833, 0.0
        %v5898 = vmax.f32 %v5834, 0.0
        %v5899 = vmax.f32 %v5835, 0.0
        %v5900 = vmax.f32 %v5836, 0.0
        %v5901 = vld [vmem:[%s5] sm:$0xff]
        %v5902 = vld [vmem:[%s5 + $0x8] sm:$0xff]
        %v5903 = vld [vmem:[%s5 + $0x10] sm:$0xff]
        %v5904 = vld [vmem:[%s5 + $0x18] sm:$0xff]
        %v5905 = vld [vmem:[%s5 + $0x20] sm:$0xff]
        %v5906 = vld [vmem:[%s5 + $0x28] sm:$0xff]
        %v5907 = vld [vmem:[%s5 + $0x30] sm:$0xff]
        %v5908 = vld [vmem:[%s5 + $0x38] sm:$0xff]
        %v5909 = vld [vmem:[%s5 + $0x40] sm:$0xff]
        %v5910 = vld [vmem:[%s5 + $0x48] sm:$0xff]
        %v5911 = vld [vmem:[%s5 + $0x50] sm:$0xff]
        %v5912 = vld [vmem:[%s5 + $0x58] sm:$0xff]
        %v5913 = vld [vmem:[%s5 + $0x60] sm:$0xff]
        %v5914 = vld [vmem:[%s5 + $0x68] sm:$0xff]
        %v5915 = vld [vmem:[%s5 + $0x70] sm:$0xff]
        %v5916 = vld [vmem:[%s5 + $0x78] sm:$0xff]
        %v5917 = vld [vmem:[%s5 + $0x80] sm:$0xff]
        %v5918 = vld [vmem:[%s5 + $0x88] sm:$0xff]
        %v5919 = vld [vmem:[%s5 + $0x90] sm:$0xff]
        %v5920 = vld [vmem:[%s5 + $0x98] sm:$0xff]
        %v5922 = vsel %vm532, %v5838, 0
        %v5925 = vsel %vm532, %v5840, 0
        %v5928 = vsel %vm532, %v5842, 0
        %v5931 = vsel %vm532, %v5844, 0
        %v5934 = vsel %vm532, %v5846, 0
        %v5937 = vsel %vm532, %v5848, 0
        %v5940 = vsel %vm532, %v5850, 0
        %v5943 = vsel %vm532, %v5852, 0
        %v5946 = vsel %vm532, %v5854, 0
        %v5949 = vsel %vm532, %v5856, 0
        %v5952 = vsel %vm532, %v5858, 0
        %v5955 = vsel %vm532, %v5860, 0
        %v5958 = vsel %vm532, %v5862, 0
        %v5961 = vsel %vm532, %v5864, 0
        %v5964 = vsel %vm532, %v5866, 0
        %v5967 = vsel %vm532, %v5868, 0
        %v5970 = vsel %vm532, %v5870, 0
        %v5973 = vsel %vm532, %v5872, 0
        %v5976 = vsel %vm532, %v5874, 0
        %v5979 = vsel %vm532, %v5876, 0
        %v5982 = vsel %vm532, %v5878, 0
        %v5985 = vsel %vm532, %v5880, 0
        %v5988 = vsel %vm532, %v5882, 0
        %v5991 = vsel %vm532, %v5884, 0
        %v5994 = vsel %vm532, %v5886, 0
        %v5997 = vsel %vm532, %v5888, 0
        %v6000 = vsel %vm532, %v5890, 0
        %v6003 = vsel %vm532, %v5892, 0
        %v6006 = vsel %vm532, %v5894, 0
        %v6009 = vsel %vm532, %v5896, 0
        %v6012 = vsel %vm532, %v5898, 0
        %v6015 = vsel %vm532, %v5900, 0
        %6017 = vmatprep.subr.mxu0 0.0
        %6018 = vmatpush1.msra.mxu0 %v5901
        %6019 = vmatprep.subr.mxu0 0.0
        %6020 = vmatpush1.msra.mxu0 %v5902
        %6021 = vmatprep.subr.mxu0 0.0
        %6022 = vmatpush1.msra.mxu0 %v5903
        %6023 = vmatprep.subr.mxu0 0.0
        %6024 = vmatpush1.msra.mxu0 %v5904
        %6025 = vmatprep.subr.mxu0 0.0
        %6026 = vmatpush1.msra.mxu0 %v5905
        %6027 = vmatprep.subr.mxu0 0.0
        %6028 = vmatpush1.msra.mxu0 %v5906
        %6029 = vmatprep.subr.mxu0 0.0
        %6030 = vmatpush1.msra.mxu0 %v5907
        %6031 = vmatprep.subr.mxu0 0.0
        %6032 = vmatpush1.msra.mxu0 %v5908
        %6033 = vmatprep.subr.mxu0 0.0
        %6034 = vmatpush1.msra.mxu0 %v5909
        %6035 = vmatprep.subr.mxu0 0.0
        %6036 = vmatpush1.msra.mxu0 %v5910
        %6037 = vmatprep.subr.mxu0 0.0
        %6038 = vmatpush1.msra.mxu0 %v5911
        %6039 = vmatprep.subr.mxu0 0.0
        %6040 = vmatpush1.msra.mxu0 %v5912
        %6041 = vmatprep.subr.mxu0 0.0
        %6042 = vmatpush1.msra.mxu0 %v5913
        %6043 = vmatprep.subr.mxu0 0.0
        %6044 = vmatpush1.msra.mxu0 %v5914
        %6045 = vmatprep.subr.mxu0 0.0
        %6046 = vmatpush1.msra.mxu0 %v5915
        %6047 = vmatprep.subr.mxu0 0.0
        %6048 = vmatpush1.msra.mxu0 %v5916
        %6049 = vmatprep.subr.mxu0 0.0
        %6050 = vmatpush1.msra.mxu0 %v5917
        %6051 = vmatprep.subr.mxu0 0.0
        %6052 = vmatpush1.msra.mxu0 %v5918
        %6053 = vmatprep.subr.mxu0 0.0
        %6054 = vmatpush1.msra.mxu0 %v5919
        %6055 = vmatprep.subr.mxu0 0.0
        %6056 = vmatpush1.msra.mxu0 %v5920
        %6057 = vmatprep.subr.mxu0 0.0
        %6058 = vmatpush1.msra.mxu0 0.0
        %6059 = vmatprep.subr.mxu0 0.0
        %6060 = vmatpush1.msra.mxu0 0.0
        %6061 = vmatprep.subr.mxu0 0.0
        %6062 = vmatpush1.msra.mxu0 0.0
        %6063 = vmatprep.subr.mxu0 0.0
        %6064 = vmatpush1.msra.mxu0 0.0
        %6065 = vmatprep.subr.mxu0 0.0
        %6066 = vmatpush1.msra.mxu0 0.0
        %6067 = vmatprep.subr.mxu0 0.0
        %6068 = vmatpush1.msra.mxu0 0.0
        %6069 = vmatprep.subr.mxu0 0.0
        %6070 = vmatpush1.msra.mxu0 0.0
        %6071 = vmatprep.subr.mxu0 0.0
        %6072 = vmatpush1.msra.mxu0 0.0
        %6073 = vmatprep.subr.mxu0 0.0
        %6074 = vmatpush1.msra.mxu0 0.0
        %6075 = vmatprep.subr.mxu0 0.0
        %6076 = vmatpush1.msra.mxu0 0.0
        %6077 = vmatprep.subr.mxu0 0.0
        %6078 = vmatpush1.msra.mxu0 0.0
        %6079 = vmatprep.subr.mxu0 0.0
        %6080 = vmatpush1.msra.mxu0 0.0
        %6081 = vmatprep.mubr.f32.mxu0 %v5922
        %6082 = vmatmul.mubr.f32.gmra.mrb[0].mxu0 %v5837
        %v6083 = vpop.f32.mrb[0].mxu0
        %v6084 = vadd.f32 0.0, %v6083
        %v6085 = vpop.f32.mrb[0].mxu0
        %6086 = vmatprep.mubr.f32.mxu0 %v5925
        %6087 = vmatmul.mubr.f32.gmra.mrb[0].mxu0 %v5839
        %v6088 = vpop.f32.mrb[0].mxu0
        %v6089 = vadd.f32 0.0, %v6088
        %v6090 = vpop.f32.mrb[0].mxu0
        %6091 = vmatprep.mubr.f32.mxu0 %v5928
        %6092 = vmatmul.mubr.f32.gmra.mrb[0].mxu0 %v5841
        %v6093 = vpop.f32.mrb[0].mxu0
        %v6094 = vadd.f32 0.0, %v6093
        %v6095 = vpop.f32.mrb[0].mxu0
        %6096 = vmatprep.mubr.f32.mxu0 %v5931
        %6097 = vmatmul.mubr.f32.gmra.mrb[0].mxu0 %v5843
        %v6098 = vpop.f32.mrb[0].mxu0
        %v6099 = vadd.f32 0.0, %v6098
        %v6100 = vpop.f32.mrb[0].mxu0
        %6101 = vmatprep.mubr.f32.mxu0 %v5934
        %6102 = vmatmul.mubr.f32.gmra.mrb[0].mxu0 %v5845
        %v6103 = vpop.f32.mrb[0].mxu0
        %v6104 = vadd.f32 0.0, %v6103
        %v6105 = vpop.f32.mrb[0].mxu0
        %6106 = vmatprep.mubr.f32.mxu0 %v5937
        %6107 = vmatmul.mubr.f32.gmra.mrb[0].mxu0 %v5847
        %v6108 = vpop.f32.mrb[0].mxu0
        %v6109 = vadd.f32 0.0, %v6108
        %v6110 = vpop.f32.mrb[0].mxu0
        %6111 = vmatprep.mubr.f32.mxu0 %v5940
        %6112 = vmatmul.mubr.f32.gmra.mrb[0].mxu0 %v5849
        %v6113 = vpop.f32.mrb[0].mxu0
        %v6114 = vadd.f32 0.0, %v6113
        %v6115 = vpop.f32.mrb[0].mxu0
        %6116 = vmatprep.mubr.f32.mxu0 %v5943
        %6117 = vmatmul.mubr.f32.gmra.mrb[0].mxu0 %v5851
        %v6118 = vpop.f32.mrb[0].mxu0
        %v6119 = vadd.f32 0.0, %v6118
        %v6120 = vpop.f32.mrb[0].mxu0
        %6121 = vmatprep.mubr.f32.mxu0 %v5946
        %6122 = vmatmul.mubr.f32.gmra.mrb[0].mxu0 %v5853
        %v6123 = vpop.f32.mrb[0].mxu0
        %v6124 = vadd.f32 0.0, %v6123
        %v6125 = vpop.f32.mrb[0].mxu0
        %6126 = vmatprep.mubr.f32.mxu0 %v5949
        %6127 = vmatmul.mubr.f32.gmra.mrb[0].mxu0 %v5855
        %v6128 = vpop.f32.mrb[0].mxu0
        %v6129 = vadd.f32 0.0, %v6128
        %v6130 = vpop.f32.mrb[0].mxu0
        %6131 = vmatprep.mubr.f32.mxu0 %v5952
        %6132 = vmatmul.mubr.f32.gmra.mrb[0].mxu0 %v5857
        %v6133 = vpop.f32.mrb[0].mxu0
        %v6134 = vadd.f32 0.0, %v6133
        %v6135 = vpop.f32.mrb[0].mxu0
        %6136 = vmatprep.mubr.f32.mxu0 %v5955
        %6137 = vmatmul.mubr.f32.gmra.mrb[0].mxu0 %v5859
        %v6138 = vpop.f32.mrb[0].mxu0
        %v6139 = vadd.f32 0.0, %v6138
        %v6140 = vpop.f32.mrb[0].mxu0
        %6141 = vmatprep.mubr.f32.mxu0 %v5958
        %6142 = vmatmul.mubr.f32.gmra.mrb[0].mxu0 %v5861
        %v6143 = vpop.f32.mrb[0].mxu0
        %v6144 = vadd.f32 0.0, %v6143
        %v6145 = vpop.f32.mrb[0].mxu0
        %6146 = vmatprep.mubr.f32.mxu0 %v5961
        %6147 = vmatmul.mubr.f32.gmra.mrb[0].mxu0 %v5863
        %v6148 = vpop.f32.mrb[0].mxu0
        %v6149 = vadd.f32 0.0, %v6148
        %v6150 = vpop.f32.mrb[0].mxu0
        %6151 = vmatprep.mubr.f32.mxu0 %v5964
        %6152 = vmatmul.mubr.f32.gmra.mrb[0].mxu0 %v5865
        %v6153 = vpop.f32.mrb[0].mxu0
        %v6154 = vadd.f32 0.0, %v6153
        %v6155 = vpop.f32.mrb[0].mxu0
        %6156 = vmatprep.mubr.f32.mxu0 %v5967
        %6157 = vmatmul.mubr.f32.gmra.mrb[0].mxu0 %v5867
        %v6158 = vpop.f32.mrb[0].mxu0
        %v6159 = vadd.f32 0.0, %v6158
        %v6160 = vpop.f32.mrb[0].mxu0
        %6161 = vmatprep.mubr.f32.mxu0 %v5970
        %6162 = vmatmul.mubr.f32.gmra.mrb[0].mxu0 %v5869
        %v6163 = vpop.f32.mrb[0].mxu0
        %v6164 = vadd.f32 0.0, %v6163
        %v6165 = vpop.f32.mrb[0].mxu0
        %6166 = vmatprep.mubr.f32.mxu0 %v5973
        %6167 = vmatmul.mubr.f32.gmra.mrb[0].mxu0 %v5871
        %v6168 = vpop.f32.mrb[0].mxu0
        %v6169 = vadd.f32 0.0, %v6168
        %v6170 = vpop.f32.mrb[0].mxu0
        %6171 = vmatprep.mubr.f32.mxu0 %v5976
        %6172 = vmatmul.mubr.f32.gmra.mrb[0].mxu0 %v5873
        %v6173 = vpop.f32.mrb[0].mxu0
        %v6174 = vadd.f32 0.0, %v6173
        %v6175 = vpop.f32.mrb[0].mxu0
        %6176 = vmatprep.mubr.f32.mxu0 %v5979
        %6177 = vmatmul.mubr.f32.gmra.mrb[0].mxu0 %v5875
        %v6178 = vpop.f32.mrb[0].mxu0
        %v6179 = vadd.f32 0.0, %v6178
        %v6180 = vpop.f32.mrb[0].mxu0
        %6181 = vmatprep.mubr.f32.mxu0 %v5982
        %6182 = vmatmul.mubr.f32.gmra.mrb[0].mxu0 %v5877
        %v6183 = vpop.f32.mrb[0].mxu0
        %v6184 = vadd.f32 0.0, %v6183
        %v6185 = vpop.f32.mrb[0].mxu0
        %6186 = vmatprep.mubr.f32.mxu0 %v5985
        %6187 = vmatmul.mubr.f32.gmra.mrb[0].mxu0 %v5879
        %v6188 = vpop.f32.mrb[0].mxu0
        %v6189 = vadd.f32 0.0, %v6188
        %v6190 = vpop.f32.mrb[0].mxu0
        %6191 = vmatprep.mubr.f32.mxu0 %v5988
        %6192 = vmatmul.mubr.f32.gmra.mrb[0].mxu0 %v5881
        %v6193 = vpop.f32.mrb[0].mxu0
        %v6194 = vadd.f32 0.0, %v6193
        %v6195 = vpop.f32.mrb[0].mxu0
        %6196 = vmatprep.mubr.f32.mxu0 %v5991
        %6197 = vmatmul.mubr.f32.gmra.mrb[0].mxu0 %v5883
        %v6198 = vpop.f32.mrb[0].mxu0
        %v6199 = vadd.f32 0.0, %v6198
        %v6200 = vpop.f32.mrb[0].mxu0
        %6201 = vmatprep.mubr.f32.mxu0 %v5994
        %6202 = vmatmul.mubr.f32.gmra.mrb[0].mxu0 %v5885
        %v6203 = vpop.f32.mrb[0].mxu0
        %v6204 = vadd.f32 0.0, %v6203
        %v6205 = vpop.f32.mrb[0].mxu0
        %6206 = vmatprep.mubr.f32.mxu0 %v5997
        %6207 = vmatmul.mubr.f32.gmra.mrb[0].mxu0 %v5887
        %v6208 = vpop.f32.mrb[0].mxu0
        %v6209 = vadd.f32 0.0, %v6208
        %v6210 = vpop.f32.mrb[0].mxu0
        %6211 = vmatprep.mubr.f32.mxu0 %v6000
        %6212 = vmatmul.mubr.f32.gmra.mrb[0].mxu0 %v5889
        %v6213 = vpop.f32.mrb[0].mxu0
        %v6214 = vadd.f32 0.0, %v6213
        %v6215 = vpop.f32.mrb[0].mxu0
        %6216 = vmatprep.mubr.f32.mxu0 %v6003
        %6217 = vmatmul.mubr.f32.gmra.mrb[0].mxu0 %v5891
        %v6218 = vpop.f32.mrb[0].mxu0
        %v6219 = vadd.f32 0.0, %v6218
        %v6220 = vpop.f32.mrb[0].mxu0
        %6221 = vmatprep.mubr.f32.mxu0 %v6006
        %6222 = vmatmul.mubr.f32.gmra.mrb[0].mxu0 %v5893
        %v6223 = vpop.f32.mrb[0].mxu0
        %v6224 = vadd.f32 0.0, %v6223
        %v6225 = vpop.f32.mrb[0].mxu0
        %6226 = vmatprep.mubr.f32.mxu0 %v6009
        %6227 = vmatmul.mubr.f32.gmra.mrb[0].mxu0 %v5895
        %v6228 = vpop.f32.mrb[0].mxu0
        %v6229 = vadd.f32 0.0, %v6228
        %v6230 = vpop.f32.mrb[0].mxu0
        %6231 = vmatprep.mubr.f32.mxu0 %v6012
        %6232 = vmatmul.mubr.f32.gmra.mrb[0].mxu0 %v5897
        %v6233 = vpop.f32.mrb[0].mxu0
        %v6234 = vadd.f32 0.0, %v6233
        %v6235 = vpop.f32.mrb[0].mxu0
        %6236 = vmatprep.mubr.f32.mxu0 %v6015
        %6237 = vmatmul.mubr.f32.gmra.mrb[0].mxu0 %v5899
        %v6238 = vpop.f32.mrb[0].mxu0
        %v6239 = vadd.f32 0.0, %v6238
        %v6240 = vpop.f32.mrb[0].mxu0
        %6241 = vdwg.mxu0
        %v6242 = vld [vmem:[%s6] sm:$0xff]
        %v6243 = vld [vmem:[%s6 + $0x8] sm:$0xff]
        %v6244 = vld [vmem:[%s6 + $0x10] sm:$0xff]
        %v6245 = vld [vmem:[%s6 + $0x18] sm:$0xff]
        %v6246 = vld [vmem:[%s6 + $0x20] sm:$0xff]
        %v6247 = vld [vmem:[%s6 + $0x28] sm:$0xff]
        %v6248 = vld [vmem:[%s6 + $0x30] sm:$0xff]
        %v6249 = vld [vmem:[%s6 + $0x38] sm:$0xff]
        %v6250 = vld [vmem:[%s6 + $0x40] sm:$0xff]
        %v6251 = vld [vmem:[%s6 + $0x48] sm:$0xff]
        %v6252 = vld [vmem:[%s6 + $0x50] sm:$0xff]
        %v6253 = vld [vmem:[%s6 + $0x58] sm:$0xff]
        %v6254 = vld [vmem:[%s6 + $0x60] sm:$0xff]
        %v6255 = vld [vmem:[%s6 + $0x68] sm:$0xff]
        %v6256 = vld [vmem:[%s6 + $0x70] sm:$0xff]
        %v6257 = vld [vmem:[%s6 + $0x78] sm:$0xff]
        %v6258 = vld [vmem:[%s6 + $0x80] sm:$0xff]
        %v6259 = vld [vmem:[%s6 + $0x88] sm:$0xff]
        %v6260 = vld [vmem:[%s6 + $0x90] sm:$0xff]
        %v6261 = vld [vmem:[%s6 + $0x98] sm:$0xff]
        %6262 = vmatprep.subr.mxu0 0.0
        %6263 = vmatpush1.msra.mxu0 %v6242
        %6264 = vmatprep.subr.mxu0 0.0
        %6265 = vmatpush1.msra.mxu0 %v6243
        %6266 = vmatprep.subr.mxu0 0.0
        %6267 = vmatpush1.msra.mxu0 %v6244
        %6268 = vmatprep.subr.mxu0 0.0
        %6269 = vmatpush1.msra.mxu0 %v6245
        %6270 = vmatprep.subr.mxu0 0.0
        %6271 = vmatpush1.msra.mxu0 %v6246
        %6272 = vmatprep.subr.mxu0 0.0
        %6273 = vmatpush1.msra.mxu0 %v6247
        %6274 = vmatprep.subr.mxu0 0.0
        %6275 = vmatpush1.msra.mxu0 %v6248
        %6276 = vmatprep.subr.mxu0 0.0
        %6277 = vmatpush1.msra.mxu0 %v6249
        %6278 = vmatprep.subr.mxu0 0.0
        %6279 = vmatpush1.msra.mxu0 %v6250
        %6280 = vmatprep.subr.mxu0 0.0
        %6281 = vmatpush1.msra.mxu0 %v6251
        %6282 = vmatprep.subr.mxu0 0.0
        %6283 = vmatpush1.msra.mxu0 %v6252
        %6284 = vmatprep.subr.mxu0 0.0
        %6285 = vmatpush1.msra.mxu0 %v6253
        %6286 = vmatprep.subr.mxu0 0.0
        %6287 = vmatpush1.msra.mxu0 %v6254
        %6288 = vmatprep.subr.mxu0 0.0
        %6289 = vmatpush1.msra.mxu0 %v6255
        %6290 = vmatprep.subr.mxu0 0.0
        %6291 = vmatpush1.msra.mxu0 %v6256
        %6292 = vmatprep.subr.mxu0 0.0
        %6293 = vmatpush1.msra.mxu0 %v6257
        %6294 = vmatprep.subr.mxu0 0.0
        %6295 = vmatpush1.msra.mxu0 %v6258
        %6296 = vmatprep.subr.mxu0 0.0
        %6297 = vmatpush1.msra.mxu0 %v6259
        %6298 = vmatprep.subr.mxu0 0.0
        %6299 = vmatpush1.msra.mxu0 %v6260
        %6300 = vmatprep.subr.mxu0 0.0
        %6301 = vmatpush1.msra.mxu0 %v6261
        %6302 = vmatprep.subr.mxu0 0.0
        %6303 = vmatpush1.msra.mxu0 0.0
        %6304 = vmatprep.subr.mxu0 0.0
        %6305 = vmatpush1.msra.mxu0 0.0
        %6306 = vmatprep.subr.mxu0 0.0
        %6307 = vmatpush1.msra.mxu0 0.0
        %6308 = vmatprep.subr.mxu0 0.0
        %6309 = vmatpush1.msra.mxu0 0.0
        %6310 = vmatprep.subr.mxu0 0.0
        %6311 = vmatpush1.msra.mxu0 0.0
        %6312 = vmatprep.subr.mxu0 0.0
        %6313 = vmatpush1.msra.mxu0 0.0
        %6314 = vmatprep.subr.mxu0 0.0
        %6315 = vmatpush1.msra.mxu0 0.0
        %6316 = vmatprep.subr.mxu0 0.0
        %6317 = vmatpush1.msra.mxu0 0.0
        %6318 = vmatprep.subr.mxu0 0.0
        %6319 = vmatpush1.msra.mxu0 0.0
        %6320 = vmatprep.subr.mxu0 0.0
        %6321 = vmatpush1.msra.mxu0 0.0
        %6322 = vmatprep.subr.mxu0 0.0
        %6323 = vmatpush1.msra.mxu0 0.0
        %6324 = vmatprep.subr.mxu0 0.0
        %6325 = vmatpush1.msra.mxu0 0.0
        %6326 = vmatprep.mubr.f32.mxu0 %v5922
        %6327 = vmatmul.mubr.f32.gmra.mrb[0].mxu0 %v5837
        %v6328 = vpop.f32.mrb[0].mxu0
        %v6329 = vadd.f32 0.0, %v6328
        %v6330 = vpop.f32.mrb[0].mxu0
        %6331 = vmatprep.mubr.f32.mxu0 %v5925
        %6332 = vmatmul.mubr.f32.gmra.mrb[0].mxu0 %v5839
        %v6333 = vpop.f32.mrb[0].mxu0
        %v6334 = vadd.f32 0.0, %v6333
        %v6335 = vpop.f32.mrb[0].mxu0
        %6336 = vmatprep.mubr.f32.mxu0 %v5928
        %6337 = vmatmul.mubr.f32.gmra.mrb[0].mxu0 %v5841
        %v6338 = vpop.f32.mrb[0].mxu0
        %v6339 = vadd.f32 0.0, %v6338
        %v6340 = vpop.f32.mrb[0].mxu0
        %6341 = vmatprep.mubr.f32.mxu0 %v5931
        %6342 = vmatmul.mubr.f32.gmra.mrb[0].mxu0 %v5843
        %v6343 = vpop.f32.mrb[0].mxu0
        %v6344 = vadd.f32 0.0, %v6343
        %v6345 = vpop.f32.mrb[0].mxu0
        %6346 = vmatprep.mubr.f32.mxu0 %v5934
        %6347 = vmatmul.mubr.f32.gmra.mrb[0].mxu0 %v5845
        %v6348 = vpop.f32.mrb[0].mxu0
        %v6349 = vadd.f32 0.0, %v6348
        %v6350 = vpop.f32.mrb[0].mxu0
        %6351 = vmatprep.mubr.f32.mxu0 %v5937
        %6352 = vmatmul.mubr.f32.gmra.mrb[0].mxu0 %v5847
        %v6353 = vpop.f32.mrb[0].mxu0
        %v6354 = vadd.f32 0.0, %v6353
        %v6355 = vpop.f32.mrb[0].mxu0
        %6356 = vmatprep.mubr.f32.mxu0 %v5940
        %6357 = vmatmul.mubr.f32.gmra.mrb[0].mxu0 %v5849
        %v6358 = vpop.f32.mrb[0].mxu0
        %v6359 = vadd.f32 0.0, %v6358
        %v6360 = vpop.f32.mrb[0].mxu0
        %6361 = vmatprep.mubr.f32.mxu0 %v5943
        %6362 = vmatmul.mubr.f32.gmra.mrb[0].mxu0 %v5851
        %v6363 = vpop.f32.mrb[0].mxu0
        %v6364 = vadd.f32 0.0, %v6363
        %v6365 = vpop.f32.mrb[0].mxu0
        %6366 = vmatprep.mubr.f32.mxu0 %v5946
        %6367 = vmatmul.mubr.f32.gmra.mrb[0].mxu0 %v5853
        %v6368 = vpop.f32.mrb[0].mxu0
        %v6369 = vadd.f32 0.0, %v6368
        %v6370 = vpop.f32.mrb[0].mxu0
        %6371 = vmatprep.mubr.f32.mxu0 %v5949
        %6372 = vmatmul.mubr.f32.gmra.mrb[0].mxu0 %v5855
        %v6373 = vpop.f32.mrb[0].mxu0
        %v6374 = vadd.f32 0.0, %v6373
        %v6375 = vpop.f32.mrb[0].mxu0
        %6376 = vmatprep.mubr.f32.mxu0 %v5952
        %6377 = vmatmul.mubr.f32.gmra.mrb[0].mxu0 %v5857
        %v6378 = vpop.f32.mrb[0].mxu0
        %v6379 = vadd.f32 0.0, %v6378
        %v6380 = vpop.f32.mrb[0].mxu0
        %6381 = vmatprep.mubr.f32.mxu0 %v5955
        %6382 = vmatmul.mubr.f32.gmra.mrb[0].mxu0 %v5859
        %v6383 = vpop.f32.mrb[0].mxu0
        %v6384 = vadd.f32 0.0, %v6383
        %v6385 = vpop.f32.mrb[0].mxu0
        %6386 = vmatprep.mubr.f32.mxu0 %v5958
        %6387 = vmatmul.mubr.f32.gmra.mrb[0].mxu0 %v5861
        %v6388 = vpop.f32.mrb[0].mxu0
        %v6389 = vadd.f32 0.0, %v6388
        %v6390 = vpop.f32.mrb[0].mxu0
        %6391 = vmatprep.mubr.f32.mxu0 %v5961
        %6392 = vmatmul.mubr.f32.gmra.mrb[0].mxu0 %v5863
        %v6393 = vpop.f32.mrb[0].mxu0
        %v6394 = vadd.f32 0.0, %v6393
        %v6395 = vpop.f32.mrb[0].mxu0
        %6396 = vmatprep.mubr.f32.mxu0 %v5964
        %6397 = vmatmul.mubr.f32.gmra.mrb[0].mxu0 %v5865
        %v6398 = vpop.f32.mrb[0].mxu0
        %v6399 = vadd.f32 0.0, %v6398
        %v6400 = vpop.f32.mrb[0].mxu0
        %6401 = vmatprep.mubr.f32.mxu0 %v5967
        %6402 = vmatmul.mubr.f32.gmra.mrb[0].mxu0 %v5867
        %v6403 = vpop.f32.mrb[0].mxu0
        %v6404 = vadd.f32 0.0, %v6403
        %v6405 = vpop.f32.mrb[0].mxu0
        %6406 = vmatprep.mubr.f32.mxu0 %v5970
        %6407 = vmatmul.mubr.f32.gmra.mrb[0].mxu0 %v5869
        %v6408 = vpop.f32.mrb[0].mxu0
        %v6409 = vadd.f32 0.0, %v6408
        %v6410 = vpop.f32.mrb[0].mxu0
        %6411 = vmatprep.mubr.f32.mxu0 %v5973
        %6412 = vmatmul.mubr.f32.gmra.mrb[0].mxu0 %v5871
        %v6413 = vpop.f32.mrb[0].mxu0
        %v6414 = vadd.f32 0.0, %v6413
        %v6415 = vpop.f32.mrb[0].mxu0
        %6416 = vmatprep.mubr.f32.mxu0 %v5976
        %6417 = vmatmul.mubr.f32.gmra.mrb[0].mxu0 %v5873
        %v6418 = vpop.f32.mrb[0].mxu0
        %v6419 = vadd.f32 0.0, %v6418
        %v6420 = vpop.f32.mrb[0].mxu0
        %6421 = vmatprep.mubr.f32.mxu0 %v5979
        %6422 = vmatmul.mubr.f32.gmra.mrb[0].mxu0 %v5875
        %v6423 = vpop.f32.mrb[0].mxu0
        %v6424 = vadd.f32 0.0, %v6423
        %v6425 = vpop.f32.mrb[0].mxu0
        %6426 = vmatprep.mubr.f32.mxu0 %v5982
        %6427 = vmatmul.mubr.f32.gmra.mrb[0].mxu0 %v5877
        %v6428 = vpop.f32.mrb[0].mxu0
        %v6429 = vadd.f32 0.0, %v6428
        %v6430 = vpop.f32.mrb[0].mxu0
        %6431 = vmatprep.mubr.f32.mxu0 %v5985
        %6432 = vmatmul.mubr.f32.gmra.mrb[0].mxu0 %v5879
        %v6433 = vpop.f32.mrb[0].mxu0
        %v6434 = vadd.f32 0.0, %v6433
        %v6435 = vpop.f32.mrb[0].mxu0
        %6436 = vmatprep.mubr.f32.mxu0 %v5988
        %6437 = vmatmul.mubr.f32.gmra.mrb[0].mxu0 %v5881
        %v6438 = vpop.f32.mrb[0].mxu0
        %v6439 = vadd.f32 0.0, %v6438
        %v6440 = vpop.f32.mrb[0].mxu0
        %6441 = vmatprep.mubr.f32.mxu0 %v5991
        %6442 = vmatmul.mubr.f32.gmra.mrb[0].mxu0 %v5883
        %v6443 = vpop.f32.mrb[0].mxu0
        %v6444 = vadd.f32 0.0, %v6443
        %v6445 = vpop.f32.mrb[0].mxu0
        %6446 = vmatprep.mubr.f32.mxu0 %v5994
        %6447 = vmatmul.mubr.f32.gmra.mrb[0].mxu0 %v5885
        %v6448 = vpop.f32.mrb[0].mxu0
        %v6449 = vadd.f32 0.0, %v6448
        %v6450 = vpop.f32.mrb[0].mxu0
        %6451 = vmatprep.mubr.f32.mxu0 %v5997
        %6452 = vmatmul.mubr.f32.gmra.mrb[0].mxu0 %v5887
        %v6453 = vpop.f32.mrb[0].mxu0
        %v6454 = vadd.f32 0.0, %v6453
        %v6455 = vpop.f32.mrb[0].mxu0
        %6456 = vmatprep.mubr.f32.mxu0 %v6000
        %6457 = vmatmul.mubr.f32.gmra.mrb[0].mxu0 %v5889
        %v6458 = vpop.f32.mrb[0].mxu0
        %v6459 = vadd.f32 0.0, %v6458
        %v6460 = vpop.f32.mrb[0].mxu0
        %6461 = vmatprep.mubr.f32.mxu0 %v6003
        %6462 = vmatmul.mubr.f32.gmra.mrb[0].mxu0 %v5891
        %v6463 = vpop.f32.mrb[0].mxu0
        %v6464 = vadd.f32 0.0, %v6463
        %v6465 = vpop.f32.mrb[0].mxu0
        %6466 = vmatprep.mubr.f32.mxu0 %v6006
        %6467 = vmatmul.mubr.f32.gmra.mrb[0].mxu0 %v5893
        %v6468 = vpop.f32.mrb[0].mxu0
        %v6469 = vadd.f32 0.0, %v6468
        %v6470 = vpop.f32.mrb[0].mxu0
        %6471 = vmatprep.mubr.f32.mxu0 %v6009
        %6472 = vmatmul.mubr.f32.gmra.mrb[0].mxu0 %v5895
        %v6473 = vpop.f32.mrb[0].mxu0
        %v6474 = vadd.f32 0.0, %v6473
        %v6475 = vpop.f32.mrb[0].mxu0
        %6476 = vmatprep.mubr.f32.mxu0 %v6012
        %6477 = vmatmul.mubr.f32.gmra.mrb[0].mxu0 %v5897
        %v6478 = vpop.f32.mrb[0].mxu0
        %v6479 = vadd.f32 0.0, %v6478
        %v6480 = vpop.f32.mrb[0].mxu0
        %6481 = vmatprep.mubr.f32.mxu0 %v6015
        %6482 = vmatmul.mubr.f32.gmra.mrb[0].mxu0 %v5899
        %v6483 = vpop.f32.mrb[0].mxu0
        %v6484 = vadd.f32 0.0, %v6483
        %v6485 = vpop.f32.mrb[0].mxu0
        %6486 = vdwg.mxu0
        %v6487 = vmax.f32 %v6084, %v6329
        %v6488 = vmax.f32 %v6089, %v6334
        %v6489 = vmax.f32 %v6094, %v6339
        %v6490 = vmax.f32 %v6099, %v6344
        %v6491 = vmax.f32 %v6104, %v6349
        %v6492 = vmax.f32 %v6109, %v6354
        %v6493 = vmax.f32 %v6114, %v6359
        %v6494 = vmax.f32 %v6119, %v6364
        %v6495 = vmax.f32 %v6124, %v6369
        %v6496 = vmax.f32 %v6129, %v6374
        %v6497 = vmax.f32 %v6134, %v6379
        %v6498 = vmax.f32 %v6139, %v6384
        %v6499 = vmax.f32 %v6144, %v6389
        %v6500 = vmax.f32 %v6149, %v6394
        %v6501 = vmax.f32 %v6154, %v6399
        %v6502 = vmax.f32 %v6159, %v6404
        %v6503 = vmax.f32 %v6164, %v6409
        %v6504 = vmax.f32 %v6169, %v6414
        %v6505 = vmax.f32 %v6174, %v6419
        %v6506 = vmax.f32 %v6179, %v6424
        %v6507 = vmax.f32 %v6184, %v6429
        %v6508 = vmax.f32 %v6189, %v6434
        %v6509 = vmax.f32 %v6194, %v6439
        %v6510 = vmax.f32 %v6199, %v6444
        %v6511 = vmax.f32 %v6204, %v6449
        %v6512 = vmax.f32 %v6209, %v6454
        %v6513 = vmax.f32 %v6214, %v6459
        %v6514 = vmax.f32 %v6219, %v6464
        %v6515 = vmax.f32 %v6224, %v6469
        %v6516 = vmax.f32 %v6229, %v6474
        %v6517 = vmax.f32 %v6234, %v6479
        %v6518 = vmax.f32 %v6239, %v6484
        %v6519 = vrot.slane %v6487, 2
        %v6520 = vrot.slane %v6488, 2
        %v6521 = vrot.slane %v6489, 2
        %v6522 = vrot.slane %v6490, 2
        %v6523 = vrot.slane %v6491, 2
        %v6524 = vrot.slane %v6492, 2
        %v6525 = vrot.slane %v6493, 2
        %v6526 = vrot.slane %v6494, 2
        %v6527 = vrot.slane %v6495, 2
        %v6528 = vrot.slane %v6496, 2
        %v6529 = vrot.slane %v6497, 2
        %v6530 = vrot.slane %v6498, 2
        %v6531 = vrot.slane %v6499, 2
        %v6532 = vrot.slane %v6500, 2
        %v6533 = vrot.slane %v6501, 2
        %v6534 = vrot.slane %v6502, 2
        %v6535 = vrot.slane %v6503, 2
        %v6536 = vrot.slane %v6504, 2
        %v6537 = vrot.slane %v6505, 2
        %v6538 = vrot.slane %v6506, 2
        %v6539 = vrot.slane %v6507, 2
        %v6540 = vrot.slane %v6508, 2
        %v6541 = vrot.slane %v6509, 2
        %v6542 = vrot.slane %v6510, 2
        %v6543 = vrot.slane %v6511, 2
        %v6544 = vrot.slane %v6512, 2
        %v6545 = vrot.slane %v6513, 2
        %v6546 = vrot.slane %v6514, 2
        %v6547 = vrot.slane %v6515, 2
        %v6548 = vrot.slane %v6516, 2
        %v6549 = vrot.slane %v6517, 2
        %v6550 = vrot.slane %v6518, 2
        %v6551 = vsel %vm1271, %v6549, %v6550
        %v6552 = vsel %vm1271, %v6548, %v6549
        %v6553 = vsel %vm1271, %v6547, %v6548
        %v6554 = vsel %vm1271, %v6546, %v6547
        %v6555 = vsel %vm1271, %v6545, %v6546
        %v6556 = vsel %vm1271, %v6544, %v6545
        %v6557 = vsel %vm1271, %v6543, %v6544
        %v6558 = vsel %vm1271, %v6542, %v6543
        %v6559 = vsel %vm1271, %v6541, %v6542
        %v6560 = vsel %vm1271, %v6540, %v6541
        %v6561 = vsel %vm1271, %v6539, %v6540
        %v6562 = vsel %vm1271, %v6538, %v6539
        %v6563 = vsel %vm1271, %v6537, %v6538
        %v6564 = vsel %vm1271, %v6536, %v6537
        %v6565 = vsel %vm1271, %v6535, %v6536
        %v6566 = vsel %vm1271, %v6534, %v6535
        %v6567 = vsel %vm1271, %v6533, %v6534
        %v6568 = vsel %vm1271, %v6532, %v6533
        %v6569 = vsel %vm1271, %v6531, %v6532
        %v6570 = vsel %vm1271, %v6530, %v6531
        %v6571 = vsel %vm1271, %v6529, %v6530
        %v6572 = vsel %vm1271, %v6528, %v6529
        %v6573 = vsel %vm1271, %v6527, %v6528
        %v6574 = vsel %vm1271, %v6526, %v6527
        %v6575 = vsel %vm1271, %v6525, %v6526
        %v6576 = vsel %vm1271, %v6524, %v6525
        %v6577 = vsel %vm1271, %v6523, %v6524
        %v6578 = vsel %vm1271, %v6522, %v6523
        %v6579 = vsel %vm1271, %v6521, %v6522
        %v6580 = vsel %vm1271, %v6520, %v6521
        %v6581 = vsel %vm1271, %v6519, %v6520
        %v6582 = vsel %vm1271, %v6550, %v6519
        %v6583 = vmax.f32 %v6487, %v6581
        %v6584 = vmax.f32 %v6488, %v6580
        %v6585 = vmax.f32 %v6489, %v6579
        %v6586 = vmax.f32 %v6490, %v6578
        %v6587 = vmax.f32 %v6491, %v6577
        %v6588 = vmax.f32 %v6492, %v6576
        %v6589 = vmax.f32 %v6493, %v6575
        %v6590 = vmax.f32 %v6494, %v6574
        %v6591 = vmax.f32 %v6495, %v6573
        %v6592 = vmax.f32 %v6496, %v6572
        %v6593 = vmax.f32 %v6497, %v6571
        %v6594 = vmax.f32 %v6498, %v6570
        %v6595 = vmax.f32 %v6499, %v6569
        %v6596 = vmax.f32 %v6500, %v6568
        %v6597 = vmax.f32 %v6501, %v6567
        %v6598 = vmax.f32 %v6502, %v6566
        %v6599 = vmax.f32 %v6503, %v6565
        %v6600 = vmax.f32 %v6504, %v6564
        %v6601 = vmax.f32 %v6505, %v6563
        %v6602 = vmax.f32 %v6506, %v6562
        %v6603 = vmax.f32 %v6507, %v6561
        %v6604 = vmax.f32 %v6508, %v6560
        %v6605 = vmax.f32 %v6509, %v6559
        %v6606 = vmax.f32 %v6510, %v6558
        %v6607 = vmax.f32 %v6511, %v6557
        %v6608 = vmax.f32 %v6512, %v6556
        %v6609 = vmax.f32 %v6513, %v6555
        %v6610 = vmax.f32 %v6514, %v6554
        %v6611 = vmax.f32 %v6515, %v6553
        %v6612 = vmax.f32 %v6516, %v6552
        %v6613 = vmax.f32 %v6517, %v6551
        %v6614 = vmax.f32 %v6518, %v6582
        %v6615 = vld [vmem:[%s7] sm:$0xff]
        %v6616 = vld [vmem:[%s7 + $0x8] sm:$0xff]
        %v6617 = vld [vmem:[%s7 + $0x10] sm:$0xff]
        %v6618 = vld [vmem:[%s7 + $0x18] sm:$0xff]
        %v6619 = vld [vmem:[%s7 + $0x20] sm:$0xff]
        %v6620 = vld [vmem:[%s7 + $0x28] sm:$0xff]
        %v6621 = vld [vmem:[%s7 + $0x30] sm:$0xff]
        %v6622 = vld [vmem:[%s7 + $0x38] sm:$0xff]
        %v6623 = vld [vmem:[%s7 + $0x40] sm:$0xff]
        %v6624 = vld [vmem:[%s7 + $0x48] sm:$0xff]
        %v6625 = vrot.slane %v6583, 4
        %v6626 = vrot.slane %v6584, 4
        %v6627 = vrot.slane %v6585, 4
        %v6628 = vrot.slane %v6586, 4
        %v6629 = vrot.slane %v6587, 4
        %v6630 = vrot.slane %v6588, 4
        %v6631 = vrot.slane %v6589, 4
        %v6632 = vrot.slane %v6590, 4
        %v6633 = vrot.slane %v6591, 4
        %v6634 = vrot.slane %v6592, 4
        %v6635 = vrot.slane %v6593, 4
        %v6636 = vrot.slane %v6594, 4
        %v6637 = vrot.slane %v6595, 4
        %v6638 = vrot.slane %v6596, 4
        %v6639 = vrot.slane %v6597, 4
        %v6640 = vrot.slane %v6598, 4
        %v6641 = vrot.slane %v6599, 4
        %v6642 = vrot.slane %v6600, 4
        %v6643 = vrot.slane %v6601, 4
        %v6644 = vrot.slane %v6602, 4
        %v6645 = vrot.slane %v6603, 4
        %v6646 = vrot.slane %v6604, 4
        %v6647 = vrot.slane %v6605, 4
        %v6648 = vrot.slane %v6606, 4
        %v6649 = vrot.slane %v6607, 4
        %v6650 = vrot.slane %v6608, 4
        %v6651 = vrot.slane %v6609, 4
        %v6652 = vrot.slane %v6610, 4
        %v6653 = vrot.slane %v6611, 4
        %v6654 = vrot.slane %v6612, 4
        %v6655 = vrot.slane %v6613, 4
        %v6656 = vrot.slane %v6614, 4
        %v6657 = vsel %vm2253, %v6655, %v6656
        %v6658 = vsel %vm2253, %v6654, %v6655
        %v6659 = vsel %vm2253, %v6653, %v6654
        %v6660 = vsel %vm2253, %v6652, %v6653
        %v6661 = vsel %vm2253, %v6651, %v6652
        %v6662 = vsel %vm2253, %v6650, %v6651
        %v6663 = vsel %vm2253, %v6649, %v6650
        %v6664 = vsel %vm2253, %v6648, %v6649
        %v6665 = vsel %vm2253, %v6647, %v6648
        %v6666 = vsel %vm2253, %v6646, %v6647
        %v6667 = vsel %vm2253, %v6645, %v6646
        %v6668 = vsel %vm2253, %v6644, %v6645
        %v6669 = vsel %vm2253, %v6643, %v6644
        %v6670 = vsel %vm2253, %v6642, %v6643
        %v6671 = vsel %vm2253, %v6641, %v6642
        %v6672 = vsel %vm2253, %v6640, %v6641
        %v6673 = vsel %vm2253, %v6639, %v6640
        %v6674 = vsel %vm2253, %v6638, %v6639
        %v6675 = vsel %vm2253, %v6637, %v6638
        %v6676 = vsel %vm2253, %v6636, %v6637
        %v6677 = vsel %vm2253, %v6635, %v6636
        %v6678 = vsel %vm2253, %v6634, %v6635
        %v6679 = vsel %vm2253, %v6633, %v6634
        %v6680 = vsel %vm2253, %v6632, %v6633
        %v6681 = vsel %vm2253, %v6631, %v6632
        %v6682 = vsel %vm2253, %v6630, %v6631
        %v6683 = vsel %vm2253, %v6629, %v6630
        %v6684 = vsel %vm2253, %v6628, %v6629
        %v6685 = vsel %vm2253, %v6627, %v6628
        %v6686 = vsel %vm2253, %v6626, %v6627
        %v6687 = vsel %vm2253, %v6625, %v6626
        %v6688 = vsel %vm2253, %v6656, %v6625
        %s6689 = scalar_lea.vmem %s7, 80
        %v6690 = vld [vmem:[%s6689] sm:$0xff]
        %v6691 = vld [vmem:[%s6689 + $0x8] sm:$0xff]
        %v6692 = vld [vmem:[%s6689 + $0x10] sm:$0xff]
        %v6693 = vld [vmem:[%s6689 + $0x18] sm:$0xff]
        %v6694 = vld [vmem:[%s6689 + $0x20] sm:$0xff]
        %v6695 = vld [vmem:[%s6689 + $0x28] sm:$0xff]
        %v6696 = vld [vmem:[%s6689 + $0x30] sm:$0xff]
        %v6697 = vld [vmem:[%s6689 + $0x38] sm:$0xff]
        %v6698 = vld [vmem:[%s6689 + $0x40] sm:$0xff]
        %v6699 = vld [vmem:[%s6689 + $0x48] sm:$0xff]
        %vm6700 = vcmask 654336
        %v6702 = vsel %vm6700, %v6687, 0
        %v6705 = vsel %vm6700, %v6686, 0
        %v6708 = vsel %vm6700, %v6685, 0
        %v6711 = vsel %vm6700, %v6684, 0
        %v6714 = vsel %vm6700, %v6683, 0
        %v6717 = vsel %vm6700, %v6682, 0
        %v6720 = vsel %vm6700, %v6681, 0
        %v6723 = vsel %vm6700, %v6680, 0
        %v6726 = vsel %vm6700, %v6679, 0
        %v6729 = vsel %vm6700, %v6678, 0
        %v6732 = vsel %vm6700, %v6677, 0
        %v6735 = vsel %vm6700, %v6676, 0
        %v6738 = vsel %vm6700, %v6675, 0
        %v6741 = vsel %vm6700, %v6674, 0
        %v6744 = vsel %vm6700, %v6673, 0
        %v6747 = vsel %vm6700, %v6672, 0
        %v6750 = vsel %vm6700, %v6671, 0
        %v6753 = vsel %vm6700, %v6670, 0
        %v6756 = vsel %vm6700, %v6669, 0
        %v6759 = vsel %vm6700, %v6668, 0
        %v6762 = vsel %vm6700, %v6667, 0
        %v6765 = vsel %vm6700, %v6666, 0
        %v6768 = vsel %vm6700, %v6665, 0
        %v6771 = vsel %vm6700, %v6664, 0
        %v6774 = vsel %vm6700, %v6663, 0
        %v6777 = vsel %vm6700, %v6662, 0
        %v6780 = vsel %vm6700, %v6661, 0
        %v6783 = vsel %vm6700, %v6660, 0
        %v6786 = vsel %vm6700, %v6659, 0
        %v6789 = vsel %vm6700, %v6658, 0
        %v6792 = vsel %vm6700, %v6657, 0
        %v6795 = vsel %vm6700, %v6688, 0
        %6797 = vmatprep.subr.mxu0 0.0
        %6798 = vmatpush1.msra.mxu0 %v6690
        %6799 = vmatprep.subr.mxu0 0.0
        %6800 = vmatpush1.msra.mxu0 %v6691
        %6801 = vmatprep.subr.mxu0 0.0
        %6802 = vmatpush1.msra.mxu0 %v6692
        %6803 = vmatprep.subr.mxu0 0.0
        %6804 = vmatpush1.msra.mxu0 %v6693
        %6805 = vmatprep.subr.mxu0 0.0
        %6806 = vmatpush1.msra.mxu0 %v6694
        %6807 = vmatprep.subr.mxu0 0.0
        %6808 = vmatpush1.msra.mxu0 %v6695
        %6809 = vmatprep.subr.mxu0 0.0
        %6810 = vmatpush1.msra.mxu0 %v6696
        %6811 = vmatprep.subr.mxu0 0.0
        %6812 = vmatpush1.msra.mxu0 %v6697
        %6813 = vmatprep.subr.mxu0 0.0
        %6814 = vmatpush1.msra.mxu0 %v6698
        %6815 = vmatprep.subr.mxu0 0.0
        %6816 = vmatpush1.msra.mxu0 %v6699
        %6817 = vmatprep.subr.mxu0 0.0
        %6818 = vmatpush1.msra.mxu0 0.0
        %6819 = vmatprep.subr.mxu0 0.0
        %6820 = vmatpush1.msra.mxu0 0.0
        %6821 = vmatprep.subr.mxu0 0.0
        %6822 = vmatpush1.msra.mxu0 0.0
        %6823 = vmatprep.subr.mxu0 0.0
        %6824 = vmatpush1.msra.mxu0 0.0
        %6825 = vmatprep.subr.mxu0 0.0
        %6826 = vmatpush1.msra.mxu0 0.0
        %6827 = vmatprep.subr.mxu0 0.0
        %6828 = vmatpush1.msra.mxu0 0.0
        %6829 = vmatprep.subr.mxu0 0.0
        %6830 = vmatpush1.msra.mxu0 0.0
        %6831 = vmatprep.subr.mxu0 0.0
        %6832 = vmatpush1.msra.mxu0 0.0
        %6833 = vmatprep.subr.mxu0 0.0
        %6834 = vmatpush1.msra.mxu0 0.0
        %6835 = vmatprep.subr.mxu0 0.0
        %6836 = vmatpush1.msra.mxu0 0.0
        %6837 = vmatprep.subr.mxu0 0.0
        %6838 = vmatpush1.msra.mxu0 0.0
        %6839 = vmatprep.subr.mxu0 0.0
        %6840 = vmatpush1.msra.mxu0 0.0
        %6841 = vmatprep.subr.mxu0 0.0
        %6842 = vmatpush1.msra.mxu0 0.0
        %6843 = vmatprep.subr.mxu0 0.0
        %6844 = vmatpush1.msra.mxu0 0.0
        %6845 = vmatprep.subr.mxu0 0.0
        %6846 = vmatpush1.msra.mxu0 0.0
        %6847 = vmatprep.subr.mxu0 0.0
        %6848 = vmatpush1.msra.mxu0 0.0
        %6849 = vmatprep.subr.mxu0 0.0
        %6850 = vmatpush1.msra.mxu0 0.0
        %6851 = vmatprep.subr.mxu0 0.0
        %6852 = vmatpush1.msra.mxu0 0.0
        %6853 = vmatprep.subr.mxu0 0.0
        %6854 = vmatpush1.msra.mxu0 0.0
        %6855 = vmatprep.subr.mxu0 0.0
        %6856 = vmatpush1.msra.mxu0 0.0
        %6857 = vmatprep.subr.mxu0 0.0
        %6858 = vmatpush1.msra.mxu0 0.0
        %6859 = vmatprep.subr.mxu0 0.0
        %6860 = vmatpush1.msra.mxu0 0.0
        %6861 = vmatprep.mubr.f32.mxu0 0.0
        %6862 = vmatmul.mubr.f32.gmra.mrb[0].mxu0 %v6702
        %v6863 = vpop.f32.mrb[0].mxu0
        %v6864 = vadd.f32 0.0, %v6863
        %v6865 = vpop.f32.mrb[0].mxu0
        %6866 = vmatprep.mubr.f32.mxu0 0.0
        %6867 = vmatmul.mubr.f32.gmra.mrb[0].mxu0 %v6705
        %v6868 = vpop.f32.mrb[0].mxu0
        %v6869 = vadd.f32 0.0, %v6868
        %v6870 = vpop.f32.mrb[0].mxu0
        %6871 = vmatprep.mubr.f32.mxu0 0.0
        %6872 = vmatmul.mubr.f32.gmra.mrb[0].mxu0 %v6708
        %v6873 = vpop.f32.mrb[0].mxu0
        %v6874 = vadd.f32 0.0, %v6873
        %v6875 = vpop.f32.mrb[0].mxu0
        %6876 = vmatprep.mubr.f32.mxu0 0.0
        %6877 = vmatmul.mubr.f32.gmra.mrb[0].mxu0 %v6711
        %v6878 = vpop.f32.mrb[0].mxu0
        %v6879 = vadd.f32 0.0, %v6878
        %v6880 = vpop.f32.mrb[0].mxu0
        %6881 = vmatprep.mubr.f32.mxu0 0.0
        %6882 = vmatmul.mubr.f32.gmra.mrb[0].mxu0 %v6714
        %v6883 = vpop.f32.mrb[0].mxu0
        %v6884 = vadd.f32 0.0, %v6883
        %v6885 = vpop.f32.mrb[0].mxu0
        %6886 = vmatprep.mubr.f32.mxu0 0.0
        %6887 = vmatmul.mubr.f32.gmra.mrb[0].mxu0 %v6717
        %v6888 = vpop.f32.mrb[0].mxu0
        %v6889 = vadd.f32 0.0, %v6888
        %v6890 = vpop.f32.mrb[0].mxu0
        %6891 = vmatprep.mubr.f32.mxu0 0.0
        %6892 = vmatmul.mubr.f32.gmra.mrb[0].mxu0 %v6720
        %v6893 = vpop.f32.mrb[0].mxu0
        %v6894 = vadd.f32 0.0, %v6893
        %v6895 = vpop.f32.mrb[0].mxu0
        %6896 = vmatprep.mubr.f32.mxu0 0.0
        %6897 = vmatmul.mubr.f32.gmra.mrb[0].mxu0 %v6723
        %v6898 = vpop.f32.mrb[0].mxu0
        %v6899 = vadd.f32 0.0, %v6898
        %v6900 = vpop.f32.mrb[0].mxu0
        %6901 = vmatprep.mubr.f32.mxu0 0.0
        %6902 = vmatmul.mubr.f32.gmra.mrb[0].mxu0 %v6726
        %v6903 = vpop.f32.mrb[0].mxu0
        %v6904 = vadd.f32 0.0, %v6903
        %v6905 = vpop.f32.mrb[0].mxu0
        %6906 = vmatprep.mubr.f32.mxu0 0.0
        %6907 = vmatmul.mubr.f32.gmra.mrb[0].mxu0 %v6729
        %v6908 = vpop.f32.mrb[0].mxu0
        %v6909 = vadd.f32 0.0, %v6908
        %v6910 = vpop.f32.mrb[0].mxu0
        %6911 = vmatprep.mubr.f32.mxu0 0.0
        %6912 = vmatmul.mubr.f32.gmra.mrb[0].mxu0 %v6732
        %v6913 = vpop.f32.mrb[0].mxu0
        %v6914 = vadd.f32 0.0, %v6913
        %v6915 = vpop.f32.mrb[0].mxu0
        %6916 = vmatprep.mubr.f32.mxu0 0.0
        %6917 = vmatmul.mubr.f32.gmra.mrb[0].mxu0 %v6735
        %v6918 = vpop.f32.mrb[0].mxu0
        %v6919 = vadd.f32 0.0, %v6918
        %v6920 = vpop.f32.mrb[0].mxu0
        %6921 = vmatprep.mubr.f32.mxu0 0.0
        %6922 = vmatmul.mubr.f32.gmra.mrb[0].mxu0 %v6738
        %v6923 = vpop.f32.mrb[0].mxu0
        %v6924 = vadd.f32 0.0, %v6923
        %v6925 = vpop.f32.mrb[0].mxu0
        %6926 = vmatprep.mubr.f32.mxu0 0.0
        %6927 = vmatmul.mubr.f32.gmra.mrb[0].mxu0 %v6741
        %v6928 = vpop.f32.mrb[0].mxu0
        %v6929 = vadd.f32 0.0, %v6928
        %v6930 = vpop.f32.mrb[0].mxu0
        %6931 = vmatprep.mubr.f32.mxu0 0.0
        %6932 = vmatmul.mubr.f32.gmra.mrb[0].mxu0 %v6744
        %v6933 = vpop.f32.mrb[0].mxu0
        %v6934 = vadd.f32 0.0, %v6933
        %v6935 = vpop.f32.mrb[0].mxu0
        %6936 = vmatprep.mubr.f32.mxu0 0.0
        %6937 = vmatmul.mubr.f32.gmra.mrb[0].mxu0 %v6747
        %v6938 = vpop.f32.mrb[0].mxu0
        %v6939 = vadd.f32 0.0, %v6938
        %v6940 = vpop.f32.mrb[0].mxu0
        %6941 = vmatprep.mubr.f32.mxu0 0.0
        %6942 = vmatmul.mubr.f32.gmra.mrb[0].mxu0 %v6750
        %v6943 = vpop.f32.mrb[0].mxu0
        %v6944 = vadd.f32 0.0, %v6943
        %v6945 = vpop.f32.mrb[0].mxu0
        %6946 = vmatprep.mubr.f32.mxu0 0.0
        %6947 = vmatmul.mubr.f32.gmra.mrb[0].mxu0 %v6753
        %v6948 = vpop.f32.mrb[0].mxu0
        %v6949 = vadd.f32 0.0, %v6948
        %v6950 = vpop.f32.mrb[0].mxu0
        %6951 = vmatprep.mubr.f32.mxu0 0.0
        %6952 = vmatmul.mubr.f32.gmra.mrb[0].mxu0 %v6756
        %v6953 = vpop.f32.mrb[0].mxu0
        %v6954 = vadd.f32 0.0, %v6953
        %v6955 = vpop.f32.mrb[0].mxu0
        %6956 = vmatprep.mubr.f32.mxu0 0.0
        %6957 = vmatmul.mubr.f32.gmra.mrb[0].mxu0 %v6759
        %v6958 = vpop.f32.mrb[0].mxu0
        %v6959 = vadd.f32 0.0, %v6958
        %v6960 = vpop.f32.mrb[0].mxu0
        %6961 = vmatprep.mubr.f32.mxu0 0.0
        %6962 = vmatmul.mubr.f32.gmra.mrb[0].mxu0 %v6762
        %v6963 = vpop.f32.mrb[0].mxu0
        %v6964 = vadd.f32 0.0, %v6963
        %v6965 = vpop.f32.mrb[0].mxu0
        %6966 = vmatprep.mubr.f32.mxu0 0.0
        %6967 = vmatmul.mubr.f32.gmra.mrb[0].mxu0 %v6765
        %v6968 = vpop.f32.mrb[0].mxu0
        %v6969 = vadd.f32 0.0, %v6968
        %v6970 = vpop.f32.mrb[0].mxu0
        %6971 = vmatprep.mubr.f32.mxu0 0.0
        %6972 = vmatmul.mubr.f32.gmra.mrb[0].mxu0 %v6768
        %v6973 = vpop.f32.mrb[0].mxu0
        %v6974 = vadd.f32 0.0, %v6973
        %v6975 = vpop.f32.mrb[0].mxu0
        %6976 = vmatprep.mubr.f32.mxu0 0.0
        %6977 = vmatmul.mubr.f32.gmra.mrb[0].mxu0 %v6771
        %v6978 = vpop.f32.mrb[0].mxu0
        %v6979 = vadd.f32 0.0, %v6978
        %v6980 = vpop.f32.mrb[0].mxu0
        %6981 = vmatprep.mubr.f32.mxu0 0.0
        %6982 = vmatmul.mubr.f32.gmra.mrb[0].mxu0 %v6774
        %v6983 = vpop.f32.mrb[0].mxu0
        %v6984 = vadd.f32 0.0, %v6983
        %v6985 = vpop.f32.mrb[0].mxu0
        %6986 = vmatprep.mubr.f32.mxu0 0.0
        %6987 = vmatmul.mubr.f32.gmra.mrb[0].mxu0 %v6777
        %v6988 = vpop.f32.mrb[0].mxu0
        %v6989 = vadd.f32 0.0, %v6988
        %v6990 = vpop.f32.mrb[0].mxu0
        %6991 = vmatprep.mubr.f32.mxu0 0.0
        %6992 = vmatmul.mubr.f32.gmra.mrb[0].mxu0 %v6780
        %v6993 = vpop.f32.mrb[0].mxu0
        %v6994 = vadd.f32 0.0, %v6993
        %v6995 = vpop.f32.mrb[0].mxu0
        %6996 = vmatprep.mubr.f32.mxu0 0.0
        %6997 = vmatmul.mubr.f32.gmra.mrb[0].mxu0 %v6783
        %v6998 = vpop.f32.mrb[0].mxu0
        %v6999 = vadd.f32 0.0, %v6998
        %v7000 = vpop.f32.mrb[0].mxu0
        %7001 = vmatprep.mubr.f32.mxu0 0.0
        %7002 = vmatmul.mubr.f32.gmra.mrb[0].mxu0 %v6786
        %v7003 = vpop.f32.mrb[0].mxu0
        %v7004 = vadd.f32 0.0, %v7003
        %v7005 = vpop.f32.mrb[0].mxu0
        %7006 = vmatprep.mubr.f32.mxu0 0.0
        %7007 = vmatmul.mubr.f32.gmra.mrb[0].mxu0 %v6789
        %v7008 = vpop.f32.mrb[0].mxu0
        %v7009 = vadd.f32 0.0, %v7008
        %v7010 = vpop.f32.mrb[0].mxu0
        %7011 = vmatprep.mubr.f32.mxu0 0.0
        %7012 = vmatmul.mubr.f32.gmra.mrb[0].mxu0 %v6792
        %v7013 = vpop.f32.mrb[0].mxu0
        %v7014 = vadd.f32 0.0, %v7013
        %v7015 = vpop.f32.mrb[0].mxu0
        %7016 = vmatprep.mubr.f32.mxu0 0.0
        %7017 = vmatmul.mubr.f32.gmra.mrb[0].mxu0 %v6795
        %v7018 = vpop.f32.mrb[0].mxu0
        %v7019 = vadd.f32 0.0, %v7018
        %v7020 = vpop.f32.mrb[0].mxu0
        %7021 = vdwg.mxu0
        %v7023 = vsel %vm6700, %v6583, 0
        %v7026 = vsel %vm6700, %v6584, 0
        %v7029 = vsel %vm6700, %v6585, 0
        %v7032 = vsel %vm6700, %v6586, 0
        %v7035 = vsel %vm6700, %v6587, 0
        %v7038 = vsel %vm6700, %v6588, 0
        %v7041 = vsel %vm6700, %v6589, 0
        %v7044 = vsel %vm6700, %v6590, 0
        %v7047 = vsel %vm6700, %v6591, 0
        %v7050 = vsel %vm6700, %v6592, 0
        %v7053 = vsel %vm6700, %v6593, 0
        %v7056 = vsel %vm6700, %v6594, 0
        %v7059 = vsel %vm6700, %v6595, 0
        %v7062 = vsel %vm6700, %v6596, 0
        %v7065 = vsel %vm6700, %v6597, 0
        %v7068 = vsel %vm6700, %v6598, 0
        %v7071 = vsel %vm6700, %v6599, 0
        %v7074 = vsel %vm6700, %v6600, 0
        %v7077 = vsel %vm6700, %v6601, 0
        %v7080 = vsel %vm6700, %v6602, 0
        %v7083 = vsel %vm6700, %v6603, 0
        %v7086 = vsel %vm6700, %v6604, 0
        %v7089 = vsel %vm6700, %v6605, 0
        %v7092 = vsel %vm6700, %v6606, 0
        %v7095 = vsel %vm6700, %v6607, 0
        %v7098 = vsel %vm6700, %v6608, 0
        %v7101 = vsel %vm6700, %v6609, 0
        %v7104 = vsel %vm6700, %v6610, 0
        %v7107 = vsel %vm6700, %v6611, 0
        %v7110 = vsel %vm6700, %v6612, 0
        %v7113 = vsel %vm6700, %v6613, 0
        %v7116 = vsel %vm6700, %v6614, 0
        %7118 = vmatprep.subr.mxu0 0.0
        %7119 = vmatpush1.msra.mxu0 %v6615
        %7120 = vmatprep.subr.mxu0 0.0
        %7121 = vmatpush1.msra.mxu0 %v6616
        %7122 = vmatprep.subr.mxu0 0.0
        %7123 = vmatpush1.msra.mxu0 %v6617
        %7124 = vmatprep.subr.mxu0 0.0
        %7125 = vmatpush1.msra.mxu0 %v6618
        %7126 = vmatprep.subr.mxu0 0.0
        %7127 = vmatpush1.msra.mxu0 %v6619
        %7128 = vmatprep.subr.mxu0 0.0
        %7129 = vmatpush1.msra.mxu0 %v6620
        %7130 = vmatprep.subr.mxu0 0.0
        %7131 = vmatpush1.msra.mxu0 %v6621
        %7132 = vmatprep.subr.mxu0 0.0
        %7133 = vmatpush1.msra.mxu0 %v6622
        %7134 = vmatprep.subr.mxu0 0.0
        %7135 = vmatpush1.msra.mxu0 %v6623
        %7136 = vmatprep.subr.mxu0 0.0
        %7137 = vmatpush1.msra.mxu0 %v6624
        %7138 = vmatprep.subr.mxu0 0.0
        %7139 = vmatpush1.msra.mxu0 0.0
        %7140 = vmatprep.subr.mxu0 0.0
        %7141 = vmatpush1.msra.mxu0 0.0
        %7142 = vmatprep.subr.mxu0 0.0
        %7143 = vmatpush1.msra.mxu0 0.0
        %7144 = vmatprep.subr.mxu0 0.0
        %7145 = vmatpush1.msra.mxu0 0.0
        %7146 = vmatprep.subr.mxu0 0.0
        %7147 = vmatpush1.msra.mxu0 0.0
        %7148 = vmatprep.subr.mxu0 0.0
        %7149 = vmatpush1.msra.mxu0 0.0
        %7150 = vmatprep.subr.mxu0 0.0
        %7151 = vmatpush1.msra.mxu0 0.0
        %7152 = vmatprep.subr.mxu0 0.0
        %7153 = vmatpush1.msra.mxu0 0.0
        %7154 = vmatprep.subr.mxu0 0.0
        %7155 = vmatpush1.msra.mxu0 0.0
        %7156 = vmatprep.subr.mxu0 0.0
        %7157 = vmatpush1.msra.mxu0 0.0
        %7158 = vmatprep.subr.mxu0 0.0
        %7159 = vmatpush1.msra.mxu0 0.0
        %7160 = vmatprep.subr.mxu0 0.0
        %7161 = vmatpush1.msra.mxu0 0.0
        %7162 = vmatprep.subr.mxu0 0.0
        %7163 = vmatpush1.msra.mxu0 0.0
        %7164 = vmatprep.subr.mxu0 0.0
        %7165 = vmatpush1.msra.mxu0 0.0
        %7166 = vmatprep.subr.mxu0 0.0
        %7167 = vmatpush1.msra.mxu0 0.0
        %7168 = vmatprep.subr.mxu0 0.0
        %7169 = vmatpush1.msra.mxu0 0.0
        %7170 = vmatprep.subr.mxu0 0.0
        %7171 = vmatpush1.msra.mxu0 0.0
        %7172 = vmatprep.subr.mxu0 0.0
        %7173 = vmatpush1.msra.mxu0 0.0
        %7174 = vmatprep.subr.mxu0 0.0
        %7175 = vmatpush1.msra.mxu0 0.0
        %7176 = vmatprep.subr.mxu0 0.0
        %7177 = vmatpush1.msra.mxu0 0.0
        %7178 = vmatprep.subr.mxu0 0.0
        %7179 = vmatpush1.msra.mxu0 0.0
        %7180 = vmatprep.subr.mxu0 0.0
        %7181 = vmatpush1.msra.mxu0 0.0
        %7182 = vmatprep.mubr.f32.mxu0 0.0
        %7183 = vmatmul.mubr.f32.gmra.mrb[0].mxu0 %v7023
        %v7184 = vpop.f32.mrb[0].mxu0
        %v7185 = vadd.f32 %v6864, %v7184
        %v7186 = vpop.f32.mrb[0].mxu0
        %7187 = vmatprep.mubr.f32.mxu0 0.0
        %7188 = vmatmul.mubr.f32.gmra.mrb[0].mxu0 %v7026
        %v7189 = vpop.f32.mrb[0].mxu0
        %v7190 = vadd.f32 %v6869, %v7189
        %v7191 = vpop.f32.mrb[0].mxu0
        %7192 = vmatprep.mubr.f32.mxu0 0.0
        %7193 = vmatmul.mubr.f32.gmra.mrb[0].mxu0 %v7029
        %v7194 = vpop.f32.mrb[0].mxu0
        %v7195 = vadd.f32 %v6874, %v7194
        %v7196 = vpop.f32.mrb[0].mxu0
        %7197 = vmatprep.mubr.f32.mxu0 0.0
        %7198 = vmatmul.mubr.f32.gmra.mrb[0].mxu0 %v7032
        %v7199 = vpop.f32.mrb[0].mxu0
        %v7200 = vadd.f32 %v6879, %v7199
        %v7201 = vpop.f32.mrb[0].mxu0
        %7202 = vmatprep.mubr.f32.mxu0 0.0
        %7203 = vmatmul.mubr.f32.gmra.mrb[0].mxu0 %v7035
        %v7204 = vpop.f32.mrb[0].mxu0
        %v7205 = vadd.f32 %v6884, %v7204
        %v7206 = vpop.f32.mrb[0].mxu0
        %7207 = vmatprep.mubr.f32.mxu0 0.0
        %7208 = vmatmul.mubr.f32.gmra.mrb[0].mxu0 %v7038
        %v7209 = vpop.f32.mrb[0].mxu0
        %v7210 = vadd.f32 %v6889, %v7209
        %v7211 = vpop.f32.mrb[0].mxu0
        %7212 = vmatprep.mubr.f32.mxu0 0.0
        %7213 = vmatmul.mubr.f32.gmra.mrb[0].mxu0 %v7041
        %v7214 = vpop.f32.mrb[0].mxu0
        %v7215 = vadd.f32 %v6894, %v7214
        %v7216 = vpop.f32.mrb[0].mxu0
        %7217 = vmatprep.mubr.f32.mxu0 0.0
        %7218 = vmatmul.mubr.f32.gmra.mrb[0].mxu0 %v7044
        %v7219 = vpop.f32.mrb[0].mxu0
        %v7220 = vadd.f32 %v6899, %v7219
        %v7221 = vpop.f32.mrb[0].mxu0
        %7222 = vmatprep.mubr.f32.mxu0 0.0
        %7223 = vmatmul.mubr.f32.gmra.mrb[0].mxu0 %v7047
        %v7224 = vpop.f32.mrb[0].mxu0
        %v7225 = vadd.f32 %v6904, %v7224
        %v7226 = vpop.f32.mrb[0].mxu0
        %7227 = vmatprep.mubr.f32.mxu0 0.0
        %7228 = vmatmul.mubr.f32.gmra.mrb[0].mxu0 %v7050
        %v7229 = vpop.f32.mrb[0].mxu0
        %v7230 = vadd.f32 %v6909, %v7229
        %v7231 = vpop.f32.mrb[0].mxu0
        %7232 = vmatprep.mubr.f32.mxu0 0.0
        %7233 = vmatmul.mubr.f32.gmra.mrb[0].mxu0 %v7053
        %v7234 = vpop.f32.mrb[0].mxu0
        %v7235 = vadd.f32 %v6914, %v7234
        %v7236 = vpop.f32.mrb[0].mxu0
        %7237 = vmatprep.mubr.f32.mxu0 0.0
        %7238 = vmatmul.mubr.f32.gmra.mrb[0].mxu0 %v7056
        %v7239 = vpop.f32.mrb[0].mxu0
        %v7240 = vadd.f32 %v6919, %v7239
        %v7241 = vpop.f32.mrb[0].mxu0
        %7242 = vmatprep.mubr.f32.mxu0 0.0
        %7243 = vmatmul.mubr.f32.gmra.mrb[0].mxu0 %v7059
        %v7244 = vpop.f32.mrb[0].mxu0
        %v7245 = vadd.f32 %v6924, %v7244
        %v7246 = vpop.f32.mrb[0].mxu0
        %7247 = vmatprep.mubr.f32.mxu0 0.0
        %7248 = vmatmul.mubr.f32.gmra.mrb[0].mxu0 %v7062
        %v7249 = vpop.f32.mrb[0].mxu0
        %v7250 = vadd.f32 %v6929, %v7249
        %v7251 = vpop.f32.mrb[0].mxu0
        %7252 = vmatprep.mubr.f32.mxu0 0.0
        %7253 = vmatmul.mubr.f32.gmra.mrb[0].mxu0 %v7065
        %v7254 = vpop.f32.mrb[0].mxu0
        %v7255 = vadd.f32 %v6934, %v7254
        %v7256 = vpop.f32.mrb[0].mxu0
        %7257 = vmatprep.mubr.f32.mxu0 0.0
        %7258 = vmatmul.mubr.f32.gmra.mrb[0].mxu0 %v7068
        %v7259 = vpop.f32.mrb[0].mxu0
        %v7260 = vadd.f32 %v6939, %v7259
        %v7261 = vpop.f32.mrb[0].mxu0
        %7262 = vmatprep.mubr.f32.mxu0 0.0
        %7263 = vmatmul.mubr.f32.gmra.mrb[0].mxu0 %v7071
        %v7264 = vpop.f32.mrb[0].mxu0
        %v7265 = vadd.f32 %v6944, %v7264
        %v7266 = vpop.f32.mrb[0].mxu0
        %7267 = vmatprep.mubr.f32.mxu0 0.0
        %7268 = vmatmul.mubr.f32.gmra.mrb[0].mxu0 %v7074
        %v7269 = vpop.f32.mrb[0].mxu0
        %v7270 = vadd.f32 %v6949, %v7269
        %v7271 = vpop.f32.mrb[0].mxu0
        %7272 = vmatprep.mubr.f32.mxu0 0.0
        %7273 = vmatmul.mubr.f32.gmra.mrb[0].mxu0 %v7077
        %v7274 = vpop.f32.mrb[0].mxu0
        %v7275 = vadd.f32 %v6954, %v7274
        %v7276 = vpop.f32.mrb[0].mxu0
        %7277 = vmatprep.mubr.f32.mxu0 0.0
        %7278 = vmatmul.mubr.f32.gmra.mrb[0].mxu0 %v7080
        %v7279 = vpop.f32.mrb[0].mxu0
        %v7280 = vadd.f32 %v6959, %v7279
        %v7281 = vpop.f32.mrb[0].mxu0
        %7282 = vmatprep.mubr.f32.mxu0 0.0
        %7283 = vmatmul.mubr.f32.gmra.mrb[0].mxu0 %v7083
        %v7284 = vpop.f32.mrb[0].mxu0
        %v7285 = vadd.f32 %v6964, %v7284
        %v7286 = vpop.f32.mrb[0].mxu0
        %7287 = vmatprep.mubr.f32.mxu0 0.0
        %7288 = vmatmul.mubr.f32.gmra.mrb[0].mxu0 %v7086
        %v7289 = vpop.f32.mrb[0].mxu0
        %v7290 = vadd.f32 %v6969, %v7289
        %v7291 = vpop.f32.mrb[0].mxu0
        %7292 = vmatprep.mubr.f32.mxu0 0.0
        %7293 = vmatmul.mubr.f32.gmra.mrb[0].mxu0 %v7089
        %v7294 = vpop.f32.mrb[0].mxu0
        %v7295 = vadd.f32 %v6974, %v7294
        %v7296 = vpop.f32.mrb[0].mxu0
        %7297 = vmatprep.mubr.f32.mxu0 0.0
        %7298 = vmatmul.mubr.f32.gmra.mrb[0].mxu0 %v7092
        %v7299 = vpop.f32.mrb[0].mxu0
        %v7300 = vadd.f32 %v6979, %v7299
        %v7301 = vpop.f32.mrb[0].mxu0
        %7302 = vmatprep.mubr.f32.mxu0 0.0
        %7303 = vmatmul.mubr.f32.gmra.mrb[0].mxu0 %v7095
        %v7304 = vpop.f32.mrb[0].mxu0
        %v7305 = vadd.f32 %v6984, %v7304
        %v7306 = vpop.f32.mrb[0].mxu0
        %7307 = vmatprep.mubr.f32.mxu0 0.0
        %7308 = vmatmul.mubr.f32.gmra.mrb[0].mxu0 %v7098
        %v7309 = vpop.f32.mrb[0].mxu0
        %v7310 = vadd.f32 %v6989, %v7309
        %v7311 = vpop.f32.mrb[0].mxu0
        %7312 = vmatprep.mubr.f32.mxu0 0.0
        %7313 = vmatmul.mubr.f32.gmra.mrb[0].mxu0 %v7101
        %v7314 = vpop.f32.mrb[0].mxu0
        %v7315 = vadd.f32 %v6994, %v7314
        %v7316 = vpop.f32.mrb[0].mxu0
        %7317 = vmatprep.mubr.f32.mxu0 0.0
        %7318 = vmatmul.mubr.f32.gmra.mrb[0].mxu0 %v7104
        %v7319 = vpop.f32.mrb[0].mxu0
        %v7320 = vadd.f32 %v6999, %v7319
        %v7321 = vpop.f32.mrb[0].mxu0
        %7322 = vmatprep.mubr.f32.mxu0 0.0
        %7323 = vmatmul.mubr.f32.gmra.mrb[0].mxu0 %v7107
        %v7324 = vpop.f32.mrb[0].mxu0
        %v7325 = vadd.f32 %v7004, %v7324
        %v7326 = vpop.f32.mrb[0].mxu0
        %7327 = vmatprep.mubr.f32.mxu0 0.0
        %7328 = vmatmul.mubr.f32.gmra.mrb[0].mxu0 %v7110
        %v7329 = vpop.f32.mrb[0].mxu0
        %v7330 = vadd.f32 %v7009, %v7329
        %v7331 = vpop.f32.mrb[0].mxu0
        %7332 = vmatprep.mubr.f32.mxu0 0.0
        %7333 = vmatmul.mubr.f32.gmra.mrb[0].mxu0 %v7113
        %v7334 = vpop.f32.mrb[0].mxu0
        %v7335 = vadd.f32 %v7014, %v7334
        %v7336 = vpop.f32.mrb[0].mxu0
        %7337 = vmatprep.mubr.f32.mxu0 0.0
        %7338 = vmatmul.mubr.f32.gmra.mrb[0].mxu0 %v7116
        %v7339 = vpop.f32.mrb[0].mxu0
        %v7340 = vadd.f32 %v7019, %v7339
        %v7341 = vpop.f32.mrb[0].mxu0
        %7342 = vdwg.mxu0
        %s7343 = scalar_lea.vmem %s7, 160
        %v7344 = vld [vmem:[%s7343] sm:$0xff]
        %v7345 = vld [vmem:[%s7343 + $0x8] sm:$0xff]
        %v7346 = vld [vmem:[%s7343 + $0x10] sm:$0xff]
        %v7347 = vld [vmem:[%s7343 + $0x18] sm:$0xff]
        %v7348 = vld [vmem:[%s7343 + $0x20] sm:$0xff]
        %v7349 = vld [vmem:[%s7343 + $0x28] sm:$0xff]
        %v7350 = vld [vmem:[%s7343 + $0x30] sm:$0xff]
        %v7351 = vld [vmem:[%s7343 + $0x38] sm:$0xff]
        %v7352 = vld [vmem:[%s7343 + $0x40] sm:$0xff]
        %v7353 = vld [vmem:[%s7343 + $0x48] sm:$0xff]
        %7354 = vmatprep.subr.mxu0 0.0
        %7355 = vmatpush1.msra.mxu0 %v7344
        %7356 = vmatprep.subr.mxu0 0.0
        %7357 = vmatpush1.msra.mxu0 %v7345
        %7358 = vmatprep.subr.mxu0 0.0
        %7359 = vmatpush1.msra.mxu0 %v7346
        %7360 = vmatprep.subr.mxu0 0.0
        %7361 = vmatpush1.msra.mxu0 %v7347
        %7362 = vmatprep.subr.mxu0 0.0
        %7363 = vmatpush1.msra.mxu0 %v7348
        %7364 = vmatprep.subr.mxu0 0.0
        %7365 = vmatpush1.msra.mxu0 %v7349
        %7366 = vmatprep.subr.mxu0 0.0
        %7367 = vmatpush1.msra.mxu0 %v7350
        %7368 = vmatprep.subr.mxu0 0.0
        %7369 = vmatpush1.msra.mxu0 %v7351
        %7370 = vmatprep.subr.mxu0 0.0
        %7371 = vmatpush1.msra.mxu0 %v7352
        %7372 = vmatprep.subr.mxu0 0.0
        %7373 = vmatpush1.msra.mxu0 %v7353
        %7374 = vmatprep.subr.mxu0 0.0
        %7375 = vmatpush1.msra.mxu0 0.0
        %7376 = vmatprep.subr.mxu0 0.0
        %7377 = vmatpush1.msra.mxu0 0.0
        %7378 = vmatprep.subr.mxu0 0.0
        %7379 = vmatpush1.msra.mxu0 0.0
        %7380 = vmatprep.subr.mxu0 0.0
        %7381 = vmatpush1.msra.mxu0 0.0
        %7382 = vmatprep.subr.mxu0 0.0
        %7383 = vmatpush1.msra.mxu0 0.0
        %7384 = vmatprep.subr.mxu0 0.0
        %7385 = vmatpush1.msra.mxu0 0.0
        %7386 = vmatprep.subr.mxu0 0.0
        %7387 = vmatpush1.msra.mxu0 0.0
        %7388 = vmatprep.subr.mxu0 0.0
        %7389 = vmatpush1.msra.mxu0 0.0
        %7390 = vmatprep.subr.mxu0 0.0
        %7391 = vmatpush1.msra.mxu0 0.0
        %7392 = vmatprep.subr.mxu0 0.0
        %7393 = vmatpush1.msra.mxu0 0.0
        %7394 = vmatprep.subr.mxu0 0.0
        %7395 = vmatpush1.msra.mxu0 0.0
        %7396 = vmatprep.subr.mxu0 0.0
        %7397 = vmatpush1.msra.mxu0 0.0
        %7398 = vmatprep.subr.mxu0 0.0
        %7399 = vmatpush1.msra.mxu0 0.0
        %7400 = vmatprep.subr.mxu0 0.0
        %7401 = vmatpush1.msra.mxu0 0.0
        %7402 = vmatprep.subr.mxu0 0.0
        %7403 = vmatpush1.msra.mxu0 0.0
        %7404 = vmatprep.subr.mxu0 0.0
        %7405 = vmatpush1.msra.mxu0 0.0
        %7406 = vmatprep.subr.mxu0 0.0
        %7407 = vmatpush1.msra.mxu0 0.0
        %7408 = vmatprep.subr.mxu0 0.0
        %7409 = vmatpush1.msra.mxu0 0.0
        %7410 = vmatprep.subr.mxu0 0.0
        %7411 = vmatpush1.msra.mxu0 0.0
        %7412 = vmatprep.subr.mxu0 0.0
        %7413 = vmatpush1.msra.mxu0 0.0
        %7414 = vmatprep.subr.mxu0 0.0
        %7415 = vmatpush1.msra.mxu0 0.0
        %7416 = vmatprep.subr.mxu0 0.0
        %7417 = vmatpush1.msra.mxu0 0.0
        %7418 = vmatprep.mubr.f32.mxu0 0.0
        %7419 = vmatmul.mubr.f32.gmra.mrb[0].mxu0 %v7026
        %v7420 = vpop.f32.mrb[0].mxu0
        %v7421 = vadd.f32 0.0, %v7420
        %v7422 = vpop.f32.mrb[0].mxu0
        %7423 = vmatprep.mubr.f32.mxu0 0.0
        %7424 = vmatmul.mubr.f32.gmra.mrb[0].mxu0 %v7029
        %v7425 = vpop.f32.mrb[0].mxu0
        %v7426 = vadd.f32 0.0, %v7425
        %v7427 = vpop.f32.mrb[0].mxu0
        %7428 = vmatprep.mubr.f32.mxu0 0.0
        %7429 = vmatmul.mubr.f32.gmra.mrb[0].mxu0 %v7032
        %v7430 = vpop.f32.mrb[0].mxu0
        %v7431 = vadd.f32 0.0, %v7430
        %v7432 = vpop.f32.mrb[0].mxu0
        %7433 = vmatprep.mubr.f32.mxu0 0.0
        %7434 = vmatmul.mubr.f32.gmra.mrb[0].mxu0 %v7035
        %v7435 = vpop.f32.mrb[0].mxu0
        %v7436 = vadd.f32 0.0, %v7435
        %v7437 = vpop.f32.mrb[0].mxu0
        %7438 = vmatprep.mubr.f32.mxu0 0.0
        %7439 = vmatmul.mubr.f32.gmra.mrb[0].mxu0 %v7038
        %v7440 = vpop.f32.mrb[0].mxu0
        %v7441 = vadd.f32 0.0, %v7440
        %v7442 = vpop.f32.mrb[0].mxu0
        %7443 = vmatprep.mubr.f32.mxu0 0.0
        %7444 = vmatmul.mubr.f32.gmra.mrb[0].mxu0 %v7041
        %v7445 = vpop.f32.mrb[0].mxu0
        %v7446 = vadd.f32 0.0, %v7445
        %v7447 = vpop.f32.mrb[0].mxu0
        %7448 = vmatprep.mubr.f32.mxu0 0.0
        %7449 = vmatmul.mubr.f32.gmra.mrb[0].mxu0 %v7044
        %v7450 = vpop.f32.mrb[0].mxu0
        %v7451 = vadd.f32 0.0, %v7450
        %v7452 = vpop.f32.mrb[0].mxu0
        %7453 = vmatprep.mubr.f32.mxu0 0.0
        %7454 = vmatmul.mubr.f32.gmra.mrb[0].mxu0 %v7047
        %v7455 = vpop.f32.mrb[0].mxu0
        %v7456 = vadd.f32 0.0, %v7455
        %v7457 = vpop.f32.mrb[0].mxu0
        %7458 = vmatprep.mubr.f32.mxu0 0.0
        %7459 = vmatmul.mubr.f32.gmra.mrb[0].mxu0 %v7050
        %v7460 = vpop.f32.mrb[0].mxu0
        %v7461 = vadd.f32 0.0, %v7460
        %v7462 = vpop.f32.mrb[0].mxu0
        %7463 = vmatprep.mubr.f32.mxu0 0.0
        %7464 = vmatmul.mubr.f32.gmra.mrb[0].mxu0 %v7053
        %v7465 = vpop.f32.mrb[0].mxu0
        %v7466 = vadd.f32 0.0, %v7465
        %v7467 = vpop.f32.mrb[0].mxu0
        %7468 = vmatprep.mubr.f32.mxu0 0.0
        %7469 = vmatmul.mubr.f32.gmra.mrb[0].mxu0 %v7056
        %v7470 = vpop.f32.mrb[0].mxu0
        %v7471 = vadd.f32 0.0, %v7470
        %v7472 = vpop.f32.mrb[0].mxu0
        %7473 = vmatprep.mubr.f32.mxu0 0.0
        %7474 = vmatmul.mubr.f32.gmra.mrb[0].mxu0 %v7059
        %v7475 = vpop.f32.mrb[0].mxu0
        %v7476 = vadd.f32 0.0, %v7475
        %v7477 = vpop.f32.mrb[0].mxu0
        %7478 = vmatprep.mubr.f32.mxu0 0.0
        %7479 = vmatmul.mubr.f32.gmra.mrb[0].mxu0 %v7062
        %v7480 = vpop.f32.mrb[0].mxu0
        %v7481 = vadd.f32 0.0, %v7480
        %v7482 = vpop.f32.mrb[0].mxu0
        %7483 = vmatprep.mubr.f32.mxu0 0.0
        %7484 = vmatmul.mubr.f32.gmra.mrb[0].mxu0 %v7065
        %v7485 = vpop.f32.mrb[0].mxu0
        %v7486 = vadd.f32 0.0, %v7485
        %v7487 = vpop.f32.mrb[0].mxu0
        %7488 = vmatprep.mubr.f32.mxu0 0.0
        %7489 = vmatmul.mubr.f32.gmra.mrb[0].mxu0 %v7068
        %v7490 = vpop.f32.mrb[0].mxu0
        %v7491 = vadd.f32 0.0, %v7490
        %v7492 = vpop.f32.mrb[0].mxu0
        %7493 = vmatprep.mubr.f32.mxu0 0.0
        %7494 = vmatmul.mubr.f32.gmra.mrb[0].mxu0 %v7071
        %v7495 = vpop.f32.mrb[0].mxu0
        %v7496 = vadd.f32 0.0, %v7495
        %v7497 = vpop.f32.mrb[0].mxu0
        %7498 = vmatprep.mubr.f32.mxu0 0.0
        %7499 = vmatmul.mubr.f32.gmra.mrb[0].mxu0 %v7074
        %v7500 = vpop.f32.mrb[0].mxu0
        %v7501 = vadd.f32 0.0, %v7500
        %v7502 = vpop.f32.mrb[0].mxu0
        %7503 = vmatprep.mubr.f32.mxu0 0.0
        %7504 = vmatmul.mubr.f32.gmra.mrb[0].mxu0 %v7077
        %v7505 = vpop.f32.mrb[0].mxu0
        %v7506 = vadd.f32 0.0, %v7505
        %v7507 = vpop.f32.mrb[0].mxu0
        %7508 = vmatprep.mubr.f32.mxu0 0.0
        %7509 = vmatmul.mubr.f32.gmra.mrb[0].mxu0 %v7080
        %v7510 = vpop.f32.mrb[0].mxu0
        %v7511 = vadd.f32 0.0, %v7510
        %v7512 = vpop.f32.mrb[0].mxu0
        %7513 = vmatprep.mubr.f32.mxu0 0.0
        %7514 = vmatmul.mubr.f32.gmra.mrb[0].mxu0 %v7083
        %v7515 = vpop.f32.mrb[0].mxu0
        %v7516 = vadd.f32 0.0, %v7515
        %v7517 = vpop.f32.mrb[0].mxu0
        %7518 = vmatprep.mubr.f32.mxu0 0.0
        %7519 = vmatmul.mubr.f32.gmra.mrb[0].mxu0 %v7086
        %v7520 = vpop.f32.mrb[0].mxu0
        %v7521 = vadd.f32 0.0, %v7520
        %v7522 = vpop.f32.mrb[0].mxu0
        %7523 = vmatprep.mubr.f32.mxu0 0.0
        %7524 = vmatmul.mubr.f32.gmra.mrb[0].mxu0 %v7089
        %v7525 = vpop.f32.mrb[0].mxu0
        %v7526 = vadd.f32 0.0, %v7525
        %v7527 = vpop.f32.mrb[0].mxu0
        %7528 = vmatprep.mubr.f32.mxu0 0.0
        %7529 = vmatmul.mubr.f32.gmra.mrb[0].mxu0 %v7092
        %v7530 = vpop.f32.mrb[0].mxu0
        %v7531 = vadd.f32 0.0, %v7530
        %v7532 = vpop.f32.mrb[0].mxu0
        %7533 = vmatprep.mubr.f32.mxu0 0.0
        %7534 = vmatmul.mubr.f32.gmra.mrb[0].mxu0 %v7095
        %v7535 = vpop.f32.mrb[0].mxu0
        %v7536 = vadd.f32 0.0, %v7535
        %v7537 = vpop.f32.mrb[0].mxu0
        %7538 = vmatprep.mubr.f32.mxu0 0.0
        %7539 = vmatmul.mubr.f32.gmra.mrb[0].mxu0 %v7098
        %v7540 = vpop.f32.mrb[0].mxu0
        %v7541 = vadd.f32 0.0, %v7540
        %v7542 = vpop.f32.mrb[0].mxu0
        %7543 = vmatprep.mubr.f32.mxu0 0.0
        %7544 = vmatmul.mubr.f32.gmra.mrb[0].mxu0 %v7101
        %v7545 = vpop.f32.mrb[0].mxu0
        %v7546 = vadd.f32 0.0, %v7545
        %v7547 = vpop.f32.mrb[0].mxu0
        %7548 = vmatprep.mubr.f32.mxu0 0.0
        %7549 = vmatmul.mubr.f32.gmra.mrb[0].mxu0 %v7104
        %v7550 = vpop.f32.mrb[0].mxu0
        %v7551 = vadd.f32 0.0, %v7550
        %v7552 = vpop.f32.mrb[0].mxu0
        %7553 = vmatprep.mubr.f32.mxu0 0.0
        %7554 = vmatmul.mubr.f32.gmra.mrb[0].mxu0 %v7107
        %v7555 = vpop.f32.mrb[0].mxu0
        %v7556 = vadd.f32 0.0, %v7555
        %v7557 = vpop.f32.mrb[0].mxu0
        %7558 = vmatprep.mubr.f32.mxu0 0.0
        %7559 = vmatmul.mubr.f32.gmra.mrb[0].mxu0 %v7110
        %v7560 = vpop.f32.mrb[0].mxu0
        %v7561 = vadd.f32 0.0, %v7560
        %v7562 = vpop.f32.mrb[0].mxu0
        %7563 = vmatprep.mubr.f32.mxu0 0.0
        %7564 = vmatmul.mubr.f32.gmra.mrb[0].mxu0 %v7113
        %v7565 = vpop.f32.mrb[0].mxu0
        %v7566 = vadd.f32 0.0, %v7565
        %v7567 = vpop.f32.mrb[0].mxu0
        %7568 = vmatprep.mubr.f32.mxu0 0.0
        %7569 = vmatmul.mubr.f32.gmra.mrb[0].mxu0 %v7116
        %v7570 = vpop.f32.mrb[0].mxu0
        %v7571 = vadd.f32 0.0, %v7570
        %v7572 = vpop.f32.mrb[0].mxu0
        %7573 = vmatprep.mubr.f32.mxu0 0.0
        %7574 = vmatmul.mubr.f32.gmra.mrb[0].mxu0 %v7023
        %v7575 = vpop.f32.mrb[0].mxu0
        %v7576 = vadd.f32 0.0, %v7575
        %v7577 = vpop.f32.mrb[0].mxu0
        %7578 = vdwg.mxu0
        %v7579 = vadd.f32 %v7185, %v7421
        %v7580 = vadd.f32 %v7190, %v7426
        %v7581 = vadd.f32 %v7195, %v7431
        %v7582 = vadd.f32 %v7200, %v7436
        %v7583 = vadd.f32 %v7205, %v7441
        %v7584 = vadd.f32 %v7210, %v7446
        %v7585 = vadd.f32 %v7215, %v7451
        %v7586 = vadd.f32 %v7220, %v7456
        %v7587 = vadd.f32 %v7225, %v7461
        %v7588 = vadd.f32 %v7230, %v7466
        %v7589 = vadd.f32 %v7235, %v7471
        %v7590 = vadd.f32 %v7240, %v7476
        %v7591 = vadd.f32 %v7245, %v7481
        %v7592 = vadd.f32 %v7250, %v7486
        %v7593 = vadd.f32 %v7255, %v7491
        %v7594 = vadd.f32 %v7260, %v7496
        %v7595 = vadd.f32 %v7265, %v7501
        %v7596 = vadd.f32 %v7270, %v7506
        %v7597 = vadd.f32 %v7275, %v7511
        %v7598 = vadd.f32 %v7280, %v7516
        %v7599 = vadd.f32 %v7285, %v7521
        %v7600 = vadd.f32 %v7290, %v7526
        %v7601 = vadd.f32 %v7295, %v7531
        %v7602 = vadd.f32 %v7300, %v7536
        %v7603 = vadd.f32 %v7305, %v7541
        %v7604 = vadd.f32 %v7310, %v7546
        %v7605 = vadd.f32 %v7315, %v7551
        %v7606 = vadd.f32 %v7320, %v7556
        %v7607 = vadd.f32 %v7325, %v7561
        %v7608 = vadd.f32 %v7330, %v7566
        %v7609 = vadd.f32 %v7335, %v7571
        %v7610 = vadd.f32 %v7340, %v7576
        %s7611 = scalar_lea.vmem %s7, 240
        %v7612 = vld [vmem:[%s7611] sm:$0xff]
        %v7613 = vld [vmem:[%s7611 + $0x8] sm:$0xff]
        %v7614 = vld [vmem:[%s7611 + $0x10] sm:$0xff]
        %v7615 = vld [vmem:[%s7611 + $0x18] sm:$0xff]
        %v7616 = vld [vmem:[%s7611 + $0x20] sm:$0xff]
        %v7617 = vld [vmem:[%s7611 + $0x28] sm:$0xff]
        %v7618 = vld [vmem:[%s7611 + $0x30] sm:$0xff]
        %v7619 = vld [vmem:[%s7611 + $0x38] sm:$0xff]
        %v7620 = vld [vmem:[%s7611 + $0x40] sm:$0xff]
        %v7621 = vld [vmem:[%s7611 + $0x48] sm:$0xff]
        %7622 = vmatprep.subr.mxu0 0.0
        %7623 = vmatpush1.msra.mxu0 %v7612
        %7624 = vmatprep.subr.mxu0 0.0
        %7625 = vmatpush1.msra.mxu0 %v7613
        %7626 = vmatprep.subr.mxu0 0.0
        %7627 = vmatpush1.msra.mxu0 %v7614
        %7628 = vmatprep.subr.mxu0 0.0
        %7629 = vmatpush1.msra.mxu0 %v7615
        %7630 = vmatprep.subr.mxu0 0.0
        %7631 = vmatpush1.msra.mxu0 %v7616
        %7632 = vmatprep.subr.mxu0 0.0
        %7633 = vmatpush1.msra.mxu0 %v7617
        %7634 = vmatprep.subr.mxu0 0.0
        %7635 = vmatpush1.msra.mxu0 %v7618
        %7636 = vmatprep.subr.mxu0 0.0
        %7637 = vmatpush1.msra.mxu0 %v7619
        %7638 = vmatprep.subr.mxu0 0.0
        %7639 = vmatpush1.msra.mxu0 %v7620
        %7640 = vmatprep.subr.mxu0 0.0
        %7641 = vmatpush1.msra.mxu0 %v7621
        %7642 = vmatprep.subr.mxu0 0.0
        %7643 = vmatpush1.msra.mxu0 0.0
        %7644 = vmatprep.subr.mxu0 0.0
        %7645 = vmatpush1.msra.mxu0 0.0
        %7646 = vmatprep.subr.mxu0 0.0
        %7647 = vmatpush1.msra.mxu0 0.0
        %7648 = vmatprep.subr.mxu0 0.0
        %7649 = vmatpush1.msra.mxu0 0.0
        %7650 = vmatprep.subr.mxu0 0.0
        %7651 = vmatpush1.msra.mxu0 0.0
        %7652 = vmatprep.subr.mxu0 0.0
        %7653 = vmatpush1.msra.mxu0 0.0
        %7654 = vmatprep.subr.mxu0 0.0
        %7655 = vmatpush1.msra.mxu0 0.0
        %7656 = vmatprep.subr.mxu0 0.0
        %7657 = vmatpush1.msra.mxu0 0.0
        %7658 = vmatprep.subr.mxu0 0.0
        %7659 = vmatpush1.msra.mxu0 0.0
        %7660 = vmatprep.subr.mxu0 0.0
        %7661 = vmatpush1.msra.mxu0 0.0
        %7662 = vmatprep.subr.mxu0 0.0
        %7663 = vmatpush1.msra.mxu0 0.0
        %7664 = vmatprep.subr.mxu0 0.0
        %7665 = vmatpush1.msra.mxu0 0.0
        %7666 = vmatprep.subr.mxu0 0.0
        %7667 = vmatpush1.msra.mxu0 0.0
        %7668 = vmatprep.subr.mxu0 0.0
        %7669 = vmatpush1.msra.mxu0 0.0
        %7670 = vmatprep.subr.mxu0 0.0
        %7671 = vmatpush1.msra.mxu0 0.0
        %7672 = vmatprep.subr.mxu0 0.0
        %7673 = vmatpush1.msra.mxu0 0.0
        %7674 = vmatprep.subr.mxu0 0.0
        %7675 = vmatpush1.msra.mxu0 0.0
        %7676 = vmatprep.subr.mxu0 0.0
        %7677 = vmatpush1.msra.mxu0 0.0
        %7678 = vmatprep.subr.mxu0 0.0
        %7679 = vmatpush1.msra.mxu0 0.0
        %7680 = vmatprep.subr.mxu0 0.0
        %7681 = vmatpush1.msra.mxu0 0.0
        %7682 = vmatprep.subr.mxu0 0.0
        %7683 = vmatpush1.msra.mxu0 0.0
        %7684 = vmatprep.subr.mxu0 0.0
        %7685 = vmatpush1.msra.mxu0 0.0
        %7686 = vmatprep.mubr.f32.mxu0 0.0
        %7687 = vmatmul.mubr.f32.gmra.mrb[0].mxu0 %v6705
        %v7688 = vpop.f32.mrb[0].mxu0
        %v7689 = vadd.f32 0.0, %v7688
        %v7690 = vpop.f32.mrb[0].mxu0
        %7691 = vmatprep.mubr.f32.mxu0 0.0
        %7692 = vmatmul.mubr.f32.gmra.mrb[0].mxu0 %v6708
        %v7693 = vpop.f32.mrb[0].mxu0
        %v7694 = vadd.f32 0.0, %v7693
        %v7695 = vpop.f32.mrb[0].mxu0
        %7696 = vmatprep.mubr.f32.mxu0 0.0
        %7697 = vmatmul.mubr.f32.gmra.mrb[0].mxu0 %v6711
        %v7698 = vpop.f32.mrb[0].mxu0
        %v7699 = vadd.f32 0.0, %v7698
        %v7700 = vpop.f32.mrb[0].mxu0
        %7701 = vmatprep.mubr.f32.mxu0 0.0
        %7702 = vmatmul.mubr.f32.gmra.mrb[0].mxu0 %v6714
        %v7703 = vpop.f32.mrb[0].mxu0
        %v7704 = vadd.f32 0.0, %v7703
        %v7705 = vpop.f32.mrb[0].mxu0
        %7706 = vmatprep.mubr.f32.mxu0 0.0
        %7707 = vmatmul.mubr.f32.gmra.mrb[0].mxu0 %v6717
        %v7708 = vpop.f32.mrb[0].mxu0
        %v7709 = vadd.f32 0.0, %v7708
        %v7710 = vpop.f32.mrb[0].mxu0
        %7711 = vmatprep.mubr.f32.mxu0 0.0
        %7712 = vmatmul.mubr.f32.gmra.mrb[0].mxu0 %v6720
        %v7713 = vpop.f32.mrb[0].mxu0
        %v7714 = vadd.f32 0.0, %v7713
        %v7715 = vpop.f32.mrb[0].mxu0
        %7716 = vmatprep.mubr.f32.mxu0 0.0
        %7717 = vmatmul.mubr.f32.gmra.mrb[0].mxu0 %v6723
        %v7718 = vpop.f32.mrb[0].mxu0
        %v7719 = vadd.f32 0.0, %v7718
        %v7720 = vpop.f32.mrb[0].mxu0
        %7721 = vmatprep.mubr.f32.mxu0 0.0
        %7722 = vmatmul.mubr.f32.gmra.mrb[0].mxu0 %v6726
        %v7723 = vpop.f32.mrb[0].mxu0
        %v7724 = vadd.f32 0.0, %v7723
        %v7725 = vpop.f32.mrb[0].mxu0
        %7726 = vmatprep.mubr.f32.mxu0 0.0
        %7727 = vmatmul.mubr.f32.gmra.mrb[0].mxu0 %v6729
        %v7728 = vpop.f32.mrb[0].mxu0
        %v7729 = vadd.f32 0.0, %v7728
        %v7730 = vpop.f32.mrb[0].mxu0
        %7731 = vmatprep.mubr.f32.mxu0 0.0
        %7732 = vmatmul.mubr.f32.gmra.mrb[0].mxu0 %v6732
        %v7733 = vpop.f32.mrb[0].mxu0
        %v7734 = vadd.f32 0.0, %v7733
        %v7735 = vpop.f32.mrb[0].mxu0
        %7736 = vmatprep.mubr.f32.mxu0 0.0
        %7737 = vmatmul.mubr.f32.gmra.mrb[0].mxu0 %v6735
        %v7738 = vpop.f32.mrb[0].mxu0
        %v7739 = vadd.f32 0.0, %v7738
        %v7740 = vpop.f32.mrb[0].mxu0
        %7741 = vmatprep.mubr.f32.mxu0 0.0
        %7742 = vmatmul.mubr.f32.gmra.mrb[0].mxu0 %v6738
        %v7743 = vpop.f32.mrb[0].mxu0
        %v7744 = vadd.f32 0.0, %v7743
        %v7745 = vpop.f32.mrb[0].mxu0
        %7746 = vmatprep.mubr.f32.mxu0 0.0
        %7747 = vmatmul.mubr.f32.gmra.mrb[0].mxu0 %v6741
        %v7748 = vpop.f32.mrb[0].mxu0
        %v7749 = vadd.f32 0.0, %v7748
        %v7750 = vpop.f32.mrb[0].mxu0
        %7751 = vmatprep.mubr.f32.mxu0 0.0
        %7752 = vmatmul.mubr.f32.gmra.mrb[0].mxu0 %v6744
        %v7753 = vpop.f32.mrb[0].mxu0
        %v7754 = vadd.f32 0.0, %v7753
        %v7755 = vpop.f32.mrb[0].mxu0
        %7756 = vmatprep.mubr.f32.mxu0 0.0
        %7757 = vmatmul.mubr.f32.gmra.mrb[0].mxu0 %v6747
        %v7758 = vpop.f32.mrb[0].mxu0
        %v7759 = vadd.f32 0.0, %v7758
        %v7760 = vpop.f32.mrb[0].mxu0
        %7761 = vmatprep.mubr.f32.mxu0 0.0
        %7762 = vmatmul.mubr.f32.gmra.mrb[0].mxu0 %v6750
        %v7763 = vpop.f32.mrb[0].mxu0
        %v7764 = vadd.f32 0.0, %v7763
        %v7765 = vpop.f32.mrb[0].mxu0
        %7766 = vmatprep.mubr.f32.mxu0 0.0
        %7767 = vmatmul.mubr.f32.gmra.mrb[0].mxu0 %v6753
        %v7768 = vpop.f32.mrb[0].mxu0
        %v7769 = vadd.f32 0.0, %v7768
        %v7770 = vpop.f32.mrb[0].mxu0
        %7771 = vmatprep.mubr.f32.mxu0 0.0
        %7772 = vmatmul.mubr.f32.gmra.mrb[0].mxu0 %v6756
        %v7773 = vpop.f32.mrb[0].mxu0
        %v7774 = vadd.f32 0.0, %v7773
        %v7775 = vpop.f32.mrb[0].mxu0
        %7776 = vmatprep.mubr.f32.mxu0 0.0
        %7777 = vmatmul.mubr.f32.gmra.mrb[0].mxu0 %v6759
        %v7778 = vpop.f32.mrb[0].mxu0
        %v7779 = vadd.f32 0.0, %v7778
        %v7780 = vpop.f32.mrb[0].mxu0
        %7781 = vmatprep.mubr.f32.mxu0 0.0
        %7782 = vmatmul.mubr.f32.gmra.mrb[0].mxu0 %v6762
        %v7783 = vpop.f32.mrb[0].mxu0
        %v7784 = vadd.f32 0.0, %v7783
        %v7785 = vpop.f32.mrb[0].mxu0
        %7786 = vmatprep.mubr.f32.mxu0 0.0
        %7787 = vmatmul.mubr.f32.gmra.mrb[0].mxu0 %v6765
        %v7788 = vpop.f32.mrb[0].mxu0
        %v7789 = vadd.f32 0.0, %v7788
        %v7790 = vpop.f32.mrb[0].mxu0
        %7791 = vmatprep.mubr.f32.mxu0 0.0
        %7792 = vmatmul.mubr.f32.gmra.mrb[0].mxu0 %v6768
        %v7793 = vpop.f32.mrb[0].mxu0
        %v7794 = vadd.f32 0.0, %v7793
        %v7795 = vpop.f32.mrb[0].mxu0
        %7796 = vmatprep.mubr.f32.mxu0 0.0
        %7797 = vmatmul.mubr.f32.gmra.mrb[0].mxu0 %v6771
        %v7798 = vpop.f32.mrb[0].mxu0
        %v7799 = vadd.f32 0.0, %v7798
        %v7800 = vpop.f32.mrb[0].mxu0
        %7801 = vmatprep.mubr.f32.mxu0 0.0
        %7802 = vmatmul.mubr.f32.gmra.mrb[0].mxu0 %v6774
        %v7803 = vpop.f32.mrb[0].mxu0
        %v7804 = vadd.f32 0.0, %v7803
        %v7805 = vpop.f32.mrb[0].mxu0
        %7806 = vmatprep.mubr.f32.mxu0 0.0
        %7807 = vmatmul.mubr.f32.gmra.mrb[0].mxu0 %v6777
        %v7808 = vpop.f32.mrb[0].mxu0
        %v7809 = vadd.f32 0.0, %v7808
        %v7810 = vpop.f32.mrb[0].mxu0
        %7811 = vmatprep.mubr.f32.mxu0 0.0
        %7812 = vmatmul.mubr.f32.gmra.mrb[0].mxu0 %v6780
        %v7813 = vpop.f32.mrb[0].mxu0
        %v7814 = vadd.f32 0.0, %v7813
        %v7815 = vpop.f32.mrb[0].mxu0
        %7816 = vmatprep.mubr.f32.mxu0 0.0
        %7817 = vmatmul.mubr.f32.gmra.mrb[0].mxu0 %v6783
        %v7818 = vpop.f32.mrb[0].mxu0
        %v7819 = vadd.f32 0.0, %v7818
        %v7820 = vpop.f32.mrb[0].mxu0
        %7821 = vmatprep.mubr.f32.mxu0 0.0
        %7822 = vmatmul.mubr.f32.gmra.mrb[0].mxu0 %v6786
        %v7823 = vpop.f32.mrb[0].mxu0
        %v7824 = vadd.f32 0.0, %v7823
        %v7825 = vpop.f32.mrb[0].mxu0
        %7826 = vmatprep.mubr.f32.mxu0 0.0
        %7827 = vmatmul.mubr.f32.gmra.mrb[0].mxu0 %v6789
        %v7828 = vpop.f32.mrb[0].mxu0
        %v7829 = vadd.f32 0.0, %v7828
        %v7830 = vpop.f32.mrb[0].mxu0
        %7831 = vmatprep.mubr.f32.mxu0 0.0
        %7832 = vmatmul.mubr.f32.gmra.mrb[0].mxu0 %v6792
        %v7833 = vpop.f32.mrb[0].mxu0
        %v7834 = vadd.f32 0.0, %v7833
        %v7835 = vpop.f32.mrb[0].mxu0
        %7836 = vmatprep.mubr.f32.mxu0 0.0
        %7837 = vmatmul.mubr.f32.gmra.mrb[0].mxu0 %v6795
        %v7838 = vpop.f32.mrb[0].mxu0
        %v7839 = vadd.f32 0.0, %v7838
        %v7840 = vpop.f32.mrb[0].mxu0
        %7841 = vmatprep.mubr.f32.mxu0 0.0
        %7842 = vmatmul.mubr.f32.gmra.mrb[0].mxu0 %v6702
        %v7843 = vpop.f32.mrb[0].mxu0
        %v7844 = vadd.f32 0.0, %v7843
        %v7845 = vpop.f32.mrb[0].mxu0
        %7846 = vdwg.mxu0
        %v7847 = vadd.f32 %v7579, %v7689
        %v7848 = vadd.f32 %v7580, %v7694
        %v7849 = vadd.f32 %v7581, %v7699
        %v7850 = vadd.f32 %v7582, %v7704
        %v7851 = vadd.f32 %v7583, %v7709
        %v7852 = vadd.f32 %v7584, %v7714
        %v7853 = vadd.f32 %v7585, %v7719
        %v7854 = vadd.f32 %v7586, %v7724
        %v7855 = vadd.f32 %v7587, %v7729
        %v7856 = vadd.f32 %v7588, %v7734
        %v7857 = vadd.f32 %v7589, %v7739
        %v7858 = vadd.f32 %v7590, %v7744
        %v7859 = vadd.f32 %v7591, %v7749
        %v7860 = vadd.f32 %v7592, %v7754
        %v7861 = vadd.f32 %v7593, %v7759
        %v7862 = vadd.f32 %v7594, %v7764
        %v7863 = vadd.f32 %v7595, %v7769
        %v7864 = vadd.f32 %v7596, %v7774
        %v7865 = vadd.f32 %v7597, %v7779
        %v7866 = vadd.f32 %v7598, %v7784
        %v7867 = vadd.f32 %v7599, %v7789
        %v7868 = vadd.f32 %v7600, %v7794
        %v7869 = vadd.f32 %v7601, %v7799
        %v7870 = vadd.f32 %v7602, %v7804
        %v7871 = vadd.f32 %v7603, %v7809
        %v7872 = vadd.f32 %v7604, %v7814
        %v7873 = vadd.f32 %v7605, %v7819
        %v7874 = vadd.f32 %v7606, %v7824
        %v7875 = vadd.f32 %v7607, %v7829
        %v7876 = vadd.f32 %v7608, %v7834
        %v7877 = vadd.f32 %v7609, %v7839
        %v7878 = vadd.f32 %v7610, %v7844
        %s7879 = scalar_lea.vmem %s7, 320
        %v7880 = vld [vmem:[%s7879] sm:$0xff]
        %v7881 = vld [vmem:[%s7879 + $0x8] sm:$0xff]
        %v7882 = vld [vmem:[%s7879 + $0x10] sm:$0xff]
        %v7883 = vld [vmem:[%s7879 + $0x18] sm:$0xff]
        %v7884 = vld [vmem:[%s7879 + $0x20] sm:$0xff]
        %v7885 = vld [vmem:[%s7879 + $0x28] sm:$0xff]
        %v7886 = vld [vmem:[%s7879 + $0x30] sm:$0xff]
        %v7887 = vld [vmem:[%s7879 + $0x38] sm:$0xff]
        %v7888 = vld [vmem:[%s7879 + $0x40] sm:$0xff]
        %v7889 = vld [vmem:[%s7879 + $0x48] sm:$0xff]
        %7890 = vmatprep.subr.mxu0 0.0
        %7891 = vmatpush1.msra.mxu0 %v7880
        %7892 = vmatprep.subr.mxu0 0.0
        %7893 = vmatpush1.msra.mxu0 %v7881
        %7894 = vmatprep.subr.mxu0 0.0
        %7895 = vmatpush1.msra.mxu0 %v7882
        %7896 = vmatprep.subr.mxu0 0.0
        %7897 = vmatpush1.msra.mxu0 %v7883
        %7898 = vmatprep.subr.mxu0 0.0
        %7899 = vmatpush1.msra.mxu0 %v7884
        %7900 = vmatprep.subr.mxu0 0.0
        %7901 = vmatpush1.msra.mxu0 %v7885
        %7902 = vmatprep.subr.mxu0 0.0
        %7903 = vmatpush1.msra.mxu0 %v7886
        %7904 = vmatprep.subr.mxu0 0.0
        %7905 = vmatpush1.msra.mxu0 %v7887
        %7906 = vmatprep.subr.mxu0 0.0
        %7907 = vmatpush1.msra.mxu0 %v7888
        %7908 = vmatprep.subr.mxu0 0.0
        %7909 = vmatpush1.msra.mxu0 %v7889
        %7910 = vmatprep.subr.mxu0 0.0
        %7911 = vmatpush1.msra.mxu0 0.0
        %7912 = vmatprep.subr.mxu0 0.0
        %7913 = vmatpush1.msra.mxu0 0.0
        %7914 = vmatprep.subr.mxu0 0.0
        %7915 = vmatpush1.msra.mxu0 0.0
        %7916 = vmatprep.subr.mxu0 0.0
        %7917 = vmatpush1.msra.mxu0 0.0
        %7918 = vmatprep.subr.mxu0 0.0
        %7919 = vmatpush1.msra.mxu0 0.0
        %7920 = vmatprep.subr.mxu0 0.0
        %7921 = vmatpush1.msra.mxu0 0.0
        %7922 = vmatprep.subr.mxu0 0.0
        %7923 = vmatpush1.msra.mxu0 0.0
        %7924 = vmatprep.subr.mxu0 0.0
        %7925 = vmatpush1.msra.mxu0 0.0
        %7926 = vmatprep.subr.mxu0 0.0
        %7927 = vmatpush1.msra.mxu0 0.0
        %7928 = vmatprep.subr.mxu0 0.0
        %7929 = vmatpush1.msra.mxu0 0.0
        %7930 = vmatprep.subr.mxu0 0.0
        %7931 = vmatpush1.msra.mxu0 0.0
        %7932 = vmatprep.subr.mxu0 0.0
        %7933 = vmatpush1.msra.mxu0 0.0
        %7934 = vmatprep.subr.mxu0 0.0
        %7935 = vmatpush1.msra.mxu0 0.0
        %7936 = vmatprep.subr.mxu0 0.0
        %7937 = vmatpush1.msra.mxu0 0.0
        %7938 = vmatprep.subr.mxu0 0.0
        %7939 = vmatpush1.msra.mxu0 0.0
        %7940 = vmatprep.subr.mxu0 0.0
        %7941 = vmatpush1.msra.mxu0 0.0
        %7942 = vmatprep.subr.mxu0 0.0
        %7943 = vmatpush1.msra.mxu0 0.0
        %7944 = vmatprep.subr.mxu0 0.0
        %7945 = vmatpush1.msra.mxu0 0.0
        %7946 = vmatprep.subr.mxu0 0.0
        %7947 = vmatpush1.msra.mxu0 0.0
        %7948 = vmatprep.subr.mxu0 0.0
        %7949 = vmatpush1.msra.mxu0 0.0
        %7950 = vmatprep.subr.mxu0 0.0
        %7951 = vmatpush1.msra.mxu0 0.0
        %7952 = vmatprep.subr.mxu0 0.0
        %7953 = vmatpush1.msra.mxu0 0.0
        %7954 = vmatprep.mubr.f32.mxu0 0.0
        %7955 = vmatmul.mubr.f32.gmra.mrb[0].mxu0 %v7029
        %v7956 = vpop.f32.mrb[0].mxu0
        %v7957 = vadd.f32 0.0, %v7956
        %v7958 = vpop.f32.mrb[0].mxu0
        %7959 = vmatprep.mubr.f32.mxu0 0.0
        %7960 = vmatmul.mubr.f32.gmra.mrb[0].mxu0 %v7032
        %v7961 = vpop.f32.mrb[0].mxu0
        %v7962 = vadd.f32 0.0, %v7961
        %v7963 = vpop.f32.mrb[0].mxu0
        %7964 = vmatprep.mubr.f32.mxu0 0.0
        %7965 = vmatmul.mubr.f32.gmra.mrb[0].mxu0 %v7035
        %v7966 = vpop.f32.mrb[0].mxu0
        %v7967 = vadd.f32 0.0, %v7966
        %v7968 = vpop.f32.mrb[0].mxu0
        %7969 = vmatprep.mubr.f32.mxu0 0.0
        %7970 = vmatmul.mubr.f32.gmra.mrb[0].mxu0 %v7038
        %v7971 = vpop.f32.mrb[0].mxu0
        %v7972 = vadd.f32 0.0, %v7971
        %v7973 = vpop.f32.mrb[0].mxu0
        %7974 = vmatprep.mubr.f32.mxu0 0.0
        %7975 = vmatmul.mubr.f32.gmra.mrb[0].mxu0 %v7041
        %v7976 = vpop.f32.mrb[0].mxu0
        %v7977 = vadd.f32 0.0, %v7976
        %v7978 = vpop.f32.mrb[0].mxu0
        %7979 = vmatprep.mubr.f32.mxu0 0.0
        %7980 = vmatmul.mubr.f32.gmra.mrb[0].mxu0 %v7044
        %v7981 = vpop.f32.mrb[0].mxu0
        %v7982 = vadd.f32 0.0, %v7981
        %v7983 = vpop.f32.mrb[0].mxu0
        %7984 = vmatprep.mubr.f32.mxu0 0.0
        %7985 = vmatmul.mubr.f32.gmra.mrb[0].mxu0 %v7047
        %v7986 = vpop.f32.mrb[0].mxu0
        %v7987 = vadd.f32 0.0, %v7986
        %v7988 = vpop.f32.mrb[0].mxu0
        %7989 = vmatprep.mubr.f32.mxu0 0.0
        %7990 = vmatmul.mubr.f32.gmra.mrb[0].mxu0 %v7050
        %v7991 = vpop.f32.mrb[0].mxu0
        %v7992 = vadd.f32 0.0, %v7991
        %v7993 = vpop.f32.mrb[0].mxu0
        %7994 = vmatprep.mubr.f32.mxu0 0.0
        %7995 = vmatmul.mubr.f32.gmra.mrb[0].mxu0 %v7053
        %v7996 = vpop.f32.mrb[0].mxu0
        %v7997 = vadd.f32 0.0, %v7996
        %v7998 = vpop.f32.mrb[0].mxu0
        %7999 = vmatprep.mubr.f32.mxu0 0.0
        %8000 = vmatmul.mubr.f32.gmra.mrb[0].mxu0 %v7056
        %v8001 = vpop.f32.mrb[0].mxu0
        %v8002 = vadd.f32 0.0, %v8001
        %v8003 = vpop.f32.mrb[0].mxu0
        %8004 = vmatprep.mubr.f32.mxu0 0.0
        %8005 = vmatmul.mubr.f32.gmra.mrb[0].mxu0 %v7059
        %v8006 = vpop.f32.mrb[0].mxu0
        %v8007 = vadd.f32 0.0, %v8006
        %v8008 = vpop.f32.mrb[0].mxu0
        %8009 = vmatprep.mubr.f32.mxu0 0.0
        %8010 = vmatmul.mubr.f32.gmra.mrb[0].mxu0 %v7062
        %v8011 = vpop.f32.mrb[0].mxu0
        %v8012 = vadd.f32 0.0, %v8011
        %v8013 = vpop.f32.mrb[0].mxu0
        %8014 = vmatprep.mubr.f32.mxu0 0.0
        %8015 = vmatmul.mubr.f32.gmra.mrb[0].mxu0 %v7065
        %v8016 = vpop.f32.mrb[0].mxu0
        %v8017 = vadd.f32 0.0, %v8016
        %v8018 = vpop.f32.mrb[0].mxu0
        %8019 = vmatprep.mubr.f32.mxu0 0.0
        %8020 = vmatmul.mubr.f32.gmra.mrb[0].mxu0 %v7068
        %v8021 = vpop.f32.mrb[0].mxu0
        %v8022 = vadd.f32 0.0, %v8021
        %v8023 = vpop.f32.mrb[0].mxu0
        %8024 = vmatprep.mubr.f32.mxu0 0.0
        %8025 = vmatmul.mubr.f32.gmra.mrb[0].mxu0 %v7071
        %v8026 = vpop.f32.mrb[0].mxu0
        %v8027 = vadd.f32 0.0, %v8026
        %v8028 = vpop.f32.mrb[0].mxu0
        %8029 = vmatprep.mubr.f32.mxu0 0.0
        %8030 = vmatmul.mubr.f32.gmra.mrb[0].mxu0 %v7074
        %v8031 = vpop.f32.mrb[0].mxu0
        %v8032 = vadd.f32 0.0, %v8031
        %v8033 = vpop.f32.mrb[0].mxu0
        %8034 = vmatprep.mubr.f32.mxu0 0.0
        %8035 = vmatmul.mubr.f32.gmra.mrb[0].mxu0 %v7077
        %v8036 = vpop.f32.mrb[0].mxu0
        %v8037 = vadd.f32 0.0, %v8036
        %v8038 = vpop.f32.mrb[0].mxu0
        %8039 = vmatprep.mubr.f32.mxu0 0.0
        %8040 = vmatmul.mubr.f32.gmra.mrb[0].mxu0 %v7080
        %v8041 = vpop.f32.mrb[0].mxu0
        %v8042 = vadd.f32 0.0, %v8041
        %v8043 = vpop.f32.mrb[0].mxu0
        %8044 = vmatprep.mubr.f32.mxu0 0.0
        %8045 = vmatmul.mubr.f32.gmra.mrb[0].mxu0 %v7083
        %v8046 = vpop.f32.mrb[0].mxu0
        %v8047 = vadd.f32 0.0, %v8046
        %v8048 = vpop.f32.mrb[0].mxu0
        %8049 = vmatprep.mubr.f32.mxu0 0.0
        %8050 = vmatmul.mubr.f32.gmra.mrb[0].mxu0 %v7086
        %v8051 = vpop.f32.mrb[0].mxu0
        %v8052 = vadd.f32 0.0, %v8051
        %v8053 = vpop.f32.mrb[0].mxu0
        %8054 = vmatprep.mubr.f32.mxu0 0.0
        %8055 = vmatmul.mubr.f32.gmra.mrb[0].mxu0 %v7089
        %v8056 = vpop.f32.mrb[0].mxu0
        %v8057 = vadd.f32 0.0, %v8056
        %v8058 = vpop.f32.mrb[0].mxu0
        %8059 = vmatprep.mubr.f32.mxu0 0.0
        %8060 = vmatmul.mubr.f32.gmra.mrb[0].mxu0 %v7092
        %v8061 = vpop.f32.mrb[0].mxu0
        %v8062 = vadd.f32 0.0, %v8061
        %v8063 = vpop.f32.mrb[0].mxu0
        %8064 = vmatprep.mubr.f32.mxu0 0.0
        %8065 = vmatmul.mubr.f32.gmra.mrb[0].mxu0 %v7095
        %v8066 = vpop.f32.mrb[0].mxu0
        %v8067 = vadd.f32 0.0, %v8066
        %v8068 = vpop.f32.mrb[0].mxu0
        %8069 = vmatprep.mubr.f32.mxu0 0.0
        %8070 = vmatmul.mubr.f32.gmra.mrb[0].mxu0 %v7098
        %v8071 = vpop.f32.mrb[0].mxu0
        %v8072 = vadd.f32 0.0, %v8071
        %v8073 = vpop.f32.mrb[0].mxu0
        %8074 = vmatprep.mubr.f32.mxu0 0.0
        %8075 = vmatmul.mubr.f32.gmra.mrb[0].mxu0 %v7101
        %v8076 = vpop.f32.mrb[0].mxu0
        %v8077 = vadd.f32 0.0, %v8076
        %v8078 = vpop.f32.mrb[0].mxu0
        %8079 = vmatprep.mubr.f32.mxu0 0.0
        %8080 = vmatmul.mubr.f32.gmra.mrb[0].mxu0 %v7104
        %v8081 = vpop.f32.mrb[0].mxu0
        %v8082 = vadd.f32 0.0, %v8081
        %v8083 = vpop.f32.mrb[0].mxu0
        %8084 = vmatprep.mubr.f32.mxu0 0.0
        %8085 = vmatmul.mubr.f32.gmra.mrb[0].mxu0 %v7107
        %v8086 = vpop.f32.mrb[0].mxu0
        %v8087 = vadd.f32 0.0, %v8086
        %v8088 = vpop.f32.mrb[0].mxu0
        %8089 = vmatprep.mubr.f32.mxu0 0.0
        %8090 = vmatmul.mubr.f32.gmra.mrb[0].mxu0 %v7110
        %v8091 = vpop.f32.mrb[0].mxu0
        %v8092 = vadd.f32 0.0, %v8091
        %v8093 = vpop.f32.mrb[0].mxu0
        %8094 = vmatprep.mubr.f32.mxu0 0.0
        %8095 = vmatmul.mubr.f32.gmra.mrb[0].mxu0 %v7113
        %v8096 = vpop.f32.mrb[0].mxu0
        %v8097 = vadd.f32 0.0, %v8096
        %v8098 = vpop.f32.mrb[0].mxu0
        %8099 = vmatprep.mubr.f32.mxu0 0.0
        %8100 = vmatmul.mubr.f32.gmra.mrb[0].mxu0 %v7116
        %v8101 = vpop.f32.mrb[0].mxu0
        %v8102 = vadd.f32 0.0, %v8101
        %v8103 = vpop.f32.mrb[0].mxu0
        %8104 = vmatprep.mubr.f32.mxu0 0.0
        %8105 = vmatmul.mubr.f32.gmra.mrb[0].mxu0 %v7023
        %v8106 = vpop.f32.mrb[0].mxu0
        %v8107 = vadd.f32 0.0, %v8106
        %v8108 = vpop.f32.mrb[0].mxu0
        %8109 = vmatprep.mubr.f32.mxu0 0.0
        %8110 = vmatmul.mubr.f32.gmra.mrb[0].mxu0 %v7026
        %v8111 = vpop.f32.mrb[0].mxu0
        %v8112 = vadd.f32 0.0, %v8111
        %v8113 = vpop.f32.mrb[0].mxu0
        %8114 = vdwg.mxu0
        %v8115 = vadd.f32 %v7847, %v7957
        %v8116 = vadd.f32 %v7848, %v7962
        %v8117 = vadd.f32 %v7849, %v7967
        %v8118 = vadd.f32 %v7850, %v7972
        %v8119 = vadd.f32 %v7851, %v7977
        %v8120 = vadd.f32 %v7852, %v7982
        %v8121 = vadd.f32 %v7853, %v7987
        %v8122 = vadd.f32 %v7854, %v7992
        %v8123 = vadd.f32 %v7855, %v7997
        %v8124 = vadd.f32 %v7856, %v8002
        %v8125 = vadd.f32 %v7857, %v8007
        %v8126 = vadd.f32 %v7858, %v8012
        %v8127 = vadd.f32 %v7859, %v8017
        %v8128 = vadd.f32 %v7860, %v8022
        %v8129 = vadd.f32 %v7861, %v8027
        %v8130 = vadd.f32 %v7862, %v8032
        %v8131 = vadd.f32 %v7863, %v8037
        %v8132 = vadd.f32 %v7864, %v8042
        %v8133 = vadd.f32 %v7865, %v8047
        %v8134 = vadd.f32 %v7866, %v8052
        %v8135 = vadd.f32 %v7867, %v8057
        %v8136 = vadd.f32 %v7868, %v8062
        %v8137 = vadd.f32 %v7869, %v8067
        %v8138 = vadd.f32 %v7870, %v8072
        %v8139 = vadd.f32 %v7871, %v8077
        %v8140 = vadd.f32 %v7872, %v8082
        %v8141 = vadd.f32 %v7873, %v8087
        %v8142 = vadd.f32 %v7874, %v8092
        %v8143 = vadd.f32 %v7875, %v8097
        %v8144 = vadd.f32 %v7876, %v8102
        %v8145 = vadd.f32 %v7877, %v8107
        %v8146 = vadd.f32 %v7878, %v8112
        %v8147 = vld [vmem:[%s10] sm:$0xff]
        %v8148 = vld [vmem:[%s10 + $0x8] sm:$0xff]
        %v8149 = vlaneseq
        %v8150 = vshrl.u32 %v8149, 7
        %v8151 = vsub.s32 2, %v8150
        %v8152 = vrot.slane %v446, %v8151
        %8153 = vmatprep.subr.mxu0 0.0
        %8154 = vmatpush1.msra.mxu0 %v8115
        %8155 = vmatprep.subr.mxu0 0.0
        %8156 = vmatpush1.msra.mxu0 %v8116
        %8157 = vmatprep.subr.mxu0 0.0
        %8158 = vmatpush1.msra.mxu0 %v8117
        %8159 = vmatprep.subr.mxu0 0.0
        %8160 = vmatpush1.msra.mxu0 %v8118
        %8161 = vmatprep.subr.mxu0 0.0
        %8162 = vmatpush1.msra.mxu0 %v8119
        %8163 = vmatprep.subr.mxu0 0.0
        %8164 = vmatpush1.msra.mxu0 %v8120
        %8165 = vmatprep.subr.mxu0 0.0
        %8166 = vmatpush1.msra.mxu0 %v8121
        %8167 = vmatprep.subr.mxu0 0.0
        %8168 = vmatpush1.msra.mxu0 %v8122
        %8169 = vmatprep.subr.mxu0 0.0
        %8170 = vmatpush1.msra.mxu0 %v8123
        %8171 = vmatprep.subr.mxu0 0.0
        %8172 = vmatpush1.msra.mxu0 %v8124
        %8173 = vmatprep.subr.mxu0 0.0
        %8174 = vmatpush1.msra.mxu0 %v8125
        %8175 = vmatprep.subr.mxu0 0.0
        %8176 = vmatpush1.msra.mxu0 %v8126
        %8177 = vmatprep.subr.mxu0 0.0
        %8178 = vmatpush1.msra.mxu0 %v8127
        %8179 = vmatprep.subr.mxu0 0.0
        %8180 = vmatpush1.msra.mxu0 %v8128
        %8181 = vmatprep.subr.mxu0 0.0
        %8182 = vmatpush1.msra.mxu0 %v8129
        %8183 = vmatprep.subr.mxu0 0.0
        %8184 = vmatpush1.msra.mxu0 %v8130
        %8185 = vmatprep.subr.mxu0 0.0
        %8186 = vmatpush1.msra.mxu0 %v8131
        %8187 = vmatprep.subr.mxu0 0.0
        %8188 = vmatpush1.msra.mxu0 %v8132
        %8189 = vmatprep.subr.mxu0 0.0
        %8190 = vmatpush1.msra.mxu0 %v8133
        %8191 = vmatprep.subr.mxu0 0.0
        %8192 = vmatpush1.msra.mxu0 %v8134
        %8193 = vmatprep.subr.mxu0 0.0
        %8194 = vmatpush1.msra.mxu0 %v8135
        %8195 = vmatprep.subr.mxu0 0.0
        %8196 = vmatpush1.msra.mxu0 %v8136
        %8197 = vmatprep.subr.mxu0 0.0
        %8198 = vmatpush1.msra.mxu0 %v8137
        %8199 = vmatprep.subr.mxu0 0.0
        %8200 = vmatpush1.msra.mxu0 %v8138
        %8201 = vmatprep.subr.mxu0 0.0
        %8202 = vmatpush1.msra.mxu0 %v8139
        %8203 = vmatprep.subr.mxu0 0.0
        %8204 = vmatpush1.msra.mxu0 %v8140
        %8205 = vmatprep.subr.mxu0 0.0
        %8206 = vmatpush1.msra.mxu0 %v8141
        %8207 = vmatprep.subr.mxu0 0.0
        %8208 = vmatpush1.msra.mxu0 %v8142
        %8209 = vmatprep.subr.mxu0 0.0
        %8210 = vmatpush1.msra.mxu0 %v8143
        %8211 = vmatprep.subr.mxu0 0.0
        %8212 = vmatpush1.msra.mxu0 %v8144
        %8213 = vmatprep.subr.mxu0 0.0
        %8214 = vmatpush1.msra.mxu0 %v8145
        %8215 = vmatprep.subr.mxu0 0.0
        %8216 = vmatpush1.msra.mxu0 %v8146
        %8217 = vmatprep.mubr.f32.mxu0 %v8148
        %8218 = vmatmul.mubr.f32.gmra.mrb[0].mxu0 %v8147
        %v8219 = vpop.f32.mrb[0].mxu0
        %v8220 = vadd.f32 %v8152, %v8219
        %v8221 = vpop.f32.mrb[0].mxu0
        %8222 = vdwg.mxu0
        %v8223 = vmax.f32 %v8220, 0.0
        %v8224 = vld [vmem:[%s8] sm:$0xff]
        %v8225 = vld [vmem:[%s8 + $0x8] sm:$0xff]
        %v8226 = vld [vmem:[%s8 + $0x10] sm:$0xff]
        %v8227 = vld [vmem:[%s8 + $0x18] sm:$0xff]
        %v8228 = vld [vmem:[%s8 + $0x20] sm:$0xff]
        %v8229 = vld [vmem:[%s8 + $0x28] sm:$0xff]
        %v8230 = vld [vmem:[%s8 + $0x30] sm:$0xff]
        %v8231 = vld [vmem:[%s8 + $0x38] sm:$0xff]
        %v8232 = vld [vmem:[%s8 + $0x40] sm:$0xff]
        %v8233 = vld [vmem:[%s8 + $0x48] sm:$0xff]
        %v8234 = vld [vmem:[%s8 + $0x50] sm:$0xff]
        %v8235 = vld [vmem:[%s8 + $0x58] sm:$0xff]
        %v8236 = vld [vmem:[%s8 + $0x60] sm:$0xff]
        %v8237 = vld [vmem:[%s8 + $0x68] sm:$0xff]
        %v8238 = vld [vmem:[%s8 + $0x70] sm:$0xff]
        %v8239 = vld [vmem:[%s8 + $0x78] sm:$0xff]
        %v8240 = vlaneseq
        %v8241 = vshrl.u32 %v8240, 7
        %v8242 = vsub.s32 3, %v8241
        %v8243 = vrot.slane %v446, %v8242
        %8244 = vmatprep.subr.mxu0 0.0
        %8245 = vmatpush1.msra.mxu0 %v8224
        %8246 = vmatprep.subr.mxu0 0.0
        %8247 = vmatpush1.msra.mxu0 %v8225
        %8248 = vmatprep.subr.mxu0 0.0
        %8249 = vmatpush1.msra.mxu0 %v8226
        %8250 = vmatprep.subr.mxu0 0.0
        %8251 = vmatpush1.msra.mxu0 %v8227
        %8252 = vmatprep.subr.mxu0 0.0
        %8253 = vmatpush1.msra.mxu0 %v8228
        %8254 = vmatprep.subr.mxu0 0.0
        %8255 = vmatpush1.msra.mxu0 %v8229
        %8256 = vmatprep.subr.mxu0 0.0
        %8257 = vmatpush1.msra.mxu0 %v8230
        %8258 = vmatprep.subr.mxu0 0.0
        %8259 = vmatpush1.msra.mxu0 %v8231
        %8260 = vmatprep.subr.mxu0 0.0
        %8261 = vmatpush1.msra.mxu0 %v8232
        %8262 = vmatprep.subr.mxu0 0.0
        %8263 = vmatpush1.msra.mxu0 %v8233
        %8264 = vmatprep.subr.mxu0 0.0
        %8265 = vmatpush1.msra.mxu0 %v8234
        %8266 = vmatprep.subr.mxu0 0.0
        %8267 = vmatpush1.msra.mxu0 %v8235
        %8268 = vmatprep.subr.mxu0 0.0
        %8269 = vmatpush1.msra.mxu0 %v8236
        %8270 = vmatprep.subr.mxu0 0.0
        %8271 = vmatpush1.msra.mxu0 %v8237
        %8272 = vmatprep.subr.mxu0 0.0
        %8273 = vmatpush1.msra.mxu0 %v8238
        %8274 = vmatprep.subr.mxu0 0.0
        %8275 = vmatpush1.msra.mxu0 %v8239
        %8276 = vmatprep.subr.mxu0 0.0
        %8277 = vmatpush1.msra.mxu0 0.0
        %8278 = vmatprep.subr.mxu0 0.0
        %8279 = vmatpush1.msra.mxu0 0.0
        %8280 = vmatprep.subr.mxu0 0.0
        %8281 = vmatpush1.msra.mxu0 0.0
        %8282 = vmatprep.subr.mxu0 0.0
        %8283 = vmatpush1.msra.mxu0 0.0
        %8284 = vmatprep.subr.mxu0 0.0
        %8285 = vmatpush1.msra.mxu0 0.0
        %8286 = vmatprep.subr.mxu0 0.0
        %8287 = vmatpush1.msra.mxu0 0.0
        %8288 = vmatprep.subr.mxu0 0.0
        %8289 = vmatpush1.msra.mxu0 0.0
        %8290 = vmatprep.subr.mxu0 0.0
        %8291 = vmatpush1.msra.mxu0 0.0
        %8292 = vmatprep.subr.mxu0 0.0
        %8293 = vmatpush1.msra.mxu0 0.0
        %8294 = vmatprep.subr.mxu0 0.0
        %8295 = vmatpush1.msra.mxu0 0.0
        %8296 = vmatprep.subr.mxu0 0.0
        %8297 = vmatpush1.msra.mxu0 0.0
        %8298 = vmatprep.subr.mxu0 0.0
        %8299 = vmatpush1.msra.mxu0 0.0
        %8300 = vmatprep.subr.mxu0 0.0
        %8301 = vmatpush1.msra.mxu0 0.0
        %8302 = vmatprep.subr.mxu0 0.0
        %8303 = vmatpush1.msra.mxu0 0.0
        %8304 = vmatprep.subr.mxu0 0.0
        %8305 = vmatpush1.msra.mxu0 0.0
        %8306 = vmatprep.subr.mxu0 0.0
        %8307 = vmatpush1.msra.mxu0 0.0
        %8308 = vmatprep.mubr.f32.mxu0 0.0
        %8309 = vmatmul.mubr.f32.gmra.mrb[0].mxu0 %v8223
        %v8310 = vpop.f32.mrb[0].mxu0
        %v8311 = vadd.f32 %v8243, %v8310
        %v8312 = vpop.f32.mrb[0].mxu0
        %8313 = vdwg.mxu0
        %v8314 = vmax.f32 %v8311, 0.0
        %v8315 = vld [vmem:[%s9] sm:$0xff]
        %v8316 = vld [vmem:[%s9 + $0x8] sm:$0xff]
        %v8317 = vld [vmem:[%s9 + $0x10] sm:$0xff]
        %v8318 = vld [vmem:[%s9 + $0x18] sm:$0xff]
        %v8319 = vld [vmem:[%s9 + $0x20] sm:$0xff]
        %v8320 = vld [vmem:[%s9 + $0x28] sm:$0xff]
        %v8321 = vld [vmem:[%s9 + $0x30] sm:$0xff]
        %v8322 = vld [vmem:[%s9 + $0x38] sm:$0xff]
        %v8323 = vld [vmem:[%s9 + $0x40] sm:$0xff]
        %v8324 = vld [vmem:[%s9 + $0x48] sm:$0xff]
        %v8325 = vld [vmem:[%s9 + $0x50] sm:$0xff]
        %v8326 = vld [vmem:[%s9 + $0x58] sm:$0xff]
        %v8327 = vld [vmem:[%s9 + $0x60] sm:$0xff]
        %v8328 = vld [vmem:[%s9 + $0x68] sm:$0xff]
        %v8329 = vld [vmem:[%s9 + $0x70] sm:$0xff]
        %v8330 = vld [vmem:[%s9 + $0x78] sm:$0xff]
        %v8331 = vlaneseq
        %v8332 = vshrl.u32 %v8331, 7
        %v8333 = vsub.s32 4, %v8332
        %v8334 = vrot.slane %v446, %v8333
        %8335 = vmatprep.subr.mxu0 0.0
        %8336 = vmatpush1.msra.mxu0 %v8315
        %8337 = vmatprep.subr.mxu0 0.0
        %8338 = vmatpush1.msra.mxu0 %v8316
        %8339 = vmatprep.subr.mxu0 0.0
        %8340 = vmatpush1.msra.mxu0 %v8317
        %8341 = vmatprep.subr.mxu0 0.0
        %8342 = vmatpush1.msra.mxu0 %v8318
        %8343 = vmatprep.subr.mxu0 0.0
        %8344 = vmatpush1.msra.mxu0 %v8319
        %8345 = vmatprep.subr.mxu0 0.0
        %8346 = vmatpush1.msra.mxu0 %v8320
        %8347 = vmatprep.subr.mxu0 0.0
        %8348 = vmatpush1.msra.mxu0 %v8321
        %8349 = vmatprep.subr.mxu0 0.0
        %8350 = vmatpush1.msra.mxu0 %v8322
        %8351 = vmatprep.subr.mxu0 0.0
        %8352 = vmatpush1.msra.mxu0 %v8323
        %8353 = vmatprep.subr.mxu0 0.0
        %8354 = vmatpush1.msra.mxu0 %v8324
        %8355 = vmatprep.subr.mxu0 0.0
        %8356 = vmatpush1.msra.mxu0 %v8325
        %8357 = vmatprep.subr.mxu0 0.0
        %8358 = vmatpush1.msra.mxu0 %v8326
        %8359 = vmatprep.subr.mxu0 0.0
        %8360 = vmatpush1.msra.mxu0 %v8327
        %8361 = vmatprep.subr.mxu0 0.0
        %8362 = vmatpush1.msra.mxu0 %v8328
        %8363 = vmatprep.subr.mxu0 0.0
        %8364 = vmatpush1.msra.mxu0 %v8329
        %8365 = vmatprep.subr.mxu0 0.0
        %8366 = vmatpush1.msra.mxu0 %v8330
        %8367 = vmatprep.subr.mxu0 0.0
        %8368 = vmatpush1.msra.mxu0 0.0
        %8369 = vmatprep.subr.mxu0 0.0
        %8370 = vmatpush1.msra.mxu0 0.0
        %8371 = vmatprep.subr.mxu0 0.0
        %8372 = vmatpush1.msra.mxu0 0.0
        %8373 = vmatprep.subr.mxu0 0.0
        %8374 = vmatpush1.msra.mxu0 0.0
        %8375 = vmatprep.subr.mxu0 0.0
        %8376 = vmatpush1.msra.mxu0 0.0
        %8377 = vmatprep.subr.mxu0 0.0
        %8378 = vmatpush1.msra.mxu0 0.0
        %8379 = vmatprep.subr.mxu0 0.0
        %8380 = vmatpush1.msra.mxu0 0.0
        %8381 = vmatprep.subr.mxu0 0.0
        %8382 = vmatpush1.msra.mxu0 0.0
        %8383 = vmatprep.subr.mxu0 0.0
        %8384 = vmatpush1.msra.mxu0 0.0
        %8385 = vmatprep.subr.mxu0 0.0
        %8386 = vmatpush1.msra.mxu0 0.0
        %8387 = vmatprep.subr.mxu0 0.0
        %8388 = vmatpush1.msra.mxu0 0.0
        %8389 = vmatprep.subr.mxu0 0.0
        %8390 = vmatpush1.msra.mxu0 0.0
        %8391 = vmatprep.subr.mxu0 0.0
        %8392 = vmatpush1.msra.mxu0 0.0
        %8393 = vmatprep.subr.mxu0 0.0
        %8394 = vmatpush1.msra.mxu0 0.0
        %8395 = vmatprep.subr.mxu0 0.0
        %8396 = vmatpush1.msra.mxu0 0.0
        %8397 = vmatprep.subr.mxu0 0.0
        %8398 = vmatpush1.msra.mxu0 0.0
        %8399 = vmatprep.mubr.f32.mxu0 0.0
        %8400 = vmatmul.mubr.f32.gmra.mrb[0].mxu0 %v8314
        %v8401 = vpop.f32.mrb[0].mxu0
        %v8402 = vadd.f32 %v8334, %v8401
        %v8403 = vpop.f32.mrb[0].mxu0
        %8404 = vdwg.mxu0
        %8405 = vst [vmem:[%s407] sm:$0xff] %v8402
        %s8406 = sand.u32 %s291, 1
        %s8407 = scalar_lea.sflag [#allocation3], %s8406
        %s8408 = sand.u32 %s291, 1
        %s8409 = smul.addr %s8408, 8
        %s8410 = scalar_lea.vmem [#allocation2], %s8409
        // Predicated region
        $region69: #{lenet5_forward.1} parent=67 // pred_check
          %p8411 = pneg %p301
        $region70: #{lenet5_forward.1} parent=67 // pred_check_branch
          %8413 = sbr.rel (%p8411) target = $region72
        $region71: #{lenet5_forward.1} parent=67 // pred_region
          %s8415 = ssub.s32 128, 128
          %8416 = vsyncadd %s8407, %s8415
          %s8417 = smul.addr %s26, 128
          %s8418 = scalar_lea.hbm %s12, %s8417
          %s8420 = sshll.u32 %s8410, 4
          %s8421 = int_to_ptr.vmem [resolvable:$true] %s8420
          %8423 = dma.vmem_to_hbm [thread:$0]  %s8421, 128, %s8418, %s8407
        $region72: #{lenet5_forward.1} parent=67 // pred_fallthru
          _
      $region68: #{lenet5_forward.1} parent=5 // pred_fallthru
        _
      %p8424 = scmp.le.s32.totalorder 2, %s21
      // Predicated region
      $region73: #{lenet5_forward.1} parent=5 // pred_check
        %p8425 = pneg %p8424
      $region74: #{lenet5_forward.1} parent=5 // pred_check_branch
        %8427 = sbr.rel (%p8425) target = $region76
      $region75: #{lenet5_forward.1} parent=5 // pred_region
        %s8428 = ssub.s32 %s21, 2
        // Predicated region
        $region77: #{lenet5_forward.1} parent=75 // pred_check
          %p8429 = pneg %p307
        $region78: #{lenet5_forward.1} parent=75 // pred_check_branch
          %8431 = sbr.rel (%p8429) target = $region80
        $region79: #{lenet5_forward.1} parent=75 // pred_region
          %s8432 = sand.u32 %s292, 1
          %s8433 = scalar_lea.sflag [#allocation3], %s8432
          %s8434 = sand.u32 %s292, 1
          %s8435 = smul.addr %s8434, 8
          %s8436 = scalar_lea.vmem [#allocation2], %s8435
          %8437 = dma.done %s8433, 128
        $region80: #{lenet5_forward.1} parent=75 // pred_fallthru
          _
      $region76: #{lenet5_forward.1} parent=5 // pred_fallthru
        _
    $region6: #{lenet5_forward.1} parent=1 // loop_footer
      %s25 = sadd.s32 1, %s21
    $region7: #{lenet5_forward.1} parent=1 // loop_footer_branch
      %20 = sbr.rel target = $region3
    $region8: #{lenet5_forward.1} parent=1 // loop_exit
      _
    %8438 = vsyncpa [#allocation3], 1
    %s8439 = scalar_lea.sflag [#allocation3], 1
    %8440 = vsyncpa %s8439, 1

</llo_original>
